<compile_context>
chip_gen: v5e
topology: v5e:2x2
jax: 0.10.0
libtpu: 0.0.40
codegen_flags: <defaults>
</compile_context>

<pallas_src>
import functools

import jax
import jax.numpy as jnp
import numpy as np
from jax.experimental import pallas as pl
from jax.experimental.pallas import tpu as pltpu


# -----------------------------------------------------------------------------
# fused DS_out kernel (one grid step per batch image)
# -----------------------------------------------------------------------------
def _ds_out_kernel(x_ref, m_ref, g_ref, bln_ref,
                   w1_ref, b1_ref, w2_ref, b2_ref, w3_ref, b3_ref,
                   o_ref, a_ref, *, Cin, W2, HW2, PAD):
    f32 = jnp.float32

    # Zero only the two PAD-wide border strips of the flat-padded activation
    # scratch (the interior is fully rewritten by every stage below).
    a_ref[:, pl.ds(0, PAD)] = jnp.zeros((Cin, PAD), f32)
    a_ref[:, pl.ds(PAD + HW2, PAD)] = jnp.zeros((Cin, PAD), f32)

    # Column-validity masks for the kx=0 / kx=2 taps (row validity is handled
    # by the zero padding of the flat scratch).
    mask_l = m_ref[pl.ds(0, 1), :]                     # [1, HW2]: w2 > 0
    mask_r = m_ref[pl.ds(1, 1), :]                     # [1, HW2]: w2 < W2-1

    # ---- LayerNorm over channels (per pixel), f32 ---------------------------
    x = x_ref[0]                                       # [Cin, HW2] f32
    mu = jnp.mean(x, axis=0, keepdims=True)
    var = jnp.mean(jnp.square(x - mu), axis=0, keepdims=True)
    xn = (x - mu) * jax.lax.rsqrt(var + 1e-5) * g_ref[...] + bln_ref[...]
    a_ref[:, pl.ds(PAD, HW2)] = xn

    def conv3x3(w_ref, b_ref):
        # 3x3 'same' conv as 9 accumulated MXU dots: [Cout, Cin] @ [Cin, HW2].
        cout = w_ref.shape[1]
        acc = jnp.zeros((cout, HW2), f32)
        for ky in range(3):
            for kx in range(3):
                shift = (ky - 1) * W2 + (kx - 1)
                v = a_ref[:, pl.ds(PAD + shift, HW2)]  # [Cin, HW2] f32
                if kx == 0:
                    v = v * mask_l
                elif kx == 2:
                    v = v * mask_r
                acc = acc + jnp.dot(w_ref[ky * 3 + kx],         # [cout, Cin] bf16
                                    v.astype(jnp.bfloat16),     # [Cin, HW2]  bf16
                                    preferred_element_type=f32)
        return acc + b_ref[...]                         # bias [cout, 1]

    a = jnp.maximum(conv3x3(w1_ref, b1_ref), 0.0)       # conv1 + ReLU  (f32)
    a_ref[:, pl.ds(PAD, HW2)] = a
    a = jnp.maximum(conv3x3(w2_ref, b2_ref), 0.0)       # conv2 + ReLU  (f32)
    a_ref[:, pl.ds(PAD, HW2)] = a
    a = conv3x3(w3_ref, b3_ref)                         # conv3 + sigmoid
    # [Cout, HW2] f32 store: minor dim = HW2 (multiple of 128) -> lane-dense,
    # and it is already NCHW so no wrapper transpose is needed.
    o_ref[0] = jax.nn.sigmoid(a).astype(o_ref.dtype)


def ds_out_forward(params, x_nchw):
    """DS_out forward.  x_nchw: [B, Cin, H, W] (PyTorch NCHW) -> [B, Cout, 2H, 2W]."""
    B, Cin, H, W = x_nchw.shape
    Cout = params["w3"].shape[1]
    H2, W2 = 2 * H, 2 * W
    HW2 = H2 * W2
    PAD = ((W2 + 1 + 127) // 128) * 128                # lane-aligned flat padding

    # 2x nearest upsample (NCHW) + flatten spatial into the lane dim.  LayerNorm
    # is per-pixel over C, so applying it after the upsample matches PyTorch.
    xu = jnp.broadcast_to(x_nchw[:, :, :, None, :, None],
                          (B, Cin, H, 2, W, 2)).reshape(B, Cin, HW2)

    # Static W-boundary masks for the kx=0 / kx=2 taps.
    wcol = np.arange(HW2) % W2
    masks = jnp.asarray(np.stack([wcol > 0, wcol < W2 - 1]).astype(np.float32))

    # Explicit scoped-VMEM budget (in/out blocks are double-buffered).
    need = (2 * (Cin + Cout) * HW2 * 4                  # in/out blocks (x2 buffers)
            + Cin * (HW2 + 2 * PAD) * 4                 # padded activation scratch
            + 6 * Cout * HW2 * 4                        # accumulators / spills (est.)
            + (1 << 20))                                # weights, masks, misc
    vmem_limit = int(min(64 * 1024 * 1024, max(32 * 1024 * 1024, 2 * need)))

    kern = functools.partial(_ds_out_kernel, Cin=Cin, W2=W2, HW2=HW2, PAD=PAD)
    out = pl.pallas_call(
        kern,
        out_shape=jax.ShapeDtypeStruct((B, Cout, HW2), jnp.float32),
        grid=(B,),
        in_specs=[
            pl.BlockSpec((1, Cin, HW2), lambda b: (b, 0, 0)),    # upsampled input (f32)
            pl.BlockSpec((2, HW2), lambda b: (0, 0)),            # column masks   (f32)
            pl.BlockSpec((Cin, 1), lambda b: (0, 0)),            # LN gamma       (f32)
            pl.BlockSpec((Cin, 1), lambda b: (0, 0)),            # LN beta        (f32)
            pl.BlockSpec((9, Cin, Cin), lambda b: (0, 0, 0)),    # conv1 w        (bf16)
            pl.BlockSpec((Cin, 1), lambda b: (0, 0)),            # conv1 b        (f32)
            pl.BlockSpec((9, Cin, Cin), lambda b: (0, 0, 0)),    # conv2 w        (bf16)
            pl.BlockSpec((Cin, 1), lambda b: (0, 0)),            # conv2 b        (f32)
            pl.BlockSpec((9, Cout, Cin), lambda b: (0, 0, 0)),   # conv3 w        (bf16)
            pl.BlockSpec((Cout, 1), lambda b: (0, 0)),           # conv3 b        (f32)
        ],
        out_specs=pl.BlockSpec((1, Cout, HW2), lambda b: (b, 0, 0)),
        scratch_shapes=[pltpu.VMEM((Cin, HW2 + 2 * PAD), jnp.float32)],
        compiler_params=pltpu.CompilerParams(
            dimension_semantics=("parallel",),
            vmem_limit_bytes=vmem_limit),
    )(xu, masks, params["ln_g"], params["ln_b"],
      params["w1"], params["b1"], params["w2"], params["b2"],
      params["w3"], params["b3"])

    # [B, Cout, H2*W2] is already NCHW -- free reshape, no transpose.
    return out.reshape(B, Cout, H2, W2)


# -----------------------------------------------------------------------------
# pure-JAX (XLA) reference for correctness checking
# -----------------------------------------------------------------------------
def ds_out_reference(params, x_nchw):
    x = x_nchw.astype(jnp.float32)
    x = jnp.repeat(jnp.repeat(x, 2, axis=2), 2, axis=3)           # nearest upsample
    mu = jnp.mean(x, axis=1, keepdims=True)
    var = jnp.mean(jnp.square(x - mu), axis=1, keepdims=True)
    g = params["ln_g"].reshape(1, -1, 1, 1)
    b = params["ln_b"].reshape(1, -1, 1, 1)
    x = (x - mu) * jax.lax.rsqrt(var + 1e-5) * g + b

    def conv(a, w9, bias):
        cout, cin = w9.shape[1], w9.shape[2]
        # [9, cout, cin] (tap = ky*3+kx) -> OIHW [cout, cin, ky, kx]
        w = jnp.transpose(w9.astype(jnp.float32), (1, 2, 0)).reshape(cout, cin, 3, 3)
        y = jax.lax.conv_general_dilated(
            a, w, window_strides=(1, 1), padding="SAME",
            dimension_numbers=("NCHW", "OIHW", "NCHW"),
            precision=jax.lax.Precision.HIGHEST)
        return y + bias.reshape(1, cout, 1, 1)

    a = jax.nn.relu(conv(x, params["w1"], params["b1"]))
    a = jax.nn.relu(conv(a, params["w2"], params["b2"]))
    return jax.nn.sigmoid(conv(a, params["w3"], params["b3"]))


# -----------------------------------------------------------------------------
# deterministic parameter construction
# -----------------------------------------------------------------------------
def init_ds_out(key, cin, cout):
    ks = jax.random.split(key, 8)

    def rnd(k, shape, scale=0.1):
        return scale * jax.random.normal(k, shape, jnp.float32)

    # Conv weights stored [9, cout, cin] with tap t = ky*3 + kx, i.e.
    # torch weight[co, ci, ky, kx] == w[ky*3+kx, co, ci].  Weights in bf16
    # (MXU-native operand dtype); biases and LayerNorm params stay f32.
    return {
        "ln_g": 1.0 + rnd(ks[0], (cin, 1)),
        "ln_b": rnd(ks[1], (cin, 1)),
        "w1": rnd(ks[2], (9, cin, cin)).astype(jnp.bfloat16),
        "b1": rnd(ks[3], (cin, 1)),
        "w2": rnd(ks[4], (9, cin, cin)).astype(jnp.bfloat16),
        "b2": rnd(ks[5], (cin, 1)),
        "w3": rnd(ks[6], (9, cout, cin)).astype(jnp.bfloat16),
        "b3": rnd(ks[7], (cout, 1)),
    }


# -----------------------------------------------------------------------------
if __name__ == "__main__":
    # DS_out(in_channels=8, out_channels=64) as used for an FCT ds head.
    B, Cin, Cout, H, W = 2, 8, 64, 16, 16
    root = jax.random.PRNGKey(0)
    k_x, k_p = jax.random.split(root)

    x = jax.random.normal(k_x, (B, Cin, H, W), jnp.float32)       # NCHW like PyTorch
    params = init_ds_out(k_p, Cin, Cout)

    fwd = jax.jit(ds_out_forward)
    y = fwd(params, x)
    jax.block_until_ready(y)
    assert y.shape == (B, Cout, 2 * H, 2 * W)

    y_ref = jax.jit(ds_out_reference)(params, x)
    jax.block_until_ready(y_ref)
    err = float(jnp.max(jnp.abs(y - y_ref)))
    assert err < 5e-2, f"mismatch vs reference: max abs err = {err}"

    print("KERNEL_OK")
</pallas_src>

<mosaic_0001>
module attributes {stable_mosaic.version = 11 : i64} {
  func.func @_ds_out_kernel(%arg0: i32, %arg1: memref<1x8x1024xf32, #tpu.memory_space<vmem>>, %arg2: memref<2x1024xf32, #tpu.memory_space<vmem>>, %arg3: memref<8x1xf32, #tpu.memory_space<vmem>>, %arg4: memref<8x1xf32, #tpu.memory_space<vmem>>, %arg5: memref<9x8x8xbf16, #tpu.memory_space<vmem>>, %arg6: memref<8x1xf32, #tpu.memory_space<vmem>>, %arg7: memref<9x8x8xbf16, #tpu.memory_space<vmem>>, %arg8: memref<8x1xf32, #tpu.memory_space<vmem>>, %arg9: memref<9x64x8xbf16, #tpu.memory_space<vmem>>, %arg10: memref<64x1xf32, #tpu.memory_space<vmem>>, %arg11: memref<1x64x1024xf32, #tpu.memory_space<vmem>>, %arg12: memref<8x1280xf32, #tpu.memory_space<vmem>>) attributes {dimension_semantics = [#tpu.dimension_semantics<parallel>], iteration_bounds = array<i64: 2>, scalar_prefetch = 0 : i64, scratch_operands = 1 : i64, tpu.core_type = #tpu.core_type<tc>, window_params = [{transform_indices = @transform_0, window_bounds = array<i64: 1, 8, 1024>}, {pipeline_mode = #tpu.pipeline_mode<synchronous>, transform_indices = @transform_1, window_bounds = array<i64: 2, 1024>}, {pipeline_mode = #tpu.pipeline_mode<synchronous>, transform_indices = @transform_2, window_bounds = array<i64: 8, 1>}, {pipeline_mode = #tpu.pipeline_mode<synchronous>, transform_indices = @transform_3, window_bounds = array<i64: 8, 1>}, {pipeline_mode = #tpu.pipeline_mode<synchronous>, transform_indices = @transform_4, window_bounds = array<i64: 9, 8, 8>}, {pipeline_mode = #tpu.pipeline_mode<synchronous>, transform_indices = @transform_5, window_bounds = array<i64: 8, 1>}, {pipeline_mode = #tpu.pipeline_mode<synchronous>, transform_indices = @transform_6, window_bounds = array<i64: 9, 8, 8>}, {pipeline_mode = #tpu.pipeline_mode<synchronous>, transform_indices = @transform_7, window_bounds = array<i64: 8, 1>}, {pipeline_mode = #tpu.pipeline_mode<synchronous>, transform_indices = @transform_8, window_bounds = array<i64: 9, 64, 8>}, {pipeline_mode = #tpu.pipeline_mode<synchronous>, transform_indices = @transform_9, window_bounds = array<i64: 64, 1>}, {transform_indices = @transform_10, window_bounds = array<i64: 1, 64, 1024>}]} {
    %cst = arith.constant 0.000000e+00 : f32
    %0 = vector.broadcast %cst : f32 to vector<8x128xf32>
    %c0 = arith.constant 0 : index
    %c0_0 = arith.constant 0 : index
    %1 = vector.load %arg12[%c0, %c0_0] : memref<8x1280xf32, #tpu.memory_space<vmem>>, vector<8x128xf32>
    tpu.vector_store %arg12[%c0, %c0_0], %0 {strides = array<i32>} : memref<8x1280xf32, #tpu.memory_space<vmem>>, vector<8x128xf32>,
    %cst_1 = arith.constant 0.000000e+00 : f32
    %2 = vector.broadcast %cst_1 : f32 to vector<8x128xf32>
    %c0_2 = arith.constant 0 : index
    %c1152 = arith.constant 1152 : index
    %3 = vector.load %arg12[%c0_2, %c1152] : memref<8x1280xf32, #tpu.memory_space<vmem>>, vector<8x128xf32>
    tpu.vector_store %arg12[%c0_2, %c1152], %2 {strides = array<i32>} : memref<8x1280xf32, #tpu.memory_space<vmem>>, vector<8x128xf32>,
    %c0_3 = arith.constant 0 : index
    %c0_4 = arith.constant 0 : index
    %4 = vector.load %arg2[%c0_3, %c0_4] : memref<2x1024xf32, #tpu.memory_space<vmem>>, vector<1x1024xf32>
    %c1 = arith.constant 1 : index
    %c0_5 = arith.constant 0 : index
    %5 = vector.load %arg2[%c1, %c0_5] : memref<2x1024xf32, #tpu.memory_space<vmem>>, vector<1x1024xf32>
    %c0_6 = arith.constant 0 : index
    %c0_7 = arith.constant 0 : index
    %c0_8 = arith.constant 0 : index
    %6 = vector.load %arg1[%c0_6, %c0_7, %c0_8] : memref<1x8x1024xf32, #tpu.memory_space<vmem>>, vector<1x8x1024xf32>
    %7 = vector.shape_cast %6 : vector<1x8x1024xf32> to vector<8x1024xf32>
    %cst_9 = arith.constant dense<0.000000e+00> : vector<1024xf32>
    %8 = vector.multi_reduction <add>, %7, %cst_9 [0] : vector<8x1024xf32> to vector<1024xf32>
    %9 = vector.shape_cast %8 : vector<1024xf32> to vector<1x1024xf32>
    %cst_10 = arith.constant 8.000000e+00 : f32
    %10 = vector.broadcast %cst_10 : f32 to vector<1x1024xf32>
    %11 = arith.divf %9, %10 : vector<1x1024xf32>
    %12 = vector.broadcast %11 : vector<1x1024xf32> to vector<8x1024xf32>
    %13 = arith.subf %7, %12 : vector<8x1024xf32>
    %14 = arith.mulf %13, %13 : vector<8x1024xf32>
    %cst_11 = arith.constant dense<0.000000e+00> : vector<1024xf32>
    %15 = vector.multi_reduction <add>, %14, %cst_11 [0] : vector<8x1024xf32> to vector<1024xf32>
    %16 = vector.shape_cast %15 : vector<1024xf32> to vector<1x1024xf32>
    %cst_12 = arith.constant 8.000000e+00 : f32
    %17 = vector.broadcast %cst_12 : f32 to vector<1x1024xf32>
    %18 = arith.divf %16, %17 : vector<1x1024xf32>
    %19 = vector.broadcast %11 : vector<1x1024xf32> to vector<8x1024xf32>
    %20 = arith.subf %7, %19 : vector<8x1024xf32>
    %cst_13 = arith.constant 9.99999974E-6 : f32
    %21 = vector.broadcast %cst_13 : f32 to vector<1x1024xf32>
    %22 = arith.addf %18, %21 : vector<1x1024xf32>
    %23 = math.rsqrt %22 : vector<1x1024xf32>
    %24 = vector.broadcast %23 : vector<1x1024xf32> to vector<8x1024xf32>
    %25 = arith.mulf %20, %24 : vector<8x1024xf32>
    %c0_14 = arith.constant 0 : index
    %c0_15 = arith.constant 0 : index
    %26 = vector.load %arg3[%c0_14, %c0_15] : memref<8x1xf32, #tpu.memory_space<vmem>>, vector<8x1xf32>
    %27 = vector.broadcast %26 : vector<8x1xf32> to vector<8x1024xf32>
    %28 = arith.mulf %25, %27 : vector<8x1024xf32>
    %c0_16 = arith.constant 0 : index
    %c0_17 = arith.constant 0 : index
    %29 = vector.load %arg4[%c0_16, %c0_17] : memref<8x1xf32, #tpu.memory_space<vmem>>, vector<8x1xf32>
    %30 = vector.broadcast %29 : vector<8x1xf32> to vector<8x1024xf32>
    %31 = arith.addf %28, %30 : vector<8x1024xf32>
    %c0_18 = arith.constant 0 : index
    %c128 = arith.constant 128 : index
    %32 = vector.load %arg12[%c0_18, %c128] : memref<8x1280xf32, #tpu.memory_space<vmem>>, vector<8x1024xf32>
    tpu.vector_store %arg12[%c0_18, %c128], %31 {strides = array<i32>} : memref<8x1280xf32, #tpu.memory_space<vmem>>, vector<8x1024xf32>,
    %cst_19 = arith.constant 0.000000e+00 : f32
    %33 = vector.broadcast %cst_19 : f32 to vector<8x1024xf32>
    %c0_20 = arith.constant 0 : index
    %c95 = arith.constant 95 : index
    %34 = vector.load %arg12[%c0_20, %c95] : memref<8x1280xf32, #tpu.memory_space<vmem>>, vector<8x1024xf32>
    %35 = vector.broadcast %4 : vector<1x1024xf32> to vector<8x1024xf32>
    %36 = arith.mulf %34, %35 : vector<8x1024xf32>
    %c0_21 = arith.constant 0 : index
    %c0_22 = arith.constant 0 : index
    %c0_23 = arith.constant 0 : index
    %37 = vector.load %arg5[%c0_21, %c0_22, %c0_23] : memref<9x8x8xbf16, #tpu.memory_space<vmem>>, vector<1x8x8xbf16>
    %38 = vector.shape_cast %37 : vector<1x8x8xbf16> to vector<8x8xbf16>
    %39 = arith.truncf %36 : vector<8x1024xf32> to vector<8x1024xbf16>
    %cst_24 = arith.constant dense<0.000000e+00> : vector<8x1024xf32>
    %40 = tpu.matmul %38, %39, %cst_24 {dimension_numbers = #tpu.dot_dimension_numbers<[1], [0], [0], [1], [0, 0, 1, 1], [], []>} : vector<8x8xbf16>, vector<8x1024xbf16>, vector<8x1024xf32> -> vector<8x1024xf32>
    %41 = arith.addf %33, %40 : vector<8x1024xf32>
    %c0_25 = arith.constant 0 : index
    %c96 = arith.constant 96 : index
    %42 = vector.load %arg12[%c0_25, %c96] : memref<8x1280xf32, #tpu.memory_space<vmem>>, vector<8x1024xf32>
    %c1_26 = arith.constant 1 : index
    %c0_27 = arith.constant 0 : index
    %c0_28 = arith.constant 0 : index
    %43 = vector.load %arg5[%c1_26, %c0_27, %c0_28] : memref<9x8x8xbf16, #tpu.memory_space<vmem>>, vector<1x8x8xbf16>
    %44 = vector.shape_cast %43 : vector<1x8x8xbf16> to vector<8x8xbf16>
    %45 = arith.truncf %42 : vector<8x1024xf32> to vector<8x1024xbf16>
    %cst_29 = arith.constant dense<0.000000e+00> : vector<8x1024xf32>
    %46 = tpu.matmul %44, %45, %cst_29 {dimension_numbers = #tpu.dot_dimension_numbers<[1], [0], [0], [1], [0, 0, 1, 1], [], []>} : vector<8x8xbf16>, vector<8x1024xbf16>, vector<8x1024xf32> -> vector<8x1024xf32>
    %47 = arith.addf %41, %46 : vector<8x1024xf32>
    %c0_30 = arith.constant 0 : index
    %c97 = arith.constant 97 : index
    %48 = vector.load %arg12[%c0_30, %c97] : memref<8x1280xf32, #tpu.memory_space<vmem>>, vector<8x1024xf32>
    %49 = vector.broadcast %5 : vector<1x1024xf32> to vector<8x1024xf32>
    %50 = arith.mulf %48, %49 : vector<8x1024xf32>
    %c2 = arith.constant 2 : index
    %c0_31 = arith.constant 0 : index
    %c0_32 = arith.constant 0 : index
    %51 = vector.load %arg5[%c2, %c0_31, %c0_32] : memref<9x8x8xbf16, #tpu.memory_space<vmem>>, vector<1x8x8xbf16>
    %52 = vector.shape_cast %51 : vector<1x8x8xbf16> to vector<8x8xbf16>
    %53 = arith.truncf %50 : vector<8x1024xf32> to vector<8x1024xbf16>
    %cst_33 = arith.constant dense<0.000000e+00> : vector<8x1024xf32>
    %54 = tpu.matmul %52, %53, %cst_33 {dimension_numbers = #tpu.dot_dimension_numbers<[1], [0], [0], [1], [0, 0, 1, 1], [], []>} : vector<8x8xbf16>, vector<8x1024xbf16>, vector<8x1024xf32> -> vector<8x1024xf32>
    %55 = arith.addf %47, %54 : vector<8x1024xf32>
    %c0_34 = arith.constant 0 : index
    %c127 = arith.constant 127 : index
    %56 = vector.load %arg12[%c0_34, %c127] : memref<8x1280xf32, #tpu.memory_space<vmem>>, vector<8x1024xf32>
    %57 = vector.broadcast %4 : vector<1x1024xf32> to vector<8x1024xf32>
    %58 = arith.mulf %56, %57 : vector<8x1024xf32>
    %c3 = arith.constant 3 : index
    %c0_35 = arith.constant 0 : index
    %c0_36 = arith.constant 0 : index
    %59 = vector.load %arg5[%c3, %c0_35, %c0_36] : memref<9x8x8xbf16, #tpu.memory_space<vmem>>, vector<1x8x8xbf16>
    %60 = vector.shape_cast %59 : vector<1x8x8xbf16> to vector<8x8xbf16>
    %61 = arith.truncf %58 : vector<8x1024xf32> to vector<8x1024xbf16>
    %cst_37 = arith.constant dense<0.000000e+00> : vector<8x1024xf32>
    %62 = tpu.matmul %60, %61, %cst_37 {dimension_numbers = #tpu.dot_dimension_numbers<[1], [0], [0], [1], [0, 0, 1, 1], [], []>} : vector<8x8xbf16>, vector<8x1024xbf16>, vector<8x1024xf32> -> vector<8x1024xf32>
    %63 = arith.addf %55, %62 : vector<8x1024xf32>
    %c0_38 = arith.constant 0 : index
    %c128_39 = arith.constant 128 : index
    %64 = vector.load %arg12[%c0_38, %c128_39] : memref<8x1280xf32, #tpu.memory_space<vmem>>, vector<8x1024xf32>
    %c4 = arith.constant 4 : index
    %c0_40 = arith.constant 0 : index
    %c0_41 = arith.constant 0 : index
    %65 = vector.load %arg5[%c4, %c0_40, %c0_41] : memref<9x8x8xbf16, #tpu.memory_space<vmem>>, vector<1x8x8xbf16>
    %66 = vector.shape_cast %65 : vector<1x8x8xbf16> to vector<8x8xbf16>
    %67 = arith.truncf %64 : vector<8x1024xf32> to vector<8x1024xbf16>
    %cst_42 = arith.constant dense<0.000000e+00> : vector<8x1024xf32>
    %68 = tpu.matmul %66, %67, %cst_42 {dimension_numbers = #tpu.dot_dimension_numbers<[1], [0], [0], [1], [0, 0, 1, 1], [], []>} : vector<8x8xbf16>, vector<8x1024xbf16>, vector<8x1024xf32> -> vector<8x1024xf32>
    %69 = arith.addf %63, %68 : vector<8x1024xf32>
    %c0_43 = arith.constant 0 : index
    %c129 = arith.constant 129 : index
    %70 = vector.load %arg12[%c0_43, %c129] : memref<8x1280xf32, #tpu.memory_space<vmem>>, vector<8x1024xf32>
    %71 = vector.broadcast %5 : vector<1x1024xf32> to vector<8x1024xf32>
    %72 = arith.mulf %70, %71 : vector<8x1024xf32>
    %c5 = arith.constant 5 : index
    %c0_44 = arith.constant 0 : index
    %c0_45 = arith.constant 0 : index
    %73 = vector.load %arg5[%c5, %c0_44, %c0_45] : memref<9x8x8xbf16, #tpu.memory_space<vmem>>, vector<1x8x8xbf16>
    %74 = vector.shape_cast %73 : vector<1x8x8xbf16> to vector<8x8xbf16>
    %75 = arith.truncf %72 : vector<8x1024xf32> to vector<8x1024xbf16>
    %cst_46 = arith.constant dense<0.000000e+00> : vector<8x1024xf32>
    %76 = tpu.matmul %74, %75, %cst_46 {dimension_numbers = #tpu.dot_dimension_numbers<[1], [0], [0], [1], [0, 0, 1, 1], [], []>} : vector<8x8xbf16>, vector<8x1024xbf16>, vector<8x1024xf32> -> vector<8x1024xf32>
    %77 = arith.addf %69, %76 : vector<8x1024xf32>
    %c0_47 = arith.constant 0 : index
    %c159 = arith.constant 159 : index
    %78 = vector.load %arg12[%c0_47, %c159] : memref<8x1280xf32, #tpu.memory_space<vmem>>, vector<8x1024xf32>
    %79 = vector.broadcast %4 : vector<1x1024xf32> to vector<8x1024xf32>
    %80 = arith.mulf %78, %79 : vector<8x1024xf32>
    %c6 = arith.constant 6 : index
    %c0_48 = arith.constant 0 : index
    %c0_49 = arith.constant 0 : index
    %81 = vector.load %arg5[%c6, %c0_48, %c0_49] : memref<9x8x8xbf16, #tpu.memory_space<vmem>>, vector<1x8x8xbf16>
    %82 = vector.shape_cast %81 : vector<1x8x8xbf16> to vector<8x8xbf16>
    %83 = arith.truncf %80 : vector<8x1024xf32> to vector<8x1024xbf16>
    %cst_50 = arith.constant dense<0.000000e+00> : vector<8x1024xf32>
    %84 = tpu.matmul %82, %83, %cst_50 {dimension_numbers = #tpu.dot_dimension_numbers<[1], [0], [0], [1], [0, 0, 1, 1], [], []>} : vector<8x8xbf16>, vector<8x1024xbf16>, vector<8x1024xf32> -> vector<8x1024xf32>
    %85 = arith.addf %77, %84 : vector<8x1024xf32>
    %c0_51 = arith.constant 0 : index
    %c160 = arith.constant 160 : index
    %86 = vector.load %arg12[%c0_51, %c160] : memref<8x1280xf32, #tpu.memory_space<vmem>>, vector<8x1024xf32>
    %c7 = arith.constant 7 : index
    %c0_52 = arith.constant 0 : index
    %c0_53 = arith.constant 0 : index
    %87 = vector.load %arg5[%c7, %c0_52, %c0_53] : memref<9x8x8xbf16, #tpu.memory_space<vmem>>, vector<1x8x8xbf16>
    %88 = vector.shape_cast %87 : vector<1x8x8xbf16> to vector<8x8xbf16>
    %89 = arith.truncf %86 : vector<8x1024xf32> to vector<8x1024xbf16>
    %cst_54 = arith.constant dense<0.000000e+00> : vector<8x1024xf32>
    %90 = tpu.matmul %88, %89, %cst_54 {dimension_numbers = #tpu.dot_dimension_numbers<[1], [0], [0], [1], [0, 0, 1, 1], [], []>} : vector<8x8xbf16>, vector<8x1024xbf16>, vector<8x1024xf32> -> vector<8x1024xf32>
    %91 = arith.addf %85, %90 : vector<8x1024xf32>
    %c0_55 = arith.constant 0 : index
    %c161 = arith.constant 161 : index
    %92 = vector.load %arg12[%c0_55, %c161] : memref<8x1280xf32, #tpu.memory_space<vmem>>, vector<8x1024xf32>
    %93 = vector.broadcast %5 : vector<1x1024xf32> to vector<8x1024xf32>
    %94 = arith.mulf %92, %93 : vector<8x1024xf32>
    %c8 = arith.constant 8 : index
    %c0_56 = arith.constant 0 : index
    %c0_57 = arith.constant 0 : index
    %95 = vector.load %arg5[%c8, %c0_56, %c0_57] : memref<9x8x8xbf16, #tpu.memory_space<vmem>>, vector<1x8x8xbf16>
    %96 = vector.shape_cast %95 : vector<1x8x8xbf16> to vector<8x8xbf16>
    %97 = arith.truncf %94 : vector<8x1024xf32> to vector<8x1024xbf16>
    %cst_58 = arith.constant dense<0.000000e+00> : vector<8x1024xf32>
    %98 = tpu.matmul %96, %97, %cst_58 {dimension_numbers = #tpu.dot_dimension_numbers<[1], [0], [0], [1], [0, 0, 1, 1], [], []>} : vector<8x8xbf16>, vector<8x1024xbf16>, vector<8x1024xf32> -> vector<8x1024xf32>
    %99 = arith.addf %91, %98 : vector<8x1024xf32>
    %c0_59 = arith.constant 0 : index
    %c0_60 = arith.constant 0 : index
    %100 = vector.load %arg6[%c0_59, %c0_60] : memref<8x1xf32, #tpu.memory_space<vmem>>, vector<8x1xf32>
    %101 = vector.broadcast %100 : vector<8x1xf32> to vector<8x1024xf32>
    %102 = arith.addf %99, %101 : vector<8x1024xf32>
    %cst_61 = arith.constant 0.000000e+00 : f32
    %103 = vector.broadcast %cst_61 : f32 to vector<8x1024xf32>
    %104 = arith.maximumf %102, %103 : vector<8x1024xf32>
    %c0_62 = arith.constant 0 : index
    %c128_63 = arith.constant 128 : index
    %105 = vector.load %arg12[%c0_62, %c128_63] : memref<8x1280xf32, #tpu.memory_space<vmem>>, vector<8x1024xf32>
    tpu.vector_store %arg12[%c0_62, %c128_63], %104 {strides = array<i32>} : memref<8x1280xf32, #tpu.memory_space<vmem>>, vector<8x1024xf32>,
    %cst_64 = arith.constant 0.000000e+00 : f32
    %106 = vector.broadcast %cst_64 : f32 to vector<8x1024xf32>
    %c0_65 = arith.constant 0 : index
    %c95_66 = arith.constant 95 : index
    %107 = vector.load %arg12[%c0_65, %c95_66] : memref<8x1280xf32, #tpu.memory_space<vmem>>, vector<8x1024xf32>
    %108 = vector.broadcast %4 : vector<1x1024xf32> to vector<8x1024xf32>
    %109 = arith.mulf %107, %108 : vector<8x1024xf32>
    %c0_67 = arith.constant 0 : index
    %c0_68 = arith.constant 0 : index
    %c0_69 = arith.constant 0 : index
    %110 = vector.load %arg7[%c0_67, %c0_68, %c0_69] : memref<9x8x8xbf16, #tpu.memory_space<vmem>>, vector<1x8x8xbf16>
    %111 = vector.shape_cast %110 : vector<1x8x8xbf16> to vector<8x8xbf16>
    %112 = arith.truncf %109 : vector<8x1024xf32> to vector<8x1024xbf16>
    %cst_70 = arith.constant dense<0.000000e+00> : vector<8x1024xf32>
    %113 = tpu.matmul %111, %112, %cst_70 {dimension_numbers = #tpu.dot_dimension_numbers<[1], [0], [0], [1], [0, 0, 1, 1], [], []>} : vector<8x8xbf16>, vector<8x1024xbf16>, vector<8x1024xf32> -> vector<8x1024xf32>
    %114 = arith.addf %106, %113 : vector<8x1024xf32>
    %c0_71 = arith.constant 0 : index
    %c96_72 = arith.constant 96 : index
    %115 = vector.load %arg12[%c0_71, %c96_72] : memref<8x1280xf32, #tpu.memory_space<vmem>>, vector<8x1024xf32>
    %c1_73 = arith.constant 1 : index
    %c0_74 = arith.constant 0 : index
    %c0_75 = arith.constant 0 : index
    %116 = vector.load %arg7[%c1_73, %c0_74, %c0_75] : memref<9x8x8xbf16, #tpu.memory_space<vmem>>, vector<1x8x8xbf16>
    %117 = vector.shape_cast %116 : vector<1x8x8xbf16> to vector<8x8xbf16>
    %118 = arith.truncf %115 : vector<8x1024xf32> to vector<8x1024xbf16>
    %cst_76 = arith.constant dense<0.000000e+00> : vector<8x1024xf32>
    %119 = tpu.matmul %117, %118, %cst_76 {dimension_numbers = #tpu.dot_dimension_numbers<[1], [0], [0], [1], [0, 0, 1, 1], [], []>} : vector<8x8xbf16>, vector<8x1024xbf16>, vector<8x1024xf32> -> vector<8x1024xf32>
    %120 = arith.addf %114, %119 : vector<8x1024xf32>
    %c0_77 = arith.constant 0 : index
    %c97_78 = arith.constant 97 : index
    %121 = vector.load %arg12[%c0_77, %c97_78] : memref<8x1280xf32, #tpu.memory_space<vmem>>, vector<8x1024xf32>
    %122 = vector.broadcast %5 : vector<1x1024xf32> to vector<8x1024xf32>
    %123 = arith.mulf %121, %122 : vector<8x1024xf32>
    %c2_79 = arith.constant 2 : index
    %c0_80 = arith.constant 0 : index
    %c0_81 = arith.constant 0 : index
    %124 = vector.load %arg7[%c2_79, %c0_80, %c0_81] : memref<9x8x8xbf16, #tpu.memory_space<vmem>>, vector<1x8x8xbf16>
    %125 = vector.shape_cast %124 : vector<1x8x8xbf16> to vector<8x8xbf16>
    %126 = arith.truncf %123 : vector<8x1024xf32> to vector<8x1024xbf16>
    %cst_82 = arith.constant dense<0.000000e+00> : vector<8x1024xf32>
    %127 = tpu.matmul %125, %126, %cst_82 {dimension_numbers = #tpu.dot_dimension_numbers<[1], [0], [0], [1], [0, 0, 1, 1], [], []>} : vector<8x8xbf16>, vector<8x1024xbf16>, vector<8x1024xf32> -> vector<8x1024xf32>
    %128 = arith.addf %120, %127 : vector<8x1024xf32>
    %c0_83 = arith.constant 0 : index
    %c127_84 = arith.constant 127 : index
    %129 = vector.load %arg12[%c0_83, %c127_84] : memref<8x1280xf32, #tpu.memory_space<vmem>>, vector<8x1024xf32>
    %130 = vector.broadcast %4 : vector<1x1024xf32> to vector<8x1024xf32>
    %131 = arith.mulf %129, %130 : vector<8x1024xf32>
    %c3_85 = arith.constant 3 : index
    %c0_86 = arith.constant 0 : index
    %c0_87 = arith.constant 0 : index
    %132 = vector.load %arg7[%c3_85, %c0_86, %c0_87] : memref<9x8x8xbf16, #tpu.memory_space<vmem>>, vector<1x8x8xbf16>
    %133 = vector.shape_cast %132 : vector<1x8x8xbf16> to vector<8x8xbf16>
    %134 = arith.truncf %131 : vector<8x1024xf32> to vector<8x1024xbf16>
    %cst_88 = arith.constant dense<0.000000e+00> : vector<8x1024xf32>
    %135 = tpu.matmul %133, %134, %cst_88 {dimension_numbers = #tpu.dot_dimension_numbers<[1], [0], [0], [1], [0, 0, 1, 1], [], []>} : vector<8x8xbf16>, vector<8x1024xbf16>, vector<8x1024xf32> -> vector<8x1024xf32>
    %136 = arith.addf %128, %135 : vector<8x1024xf32>
    %c0_89 = arith.constant 0 : index
    %c128_90 = arith.constant 128 : index
    %137 = vector.load %arg12[%c0_89, %c128_90] : memref<8x1280xf32, #tpu.memory_space<vmem>>, vector<8x1024xf32>
    %c4_91 = arith.constant 4 : index
    %c0_92 = arith.constant 0 : index
    %c0_93 = arith.constant 0 : index
    %138 = vector.load %arg7[%c4_91, %c0_92, %c0_93] : memref<9x8x8xbf16, #tpu.memory_space<vmem>>, vector<1x8x8xbf16>
    %139 = vector.shape_cast %138 : vector<1x8x8xbf16> to vector<8x8xbf16>
    %140 = arith.truncf %137 : vector<8x1024xf32> to vector<8x1024xbf16>
    %cst_94 = arith.constant dense<0.000000e+00> : vector<8x1024xf32>
    %141 = tpu.matmul %139, %140, %cst_94 {dimension_numbers = #tpu.dot_dimension_numbers<[1], [0], [0], [1], [0, 0, 1, 1], [], []>} : vector<8x8xbf16>, vector<8x1024xbf16>, vector<8x1024xf32> -> vector<8x1024xf32>
    %142 = arith.addf %136, %141 : vector<8x1024xf32>
    %c0_95 = arith.constant 0 : index
    %c129_96 = arith.constant 129 : index
    %143 = vector.load %arg12[%c0_95, %c129_96] : memref<8x1280xf32, #tpu.memory_space<vmem>>, vector<8x1024xf32>
    %144 = vector.broadcast %5 : vector<1x1024xf32> to vector<8x1024xf32>
    %145 = arith.mulf %143, %144 : vector<8x1024xf32>
    %c5_97 = arith.constant 5 : index
    %c0_98 = arith.constant 0 : index
    %c0_99 = arith.constant 0 : index
    %146 = vector.load %arg7[%c5_97, %c0_98, %c0_99] : memref<9x8x8xbf16, #tpu.memory_space<vmem>>, vector<1x8x8xbf16>
    %147 = vector.shape_cast %146 : vector<1x8x8xbf16> to vector<8x8xbf16>
    %148 = arith.truncf %145 : vector<8x1024xf32> to vector<8x1024xbf16>
    %cst_100 = arith.constant dense<0.000000e+00> : vector<8x1024xf32>
    %149 = tpu.matmul %147, %148, %cst_100 {dimension_numbers = #tpu.dot_dimension_numbers<[1], [0], [0], [1], [0, 0, 1, 1], [], []>} : vector<8x8xbf16>, vector<8x1024xbf16>, vector<8x1024xf32> -> vector<8x1024xf32>
    %150 = arith.addf %142, %149 : vector<8x1024xf32>
    %c0_101 = arith.constant 0 : index
    %c159_102 = arith.constant 159 : index
    %151 = vector.load %arg12[%c0_101, %c159_102] : memref<8x1280xf32, #tpu.memory_space<vmem>>, vector<8x1024xf32>
    %152 = vector.broadcast %4 : vector<1x1024xf32> to vector<8x1024xf32>
    %153 = arith.mulf %151, %152 : vector<8x1024xf32>
    %c6_103 = arith.constant 6 : index
    %c0_104 = arith.constant 0 : index
    %c0_105 = arith.constant 0 : index
    %154 = vector.load %arg7[%c6_103, %c0_104, %c0_105] : memref<9x8x8xbf16, #tpu.memory_space<vmem>>, vector<1x8x8xbf16>
    %155 = vector.shape_cast %154 : vector<1x8x8xbf16> to vector<8x8xbf16>
    %156 = arith.truncf %153 : vector<8x1024xf32> to vector<8x1024xbf16>
    %cst_106 = arith.constant dense<0.000000e+00> : vector<8x1024xf32>
    %157 = tpu.matmul %155, %156, %cst_106 {dimension_numbers = #tpu.dot_dimension_numbers<[1], [0], [0], [1], [0, 0, 1, 1], [], []>} : vector<8x8xbf16>, vector<8x1024xbf16>, vector<8x1024xf32> -> vector<8x1024xf32>
    %158 = arith.addf %150, %157 : vector<8x1024xf32>
    %c0_107 = arith.constant 0 : index
    %c160_108 = arith.constant 160 : index
    %159 = vector.load %arg12[%c0_107, %c160_108] : memref<8x1280xf32, #tpu.memory_space<vmem>>, vector<8x1024xf32>
    %c7_109 = arith.constant 7 : index
    %c0_110 = arith.constant 0 : index
    %c0_111 = arith.constant 0 : index
    %160 = vector.load %arg7[%c7_109, %c0_110, %c0_111] : memref<9x8x8xbf16, #tpu.memory_space<vmem>>, vector<1x8x8xbf16>
    %161 = vector.shape_cast %160 : vector<1x8x8xbf16> to vector<8x8xbf16>
    %162 = arith.truncf %159 : vector<8x1024xf32> to vector<8x1024xbf16>
    %cst_112 = arith.constant dense<0.000000e+00> : vector<8x1024xf32>
    %163 = tpu.matmul %161, %162, %cst_112 {dimension_numbers = #tpu.dot_dimension_numbers<[1], [0], [0], [1], [0, 0, 1, 1], [], []>} : vector<8x8xbf16>, vector<8x1024xbf16>, vector<8x1024xf32> -> vector<8x1024xf32>
    %164 = arith.addf %158, %163 : vector<8x1024xf32>
    %c0_113 = arith.constant 0 : index
    %c161_114 = arith.constant 161 : index
    %165 = vector.load %arg12[%c0_113, %c161_114] : memref<8x1280xf32, #tpu.memory_space<vmem>>, vector<8x1024xf32>
    %166 = vector.broadcast %5 : vector<1x1024xf32> to vector<8x1024xf32>
    %167 = arith.mulf %165, %166 : vector<8x1024xf32>
    %c8_115 = arith.constant 8 : index
    %c0_116 = arith.constant 0 : index
    %c0_117 = arith.constant 0 : index
    %168 = vector.load %arg7[%c8_115, %c0_116, %c0_117] : memref<9x8x8xbf16, #tpu.memory_space<vmem>>, vector<1x8x8xbf16>
    %169 = vector.shape_cast %168 : vector<1x8x8xbf16> to vector<8x8xbf16>
    %170 = arith.truncf %167 : vector<8x1024xf32> to vector<8x1024xbf16>
    %cst_118 = arith.constant dense<0.000000e+00> : vector<8x1024xf32>
    %171 = tpu.matmul %169, %170, %cst_118 {dimension_numbers = #tpu.dot_dimension_numbers<[1], [0], [0], [1], [0, 0, 1, 1], [], []>} : vector<8x8xbf16>, vector<8x1024xbf16>, vector<8x1024xf32> -> vector<8x1024xf32>
    %172 = arith.addf %164, %171 : vector<8x1024xf32>
    %c0_119 = arith.constant 0 : index
    %c0_120 = arith.constant 0 : index
    %173 = vector.load %arg8[%c0_119, %c0_120] : memref<8x1xf32, #tpu.memory_space<vmem>>, vector<8x1xf32>
    %174 = vector.broadcast %173 : vector<8x1xf32> to vector<8x1024xf32>
    %175 = arith.addf %172, %174 : vector<8x1024xf32>
    %cst_121 = arith.constant 0.000000e+00 : f32
    %176 = vector.broadcast %cst_121 : f32 to vector<8x1024xf32>
    %177 = arith.maximumf %175, %176 : vector<8x1024xf32>
    %c0_122 = arith.constant 0 : index
    %c128_123 = arith.constant 128 : index
    %178 = vector.load %arg12[%c0_122, %c128_123] : memref<8x1280xf32, #tpu.memory_space<vmem>>, vector<8x1024xf32>
    tpu.vector_store %arg12[%c0_122, %c128_123], %177 {strides = array<i32>} : memref<8x1280xf32, #tpu.memory_space<vmem>>, vector<8x1024xf32>,
    %cst_124 = arith.constant 0.000000e+00 : f32
    %179 = vector.broadcast %cst_124 : f32 to vector<64x1024xf32>
    %c0_125 = arith.constant 0 : index
    %c95_126 = arith.constant 95 : index
    %180 = vector.load %arg12[%c0_125, %c95_126] : memref<8x1280xf32, #tpu.memory_space<vmem>>, vector<8x1024xf32>
    %181 = vector.broadcast %4 : vector<1x1024xf32> to vector<8x1024xf32>
    %182 = arith.mulf %180, %181 : vector<8x1024xf32>
    %c0_127 = arith.constant 0 : index
    %c0_128 = arith.constant 0 : index
    %c0_129 = arith.constant 0 : index
    %183 = vector.load %arg9[%c0_127, %c0_128, %c0_129] : memref<9x64x8xbf16, #tpu.memory_space<vmem>>, vector<1x64x8xbf16>
    %184 = vector.shape_cast %183 : vector<1x64x8xbf16> to vector<64x8xbf16>
    %185 = arith.truncf %182 : vector<8x1024xf32> to vector<8x1024xbf16>
    %cst_130 = arith.constant dense<0.000000e+00> : vector<64x1024xf32>
    %186 = tpu.matmul %184, %185, %cst_130 {dimension_numbers = #tpu.dot_dimension_numbers<[1], [0], [0], [1], [0, 0, 1, 1], [], []>} : vector<64x8xbf16>, vector<8x1024xbf16>, vector<64x1024xf32> -> vector<64x1024xf32>
    %187 = arith.addf %179, %186 : vector<64x1024xf32>
    %c0_131 = arith.constant 0 : index
    %c96_132 = arith.constant 96 : index
    %188 = vector.load %arg12[%c0_131, %c96_132] : memref<8x1280xf32, #tpu.memory_space<vmem>>, vector<8x1024xf32>
    %c1_133 = arith.constant 1 : index
    %c0_134 = arith.constant 0 : index
    %c0_135 = arith.constant 0 : index
    %189 = vector.load %arg9[%c1_133, %c0_134, %c0_135] : memref<9x64x8xbf16, #tpu.memory_space<vmem>>, vector<1x64x8xbf16>
    %190 = vector.shape_cast %189 : vector<1x64x8xbf16> to vector<64x8xbf16>
    %191 = arith.truncf %188 : vector<8x1024xf32> to vector<8x1024xbf16>
    %cst_136 = arith.constant dense<0.000000e+00> : vector<64x1024xf32>
    %192 = tpu.matmul %190, %191, %cst_136 {dimension_numbers = #tpu.dot_dimension_numbers<[1], [0], [0], [1], [0, 0, 1, 1], [], []>} : vector<64x8xbf16>, vector<8x1024xbf16>, vector<64x1024xf32> -> vector<64x1024xf32>
    %193 = arith.addf %187, %192 : vector<64x1024xf32>
    %c0_137 = arith.constant 0 : index
    %c97_138 = arith.constant 97 : index
    %194 = vector.load %arg12[%c0_137, %c97_138] : memref<8x1280xf32, #tpu.memory_space<vmem>>, vector<8x1024xf32>
    %195 = vector.broadcast %5 : vector<1x1024xf32> to vector<8x1024xf32>
    %196 = arith.mulf %194, %195 : vector<8x1024xf32>
    %c2_139 = arith.constant 2 : index
    %c0_140 = arith.constant 0 : index
    %c0_141 = arith.constant 0 : index
    %197 = vector.load %arg9[%c2_139, %c0_140, %c0_141] : memref<9x64x8xbf16, #tpu.memory_space<vmem>>, vector<1x64x8xbf16>
    %198 = vector.shape_cast %197 : vector<1x64x8xbf16> to vector<64x8xbf16>
    %199 = arith.truncf %196 : vector<8x1024xf32> to vector<8x1024xbf16>
    %cst_142 = arith.constant dense<0.000000e+00> : vector<64x1024xf32>
    %200 = tpu.matmul %198, %199, %cst_142 {dimension_numbers = #tpu.dot_dimension_numbers<[1], [0], [0], [1], [0, 0, 1, 1], [], []>} : vector<64x8xbf16>, vector<8x1024xbf16>, vector<64x1024xf32> -> vector<64x1024xf32>
    %201 = arith.addf %193, %200 : vector<64x1024xf32>
    %c0_143 = arith.constant 0 : index
    %c127_144 = arith.constant 127 : index
    %202 = vector.load %arg12[%c0_143, %c127_144] : memref<8x1280xf32, #tpu.memory_space<vmem>>, vector<8x1024xf32>
    %203 = vector.broadcast %4 : vector<1x1024xf32> to vector<8x1024xf32>
    %204 = arith.mulf %202, %203 : vector<8x1024xf32>
    %c3_145 = arith.constant 3 : index
    %c0_146 = arith.constant 0 : index
    %c0_147 = arith.constant 0 : index
    %205 = vector.load %arg9[%c3_145, %c0_146, %c0_147] : memref<9x64x8xbf16, #tpu.memory_space<vmem>>, vector<1x64x8xbf16>
    %206 = vector.shape_cast %205 : vector<1x64x8xbf16> to vector<64x8xbf16>
    %207 = arith.truncf %204 : vector<8x1024xf32> to vector<8x1024xbf16>
    %cst_148 = arith.constant dense<0.000000e+00> : vector<64x1024xf32>
    %208 = tpu.matmul %206, %207, %cst_148 {dimension_numbers = #tpu.dot_dimension_numbers<[1], [0], [0], [1], [0, 0, 1, 1], [], []>} : vector<64x8xbf16>, vector<8x1024xbf16>, vector<64x1024xf32> -> vector<64x1024xf32>
    %209 = arith.addf %201, %208 : vector<64x1024xf32>
    %c0_149 = arith.constant 0 : index
    %c128_150 = arith.constant 128 : index
    %210 = vector.load %arg12[%c0_149, %c128_150] : memref<8x1280xf32, #tpu.memory_space<vmem>>, vector<8x1024xf32>
    %c4_151 = arith.constant 4 : index
    %c0_152 = arith.constant 0 : index
    %c0_153 = arith.constant 0 : index
    %211 = vector.load %arg9[%c4_151, %c0_152, %c0_153] : memref<9x64x8xbf16, #tpu.memory_space<vmem>>, vector<1x64x8xbf16>
    %212 = vector.shape_cast %211 : vector<1x64x8xbf16> to vector<64x8xbf16>
    %213 = arith.truncf %210 : vector<8x1024xf32> to vector<8x1024xbf16>
    %cst_154 = arith.constant dense<0.000000e+00> : vector<64x1024xf32>
    %214 = tpu.matmul %212, %213, %cst_154 {dimension_numbers = #tpu.dot_dimension_numbers<[1], [0], [0], [1], [0, 0, 1, 1], [], []>} : vector<64x8xbf16>, vector<8x1024xbf16>, vector<64x1024xf32> -> vector<64x1024xf32>
    %215 = arith.addf %209, %214 : vector<64x1024xf32>
    %c0_155 = arith.constant 0 : index
    %c129_156 = arith.constant 129 : index
    %216 = vector.load %arg12[%c0_155, %c129_156] : memref<8x1280xf32, #tpu.memory_space<vmem>>, vector<8x1024xf32>
    %217 = vector.broadcast %5 : vector<1x1024xf32> to vector<8x1024xf32>
    %218 = arith.mulf %216, %217 : vector<8x1024xf32>
    %c5_157 = arith.constant 5 : index
    %c0_158 = arith.constant 0 : index
    %c0_159 = arith.constant 0 : index
    %219 = vector.load %arg9[%c5_157, %c0_158, %c0_159] : memref<9x64x8xbf16, #tpu.memory_space<vmem>>, vector<1x64x8xbf16>
    %220 = vector.shape_cast %219 : vector<1x64x8xbf16> to vector<64x8xbf16>
    %221 = arith.truncf %218 : vector<8x1024xf32> to vector<8x1024xbf16>
    %cst_160 = arith.constant dense<0.000000e+00> : vector<64x1024xf32>
    %222 = tpu.matmul %220, %221, %cst_160 {dimension_numbers = #tpu.dot_dimension_numbers<[1], [0], [0], [1], [0, 0, 1, 1], [], []>} : vector<64x8xbf16>, vector<8x1024xbf16>, vector<64x1024xf32> -> vector<64x1024xf32>
    %223 = arith.addf %215, %222 : vector<64x1024xf32>
    %c0_161 = arith.constant 0 : index
    %c159_162 = arith.constant 159 : index
    %224 = vector.load %arg12[%c0_161, %c159_162] : memref<8x1280xf32, #tpu.memory_space<vmem>>, vector<8x1024xf32>
    %225 = vector.broadcast %4 : vector<1x1024xf32> to vector<8x1024xf32>
    %226 = arith.mulf %224, %225 : vector<8x1024xf32>
    %c6_163 = arith.constant 6 : index
    %c0_164 = arith.constant 0 : index
    %c0_165 = arith.constant 0 : index
    %227 = vector.load %arg9[%c6_163, %c0_164, %c0_165] : memref<9x64x8xbf16, #tpu.memory_space<vmem>>, vector<1x64x8xbf16>
    %228 = vector.shape_cast %227 : vector<1x64x8xbf16> to vector<64x8xbf16>
    %229 = arith.truncf %226 : vector<8x1024xf32> to vector<8x1024xbf16>
    %cst_166 = arith.constant dense<0.000000e+00> : vector<64x1024xf32>
    %230 = tpu.matmul %228, %229, %cst_166 {dimension_numbers = #tpu.dot_dimension_numbers<[1], [0], [0], [1], [0, 0, 1, 1], [], []>} : vector<64x8xbf16>, vector<8x1024xbf16>, vector<64x1024xf32> -> vector<64x1024xf32>
    %231 = arith.addf %223, %230 : vector<64x1024xf32>
    %c0_167 = arith.constant 0 : index
    %c160_168 = arith.constant 160 : index
    %232 = vector.load %arg12[%c0_167, %c160_168] : memref<8x1280xf32, #tpu.memory_space<vmem>>, vector<8x1024xf32>
    %c7_169 = arith.constant 7 : index
    %c0_170 = arith.constant 0 : index
    %c0_171 = arith.constant 0 : index
    %233 = vector.load %arg9[%c7_169, %c0_170, %c0_171] : memref<9x64x8xbf16, #tpu.memory_space<vmem>>, vector<1x64x8xbf16>
    %234 = vector.shape_cast %233 : vector<1x64x8xbf16> to vector<64x8xbf16>
    %235 = arith.truncf %232 : vector<8x1024xf32> to vector<8x1024xbf16>
    %cst_172 = arith.constant dense<0.000000e+00> : vector<64x1024xf32>
    %236 = tpu.matmul %234, %235, %cst_172 {dimension_numbers = #tpu.dot_dimension_numbers<[1], [0], [0], [1], [0, 0, 1, 1], [], []>} : vector<64x8xbf16>, vector<8x1024xbf16>, vector<64x1024xf32> -> vector<64x1024xf32>
    %237 = arith.addf %231, %236 : vector<64x1024xf32>
    %c0_173 = arith.constant 0 : index
    %c161_174 = arith.constant 161 : index
    %238 = vector.load %arg12[%c0_173, %c161_174] : memref<8x1280xf32, #tpu.memory_space<vmem>>, vector<8x1024xf32>
    %239 = vector.broadcast %5 : vector<1x1024xf32> to vector<8x1024xf32>
    %240 = arith.mulf %238, %239 : vector<8x1024xf32>
    %c8_175 = arith.constant 8 : index
    %c0_176 = arith.constant 0 : index
    %c0_177 = arith.constant 0 : index
    %241 = vector.load %arg9[%c8_175, %c0_176, %c0_177] : memref<9x64x8xbf16, #tpu.memory_space<vmem>>, vector<1x64x8xbf16>
    %242 = vector.shape_cast %241 : vector<1x64x8xbf16> to vector<64x8xbf16>
    %243 = arith.truncf %240 : vector<8x1024xf32> to vector<8x1024xbf16>
    %cst_178 = arith.constant dense<0.000000e+00> : vector<64x1024xf32>
    %244 = tpu.matmul %242, %243, %cst_178 {dimension_numbers = #tpu.dot_dimension_numbers<[1], [0], [0], [1], [0, 0, 1, 1], [], []>} : vector<64x8xbf16>, vector<8x1024xbf16>, vector<64x1024xf32> -> vector<64x1024xf32>
    %245 = arith.addf %237, %244 : vector<64x1024xf32>
    %c0_179 = arith.constant 0 : index
    %c0_180 = arith.constant 0 : index
    %246 = vector.load %arg10[%c0_179, %c0_180] : memref<64x1xf32, #tpu.memory_space<vmem>>, vector<64x1xf32>
    %247 = vector.broadcast %246 : vector<64x1xf32> to vector<64x1024xf32>
    %248 = arith.addf %245, %247 : vector<64x1024xf32>
    %249 = arith.negf %248 : vector<64x1024xf32>
    %250 = math.exp %249 : vector<64x1024xf32>
    %cst_181 = arith.constant 1.000000e+00 : f32
    %251 = vector.broadcast %cst_181 : f32 to vector<64x1024xf32>
    %252 = arith.addf %251, %250 : vector<64x1024xf32>
    %253 = arith.divf %251, %252 : vector<64x1024xf32>
    %c0_182 = arith.constant 0 : index
    %c0_183 = arith.constant 0 : index
    %c0_184 = arith.constant 0 : index
    %254 = vector.load %arg11[%c0_182, %c0_183, %c0_184] : memref<1x64x1024xf32, #tpu.memory_space<vmem>>, vector<1x64x1024xf32>
    %255 = vector.shape_cast %254 : vector<1x64x1024xf32> to vector<64x1024xf32>
    %256 = vector.shape_cast %253 : vector<64x1024xf32> to vector<1x64x1024xf32>
    tpu.vector_store %arg11[%c0_182, %c0_183, %c0_184], %256 {strides = array<i32>} : memref<1x64x1024xf32, #tpu.memory_space<vmem>>, vector<1x64x1024xf32>,
    return
  }
  func.func @transform_0(%arg0: i32) -> (i32, i32, i32) {
    %c0_i32 = arith.constant 0 : i32
    %c0_i32_0 = arith.constant 0 : i32
    %c0_i32_1 = arith.constant 0 : i32
    return %arg0, %c0_i32, %c0_i32_0 : i32, i32, i32
  }
  func.func @transform_1(%arg0: i32) -> (i32, i32) {
    %c0_i32 = arith.constant 0 : i32
    %c0_i32_0 = arith.constant 0 : i32
    %c0_i32_1 = arith.constant 0 : i32
    return %c0_i32, %c0_i32_0 : i32, i32
  }
  func.func @transform_2(%arg0: i32) -> (i32, i32) {
    %c0_i32 = arith.constant 0 : i32
    %c0_i32_0 = arith.constant 0 : i32
    %c0_i32_1 = arith.constant 0 : i32
    return %c0_i32, %c0_i32_0 : i32, i32
  }
  func.func @transform_3(%arg0: i32) -> (i32, i32) {
    %c0_i32 = arith.constant 0 : i32
    %c0_i32_0 = arith.constant 0 : i32
    %c0_i32_1 = arith.constant 0 : i32
    return %c0_i32, %c0_i32_0 : i32, i32
  }
  func.func @transform_4(%arg0: i32) -> (i32, i32, i32) {
    %c0_i32 = arith.constant 0 : i32
    %c0_i32_0 = arith.constant 0 : i32
    %c0_i32_1 = arith.constant 0 : i32
    %c0_i32_2 = arith.constant 0 : i32
    return %c0_i32, %c0_i32_0, %c0_i32_1 : i32, i32, i32
  }
  func.func @transform_5(%arg0: i32) -> (i32, i32) {
    %c0_i32 = arith.constant 0 : i32
    %c0_i32_0 = arith.constant 0 : i32
    %c0_i32_1 = arith.constant 0 : i32
    return %c0_i32, %c0_i32_0 : i32, i32
  }
  func.func @transform_6(%arg0: i32) -> (i32, i32, i32) {
    %c0_i32 = arith.constant 0 : i32
    %c0_i32_0 = arith.constant 0 : i32
    %c0_i32_1 = arith.constant 0 : i32
    %c0_i32_2 = arith.constant 0 : i32
    return %c0_i32, %c0_i32_0, %c0_i32_1 : i32, i32, i32
  }
  func.func @transform_7(%arg0: i32) -> (i32, i32) {
    %c0_i32 = arith.constant 0 : i32
    %c0_i32_0 = arith.constant 0 : i32
    %c0_i32_1 = arith.constant 0 : i32
    return %c0_i32, %c0_i32_0 : i32, i32
  }
  func.func @transform_8(%arg0: i32) -> (i32, i32, i32) {
    %c0_i32 = arith.constant 0 : i32
    %c0_i32_0 = arith.constant 0 : i32
    %c0_i32_1 = arith.constant 0 : i32
    %c0_i32_2 = arith.constant 0 : i32
    return %c0_i32, %c0_i32_0, %c0_i32_1 : i32, i32, i32
  }
  func.func @transform_9(%arg0: i32) -> (i32, i32) {
    %c0_i32 = arith.constant 0 : i32
    %c0_i32_0 = arith.constant 0 : i32
    %c0_i32_1 = arith.constant 0 : i32
    return %c0_i32, %c0_i32_0 : i32, i32
  }
  func.func @transform_10(%arg0: i32) -> (i32, i32, i32) {
    %c0_i32 = arith.constant 0 : i32
    %c0_i32_0 = arith.constant 0 : i32
    %c0_i32_1 = arith.constant 0 : i32
    return %arg0, %c0_i32, %c0_i32_0 : i32, i32, i32
  }
}

</mosaic_0001>

<llo_original>
// kernel: ds_out_forward.1
$region0: #{ds_out_forward.1}
  #allocation0 [shape = 'u32[]', space=smem, size = 0x4, offset = 0x4, fixed_abs, tag = 'smem constant byte address 0x4 - core index']
  #allocation1 [shape = 'u32[72,128]{1,0:T(1,128)}', space=vmem, size = 0x9000, scoped, tag = 'internal scratch']
  #allocation2 [shape = 'f32[8,1280]{1,0:T(8,128)}', space=vmem, size = 0xa000, scoped, tag = 'scratch operand']
  %s0 = inlined_call_operand.vmem [shape: f32[2,8,1024], index: 0, kind: input, shape index: {}]
  %s1 = inlined_call_operand.vmem [shape: f32[2,1024], index: 1, kind: input, shape index: {}]
  %s2 = inlined_call_operand.vmem [shape: f32[8,1], index: 2, kind: input, shape index: {}]
  %s3 = inlined_call_operand.vmem [shape: f32[8,1], index: 3, kind: input, shape index: {}]
  %s4 = inlined_call_operand.vmem [shape: bf16[9,8,8], index: 4, kind: input, shape index: {}]
  %s5 = inlined_call_operand.vmem [shape: f32[8,1], index: 5, kind: input, shape index: {}]
  %s6 = inlined_call_operand.vmem [shape: bf16[9,8,8], index: 6, kind: input, shape index: {}]
  %s7 = inlined_call_operand.vmem [shape: f32[8,1], index: 7, kind: input, shape index: {}]
  %s8 = inlined_call_operand.vmem [shape: bf16[9,64,8], index: 8, kind: input, shape index: {}]
  %s9 = inlined_call_operand.vmem [shape: f32[64,1], index: 9, kind: input, shape index: {}]
  %s10 = inlined_call_operand.vmem [shape: f32[2,64,1024], index: 10, kind: output, shape index: {}]
  %s11 = sld [smem:[#allocation0]]
  $region73: #{ds_out_forward.1} parent=0
    _
  %s13 = ssub.s32 1, %s11
  %s14 = scalar_select 0, %s13, %s11
  loop: start=0, step=1, limit=4
  $region2: #{ds_out_forward.1} parent=0 // loop_pre_header
    _
  $region3: #{ds_out_forward.1} parent=0 // loop_header
    %s16 = sphi 0, %s20
    %p17 = scmp.ge.s32.totalorder %s16, 4
    %s26 = sphi 0, %s28
    %s29 = sphi 0, %s26
    %s30 = sphi 0, %s29
    %s46 = sphi 0, %s30
    %s50 = sphi 0, %s50
    %s52 = sphi 0, %s50
    %s53 = sphi 0, %s52
    %s67 = sphi 0, %s53
    %s71 = sphi 0, %s71
    %s73 = sphi 0, %s71
    %s74 = sphi 0, %s73
    %s88 = sphi 0, %s74
    %s92 = sphi 0, %s92
    %s94 = sphi 0, %s92
    %s95 = sphi 0, %s94
    %s109 = sphi 0, %s95
    %s113 = sphi 0, %s113
    %s115 = sphi 0, %s113
    %s116 = sphi 0, %s115
    %s130 = sphi 0, %s116
    %s134 = sphi 0, %s134
    %s136 = sphi 0, %s134
    %s137 = sphi 0, %s136
    %s151 = sphi 0, %s137
    %s155 = sphi 0, %s155
    %s157 = sphi 0, %s155
    %s158 = sphi 0, %s157
    %s172 = sphi 0, %s158
    %s176 = sphi 0, %s176
    %s178 = sphi 0, %s176
    %s179 = sphi 0, %s178
    %s193 = sphi 0, %s179
    %s197 = sphi 0, %s197
    %s199 = sphi 0, %s197
    %s200 = sphi 0, %s199
    %s214 = sphi 0, %s200
    %s218 = sphi 0, %s218
    %s220 = sphi 0, %s218
    %s221 = sphi 0, %s220
    %s235 = sphi 0, %s221
    %s241 = sphi 0, %s243
    %s244 = sphi 0, %s241
    %s245 = sphi 0, %s244
    %s261 = sphi 0, %s245
  $region4: #{ds_out_forward.1} parent=0 // loop_header_branch
    %19 = sbr.rel (%p17) target = $region8
  $region5: #{ds_out_forward.1} parent=0 // loop_body
    %s21 = ssub.s32 %s16, 1
    %s22 = ssub.s32 %s16, 2
    %s23 = sadd.s32 %s16, 1
    %s24 = ssub.s32 %s16, %s23
    %p25 = scmp.eq.s32.totalorder %s24, 0
    %s27 = sadd.s32 %s26, 1
    %s28 = scalar_select %p25, %s26, %s27
    %p31 = pneg %p25
    %p32 = scmp.eq.s32.totalorder %s16, 1
    %p33 = por %p31, %p32
    %p34 = scmp.ne.s32.totalorder %s26, %s29
    %p35 = scmp.eq.s32.totalorder %s16, 0
    %p36 = por %p34, %p35
    %p37 = scmp.ne.s32.totalorder %s26, %s29
    %p38 = scmp.eq.s32.totalorder %s21, 1
    %p39 = por %p37, %p38
    %p40 = scmp.ne.s32.totalorder %s29, %s30
    %p41 = scmp.eq.s32.totalorder %s21, 0
    %p42 = por %p40, %p41
    %p43 = scmp.ne.s32.totalorder %s29, %s30
    %p44 = scmp.eq.s32.totalorder %s22, 1
    %p45 = por %p43, %p44
    %p47 = scmp.ne.s32.totalorder %s30, %s46
    %p48 = scmp.eq.s32.totalorder %s22, 0
    %p49 = por %p47, %p48
    %s51 = sadd.s32 %s50, 1
    %p54 = scmp.eq.s32.totalorder %s16, 1
    %p55 = scmp.ne.s32.totalorder %s50, %s52
    %p56 = scmp.eq.s32.totalorder %s16, 0
    %p57 = por %p55, %p56
    %p58 = scmp.ne.s32.totalorder %s50, %s52
    %p59 = scmp.eq.s32.totalorder %s21, 1
    %p60 = por %p58, %p59
    %p61 = scmp.ne.s32.totalorder %s52, %s53
    %p62 = scmp.eq.s32.totalorder %s21, 0
    %p63 = por %p61, %p62
    %p64 = scmp.ne.s32.totalorder %s52, %s53
    %p65 = scmp.eq.s32.totalorder %s22, 1
    %p66 = por %p64, %p65
    %p68 = scmp.ne.s32.totalorder %s53, %s67
    %p69 = scmp.eq.s32.totalorder %s22, 0
    %p70 = por %p68, %p69
    %s72 = sadd.s32 %s71, 1
    %p75 = scmp.eq.s32.totalorder %s16, 1
    %p76 = scmp.ne.s32.totalorder %s71, %s73
    %p77 = scmp.eq.s32.totalorder %s16, 0
    %p78 = por %p76, %p77
    %p79 = scmp.ne.s32.totalorder %s71, %s73
    %p80 = scmp.eq.s32.totalorder %s21, 1
    %p81 = por %p79, %p80
    %p82 = scmp.ne.s32.totalorder %s73, %s74
    %p83 = scmp.eq.s32.totalorder %s21, 0
    %p84 = por %p82, %p83
    %p85 = scmp.ne.s32.totalorder %s73, %s74
    %p86 = scmp.eq.s32.totalorder %s22, 1
    %p87 = por %p85, %p86
    %p89 = scmp.ne.s32.totalorder %s74, %s88
    %p90 = scmp.eq.s32.totalorder %s22, 0
    %p91 = por %p89, %p90
    %s93 = sadd.s32 %s92, 1
    %p96 = scmp.eq.s32.totalorder %s16, 1
    %p97 = scmp.ne.s32.totalorder %s92, %s94
    %p98 = scmp.eq.s32.totalorder %s16, 0
    %p99 = por %p97, %p98
    %p100 = scmp.ne.s32.totalorder %s92, %s94
    %p101 = scmp.eq.s32.totalorder %s21, 1
    %p102 = por %p100, %p101
    %p103 = scmp.ne.s32.totalorder %s94, %s95
    %p104 = scmp.eq.s32.totalorder %s21, 0
    %p105 = por %p103, %p104
    %p106 = scmp.ne.s32.totalorder %s94, %s95
    %p107 = scmp.eq.s32.totalorder %s22, 1
    %p108 = por %p106, %p107
    %p110 = scmp.ne.s32.totalorder %s95, %s109
    %p111 = scmp.eq.s32.totalorder %s22, 0
    %p112 = por %p110, %p111
    %s114 = sadd.s32 %s113, 1
    %p117 = scmp.eq.s32.totalorder %s16, 1
    %p118 = scmp.ne.s32.totalorder %s113, %s115
    %p119 = scmp.eq.s32.totalorder %s16, 0
    %p120 = por %p118, %p119
    %p121 = scmp.ne.s32.totalorder %s113, %s115
    %p122 = scmp.eq.s32.totalorder %s21, 1
    %p123 = por %p121, %p122
    %p124 = scmp.ne.s32.totalorder %s115, %s116
    %p125 = scmp.eq.s32.totalorder %s21, 0
    %p126 = por %p124, %p125
    %p127 = scmp.ne.s32.totalorder %s115, %s116
    %p128 = scmp.eq.s32.totalorder %s22, 1
    %p129 = por %p127, %p128
    %p131 = scmp.ne.s32.totalorder %s116, %s130
    %p132 = scmp.eq.s32.totalorder %s22, 0
    %p133 = por %p131, %p132
    %s135 = sadd.s32 %s134, 1
    %p138 = scmp.eq.s32.totalorder %s16, 1
    %p139 = scmp.ne.s32.totalorder %s134, %s136
    %p140 = scmp.eq.s32.totalorder %s16, 0
    %p141 = por %p139, %p140
    %p142 = scmp.ne.s32.totalorder %s134, %s136
    %p143 = scmp.eq.s32.totalorder %s21, 1
    %p144 = por %p142, %p143
    %p145 = scmp.ne.s32.totalorder %s136, %s137
    %p146 = scmp.eq.s32.totalorder %s21, 0
    %p147 = por %p145, %p146
    %p148 = scmp.ne.s32.totalorder %s136, %s137
    %p149 = scmp.eq.s32.totalorder %s22, 1
    %p150 = por %p148, %p149
    %p152 = scmp.ne.s32.totalorder %s137, %s151
    %p153 = scmp.eq.s32.totalorder %s22, 0
    %p154 = por %p152, %p153
    %s156 = sadd.s32 %s155, 1
    %p159 = scmp.eq.s32.totalorder %s16, 1
    %p160 = scmp.ne.s32.totalorder %s155, %s157
    %p161 = scmp.eq.s32.totalorder %s16, 0
    %p162 = por %p160, %p161
    %p163 = scmp.ne.s32.totalorder %s155, %s157
    %p164 = scmp.eq.s32.totalorder %s21, 1
    %p165 = por %p163, %p164
    %p166 = scmp.ne.s32.totalorder %s157, %s158
    %p167 = scmp.eq.s32.totalorder %s21, 0
    %p168 = por %p166, %p167
    %p169 = scmp.ne.s32.totalorder %s157, %s158
    %p170 = scmp.eq.s32.totalorder %s22, 1
    %p171 = por %p169, %p170
    %p173 = scmp.ne.s32.totalorder %s158, %s172
    %p174 = scmp.eq.s32.totalorder %s22, 0
    %p175 = por %p173, %p174
    %s177 = sadd.s32 %s176, 1
    %p180 = scmp.eq.s32.totalorder %s16, 1
    %p181 = scmp.ne.s32.totalorder %s176, %s178
    %p182 = scmp.eq.s32.totalorder %s16, 0
    %p183 = por %p181, %p182
    %p184 = scmp.ne.s32.totalorder %s176, %s178
    %p185 = scmp.eq.s32.totalorder %s21, 1
    %p186 = por %p184, %p185
    %p187 = scmp.ne.s32.totalorder %s178, %s179
    %p188 = scmp.eq.s32.totalorder %s21, 0
    %p189 = por %p187, %p188
    %p190 = scmp.ne.s32.totalorder %s178, %s179
    %p191 = scmp.eq.s32.totalorder %s22, 1
    %p192 = por %p190, %p191
    %p194 = scmp.ne.s32.totalorder %s179, %s193
    %p195 = scmp.eq.s32.totalorder %s22, 0
    %p196 = por %p194, %p195
    %s198 = sadd.s32 %s197, 1
    %p201 = scmp.eq.s32.totalorder %s16, 1
    %p202 = scmp.ne.s32.totalorder %s197, %s199
    %p203 = scmp.eq.s32.totalorder %s16, 0
    %p204 = por %p202, %p203
    %p205 = scmp.ne.s32.totalorder %s197, %s199
    %p206 = scmp.eq.s32.totalorder %s21, 1
    %p207 = por %p205, %p206
    %p208 = scmp.ne.s32.totalorder %s199, %s200
    %p209 = scmp.eq.s32.totalorder %s21, 0
    %p210 = por %p208, %p209
    %p211 = scmp.ne.s32.totalorder %s199, %s200
    %p212 = scmp.eq.s32.totalorder %s22, 1
    %p213 = por %p211, %p212
    %p215 = scmp.ne.s32.totalorder %s200, %s214
    %p216 = scmp.eq.s32.totalorder %s22, 0
    %p217 = por %p215, %p216
    %s219 = sadd.s32 %s218, 1
    %p222 = scmp.eq.s32.totalorder %s16, 1
    %p223 = scmp.ne.s32.totalorder %s218, %s220
    %p224 = scmp.eq.s32.totalorder %s16, 0
    %p225 = por %p223, %p224
    %p226 = scmp.ne.s32.totalorder %s218, %s220
    %p227 = scmp.eq.s32.totalorder %s21, 1
    %p228 = por %p226, %p227
    %p229 = scmp.ne.s32.totalorder %s220, %s221
    %p230 = scmp.eq.s32.totalorder %s21, 0
    %p231 = por %p229, %p230
    %p232 = scmp.ne.s32.totalorder %s220, %s221
    %p233 = scmp.eq.s32.totalorder %s22, 1
    %p234 = por %p232, %p233
    %p236 = scmp.ne.s32.totalorder %s221, %s235
    %p237 = scmp.eq.s32.totalorder %s22, 0
    %p238 = por %p236, %p237
    %s239 = ssub.s32 %s16, %s23
    %p240 = scmp.eq.s32.totalorder %s239, 0
    %s242 = sadd.s32 %s241, 1
    %s243 = scalar_select %p240, %s241, %s242
    %p246 = pneg %p240
    %p247 = scmp.eq.s32.totalorder %s16, 1
    %p248 = por %p246, %p247
    %p249 = scmp.ne.s32.totalorder %s241, %s244
    %p250 = scmp.eq.s32.totalorder %s16, 0
    %p251 = por %p249, %p250
    %p252 = scmp.ne.s32.totalorder %s241, %s244
    %p253 = scmp.eq.s32.totalorder %s21, 1
    %p254 = por %p252, %p253
    %p255 = scmp.ne.s32.totalorder %s244, %s245
    %p256 = scmp.eq.s32.totalorder %s21, 0
    %p257 = por %p255, %p256
    %p258 = scmp.ne.s32.totalorder %s244, %s245
    %p259 = scmp.eq.s32.totalorder %s22, 1
    %p260 = por %p258, %p259
    %p262 = scmp.ne.s32.totalorder %s245, %s261
    %p263 = scmp.eq.s32.totalorder %s22, 0
    %p264 = por %p262, %p263
    %p265 = scmp.le.s32.totalorder 1, %s16
    %p266 = scmp.lt.s32.totalorder %s16, 3
    %p267 = pnand %p265, %p266
    %p268 = pneg %p267
    // Predicated region
    $region9: #{ds_out_forward.1} parent=5 // pred_check
      _
    $region10: #{ds_out_forward.1} parent=5 // pred_check_branch
      %270 = sbr.rel (%p267) target = $region12
    $region11: #{ds_out_forward.1} parent=5 // pred_region
      %s271 = ssub.s32 %s16, 1
      // Predicated region
      $region13: #{ds_out_forward.1} parent=11 // pred_check
        %p272 = pneg %p63
      $region14: #{ds_out_forward.1} parent=11 // pred_check_branch
        %274 = sbr.rel (%p272) target = $region16
      $region15: #{ds_out_forward.1} parent=11 // pred_region
        _
      $region16: #{ds_out_forward.1} parent=11 // pred_fallthru
        _
      // Predicated region
      $region17: #{ds_out_forward.1} parent=11 // pred_check
        %p275 = pneg %p84
      $region18: #{ds_out_forward.1} parent=11 // pred_check_branch
        %277 = sbr.rel (%p275) target = $region20
      $region19: #{ds_out_forward.1} parent=11 // pred_region
        _
      $region20: #{ds_out_forward.1} parent=11 // pred_fallthru
        _
      // Predicated region
      $region21: #{ds_out_forward.1} parent=11 // pred_check
        %p278 = pneg %p105
      $region22: #{ds_out_forward.1} parent=11 // pred_check_branch
        %280 = sbr.rel (%p278) target = $region24
      $region23: #{ds_out_forward.1} parent=11 // pred_region
        _
      $region24: #{ds_out_forward.1} parent=11 // pred_fallthru
        _
      // Predicated region
      $region25: #{ds_out_forward.1} parent=11 // pred_check
        %p281 = pneg %p126
      $region26: #{ds_out_forward.1} parent=11 // pred_check_branch
        %283 = sbr.rel (%p281) target = $region28
      $region27: #{ds_out_forward.1} parent=11 // pred_region
        _
      $region28: #{ds_out_forward.1} parent=11 // pred_fallthru
        _
      // Predicated region
      $region29: #{ds_out_forward.1} parent=11 // pred_check
        %p284 = pneg %p147
      $region30: #{ds_out_forward.1} parent=11 // pred_check_branch
        %286 = sbr.rel (%p284) target = $region32
      $region31: #{ds_out_forward.1} parent=11 // pred_region
        _
      $region32: #{ds_out_forward.1} parent=11 // pred_fallthru
        _
      // Predicated region
      $region33: #{ds_out_forward.1} parent=11 // pred_check
        %p287 = pneg %p168
      $region34: #{ds_out_forward.1} parent=11 // pred_check_branch
        %289 = sbr.rel (%p287) target = $region36
      $region35: #{ds_out_forward.1} parent=11 // pred_region
        _
      $region36: #{ds_out_forward.1} parent=11 // pred_fallthru
        _
      // Predicated region
      $region37: #{ds_out_forward.1} parent=11 // pred_check
        %p290 = pneg %p189
      $region38: #{ds_out_forward.1} parent=11 // pred_check_branch
        %292 = sbr.rel (%p290) target = $region40
      $region39: #{ds_out_forward.1} parent=11 // pred_region
        _
      $region40: #{ds_out_forward.1} parent=11 // pred_fallthru
        _
      // Predicated region
      $region41: #{ds_out_forward.1} parent=11 // pred_check
        %p293 = pneg %p210
      $region42: #{ds_out_forward.1} parent=11 // pred_check_branch
        %295 = sbr.rel (%p293) target = $region44
      $region43: #{ds_out_forward.1} parent=11 // pred_region
        _
      $region44: #{ds_out_forward.1} parent=11 // pred_fallthru
        _
      // Predicated region
      $region45: #{ds_out_forward.1} parent=11 // pred_check
        %p296 = pneg %p231
      $region46: #{ds_out_forward.1} parent=11 // pred_check_branch
        %298 = sbr.rel (%p296) target = $region48
      $region47: #{ds_out_forward.1} parent=11 // pred_region
        _
      $region48: #{ds_out_forward.1} parent=11 // pred_fallthru
        _
    $region12: #{ds_out_forward.1} parent=5 // pred_fallthru
      _
    %p299 = scmp.lt.s32.totalorder %s16, 2
    // Predicated region
    $region49: #{ds_out_forward.1} parent=5 // pred_check
      %p300 = pneg %p299
    $region50: #{ds_out_forward.1} parent=5 // pred_check_branch
      %302 = sbr.rel (%p300) target = $region52
    $region51: #{ds_out_forward.1} parent=5 // pred_region
      // Predicated region
      $region53: #{ds_out_forward.1} parent=51 // pred_check
        %p303 = pneg %p36
      $region54: #{ds_out_forward.1} parent=51 // pred_check_branch
        %305 = sbr.rel (%p303) target = $region56
      $region55: #{ds_out_forward.1} parent=51 // pred_region
        %p306 = scmp.lt.s32.totalorder %s16, 1
        %s307 = scalar_select %p306, %s16, 1
        %s308 = smul.addr %s307, 8
        %s309 = smul.addr %s308, 8
        %s310 = scalar_lea.vmem %s0, %s309
      $region56: #{ds_out_forward.1} parent=51 // pred_fallthru
        _
    $region52: #{ds_out_forward.1} parent=5 // pred_fallthru
      _
    %p311 = scmp.le.s32.totalorder 1, %s16
    %p312 = scmp.lt.s32.totalorder %s16, 3
    %p313 = pnand %p311, %p312
    %p314 = pneg %p313
    // Predicated region
    $region57: #{ds_out_forward.1} parent=5 // pred_check
      _
    $region58: #{ds_out_forward.1} parent=5 // pred_check_branch
      %316 = sbr.rel (%p313) target = $region60
    $region59: #{ds_out_forward.1} parent=5 // pred_region
      %s317 = ssub.s32 %s16, 1
      %p318 = scmp.lt.s32.totalorder %s21, 1
      %s319 = scalar_select %p318, %s21, 1
      %s320 = smul.addr %s319, 8
      %s321 = smul.addr %s320, 8
      %s322 = scalar_lea.vmem %s0, %s321
      %p323 = pneg %p42
      %p324 = pneg %p39
      %p325 = pneg %p63
      %p326 = pneg %p60
      %p327 = pneg %p84
      %p328 = pneg %p81
      %p329 = pneg %p105
      %p330 = pneg %p102
      %p331 = pneg %p126
      %p332 = pneg %p123
      %p333 = pneg %p147
      %p334 = pneg %p144
      %p335 = pneg %p168
      %p336 = pneg %p165
      %p337 = pneg %p189
      %p338 = pneg %p186
      %p339 = pneg %p210
      %p340 = pneg %p207
      %p341 = pneg %p231
      %p342 = pneg %p228
      %p343 = pneg %p257
      %p344 = pneg %p254
      %p345 = scmp.lt.s32.totalorder %s21, 1
      %s346 = scalar_select %p345, %s21, 1
      %s347 = smul.addr %s346, 64
      %s348 = smul.addr %s347, 8
      %s349 = scalar_lea.vmem %s10, %s348
      %p350 = scmp.lt.s32.totalorder %s21, 1
      %s351 = scalar_select %p350, %s21, 1
      %s352 = smul.addr %s351, 8
      %s353 = smul.addr %s352, 8
      %s354 = scalar_lea.vmem %s0, %s353
      %p355 = scmp.lt.s32.totalorder %s21, 1
      %s356 = scalar_select %p355, %s21, 1
      %s357 = smul.addr %s356, 64
      %s358 = smul.addr %s357, 8
      %s359 = scalar_lea.vmem %s10, %s358
      %361 = vst [vmem:[#allocation2] sm:$0xff] 0.0
      %362 = vst [vmem:[#allocation2 + $0x48] sm:$0xff] 0.0
      %v363 = vld [vmem:[%s1] ss:$2 sm:$0xff]
      %s364 = scalar_lea.vmem %s1, 1
      %v365 = vld [vmem:[%s364] ss:$2 sm:$0xff]
      %v366 = vld [vmem:[%s354] sm:$0xff]
      %v367 = vld [vmem:[%s354 + $0x8] sm:$0xff]
      %v368 = vld [vmem:[%s354 + $0x10] sm:$0xff]
      %v369 = vld [vmem:[%s354 + $0x18] sm:$0xff]
      %v370 = vld [vmem:[%s354 + $0x20] sm:$0xff]
      %v371 = vld [vmem:[%s354 + $0x28] sm:$0xff]
      %v372 = vld [vmem:[%s354 + $0x30] sm:$0xff]
      %v373 = vld [vmem:[%s354 + $0x38] sm:$0xff]
      %v374 = vrot.slane %v366, 4
      %v375 = vadd.f32 %v366, %v374
      %v376 = vrot.slane %v375, 2
      %v377 = vadd.f32 %v375, %v376
      %v378 = vrot.slane %v377, 1
      %v379 = vadd.f32 %v377, %v378
      %v380 = vrot.slane %v367, 4
      %v381 = vadd.f32 %v367, %v380
      %v382 = vrot.slane %v381, 2
      %v383 = vadd.f32 %v381, %v382
      %v384 = vrot.slane %v383, 1
      %v385 = vadd.f32 %v383, %v384
      %v386 = vrot.slane %v368, 4
      %v387 = vadd.f32 %v368, %v386
      %v388 = vrot.slane %v387, 2
      %v389 = vadd.f32 %v387, %v388
      %v390 = vrot.slane %v389, 1
      %v391 = vadd.f32 %v389, %v390
      %v392 = vrot.slane %v369, 4
      %v393 = vadd.f32 %v369, %v392
      %v394 = vrot.slane %v393, 2
      %v395 = vadd.f32 %v393, %v394
      %v396 = vrot.slane %v395, 1
      %v397 = vadd.f32 %v395, %v396
      %v398 = vrot.slane %v370, 4
      %v399 = vadd.f32 %v370, %v398
      %v400 = vrot.slane %v399, 2
      %v401 = vadd.f32 %v399, %v400
      %v402 = vrot.slane %v401, 1
      %v403 = vadd.f32 %v401, %v402
      %v404 = vrot.slane %v371, 4
      %v405 = vadd.f32 %v371, %v404
      %v406 = vrot.slane %v405, 2
      %v407 = vadd.f32 %v405, %v406
      %v408 = vrot.slane %v407, 1
      %v409 = vadd.f32 %v407, %v408
      %v410 = vrot.slane %v372, 4
      %v411 = vadd.f32 %v372, %v410
      %v412 = vrot.slane %v411, 2
      %v413 = vadd.f32 %v411, %v412
      %v414 = vrot.slane %v413, 1
      %v415 = vadd.f32 %v413, %v414
      %v416 = vrot.slane %v373, 4
      %v417 = vadd.f32 %v373, %v416
      %v418 = vrot.slane %v417, 2
      %v419 = vadd.f32 %v417, %v418
      %v420 = vrot.slane %v419, 1
      %v421 = vadd.f32 %v419, %v420
      %v422 = vrcp.pop 8.0
      %v423 = vmul.f32 8.0, %v422
      %v424 = vsub.f32 1.0, %v423
      %v425 = vmul.f32 %v422, %v424
      %v426 = vadd.f32 %v422, %v425
      %vm427 = vweird.f32 %v422
      %v428 = vsel %vm427, %v422, %v426
      %v429 = vmul.f32 %v379, %v428
      %v430 = vmul.f32 %v385, %v428
      %v431 = vmul.f32 %v391, %v428
      %v432 = vmul.f32 %v397, %v428
      %v433 = vmul.f32 %v403, %v428
      %v434 = vmul.f32 %v409, %v428
      %v435 = vmul.f32 %v415, %v428
      %v436 = vmul.f32 %v421, %v428
      %v437 = vsub.f32 %v366, %v429
      %v438 = vsub.f32 %v367, %v430
      %v439 = vsub.f32 %v368, %v431
      %v440 = vsub.f32 %v369, %v432
      %v441 = vsub.f32 %v370, %v433
      %v442 = vsub.f32 %v371, %v434
      %v443 = vsub.f32 %v372, %v435
      %v444 = vsub.f32 %v373, %v436
      %v445 = vmul.f32 %v437, %v437
      %v446 = vmul.f32 %v438, %v438
      %v447 = vmul.f32 %v439, %v439
      %v448 = vmul.f32 %v440, %v440
      %v449 = vmul.f32 %v441, %v441
      %v450 = vmul.f32 %v442, %v442
      %v451 = vmul.f32 %v443, %v443
      %v452 = vmul.f32 %v444, %v444
      %v453 = vrot.slane %v445, 4
      %v454 = vadd.f32 %v445, %v453
      %v455 = vrot.slane %v454, 2
      %v456 = vadd.f32 %v454, %v455
      %v457 = vrot.slane %v456, 1
      %v458 = vadd.f32 %v456, %v457
      %v459 = vrot.slane %v446, 4
      %v460 = vadd.f32 %v446, %v459
      %v461 = vrot.slane %v460, 2
      %v462 = vadd.f32 %v460, %v461
      %v463 = vrot.slane %v462, 1
      %v464 = vadd.f32 %v462, %v463
      %v465 = vrot.slane %v447, 4
      %v466 = vadd.f32 %v447, %v465
      %v467 = vrot.slane %v466, 2
      %v468 = vadd.f32 %v466, %v467
      %v469 = vrot.slane %v468, 1
      %v470 = vadd.f32 %v468, %v469
      %v471 = vrot.slane %v448, 4
      %v472 = vadd.f32 %v448, %v471
      %v473 = vrot.slane %v472, 2
      %v474 = vadd.f32 %v472, %v473
      %v475 = vrot.slane %v474, 1
      %v476 = vadd.f32 %v474, %v475
      %v477 = vrot.slane %v449, 4
      %v478 = vadd.f32 %v449, %v477
      %v479 = vrot.slane %v478, 2
      %v480 = vadd.f32 %v478, %v479
      %v481 = vrot.slane %v480, 1
      %v482 = vadd.f32 %v480, %v481
      %v483 = vrot.slane %v450, 4
      %v484 = vadd.f32 %v450, %v483
      %v485 = vrot.slane %v484, 2
      %v486 = vadd.f32 %v484, %v485
      %v487 = vrot.slane %v486, 1
      %v488 = vadd.f32 %v486, %v487
      %v489 = vrot.slane %v451, 4
      %v490 = vadd.f32 %v451, %v489
      %v491 = vrot.slane %v490, 2
      %v492 = vadd.f32 %v490, %v491
      %v493 = vrot.slane %v492, 1
      %v494 = vadd.f32 %v492, %v493
      %v495 = vrot.slane %v452, 4
      %v496 = vadd.f32 %v452, %v495
      %v497 = vrot.slane %v496, 2
      %v498 = vadd.f32 %v496, %v497
      %v499 = vrot.slane %v498, 1
      %v500 = vadd.f32 %v498, %v499
      %v501 = vmul.f32 %v458, %v428
      %v502 = vmul.f32 %v464, %v428
      %v503 = vmul.f32 %v470, %v428
      %v504 = vmul.f32 %v476, %v428
      %v505 = vmul.f32 %v482, %v428
      %v506 = vmul.f32 %v488, %v428
      %v507 = vmul.f32 %v494, %v428
      %v508 = vmul.f32 %v500, %v428
      %v509 = vadd.f32 %v501, 1e-05
      %v510 = vadd.f32 %v502, 1e-05
      %v511 = vadd.f32 %v503, 1e-05
      %v512 = vadd.f32 %v504, 1e-05
      %v513 = vadd.f32 %v505, 1e-05
      %v514 = vadd.f32 %v506, 1e-05
      %v515 = vadd.f32 %v507, 1e-05
      %v516 = vadd.f32 %v508, 1e-05
      %v517 = vrsqrt.pop %v509
      %v518 = vmul.f32 %v517, %v509
      %v519 = vmul.f32 %v518, %v517
      %v520 = vmul.f32 0.5, %v519
      %v521 = vsub.f32 1.5, %v520
      %v522 = vmul.f32 %v517, %v521
      %vm523 = vweird.f32 %v509
      %vm524 = vweird.f32 %v517
      %vm525 = vmor %vm523, %vm524
      %v526 = vsel %vm525, %v517, %v522
      %v527 = vrsqrt.pop %v510
      %v528 = vmul.f32 %v527, %v510
      %v529 = vmul.f32 %v528, %v527
      %v530 = vmul.f32 0.5, %v529
      %v531 = vsub.f32 1.5, %v530
      %v532 = vmul.f32 %v527, %v531
      %vm533 = vweird.f32 %v510
      %vm534 = vweird.f32 %v527
      %vm535 = vmor %vm533, %vm534
      %v536 = vsel %vm535, %v527, %v532
      %v537 = vrsqrt.pop %v511
      %v538 = vmul.f32 %v537, %v511
      %v539 = vmul.f32 %v538, %v537
      %v540 = vmul.f32 0.5, %v539
      %v541 = vsub.f32 1.5, %v540
      %v542 = vmul.f32 %v537, %v541
      %vm543 = vweird.f32 %v511
      %vm544 = vweird.f32 %v537
      %vm545 = vmor %vm543, %vm544
      %v546 = vsel %vm545, %v537, %v542
      %v547 = vrsqrt.pop %v512
      %v548 = vmul.f32 %v547, %v512
      %v549 = vmul.f32 %v548, %v547
      %v550 = vmul.f32 0.5, %v549
      %v551 = vsub.f32 1.5, %v550
      %v552 = vmul.f32 %v547, %v551
      %vm553 = vweird.f32 %v512
      %vm554 = vweird.f32 %v547
      %vm555 = vmor %vm553, %vm554
      %v556 = vsel %vm555, %v547, %v552
      %v557 = vrsqrt.pop %v513
      %v558 = vmul.f32 %v557, %v513
      %v559 = vmul.f32 %v558, %v557
      %v560 = vmul.f32 0.5, %v559
      %v561 = vsub.f32 1.5, %v560
      %v562 = vmul.f32 %v557, %v561
      %vm563 = vweird.f32 %v513
      %vm564 = vweird.f32 %v557
      %vm565 = vmor %vm563, %vm564
      %v566 = vsel %vm565, %v557, %v562
      %v567 = vrsqrt.pop %v514
      %v568 = vmul.f32 %v567, %v514
      %v569 = vmul.f32 %v568, %v567
      %v570 = vmul.f32 0.5, %v569
      %v571 = vsub.f32 1.5, %v570
      %v572 = vmul.f32 %v567, %v571
      %vm573 = vweird.f32 %v514
      %vm574 = vweird.f32 %v567
      %vm575 = vmor %vm573, %vm574
      %v576 = vsel %vm575, %v567, %v572
      %v577 = vrsqrt.pop %v515
      %v578 = vmul.f32 %v577, %v515
      %v579 = vmul.f32 %v578, %v577
      %v580 = vmul.f32 0.5, %v579
      %v581 = vsub.f32 1.5, %v580
      %v582 = vmul.f32 %v577, %v581
      %vm583 = vweird.f32 %v515
      %vm584 = vweird.f32 %v577
      %vm585 = vmor %vm583, %vm584
      %v586 = vsel %vm585, %v577, %v582
      %v587 = vrsqrt.pop %v516
      %v588 = vmul.f32 %v587, %v516
      %v589 = vmul.f32 %v588, %v587
      %v590 = vmul.f32 0.5, %v589
      %v591 = vsub.f32 1.5, %v590
      %v592 = vmul.f32 %v587, %v591
      %vm593 = vweird.f32 %v516
      %vm594 = vweird.f32 %v587
      %vm595 = vmor %vm593, %vm594
      %v596 = vsel %vm595, %v587, %v592
      %v597 = vmul.f32 %v437, %v526
      %v598 = vmul.f32 %v438, %v536
      %v599 = vmul.f32 %v439, %v546
      %v600 = vmul.f32 %v440, %v556
      %v601 = vmul.f32 %v441, %v566
      %v602 = vmul.f32 %v442, %v576
      %v603 = vmul.f32 %v443, %v586
      %v604 = vmul.f32 %v444, %v596
      %v605 = vld [vmem:[%s2] sm:$0xff]
      %607 = vset.pattern.permute.xlu0 0
      %608 = vperm.xlu0 %607, %v605
      %v609 = vpop.permute.xlu0 %608
      %v611 = vmul.f32 %v597, %v609
      %v612 = vmul.f32 %v598, %v609
      %v613 = vmul.f32 %v599, %v609
      %v614 = vmul.f32 %v600, %v609
      %v615 = vmul.f32 %v601, %v609
      %v616 = vmul.f32 %v602, %v609
      %v617 = vmul.f32 %v603, %v609
      %v618 = vmul.f32 %v604, %v609
      %v619 = vld [vmem:[%s3] sm:$0xff]
      %621 = vset.pattern.permute.xlu0 0
      %622 = vperm.xlu0 %621, %v619
      %v623 = vpop.permute.xlu0 %622
      %v625 = vadd.f32 %v611, %v623
      %v626 = vadd.f32 %v612, %v623
      %v627 = vadd.f32 %v613, %v623
      %v628 = vadd.f32 %v614, %v623
      %v629 = vadd.f32 %v615, %v623
      %v630 = vadd.f32 %v616, %v623
      %v631 = vadd.f32 %v617, %v623
      %v632 = vadd.f32 %v618, %v623
      %633 = vst [vmem:[#allocation2 + $0x8] sm:$0xff] %v625
      %634 = vst [vmem:[#allocation2 + $0x10] sm:$0xff] %v626
      %635 = vst [vmem:[#allocation2 + $0x18] sm:$0xff] %v627
      %636 = vst [vmem:[#allocation2 + $0x20] sm:$0xff] %v628
      %637 = vst [vmem:[#allocation2 + $0x28] sm:$0xff] %v629
      %638 = vst [vmem:[#allocation2 + $0x30] sm:$0xff] %v630
      %639 = vst [vmem:[#allocation2 + $0x38] sm:$0xff] %v631
      %640 = vst [vmem:[#allocation2 + $0x40] sm:$0xff] %v632
      %v641 = vld [vmem:[#allocation2] sm:$0xff]
      %v642 = vld [vmem:[#allocation2 + $0x8] sm:$0xff]
      %v643 = vld [vmem:[#allocation2 + $0x10] sm:$0xff]
      %v644 = vld [vmem:[#allocation2 + $0x18] sm:$0xff]
      %v645 = vld [vmem:[#allocation2 + $0x20] sm:$0xff]
      %v646 = vld [vmem:[#allocation2 + $0x28] sm:$0xff]
      %v647 = vld [vmem:[#allocation2 + $0x30] sm:$0xff]
      %v648 = vld [vmem:[#allocation2 + $0x38] sm:$0xff]
      %v649 = vld [vmem:[#allocation2 + $0x40] sm:$0xff]
      %v651 = vperm.slane %v363, 0
      %v652 = vperm.slane %v363, 1
      %v653 = vperm.slane %v363, 2
      %v654 = vperm.slane %v363, 3
      %v655 = vperm.slane %v363, 4
      %v656 = vperm.slane %v363, 5
      %v657 = vperm.slane %v363, 6
      %v658 = vperm.slane %v363, 7
      %659 = vrot.lane.b32.xlu0 %v651, 95
      %v660 = vpop.permute.xlu0 %659
      %661 = vrot.lane.b32.xlu0 %v652, 95
      %v662 = vpop.permute.xlu0 %661
      %663 = vrot.lane.b32.xlu0 %v653, 95
      %v664 = vpop.permute.xlu0 %663
      %665 = vrot.lane.b32.xlu0 %v654, 95
      %v666 = vpop.permute.xlu0 %665
      %667 = vrot.lane.b32.xlu0 %v655, 95
      %v668 = vpop.permute.xlu0 %667
      %669 = vrot.lane.b32.xlu0 %v656, 95
      %v670 = vpop.permute.xlu0 %669
      %671 = vrot.lane.b32.xlu0 %v657, 95
      %v672 = vpop.permute.xlu0 %671
      %673 = vrot.lane.b32.xlu0 %v658, 95
      %v674 = vpop.permute.xlu0 %673
      %vm675 = vcmask 777216
      %v676 = vsel %vm675, %v660, %v662
      %v677 = vsel %vm675, %v662, %v664
      %v678 = vsel %vm675, %v664, %v666
      %v679 = vsel %vm675, %v666, %v668
      %v680 = vsel %vm675, %v668, %v670
      %v681 = vsel %vm675, %v670, %v672
      %v682 = vsel %vm675, %v672, %v674
      %v692 = vmul.f32 %v641, %v660
      %v693 = vmul.f32 %v642, %v676
      %v694 = vmul.f32 %v643, %v677
      %v695 = vmul.f32 %v644, %v678
      %v696 = vmul.f32 %v645, %v679
      %v697 = vmul.f32 %v646, %v680
      %v698 = vmul.f32 %v647, %v681
      %v699 = vmul.f32 %v648, %v682
      %v700 = vmul.f32 %v649, %v674
      %v701 = vld [vmem:[%s4] sm:$0xf]
      %v702 = vpack.c.bf16 %v692, %v692
      %v703 = vpack.c.bf16 %v693, %v693
      %v704 = vpack.c.bf16 %v694, %v694
      %v705 = vpack.c.bf16 %v695, %v695
      %v706 = vpack.c.bf16 %v696, %v696
      %v707 = vpack.c.bf16 %v697, %v697
      %v708 = vpack.c.bf16 %v698, %v698
      %v709 = vpack.c.bf16 %v699, %v699
      %v710 = vpack.c.bf16 %v700, %v700
      %s711 = scalar_lea.vmem %s4, 4
      %v712 = vld [vmem:[%s711] sm:$0xf]
      %v713 = vpack.c.bf16 %v641, %v641
      %v714 = vpack.c.bf16 %v642, %v642
      %v715 = vpack.c.bf16 %v643, %v643
      %v716 = vpack.c.bf16 %v644, %v644
      %v717 = vpack.c.bf16 %v645, %v645
      %v718 = vpack.c.bf16 %v646, %v646
      %v719 = vpack.c.bf16 %v647, %v647
      %v720 = vpack.c.bf16 %v648, %v648
      %v721 = vpack.c.bf16 %v649, %v649
      %731 = vrot.lane.b32.xlu0 %v713, 32
      %v732 = vpop.permute.xlu0 %731
      %733 = vrot.lane.b32.xlu0 %v714, 32
      %v734 = vpop.permute.xlu0 %733
      %735 = vrot.lane.b32.xlu0 %v715, 32
      %v736 = vpop.permute.xlu0 %735
      %737 = vrot.lane.b32.xlu0 %v716, 32
      %v738 = vpop.permute.xlu0 %737
      %739 = vrot.lane.b32.xlu0 %v717, 32
      %v740 = vpop.permute.xlu0 %739
      %741 = vrot.lane.b32.xlu0 %v718, 32
      %v742 = vpop.permute.xlu0 %741
      %743 = vrot.lane.b32.xlu0 %v719, 32
      %v744 = vpop.permute.xlu0 %743
      %745 = vrot.lane.b32.xlu0 %v720, 32
      %v746 = vpop.permute.xlu0 %745
      %747 = vrot.lane.b32.xlu0 %v721, 32
      %v748 = vpop.permute.xlu0 %747
      %vm749 = vcmask 261120
      %v750 = vsel %vm749, %v732, %v734
      %v751 = vsel %vm749, %v734, %v736
      %v752 = vsel %vm749, %v736, %v738
      %v753 = vsel %vm749, %v738, %v740
      %v754 = vsel %vm749, %v740, %v742
      %v755 = vsel %vm749, %v742, %v744
      %v756 = vsel %vm749, %v744, %v746
      %v757 = vsel %vm749, %v746, %v748
      %vm758 = vcmask 64512
      %v760 = vsel %vm758, %v712, 0
      %vm762 = vcmask 1043456
      %v764 = vsel %vm762, %v750, 0
      %v767 = vsel %vm762, %v751, 0
      %v770 = vsel %vm762, %v752, 0
      %v773 = vsel %vm762, %v753, 0
      %v776 = vsel %vm762, %v754, 0
      %v779 = vsel %vm762, %v755, 0
      %v782 = vsel %vm762, %v756, 0
      %v785 = vsel %vm762, %v757, 0
      %787 = vmatpush.bf16.msra.mxu0 0
      %788 = vmatpush.bf16.msra.mxu0 0
      %789 = vmatpush.bf16.msra.mxu0 0
      %790 = vmatpush.bf16.msra.mxu0 0
      %791 = vmatpush.bf16.msra.mxu0 0
      %792 = vmatpush.bf16.msra.mxu0 0
      %793 = vmatpush.bf16.msra.mxu0 0
      %794 = vmatpush.bf16.msra.mxu0 %v764
      %795 = vmatmul.bf16.gmra.mxu0 %v760
      %v796 = vpop.f32.mrf.mxu0
      %v797 = vadd.f32 0.0, %v796
      %v798 = vpop.f32.mrf.mxu0
      %799 = vdwg.mxu0
      %800 = vmatpush.bf16.msra.mxu0 0
      %801 = vmatpush.bf16.msra.mxu0 0
      %802 = vmatpush.bf16.msra.mxu0 0
      %803 = vmatpush.bf16.msra.mxu0 0
      %804 = vmatpush.bf16.msra.mxu0 0
      %805 = vmatpush.bf16.msra.mxu0 0
      %806 = vmatpush.bf16.msra.mxu0 0
      %807 = vmatpush.bf16.msra.mxu0 %v767
      %808 = vmatmul.bf16.gmra.mxu0 %v760
      %v809 = vpop.f32.mrf.mxu0
      %v810 = vadd.f32 0.0, %v809
      %v811 = vpop.f32.mrf.mxu0
      %812 = vdwg.mxu0
      %813 = vmatpush.bf16.msra.mxu0 0
      %814 = vmatpush.bf16.msra.mxu0 0
      %815 = vmatpush.bf16.msra.mxu0 0
      %816 = vmatpush.bf16.msra.mxu0 0
      %817 = vmatpush.bf16.msra.mxu0 0
      %818 = vmatpush.bf16.msra.mxu0 0
      %819 = vmatpush.bf16.msra.mxu0 0
      %820 = vmatpush.bf16.msra.mxu0 %v770
      %821 = vmatmul.bf16.gmra.mxu0 %v760
      %v822 = vpop.f32.mrf.mxu0
      %v823 = vadd.f32 0.0, %v822
      %v824 = vpop.f32.mrf.mxu0
      %825 = vdwg.mxu0
      %826 = vmatpush.bf16.msra.mxu0 0
      %827 = vmatpush.bf16.msra.mxu0 0
      %828 = vmatpush.bf16.msra.mxu0 0
      %829 = vmatpush.bf16.msra.mxu0 0
      %830 = vmatpush.bf16.msra.mxu0 0
      %831 = vmatpush.bf16.msra.mxu0 0
      %832 = vmatpush.bf16.msra.mxu0 0
      %833 = vmatpush.bf16.msra.mxu0 %v773
      %834 = vmatmul.bf16.gmra.mxu0 %v760
      %v835 = vpop.f32.mrf.mxu0
      %v836 = vadd.f32 0.0, %v835
      %v837 = vpop.f32.mrf.mxu0
      %838 = vdwg.mxu0
      %839 = vmatpush.bf16.msra.mxu0 0
      %840 = vmatpush.bf16.msra.mxu0 0
      %841 = vmatpush.bf16.msra.mxu0 0
      %842 = vmatpush.bf16.msra.mxu0 0
      %843 = vmatpush.bf16.msra.mxu0 0
      %844 = vmatpush.bf16.msra.mxu0 0
      %845 = vmatpush.bf16.msra.mxu0 0
      %846 = vmatpush.bf16.msra.mxu0 %v776
      %847 = vmatmul.bf16.gmra.mxu0 %v760
      %v848 = vpop.f32.mrf.mxu0
      %v849 = vadd.f32 0.0, %v848
      %v850 = vpop.f32.mrf.mxu0
      %851 = vdwg.mxu0
      %852 = vmatpush.bf16.msra.mxu0 0
      %853 = vmatpush.bf16.msra.mxu0 0
      %854 = vmatpush.bf16.msra.mxu0 0
      %855 = vmatpush.bf16.msra.mxu0 0
      %856 = vmatpush.bf16.msra.mxu0 0
      %857 = vmatpush.bf16.msra.mxu0 0
      %858 = vmatpush.bf16.msra.mxu0 0
      %859 = vmatpush.bf16.msra.mxu0 %v779
      %860 = vmatmul.bf16.gmra.mxu0 %v760
      %v861 = vpop.f32.mrf.mxu0
      %v862 = vadd.f32 0.0, %v861
      %v863 = vpop.f32.mrf.mxu0
      %864 = vdwg.mxu0
      %865 = vmatpush.bf16.msra.mxu0 0
      %866 = vmatpush.bf16.msra.mxu0 0
      %867 = vmatpush.bf16.msra.mxu0 0
      %868 = vmatpush.bf16.msra.mxu0 0
      %869 = vmatpush.bf16.msra.mxu0 0
      %870 = vmatpush.bf16.msra.mxu0 0
      %871 = vmatpush.bf16.msra.mxu0 0
      %872 = vmatpush.bf16.msra.mxu0 %v782
      %873 = vmatmul.bf16.gmra.mxu0 %v760
      %v874 = vpop.f32.mrf.mxu0
      %v875 = vadd.f32 0.0, %v874
      %v876 = vpop.f32.mrf.mxu0
      %877 = vdwg.mxu0
      %878 = vmatpush.bf16.msra.mxu0 0
      %879 = vmatpush.bf16.msra.mxu0 0
      %880 = vmatpush.bf16.msra.mxu0 0
      %881 = vmatpush.bf16.msra.mxu0 0
      %882 = vmatpush.bf16.msra.mxu0 0
      %883 = vmatpush.bf16.msra.mxu0 0
      %884 = vmatpush.bf16.msra.mxu0 0
      %885 = vmatpush.bf16.msra.mxu0 %v785
      %886 = vmatmul.bf16.gmra.mxu0 %v760
      %v887 = vpop.f32.mrf.mxu0
      %v888 = vadd.f32 0.0, %v887
      %v889 = vpop.f32.mrf.mxu0
      %890 = vdwg.mxu0
      %900 = vrot.lane.b32.xlu0 %v702, 33
      %v901 = vpop.permute.xlu0 %900
      %902 = vrot.lane.b32.xlu0 %v703, 33
      %v903 = vpop.permute.xlu0 %902
      %904 = vrot.lane.b32.xlu0 %v704, 33
      %v905 = vpop.permute.xlu0 %904
      %906 = vrot.lane.b32.xlu0 %v705, 33
      %v907 = vpop.permute.xlu0 %906
      %908 = vrot.lane.b32.xlu0 %v706, 33
      %v909 = vpop.permute.xlu0 %908
      %910 = vrot.lane.b32.xlu0 %v707, 33
      %v911 = vpop.permute.xlu0 %910
      %912 = vrot.lane.b32.xlu0 %v708, 33
      %v913 = vpop.permute.xlu0 %912
      %914 = vrot.lane.b32.xlu0 %v709, 33
      %v915 = vpop.permute.xlu0 %914
      %916 = vrot.lane.b32.xlu0 %v710, 33
      %v917 = vpop.permute.xlu0 %916
      %vm918 = vcmask 269312
      %v919 = vsel %vm918, %v901, %v903
      %v920 = vsel %vm918, %v903, %v905
      %v921 = vsel %vm918, %v905, %v907
      %v922 = vsel %vm918, %v907, %v909
      %v923 = vsel %vm918, %v909, %v911
      %v924 = vsel %vm918, %v911, %v913
      %v925 = vsel %vm918, %v913, %v915
      %v926 = vsel %vm918, %v915, %v917
      %v928 = vsel %vm758, %v701, 0
      %v931 = vsel %vm762, %v919, 0
      %v934 = vsel %vm762, %v920, 0
      %v937 = vsel %vm762, %v921, 0
      %v940 = vsel %vm762, %v922, 0
      %v943 = vsel %vm762, %v923, 0
      %v946 = vsel %vm762, %v924, 0
      %v949 = vsel %vm762, %v925, 0
      %v952 = vsel %vm762, %v926, 0
      %954 = vmatpush.bf16.msra.mxu0 0
      %955 = vmatpush.bf16.msra.mxu0 0
      %956 = vmatpush.bf16.msra.mxu0 0
      %957 = vmatpush.bf16.msra.mxu0 0
      %958 = vmatpush.bf16.msra.mxu0 0
      %959 = vmatpush.bf16.msra.mxu0 0
      %960 = vmatpush.bf16.msra.mxu0 0
      %961 = vmatpush.bf16.msra.mxu0 %v931
      %962 = vmatmul.bf16.gmra.mxu0 %v928
      %v963 = vpop.f32.mrf.mxu0
      %v964 = vadd.f32 %v797, %v963
      %v965 = vpop.f32.mrf.mxu0
      %966 = vdwg.mxu0
      %967 = vmatpush.bf16.msra.mxu0 0
      %968 = vmatpush.bf16.msra.mxu0 0
      %969 = vmatpush.bf16.msra.mxu0 0
      %970 = vmatpush.bf16.msra.mxu0 0
      %971 = vmatpush.bf16.msra.mxu0 0
      %972 = vmatpush.bf16.msra.mxu0 0
      %973 = vmatpush.bf16.msra.mxu0 0
      %974 = vmatpush.bf16.msra.mxu0 %v934
      %975 = vmatmul.bf16.gmra.mxu0 %v928
      %v976 = vpop.f32.mrf.mxu0
      %v977 = vadd.f32 %v810, %v976
      %v978 = vpop.f32.mrf.mxu0
      %979 = vdwg.mxu0
      %980 = vmatpush.bf16.msra.mxu0 0
      %981 = vmatpush.bf16.msra.mxu0 0
      %982 = vmatpush.bf16.msra.mxu0 0
      %983 = vmatpush.bf16.msra.mxu0 0
      %984 = vmatpush.bf16.msra.mxu0 0
      %985 = vmatpush.bf16.msra.mxu0 0
      %986 = vmatpush.bf16.msra.mxu0 0
      %987 = vmatpush.bf16.msra.mxu0 %v937
      %988 = vmatmul.bf16.gmra.mxu0 %v928
      %v989 = vpop.f32.mrf.mxu0
      %v990 = vadd.f32 %v823, %v989
      %v991 = vpop.f32.mrf.mxu0
      %992 = vdwg.mxu0
      %993 = vmatpush.bf16.msra.mxu0 0
      %994 = vmatpush.bf16.msra.mxu0 0
      %995 = vmatpush.bf16.msra.mxu0 0
      %996 = vmatpush.bf16.msra.mxu0 0
      %997 = vmatpush.bf16.msra.mxu0 0
      %998 = vmatpush.bf16.msra.mxu0 0
      %999 = vmatpush.bf16.msra.mxu0 0
      %1000 = vmatpush.bf16.msra.mxu0 %v940
      %1001 = vmatmul.bf16.gmra.mxu0 %v928
      %v1002 = vpop.f32.mrf.mxu0
      %v1003 = vadd.f32 %v836, %v1002
      %v1004 = vpop.f32.mrf.mxu0
      %1005 = vdwg.mxu0
      %1006 = vmatpush.bf16.msra.mxu0 0
      %1007 = vmatpush.bf16.msra.mxu0 0
      %1008 = vmatpush.bf16.msra.mxu0 0
      %1009 = vmatpush.bf16.msra.mxu0 0
      %1010 = vmatpush.bf16.msra.mxu0 0
      %1011 = vmatpush.bf16.msra.mxu0 0
      %1012 = vmatpush.bf16.msra.mxu0 0
      %1013 = vmatpush.bf16.msra.mxu0 %v943
      %1014 = vmatmul.bf16.gmra.mxu0 %v928
      %v1015 = vpop.f32.mrf.mxu0
      %v1016 = vadd.f32 %v849, %v1015
      %v1017 = vpop.f32.mrf.mxu0
      %1018 = vdwg.mxu0
      %1019 = vmatpush.bf16.msra.mxu0 0
      %1020 = vmatpush.bf16.msra.mxu0 0
      %1021 = vmatpush.bf16.msra.mxu0 0
      %1022 = vmatpush.bf16.msra.mxu0 0
      %1023 = vmatpush.bf16.msra.mxu0 0
      %1024 = vmatpush.bf16.msra.mxu0 0
      %1025 = vmatpush.bf16.msra.mxu0 0
      %1026 = vmatpush.bf16.msra.mxu0 %v946
      %1027 = vmatmul.bf16.gmra.mxu0 %v928
      %v1028 = vpop.f32.mrf.mxu0
      %v1029 = vadd.f32 %v862, %v1028
      %v1030 = vpop.f32.mrf.mxu0
      %1031 = vdwg.mxu0
      %1032 = vmatpush.bf16.msra.mxu0 0
      %1033 = vmatpush.bf16.msra.mxu0 0
      %1034 = vmatpush.bf16.msra.mxu0 0
      %1035 = vmatpush.bf16.msra.mxu0 0
      %1036 = vmatpush.bf16.msra.mxu0 0
      %1037 = vmatpush.bf16.msra.mxu0 0
      %1038 = vmatpush.bf16.msra.mxu0 0
      %1039 = vmatpush.bf16.msra.mxu0 %v949
      %1040 = vmatmul.bf16.gmra.mxu0 %v928
      %v1041 = vpop.f32.mrf.mxu0
      %v1042 = vadd.f32 %v875, %v1041
      %v1043 = vpop.f32.mrf.mxu0
      %1044 = vdwg.mxu0
      %1045 = vmatpush.bf16.msra.mxu0 0
      %1046 = vmatpush.bf16.msra.mxu0 0
      %1047 = vmatpush.bf16.msra.mxu0 0
      %1048 = vmatpush.bf16.msra.mxu0 0
      %1049 = vmatpush.bf16.msra.mxu0 0
      %1050 = vmatpush.bf16.msra.mxu0 0
      %1051 = vmatpush.bf16.msra.mxu0 0
      %1052 = vmatpush.bf16.msra.mxu0 %v952
      %1053 = vmatmul.bf16.gmra.mxu0 %v928
      %v1054 = vpop.f32.mrf.mxu0
      %v1055 = vadd.f32 %v888, %v1054
      %v1056 = vpop.f32.mrf.mxu0
      %1057 = vdwg.mxu0
      %v1059 = vperm.slane %v365, 0
      %v1060 = vperm.slane %v365, 1
      %v1061 = vperm.slane %v365, 2
      %v1062 = vperm.slane %v365, 3
      %v1063 = vperm.slane %v365, 4
      %v1064 = vperm.slane %v365, 5
      %v1065 = vperm.slane %v365, 6
      %v1066 = vperm.slane %v365, 7
      %1067 = vrot.lane.b32.xlu0 %v1059, 97
      %v1068 = vpop.permute.xlu0 %1067
      %1069 = vrot.lane.b32.xlu0 %v1060, 97
      %v1070 = vpop.permute.xlu0 %1069
      %1071 = vrot.lane.b32.xlu0 %v1061, 97
      %v1072 = vpop.permute.xlu0 %1071
      %1073 = vrot.lane.b32.xlu0 %v1062, 97
      %v1074 = vpop.permute.xlu0 %1073
      %1075 = vrot.lane.b32.xlu0 %v1063, 97
      %v1076 = vpop.permute.xlu0 %1075
      %1077 = vrot.lane.b32.xlu0 %v1064, 97
      %v1078 = vpop.permute.xlu0 %1077
      %1079 = vrot.lane.b32.xlu0 %v1065, 97
      %v1080 = vpop.permute.xlu0 %1079
      %1081 = vrot.lane.b32.xlu0 %v1066, 97
      %v1082 = vpop.permute.xlu0 %1081
      %vm1083 = vcmask 793600
      %v1084 = vsel %vm1083, %v1068, %v1070
      %v1085 = vsel %vm1083, %v1070, %v1072
      %v1086 = vsel %vm1083, %v1072, %v1074
      %v1087 = vsel %vm1083, %v1074, %v1076
      %v1088 = vsel %vm1083, %v1076, %v1078
      %v1089 = vsel %vm1083, %v1078, %v1080
      %v1090 = vsel %vm1083, %v1080, %v1082
      %v1100 = vmul.f32 %v641, %v1068
      %v1101 = vmul.f32 %v642, %v1084
      %v1102 = vmul.f32 %v643, %v1085
      %v1103 = vmul.f32 %v644, %v1086
      %v1104 = vmul.f32 %v645, %v1087
      %v1105 = vmul.f32 %v646, %v1088
      %v1106 = vmul.f32 %v647, %v1089
      %v1107 = vmul.f32 %v648, %v1090
      %v1108 = vmul.f32 %v649, %v1082
      %s1109 = scalar_lea.vmem %s4, 8
      %v1110 = vld [vmem:[%s1109] sm:$0xf]
      %v1111 = vpack.c.bf16 %v1100, %v1100
      %v1112 = vpack.c.bf16 %v1101, %v1101
      %v1113 = vpack.c.bf16 %v1102, %v1102
      %v1114 = vpack.c.bf16 %v1103, %v1103
      %v1115 = vpack.c.bf16 %v1104, %v1104
      %v1116 = vpack.c.bf16 %v1105, %v1105
      %v1117 = vpack.c.bf16 %v1106, %v1106
      %v1118 = vpack.c.bf16 %v1107, %v1107
      %v1119 = vpack.c.bf16 %v1108, %v1108
      %1129 = vrot.lane.b32.xlu0 %v1111, 31
      %v1130 = vpop.permute.xlu0 %1129
      %1131 = vrot.lane.b32.xlu0 %v1112, 31
      %v1132 = vpop.permute.xlu0 %1131
      %1133 = vrot.lane.b32.xlu0 %v1113, 31
      %v1134 = vpop.permute.xlu0 %1133
      %1135 = vrot.lane.b32.xlu0 %v1114, 31
      %v1136 = vpop.permute.xlu0 %1135
      %1137 = vrot.lane.b32.xlu0 %v1115, 31
      %v1138 = vpop.permute.xlu0 %1137
      %1139 = vrot.lane.b32.xlu0 %v1116, 31
      %v1140 = vpop.permute.xlu0 %1139
      %1141 = vrot.lane.b32.xlu0 %v1117, 31
      %v1142 = vpop.permute.xlu0 %1141
      %1143 = vrot.lane.b32.xlu0 %v1118, 31
      %v1144 = vpop.permute.xlu0 %1143
      %1145 = vrot.lane.b32.xlu0 %v1119, 31
      %v1146 = vpop.permute.xlu0 %1145
      %vm1147 = vcmask 252928
      %v1148 = vsel %vm1147, %v1130, %v1132
      %v1149 = vsel %vm1147, %v1132, %v1134
      %v1150 = vsel %vm1147, %v1134, %v1136
      %v1151 = vsel %vm1147, %v1136, %v1138
      %v1152 = vsel %vm1147, %v1138, %v1140
      %v1153 = vsel %vm1147, %v1140, %v1142
      %v1154 = vsel %vm1147, %v1142, %v1144
      %v1155 = vsel %vm1147, %v1144, %v1146
      %v1157 = vsel %vm758, %v1110, 0
      %v1160 = vsel %vm762, %v1148, 0
      %v1163 = vsel %vm762, %v1149, 0
      %v1166 = vsel %vm762, %v1150, 0
      %v1169 = vsel %vm762, %v1151, 0
      %v1172 = vsel %vm762, %v1152, 0
      %v1175 = vsel %vm762, %v1153, 0
      %v1178 = vsel %vm762, %v1154, 0
      %v1181 = vsel %vm762, %v1155, 0
      %1183 = vmatpush.bf16.msra.mxu0 0
      %1184 = vmatpush.bf16.msra.mxu0 0
      %1185 = vmatpush.bf16.msra.mxu0 0
      %1186 = vmatpush.bf16.msra.mxu0 0
      %1187 = vmatpush.bf16.msra.mxu0 0
      %1188 = vmatpush.bf16.msra.mxu0 0
      %1189 = vmatpush.bf16.msra.mxu0 0
      %1190 = vmatpush.bf16.msra.mxu0 %v1160
      %1191 = vmatmul.bf16.gmra.mxu0 %v1157
      %v1192 = vpop.f32.mrf.mxu0
      %v1193 = vadd.f32 0.0, %v1192
      %v1194 = vpop.f32.mrf.mxu0
      %1195 = vdwg.mxu0
      %1196 = vmatpush.bf16.msra.mxu0 0
      %1197 = vmatpush.bf16.msra.mxu0 0
      %1198 = vmatpush.bf16.msra.mxu0 0
      %1199 = vmatpush.bf16.msra.mxu0 0
      %1200 = vmatpush.bf16.msra.mxu0 0
      %1201 = vmatpush.bf16.msra.mxu0 0
      %1202 = vmatpush.bf16.msra.mxu0 0
      %1203 = vmatpush.bf16.msra.mxu0 %v1163
      %1204 = vmatmul.bf16.gmra.mxu0 %v1157
      %v1205 = vpop.f32.mrf.mxu0
      %v1206 = vadd.f32 0.0, %v1205
      %v1207 = vpop.f32.mrf.mxu0
      %1208 = vdwg.mxu0
      %1209 = vmatpush.bf16.msra.mxu0 0
      %1210 = vmatpush.bf16.msra.mxu0 0
      %1211 = vmatpush.bf16.msra.mxu0 0
      %1212 = vmatpush.bf16.msra.mxu0 0
      %1213 = vmatpush.bf16.msra.mxu0 0
      %1214 = vmatpush.bf16.msra.mxu0 0
      %1215 = vmatpush.bf16.msra.mxu0 0
      %1216 = vmatpush.bf16.msra.mxu0 %v1166
      %1217 = vmatmul.bf16.gmra.mxu0 %v1157
      %v1218 = vpop.f32.mrf.mxu0
      %v1219 = vadd.f32 0.0, %v1218
      %v1220 = vpop.f32.mrf.mxu0
      %1221 = vdwg.mxu0
      %1222 = vmatpush.bf16.msra.mxu0 0
      %1223 = vmatpush.bf16.msra.mxu0 0
      %1224 = vmatpush.bf16.msra.mxu0 0
      %1225 = vmatpush.bf16.msra.mxu0 0
      %1226 = vmatpush.bf16.msra.mxu0 0
      %1227 = vmatpush.bf16.msra.mxu0 0
      %1228 = vmatpush.bf16.msra.mxu0 0
      %1229 = vmatpush.bf16.msra.mxu0 %v1169
      %1230 = vmatmul.bf16.gmra.mxu0 %v1157
      %v1231 = vpop.f32.mrf.mxu0
      %v1232 = vadd.f32 0.0, %v1231
      %v1233 = vpop.f32.mrf.mxu0
      %1234 = vdwg.mxu0
      %1235 = vmatpush.bf16.msra.mxu0 0
      %1236 = vmatpush.bf16.msra.mxu0 0
      %1237 = vmatpush.bf16.msra.mxu0 0
      %1238 = vmatpush.bf16.msra.mxu0 0
      %1239 = vmatpush.bf16.msra.mxu0 0
      %1240 = vmatpush.bf16.msra.mxu0 0
      %1241 = vmatpush.bf16.msra.mxu0 0
      %1242 = vmatpush.bf16.msra.mxu0 %v1172
      %1243 = vmatmul.bf16.gmra.mxu0 %v1157
      %v1244 = vpop.f32.mrf.mxu0
      %v1245 = vadd.f32 0.0, %v1244
      %v1246 = vpop.f32.mrf.mxu0
      %1247 = vdwg.mxu0
      %1248 = vmatpush.bf16.msra.mxu0 0
      %1249 = vmatpush.bf16.msra.mxu0 0
      %1250 = vmatpush.bf16.msra.mxu0 0
      %1251 = vmatpush.bf16.msra.mxu0 0
      %1252 = vmatpush.bf16.msra.mxu0 0
      %1253 = vmatpush.bf16.msra.mxu0 0
      %1254 = vmatpush.bf16.msra.mxu0 0
      %1255 = vmatpush.bf16.msra.mxu0 %v1175
      %1256 = vmatmul.bf16.gmra.mxu0 %v1157
      %v1257 = vpop.f32.mrf.mxu0
      %v1258 = vadd.f32 0.0, %v1257
      %v1259 = vpop.f32.mrf.mxu0
      %1260 = vdwg.mxu0
      %1261 = vmatpush.bf16.msra.mxu0 0
      %1262 = vmatpush.bf16.msra.mxu0 0
      %1263 = vmatpush.bf16.msra.mxu0 0
      %1264 = vmatpush.bf16.msra.mxu0 0
      %1265 = vmatpush.bf16.msra.mxu0 0
      %1266 = vmatpush.bf16.msra.mxu0 0
      %1267 = vmatpush.bf16.msra.mxu0 0
      %1268 = vmatpush.bf16.msra.mxu0 %v1178
      %1269 = vmatmul.bf16.gmra.mxu0 %v1157
      %v1270 = vpop.f32.mrf.mxu0
      %v1271 = vadd.f32 0.0, %v1270
      %v1272 = vpop.f32.mrf.mxu0
      %1273 = vdwg.mxu0
      %1274 = vmatpush.bf16.msra.mxu0 0
      %1275 = vmatpush.bf16.msra.mxu0 0
      %1276 = vmatpush.bf16.msra.mxu0 0
      %1277 = vmatpush.bf16.msra.mxu0 0
      %1278 = vmatpush.bf16.msra.mxu0 0
      %1279 = vmatpush.bf16.msra.mxu0 0
      %1280 = vmatpush.bf16.msra.mxu0 0
      %1281 = vmatpush.bf16.msra.mxu0 %v1181
      %1282 = vmatmul.bf16.gmra.mxu0 %v1157
      %v1283 = vpop.f32.mrf.mxu0
      %v1284 = vadd.f32 0.0, %v1283
      %v1285 = vpop.f32.mrf.mxu0
      %1286 = vdwg.mxu0
      %v1287 = vadd.f32 %v964, %v1193
      %v1288 = vadd.f32 %v977, %v1206
      %v1289 = vadd.f32 %v990, %v1219
      %v1290 = vadd.f32 %v1003, %v1232
      %v1291 = vadd.f32 %v1016, %v1245
      %v1292 = vadd.f32 %v1029, %v1258
      %v1293 = vadd.f32 %v1042, %v1271
      %v1294 = vadd.f32 %v1055, %v1284
      %1295 = vrot.lane.b32.xlu0 %v651, 127
      %v1296 = vpop.permute.xlu0 %1295
      %1297 = vrot.lane.b32.xlu0 %v652, 127
      %v1298 = vpop.permute.xlu0 %1297
      %1299 = vrot.lane.b32.xlu0 %v653, 127
      %v1300 = vpop.permute.xlu0 %1299
      %1301 = vrot.lane.b32.xlu0 %v654, 127
      %v1302 = vpop.permute.xlu0 %1301
      %1303 = vrot.lane.b32.xlu0 %v655, 127
      %v1304 = vpop.permute.xlu0 %1303
      %1305 = vrot.lane.b32.xlu0 %v656, 127
      %v1306 = vpop.permute.xlu0 %1305
      %1307 = vrot.lane.b32.xlu0 %v657, 127
      %v1308 = vpop.permute.xlu0 %1307
      %1309 = vrot.lane.b32.xlu0 %v658, 127
      %v1310 = vpop.permute.xlu0 %1309
      %vm1311 = vcmask 1039360
      %v1312 = vsel %vm1311, %v1296, %v1298
      %v1313 = vsel %vm1311, %v1298, %v1300
      %v1314 = vsel %vm1311, %v1300, %v1302
      %v1315 = vsel %vm1311, %v1302, %v1304
      %v1316 = vsel %vm1311, %v1304, %v1306
      %v1317 = vsel %vm1311, %v1306, %v1308
      %v1318 = vsel %vm1311, %v1308, %v1310
      %v1328 = vmul.f32 %v641, %v1296
      %v1329 = vmul.f32 %v642, %v1312
      %v1330 = vmul.f32 %v643, %v1313
      %v1331 = vmul.f32 %v644, %v1314
      %v1332 = vmul.f32 %v645, %v1315
      %v1333 = vmul.f32 %v646, %v1316
      %v1334 = vmul.f32 %v647, %v1317
      %v1335 = vmul.f32 %v648, %v1318
      %v1336 = vmul.f32 %v649, %v1310
      %s1337 = scalar_lea.vmem %s4, 12
      %v1338 = vld [vmem:[%s1337] sm:$0xf]
      %v1339 = vpack.c.bf16 %v1328, %v1328
      %v1340 = vpack.c.bf16 %v1329, %v1329
      %v1341 = vpack.c.bf16 %v1330, %v1330
      %v1342 = vpack.c.bf16 %v1331, %v1331
      %v1343 = vpack.c.bf16 %v1332, %v1332
      %v1344 = vpack.c.bf16 %v1333, %v1333
      %v1345 = vpack.c.bf16 %v1334, %v1334
      %v1346 = vpack.c.bf16 %v1335, %v1335
      %v1347 = vpack.c.bf16 %v1336, %v1336
      %1357 = vrot.lane.b32.xlu0 %v1339, 1
      %v1358 = vpop.permute.xlu0 %1357
      %1359 = vrot.lane.b32.xlu0 %v1340, 1
      %v1360 = vpop.permute.xlu0 %1359
      %1361 = vrot.lane.b32.xlu0 %v1341, 1
      %v1362 = vpop.permute.xlu0 %1361
      %1363 = vrot.lane.b32.xlu0 %v1342, 1
      %v1364 = vpop.permute.xlu0 %1363
      %1365 = vrot.lane.b32.xlu0 %v1343, 1
      %v1366 = vpop.permute.xlu0 %1365
      %1367 = vrot.lane.b32.xlu0 %v1344, 1
      %v1368 = vpop.permute.xlu0 %1367
      %1369 = vrot.lane.b32.xlu0 %v1345, 1
      %v1370 = vpop.permute.xlu0 %1369
      %1371 = vrot.lane.b32.xlu0 %v1346, 1
      %v1372 = vpop.permute.xlu0 %1371
      %1373 = vrot.lane.b32.xlu0 %v1347, 1
      %v1374 = vpop.permute.xlu0 %1373
      %vm1375 = vcmask 7168
      %v1376 = vsel %vm1375, %v1358, %v1360
      %v1377 = vsel %vm1375, %v1360, %v1362
      %v1378 = vsel %vm1375, %v1362, %v1364
      %v1379 = vsel %vm1375, %v1364, %v1366
      %v1380 = vsel %vm1375, %v1366, %v1368
      %v1381 = vsel %vm1375, %v1368, %v1370
      %v1382 = vsel %vm1375, %v1370, %v1372
      %v1383 = vsel %vm1375, %v1372, %v1374
      %v1385 = vsel %vm758, %v1338, 0
      %v1388 = vsel %vm762, %v1376, 0
      %v1391 = vsel %vm762, %v1377, 0
      %v1394 = vsel %vm762, %v1378, 0
      %v1397 = vsel %vm762, %v1379, 0
      %v1400 = vsel %vm762, %v1380, 0
      %v1403 = vsel %vm762, %v1381, 0
      %v1406 = vsel %vm762, %v1382, 0
      %v1409 = vsel %vm762, %v1383, 0
      %1411 = vmatpush.bf16.msra.mxu0 0
      %1412 = vmatpush.bf16.msra.mxu0 0
      %1413 = vmatpush.bf16.msra.mxu0 0
      %1414 = vmatpush.bf16.msra.mxu0 0
      %1415 = vmatpush.bf16.msra.mxu0 0
      %1416 = vmatpush.bf16.msra.mxu0 0
      %1417 = vmatpush.bf16.msra.mxu0 0
      %1418 = vmatpush.bf16.msra.mxu0 %v1388
      %1419 = vmatmul.bf16.gmra.mxu0 %v1385
      %v1420 = vpop.f32.mrf.mxu0
      %v1421 = vadd.f32 0.0, %v1420
      %v1422 = vpop.f32.mrf.mxu0
      %1423 = vdwg.mxu0
      %1424 = vmatpush.bf16.msra.mxu0 0
      %1425 = vmatpush.bf16.msra.mxu0 0
      %1426 = vmatpush.bf16.msra.mxu0 0
      %1427 = vmatpush.bf16.msra.mxu0 0
      %1428 = vmatpush.bf16.msra.mxu0 0
      %1429 = vmatpush.bf16.msra.mxu0 0
      %1430 = vmatpush.bf16.msra.mxu0 0
      %1431 = vmatpush.bf16.msra.mxu0 %v1391
      %1432 = vmatmul.bf16.gmra.mxu0 %v1385
      %v1433 = vpop.f32.mrf.mxu0
      %v1434 = vadd.f32 0.0, %v1433
      %v1435 = vpop.f32.mrf.mxu0
      %1436 = vdwg.mxu0
      %1437 = vmatpush.bf16.msra.mxu0 0
      %1438 = vmatpush.bf16.msra.mxu0 0
      %1439 = vmatpush.bf16.msra.mxu0 0
      %1440 = vmatpush.bf16.msra.mxu0 0
      %1441 = vmatpush.bf16.msra.mxu0 0
      %1442 = vmatpush.bf16.msra.mxu0 0
      %1443 = vmatpush.bf16.msra.mxu0 0
      %1444 = vmatpush.bf16.msra.mxu0 %v1394
      %1445 = vmatmul.bf16.gmra.mxu0 %v1385
      %v1446 = vpop.f32.mrf.mxu0
      %v1447 = vadd.f32 0.0, %v1446
      %v1448 = vpop.f32.mrf.mxu0
      %1449 = vdwg.mxu0
      %1450 = vmatpush.bf16.msra.mxu0 0
      %1451 = vmatpush.bf16.msra.mxu0 0
      %1452 = vmatpush.bf16.msra.mxu0 0
      %1453 = vmatpush.bf16.msra.mxu0 0
      %1454 = vmatpush.bf16.msra.mxu0 0
      %1455 = vmatpush.bf16.msra.mxu0 0
      %1456 = vmatpush.bf16.msra.mxu0 0
      %1457 = vmatpush.bf16.msra.mxu0 %v1397
      %1458 = vmatmul.bf16.gmra.mxu0 %v1385
      %v1459 = vpop.f32.mrf.mxu0
      %v1460 = vadd.f32 0.0, %v1459
      %v1461 = vpop.f32.mrf.mxu0
      %1462 = vdwg.mxu0
      %1463 = vmatpush.bf16.msra.mxu0 0
      %1464 = vmatpush.bf16.msra.mxu0 0
      %1465 = vmatpush.bf16.msra.mxu0 0
      %1466 = vmatpush.bf16.msra.mxu0 0
      %1467 = vmatpush.bf16.msra.mxu0 0
      %1468 = vmatpush.bf16.msra.mxu0 0
      %1469 = vmatpush.bf16.msra.mxu0 0
      %1470 = vmatpush.bf16.msra.mxu0 %v1400
      %1471 = vmatmul.bf16.gmra.mxu0 %v1385
      %v1472 = vpop.f32.mrf.mxu0
      %v1473 = vadd.f32 0.0, %v1472
      %v1474 = vpop.f32.mrf.mxu0
      %1475 = vdwg.mxu0
      %1476 = vmatpush.bf16.msra.mxu0 0
      %1477 = vmatpush.bf16.msra.mxu0 0
      %1478 = vmatpush.bf16.msra.mxu0 0
      %1479 = vmatpush.bf16.msra.mxu0 0
      %1480 = vmatpush.bf16.msra.mxu0 0
      %1481 = vmatpush.bf16.msra.mxu0 0
      %1482 = vmatpush.bf16.msra.mxu0 0
      %1483 = vmatpush.bf16.msra.mxu0 %v1403
      %1484 = vmatmul.bf16.gmra.mxu0 %v1385
      %v1485 = vpop.f32.mrf.mxu0
      %v1486 = vadd.f32 0.0, %v1485
      %v1487 = vpop.f32.mrf.mxu0
      %1488 = vdwg.mxu0
      %1489 = vmatpush.bf16.msra.mxu0 0
      %1490 = vmatpush.bf16.msra.mxu0 0
      %1491 = vmatpush.bf16.msra.mxu0 0
      %1492 = vmatpush.bf16.msra.mxu0 0
      %1493 = vmatpush.bf16.msra.mxu0 0
      %1494 = vmatpush.bf16.msra.mxu0 0
      %1495 = vmatpush.bf16.msra.mxu0 0
      %1496 = vmatpush.bf16.msra.mxu0 %v1406
      %1497 = vmatmul.bf16.gmra.mxu0 %v1385
      %v1498 = vpop.f32.mrf.mxu0
      %v1499 = vadd.f32 0.0, %v1498
      %v1500 = vpop.f32.mrf.mxu0
      %1501 = vdwg.mxu0
      %1502 = vmatpush.bf16.msra.mxu0 0
      %1503 = vmatpush.bf16.msra.mxu0 0
      %1504 = vmatpush.bf16.msra.mxu0 0
      %1505 = vmatpush.bf16.msra.mxu0 0
      %1506 = vmatpush.bf16.msra.mxu0 0
      %1507 = vmatpush.bf16.msra.mxu0 0
      %1508 = vmatpush.bf16.msra.mxu0 0
      %1509 = vmatpush.bf16.msra.mxu0 %v1409
      %1510 = vmatmul.bf16.gmra.mxu0 %v1385
      %v1511 = vpop.f32.mrf.mxu0
      %v1512 = vadd.f32 0.0, %v1511
      %v1513 = vpop.f32.mrf.mxu0
      %1514 = vdwg.mxu0
      %v1515 = vadd.f32 %v1287, %v1421
      %v1516 = vadd.f32 %v1288, %v1434
      %v1517 = vadd.f32 %v1289, %v1447
      %v1518 = vadd.f32 %v1290, %v1460
      %v1519 = vadd.f32 %v1291, %v1473
      %v1520 = vadd.f32 %v1292, %v1486
      %v1521 = vadd.f32 %v1293, %v1499
      %v1522 = vadd.f32 %v1294, %v1512
      %s1523 = scalar_lea.vmem %s4, 16
      %v1524 = vld [vmem:[%s1523] sm:$0xf]
      %v1526 = vsel %vm758, %v1524, 0
      %v1529 = vsel %vm762, %v714, 0
      %v1532 = vsel %vm762, %v715, 0
      %v1535 = vsel %vm762, %v716, 0
      %v1538 = vsel %vm762, %v717, 0
      %v1541 = vsel %vm762, %v718, 0
      %v1544 = vsel %vm762, %v719, 0
      %v1547 = vsel %vm762, %v720, 0
      %v1550 = vsel %vm762, %v721, 0
      %1552 = vmatpush.bf16.msra.mxu0 0
      %1553 = vmatpush.bf16.msra.mxu0 0
      %1554 = vmatpush.bf16.msra.mxu0 0
      %1555 = vmatpush.bf16.msra.mxu0 0
      %1556 = vmatpush.bf16.msra.mxu0 0
      %1557 = vmatpush.bf16.msra.mxu0 0
      %1558 = vmatpush.bf16.msra.mxu0 0
      %1559 = vmatpush.bf16.msra.mxu0 %v1529
      %1560 = vmatmul.bf16.gmra.mxu0 %v1526
      %v1561 = vpop.f32.mrf.mxu0
      %v1562 = vadd.f32 0.0, %v1561
      %v1563 = vpop.f32.mrf.mxu0
      %1564 = vdwg.mxu0
      %1565 = vmatpush.bf16.msra.mxu0 0
      %1566 = vmatpush.bf16.msra.mxu0 0
      %1567 = vmatpush.bf16.msra.mxu0 0
      %1568 = vmatpush.bf16.msra.mxu0 0
      %1569 = vmatpush.bf16.msra.mxu0 0
      %1570 = vmatpush.bf16.msra.mxu0 0
      %1571 = vmatpush.bf16.msra.mxu0 0
      %1572 = vmatpush.bf16.msra.mxu0 %v1532
      %1573 = vmatmul.bf16.gmra.mxu0 %v1526
      %v1574 = vpop.f32.mrf.mxu0
      %v1575 = vadd.f32 0.0, %v1574
      %v1576 = vpop.f32.mrf.mxu0
      %1577 = vdwg.mxu0
      %1578 = vmatpush.bf16.msra.mxu0 0
      %1579 = vmatpush.bf16.msra.mxu0 0
      %1580 = vmatpush.bf16.msra.mxu0 0
      %1581 = vmatpush.bf16.msra.mxu0 0
      %1582 = vmatpush.bf16.msra.mxu0 0
      %1583 = vmatpush.bf16.msra.mxu0 0
      %1584 = vmatpush.bf16.msra.mxu0 0
      %1585 = vmatpush.bf16.msra.mxu0 %v1535
      %1586 = vmatmul.bf16.gmra.mxu0 %v1526
      %v1587 = vpop.f32.mrf.mxu0
      %v1588 = vadd.f32 0.0, %v1587
      %v1589 = vpop.f32.mrf.mxu0
      %1590 = vdwg.mxu0
      %1591 = vmatpush.bf16.msra.mxu0 0
      %1592 = vmatpush.bf16.msra.mxu0 0
      %1593 = vmatpush.bf16.msra.mxu0 0
      %1594 = vmatpush.bf16.msra.mxu0 0
      %1595 = vmatpush.bf16.msra.mxu0 0
      %1596 = vmatpush.bf16.msra.mxu0 0
      %1597 = vmatpush.bf16.msra.mxu0 0
      %1598 = vmatpush.bf16.msra.mxu0 %v1538
      %1599 = vmatmul.bf16.gmra.mxu0 %v1526
      %v1600 = vpop.f32.mrf.mxu0
      %v1601 = vadd.f32 0.0, %v1600
      %v1602 = vpop.f32.mrf.mxu0
      %1603 = vdwg.mxu0
      %1604 = vmatpush.bf16.msra.mxu0 0
      %1605 = vmatpush.bf16.msra.mxu0 0
      %1606 = vmatpush.bf16.msra.mxu0 0
      %1607 = vmatpush.bf16.msra.mxu0 0
      %1608 = vmatpush.bf16.msra.mxu0 0
      %1609 = vmatpush.bf16.msra.mxu0 0
      %1610 = vmatpush.bf16.msra.mxu0 0
      %1611 = vmatpush.bf16.msra.mxu0 %v1541
      %1612 = vmatmul.bf16.gmra.mxu0 %v1526
      %v1613 = vpop.f32.mrf.mxu0
      %v1614 = vadd.f32 0.0, %v1613
      %v1615 = vpop.f32.mrf.mxu0
      %1616 = vdwg.mxu0
      %1617 = vmatpush.bf16.msra.mxu0 0
      %1618 = vmatpush.bf16.msra.mxu0 0
      %1619 = vmatpush.bf16.msra.mxu0 0
      %1620 = vmatpush.bf16.msra.mxu0 0
      %1621 = vmatpush.bf16.msra.mxu0 0
      %1622 = vmatpush.bf16.msra.mxu0 0
      %1623 = vmatpush.bf16.msra.mxu0 0
      %1624 = vmatpush.bf16.msra.mxu0 %v1544
      %1625 = vmatmul.bf16.gmra.mxu0 %v1526
      %v1626 = vpop.f32.mrf.mxu0
      %v1627 = vadd.f32 0.0, %v1626
      %v1628 = vpop.f32.mrf.mxu0
      %1629 = vdwg.mxu0
      %1630 = vmatpush.bf16.msra.mxu0 0
      %1631 = vmatpush.bf16.msra.mxu0 0
      %1632 = vmatpush.bf16.msra.mxu0 0
      %1633 = vmatpush.bf16.msra.mxu0 0
      %1634 = vmatpush.bf16.msra.mxu0 0
      %1635 = vmatpush.bf16.msra.mxu0 0
      %1636 = vmatpush.bf16.msra.mxu0 0
      %1637 = vmatpush.bf16.msra.mxu0 %v1547
      %1638 = vmatmul.bf16.gmra.mxu0 %v1526
      %v1639 = vpop.f32.mrf.mxu0
      %v1640 = vadd.f32 0.0, %v1639
      %v1641 = vpop.f32.mrf.mxu0
      %1642 = vdwg.mxu0
      %1643 = vmatpush.bf16.msra.mxu0 0
      %1644 = vmatpush.bf16.msra.mxu0 0
      %1645 = vmatpush.bf16.msra.mxu0 0
      %1646 = vmatpush.bf16.msra.mxu0 0
      %1647 = vmatpush.bf16.msra.mxu0 0
      %1648 = vmatpush.bf16.msra.mxu0 0
      %1649 = vmatpush.bf16.msra.mxu0 0
      %1650 = vmatpush.bf16.msra.mxu0 %v1550
      %1651 = vmatmul.bf16.gmra.mxu0 %v1526
      %v1652 = vpop.f32.mrf.mxu0
      %v1653 = vadd.f32 0.0, %v1652
      %v1654 = vpop.f32.mrf.mxu0
      %1655 = vdwg.mxu0
      %v1656 = vadd.f32 %v1515, %v1562
      %v1657 = vadd.f32 %v1516, %v1575
      %v1658 = vadd.f32 %v1517, %v1588
      %v1659 = vadd.f32 %v1518, %v1601
      %v1660 = vadd.f32 %v1519, %v1614
      %v1661 = vadd.f32 %v1520, %v1627
      %v1662 = vadd.f32 %v1521, %v1640
      %v1663 = vadd.f32 %v1522, %v1653
      %v1664 = vld [vmem:[#allocation2 + $0x8] sm:$0xff]
      %v1665 = vld [vmem:[#allocation2 + $0x10] sm:$0xff]
      %v1666 = vld [vmem:[#allocation2 + $0x18] sm:$0xff]
      %v1667 = vld [vmem:[#allocation2 + $0x20] sm:$0xff]
      %v1668 = vld [vmem:[#allocation2 + $0x28] sm:$0xff]
      %v1669 = vld [vmem:[#allocation2 + $0x30] sm:$0xff]
      %v1670 = vld [vmem:[#allocation2 + $0x38] sm:$0xff]
      %v1671 = vld [vmem:[#allocation2 + $0x40] sm:$0xff]
      %v1672 = vld [vmem:[#allocation2 + $0x48] sm:$0xff]
      %1673 = vrot.lane.b32.xlu0 %v1059, 1
      %v1674 = vpop.permute.xlu0 %1673
      %1675 = vrot.lane.b32.xlu0 %v1060, 1
      %v1676 = vpop.permute.xlu0 %1675
      %1677 = vrot.lane.b32.xlu0 %v1061, 1
      %v1678 = vpop.permute.xlu0 %1677
      %1679 = vrot.lane.b32.xlu0 %v1062, 1
      %v1680 = vpop.permute.xlu0 %1679
      %1681 = vrot.lane.b32.xlu0 %v1063, 1
      %v1682 = vpop.permute.xlu0 %1681
      %1683 = vrot.lane.b32.xlu0 %v1064, 1
      %v1684 = vpop.permute.xlu0 %1683
      %1685 = vrot.lane.b32.xlu0 %v1065, 1
      %v1686 = vpop.permute.xlu0 %1685
      %1687 = vrot.lane.b32.xlu0 %v1066, 1
      %v1688 = vpop.permute.xlu0 %1687
      %vm1689 = vcmask 7168
      %v1690 = vsel %vm1689, %v1674, %v1676
      %v1691 = vsel %vm1689, %v1676, %v1678
      %v1692 = vsel %vm1689, %v1678, %v1680
      %v1693 = vsel %vm1689, %v1680, %v1682
      %v1694 = vsel %vm1689, %v1682, %v1684
      %v1695 = vsel %vm1689, %v1684, %v1686
      %v1696 = vsel %vm1689, %v1686, %v1688
      %v1706 = vmul.f32 %v1664, %v1674
      %v1707 = vmul.f32 %v1665, %v1690
      %v1708 = vmul.f32 %v1666, %v1691
      %v1709 = vmul.f32 %v1667, %v1692
      %v1710 = vmul.f32 %v1668, %v1693
      %v1711 = vmul.f32 %v1669, %v1694
      %v1712 = vmul.f32 %v1670, %v1695
      %v1713 = vmul.f32 %v1671, %v1696
      %v1714 = vmul.f32 %v1672, %v1688
      %s1715 = scalar_lea.vmem %s4, 20
      %v1716 = vld [vmem:[%s1715] sm:$0xf]
      %v1717 = vpack.c.bf16 %v1706, %v1706
      %v1718 = vpack.c.bf16 %v1707, %v1707
      %v1719 = vpack.c.bf16 %v1708, %v1708
      %v1720 = vpack.c.bf16 %v1709, %v1709
      %v1721 = vpack.c.bf16 %v1710, %v1710
      %v1722 = vpack.c.bf16 %v1711, %v1711
      %v1723 = vpack.c.bf16 %v1712, %v1712
      %v1724 = vpack.c.bf16 %v1713, %v1713
      %v1725 = vpack.c.bf16 %v1714, %v1714
      %1735 = vrot.lane.b32.xlu0 %v1717, 127
      %v1736 = vpop.permute.xlu0 %1735
      %1737 = vrot.lane.b32.xlu0 %v1718, 127
      %v1738 = vpop.permute.xlu0 %1737
      %1739 = vrot.lane.b32.xlu0 %v1719, 127
      %v1740 = vpop.permute.xlu0 %1739
      %1741 = vrot.lane.b32.xlu0 %v1720, 127
      %v1742 = vpop.permute.xlu0 %1741
      %1743 = vrot.lane.b32.xlu0 %v1721, 127
      %v1744 = vpop.permute.xlu0 %1743
      %1745 = vrot.lane.b32.xlu0 %v1722, 127
      %v1746 = vpop.permute.xlu0 %1745
      %1747 = vrot.lane.b32.xlu0 %v1723, 127
      %v1748 = vpop.permute.xlu0 %1747
      %1749 = vrot.lane.b32.xlu0 %v1724, 127
      %v1750 = vpop.permute.xlu0 %1749
      %1751 = vrot.lane.b32.xlu0 %v1725, 127
      %v1752 = vpop.permute.xlu0 %1751
      %vm1753 = vcmask 1039360
      %v1754 = vsel %vm1753, %v1736, %v1738
      %v1755 = vsel %vm1753, %v1738, %v1740
      %v1756 = vsel %vm1753, %v1740, %v1742
      %v1757 = vsel %vm1753, %v1742, %v1744
      %v1758 = vsel %vm1753, %v1744, %v1746
      %v1759 = vsel %vm1753, %v1746, %v1748
      %v1760 = vsel %vm1753, %v1748, %v1750
      %v1761 = vsel %vm1753, %v1750, %v1752
      %v1763 = vsel %vm758, %v1716, 0
      %v1766 = vsel %vm762, %v1754, 0
      %v1769 = vsel %vm762, %v1755, 0
      %v1772 = vsel %vm762, %v1756, 0
      %v1775 = vsel %vm762, %v1757, 0
      %v1778 = vsel %vm762, %v1758, 0
      %v1781 = vsel %vm762, %v1759, 0
      %v1784 = vsel %vm762, %v1760, 0
      %v1787 = vsel %vm762, %v1761, 0
      %1789 = vmatpush.bf16.msra.mxu0 0
      %1790 = vmatpush.bf16.msra.mxu0 0
      %1791 = vmatpush.bf16.msra.mxu0 0
      %1792 = vmatpush.bf16.msra.mxu0 0
      %1793 = vmatpush.bf16.msra.mxu0 0
      %1794 = vmatpush.bf16.msra.mxu0 0
      %1795 = vmatpush.bf16.msra.mxu0 0
      %1796 = vmatpush.bf16.msra.mxu0 %v1766
      %1797 = vmatmul.bf16.gmra.mxu0 %v1763
      %v1798 = vpop.f32.mrf.mxu0
      %v1799 = vadd.f32 0.0, %v1798
      %v1800 = vpop.f32.mrf.mxu0
      %1801 = vdwg.mxu0
      %1802 = vmatpush.bf16.msra.mxu0 0
      %1803 = vmatpush.bf16.msra.mxu0 0
      %1804 = vmatpush.bf16.msra.mxu0 0
      %1805 = vmatpush.bf16.msra.mxu0 0
      %1806 = vmatpush.bf16.msra.mxu0 0
      %1807 = vmatpush.bf16.msra.mxu0 0
      %1808 = vmatpush.bf16.msra.mxu0 0
      %1809 = vmatpush.bf16.msra.mxu0 %v1769
      %1810 = vmatmul.bf16.gmra.mxu0 %v1763
      %v1811 = vpop.f32.mrf.mxu0
      %v1812 = vadd.f32 0.0, %v1811
      %v1813 = vpop.f32.mrf.mxu0
      %1814 = vdwg.mxu0
      %1815 = vmatpush.bf16.msra.mxu0 0
      %1816 = vmatpush.bf16.msra.mxu0 0
      %1817 = vmatpush.bf16.msra.mxu0 0
      %1818 = vmatpush.bf16.msra.mxu0 0
      %1819 = vmatpush.bf16.msra.mxu0 0
      %1820 = vmatpush.bf16.msra.mxu0 0
      %1821 = vmatpush.bf16.msra.mxu0 0
      %1822 = vmatpush.bf16.msra.mxu0 %v1772
      %1823 = vmatmul.bf16.gmra.mxu0 %v1763
      %v1824 = vpop.f32.mrf.mxu0
      %v1825 = vadd.f32 0.0, %v1824
      %v1826 = vpop.f32.mrf.mxu0
      %1827 = vdwg.mxu0
      %1828 = vmatpush.bf16.msra.mxu0 0
      %1829 = vmatpush.bf16.msra.mxu0 0
      %1830 = vmatpush.bf16.msra.mxu0 0
      %1831 = vmatpush.bf16.msra.mxu0 0
      %1832 = vmatpush.bf16.msra.mxu0 0
      %1833 = vmatpush.bf16.msra.mxu0 0
      %1834 = vmatpush.bf16.msra.mxu0 0
      %1835 = vmatpush.bf16.msra.mxu0 %v1775
      %1836 = vmatmul.bf16.gmra.mxu0 %v1763
      %v1837 = vpop.f32.mrf.mxu0
      %v1838 = vadd.f32 0.0, %v1837
      %v1839 = vpop.f32.mrf.mxu0
      %1840 = vdwg.mxu0
      %1841 = vmatpush.bf16.msra.mxu0 0
      %1842 = vmatpush.bf16.msra.mxu0 0
      %1843 = vmatpush.bf16.msra.mxu0 0
      %1844 = vmatpush.bf16.msra.mxu0 0
      %1845 = vmatpush.bf16.msra.mxu0 0
      %1846 = vmatpush.bf16.msra.mxu0 0
      %1847 = vmatpush.bf16.msra.mxu0 0
      %1848 = vmatpush.bf16.msra.mxu0 %v1778
      %1849 = vmatmul.bf16.gmra.mxu0 %v1763
      %v1850 = vpop.f32.mrf.mxu0
      %v1851 = vadd.f32 0.0, %v1850
      %v1852 = vpop.f32.mrf.mxu0
      %1853 = vdwg.mxu0
      %1854 = vmatpush.bf16.msra.mxu0 0
      %1855 = vmatpush.bf16.msra.mxu0 0
      %1856 = vmatpush.bf16.msra.mxu0 0
      %1857 = vmatpush.bf16.msra.mxu0 0
      %1858 = vmatpush.bf16.msra.mxu0 0
      %1859 = vmatpush.bf16.msra.mxu0 0
      %1860 = vmatpush.bf16.msra.mxu0 0
      %1861 = vmatpush.bf16.msra.mxu0 %v1781
      %1862 = vmatmul.bf16.gmra.mxu0 %v1763
      %v1863 = vpop.f32.mrf.mxu0
      %v1864 = vadd.f32 0.0, %v1863
      %v1865 = vpop.f32.mrf.mxu0
      %1866 = vdwg.mxu0
      %1867 = vmatpush.bf16.msra.mxu0 0
      %1868 = vmatpush.bf16.msra.mxu0 0
      %1869 = vmatpush.bf16.msra.mxu0 0
      %1870 = vmatpush.bf16.msra.mxu0 0
      %1871 = vmatpush.bf16.msra.mxu0 0
      %1872 = vmatpush.bf16.msra.mxu0 0
      %1873 = vmatpush.bf16.msra.mxu0 0
      %1874 = vmatpush.bf16.msra.mxu0 %v1784
      %1875 = vmatmul.bf16.gmra.mxu0 %v1763
      %v1876 = vpop.f32.mrf.mxu0
      %v1877 = vadd.f32 0.0, %v1876
      %v1878 = vpop.f32.mrf.mxu0
      %1879 = vdwg.mxu0
      %1880 = vmatpush.bf16.msra.mxu0 0
      %1881 = vmatpush.bf16.msra.mxu0 0
      %1882 = vmatpush.bf16.msra.mxu0 0
      %1883 = vmatpush.bf16.msra.mxu0 0
      %1884 = vmatpush.bf16.msra.mxu0 0
      %1885 = vmatpush.bf16.msra.mxu0 0
      %1886 = vmatpush.bf16.msra.mxu0 0
      %1887 = vmatpush.bf16.msra.mxu0 %v1787
      %1888 = vmatmul.bf16.gmra.mxu0 %v1763
      %v1889 = vpop.f32.mrf.mxu0
      %v1890 = vadd.f32 0.0, %v1889
      %v1891 = vpop.f32.mrf.mxu0
      %1892 = vdwg.mxu0
      %v1893 = vadd.f32 %v1656, %v1799
      %v1894 = vadd.f32 %v1657, %v1812
      %v1895 = vadd.f32 %v1658, %v1825
      %v1896 = vadd.f32 %v1659, %v1838
      %v1897 = vadd.f32 %v1660, %v1851
      %v1898 = vadd.f32 %v1661, %v1864
      %v1899 = vadd.f32 %v1662, %v1877
      %v1900 = vadd.f32 %v1663, %v1890
      %1901 = vrot.lane.b32.xlu0 %v651, 31
      %v1902 = vpop.permute.xlu0 %1901
      %1903 = vrot.lane.b32.xlu0 %v652, 31
      %v1904 = vpop.permute.xlu0 %1903
      %1905 = vrot.lane.b32.xlu0 %v653, 31
      %v1906 = vpop.permute.xlu0 %1905
      %1907 = vrot.lane.b32.xlu0 %v654, 31
      %v1908 = vpop.permute.xlu0 %1907
      %1909 = vrot.lane.b32.xlu0 %v655, 31
      %v1910 = vpop.permute.xlu0 %1909
      %1911 = vrot.lane.b32.xlu0 %v656, 31
      %v1912 = vpop.permute.xlu0 %1911
      %1913 = vrot.lane.b32.xlu0 %v657, 31
      %v1914 = vpop.permute.xlu0 %1913
      %1915 = vrot.lane.b32.xlu0 %v658, 31
      %v1916 = vpop.permute.xlu0 %1915
      %vm1917 = vcmask 252928
      %v1918 = vsel %vm1917, %v1902, %v1904
      %v1919 = vsel %vm1917, %v1904, %v1906
      %v1920 = vsel %vm1917, %v1906, %v1908
      %v1921 = vsel %vm1917, %v1908, %v1910
      %v1922 = vsel %vm1917, %v1910, %v1912
      %v1923 = vsel %vm1917, %v1912, %v1914
      %v1924 = vsel %vm1917, %v1914, %v1916
      %v1934 = vmul.f32 %v1664, %v1902
      %v1935 = vmul.f32 %v1665, %v1918
      %v1936 = vmul.f32 %v1666, %v1919
      %v1937 = vmul.f32 %v1667, %v1920
      %v1938 = vmul.f32 %v1668, %v1921
      %v1939 = vmul.f32 %v1669, %v1922
      %v1940 = vmul.f32 %v1670, %v1923
      %v1941 = vmul.f32 %v1671, %v1924
      %v1942 = vmul.f32 %v1672, %v1916
      %s1943 = scalar_lea.vmem %s4, 24
      %v1944 = vld [vmem:[%s1943] sm:$0xf]
      %v1945 = vpack.c.bf16 %v1934, %v1934
      %v1946 = vpack.c.bf16 %v1935, %v1935
      %v1947 = vpack.c.bf16 %v1936, %v1936
      %v1948 = vpack.c.bf16 %v1937, %v1937
      %v1949 = vpack.c.bf16 %v1938, %v1938
      %v1950 = vpack.c.bf16 %v1939, %v1939
      %v1951 = vpack.c.bf16 %v1940, %v1940
      %v1952 = vpack.c.bf16 %v1941, %v1941
      %v1953 = vpack.c.bf16 %v1942, %v1942
      %1963 = vrot.lane.b32.xlu0 %v1945, 97
      %v1964 = vpop.permute.xlu0 %1963
      %1965 = vrot.lane.b32.xlu0 %v1946, 97
      %v1966 = vpop.permute.xlu0 %1965
      %1967 = vrot.lane.b32.xlu0 %v1947, 97
      %v1968 = vpop.permute.xlu0 %1967
      %1969 = vrot.lane.b32.xlu0 %v1948, 97
      %v1970 = vpop.permute.xlu0 %1969
      %1971 = vrot.lane.b32.xlu0 %v1949, 97
      %v1972 = vpop.permute.xlu0 %1971
      %1973 = vrot.lane.b32.xlu0 %v1950, 97
      %v1974 = vpop.permute.xlu0 %1973
      %1975 = vrot.lane.b32.xlu0 %v1951, 97
      %v1976 = vpop.permute.xlu0 %1975
      %1977 = vrot.lane.b32.xlu0 %v1952, 97
      %v1978 = vpop.permute.xlu0 %1977
      %1979 = vrot.lane.b32.xlu0 %v1953, 97
      %v1980 = vpop.permute.xlu0 %1979
      %vm1981 = vcmask 793600
      %v1982 = vsel %vm1981, %v1964, %v1966
      %v1983 = vsel %vm1981, %v1966, %v1968
      %v1984 = vsel %vm1981, %v1968, %v1970
      %v1985 = vsel %vm1981, %v1970, %v1972
      %v1986 = vsel %vm1981, %v1972, %v1974
      %v1987 = vsel %vm1981, %v1974, %v1976
      %v1988 = vsel %vm1981, %v1976, %v1978
      %v1989 = vsel %vm1981, %v1978, %v1980
      %v1991 = vsel %vm758, %v1944, 0
      %v1994 = vsel %vm762, %v1982, 0
      %v1997 = vsel %vm762, %v1983, 0
      %v2000 = vsel %vm762, %v1984, 0
      %v2003 = vsel %vm762, %v1985, 0
      %v2006 = vsel %vm762, %v1986, 0
      %v2009 = vsel %vm762, %v1987, 0
      %v2012 = vsel %vm762, %v1988, 0
      %v2015 = vsel %vm762, %v1989, 0
      %2017 = vmatpush.bf16.msra.mxu0 0
      %2018 = vmatpush.bf16.msra.mxu0 0
      %2019 = vmatpush.bf16.msra.mxu0 0
      %2020 = vmatpush.bf16.msra.mxu0 0
      %2021 = vmatpush.bf16.msra.mxu0 0
      %2022 = vmatpush.bf16.msra.mxu0 0
      %2023 = vmatpush.bf16.msra.mxu0 0
      %2024 = vmatpush.bf16.msra.mxu0 %v1994
      %2025 = vmatmul.bf16.gmra.mxu0 %v1991
      %v2026 = vpop.f32.mrf.mxu0
      %v2027 = vadd.f32 0.0, %v2026
      %v2028 = vpop.f32.mrf.mxu0
      %2029 = vdwg.mxu0
      %2030 = vmatpush.bf16.msra.mxu0 0
      %2031 = vmatpush.bf16.msra.mxu0 0
      %2032 = vmatpush.bf16.msra.mxu0 0
      %2033 = vmatpush.bf16.msra.mxu0 0
      %2034 = vmatpush.bf16.msra.mxu0 0
      %2035 = vmatpush.bf16.msra.mxu0 0
      %2036 = vmatpush.bf16.msra.mxu0 0
      %2037 = vmatpush.bf16.msra.mxu0 %v1997
      %2038 = vmatmul.bf16.gmra.mxu0 %v1991
      %v2039 = vpop.f32.mrf.mxu0
      %v2040 = vadd.f32 0.0, %v2039
      %v2041 = vpop.f32.mrf.mxu0
      %2042 = vdwg.mxu0
      %2043 = vmatpush.bf16.msra.mxu0 0
      %2044 = vmatpush.bf16.msra.mxu0 0
      %2045 = vmatpush.bf16.msra.mxu0 0
      %2046 = vmatpush.bf16.msra.mxu0 0
      %2047 = vmatpush.bf16.msra.mxu0 0
      %2048 = vmatpush.bf16.msra.mxu0 0
      %2049 = vmatpush.bf16.msra.mxu0 0
      %2050 = vmatpush.bf16.msra.mxu0 %v2000
      %2051 = vmatmul.bf16.gmra.mxu0 %v1991
      %v2052 = vpop.f32.mrf.mxu0
      %v2053 = vadd.f32 0.0, %v2052
      %v2054 = vpop.f32.mrf.mxu0
      %2055 = vdwg.mxu0
      %2056 = vmatpush.bf16.msra.mxu0 0
      %2057 = vmatpush.bf16.msra.mxu0 0
      %2058 = vmatpush.bf16.msra.mxu0 0
      %2059 = vmatpush.bf16.msra.mxu0 0
      %2060 = vmatpush.bf16.msra.mxu0 0
      %2061 = vmatpush.bf16.msra.mxu0 0
      %2062 = vmatpush.bf16.msra.mxu0 0
      %2063 = vmatpush.bf16.msra.mxu0 %v2003
      %2064 = vmatmul.bf16.gmra.mxu0 %v1991
      %v2065 = vpop.f32.mrf.mxu0
      %v2066 = vadd.f32 0.0, %v2065
      %v2067 = vpop.f32.mrf.mxu0
      %2068 = vdwg.mxu0
      %2069 = vmatpush.bf16.msra.mxu0 0
      %2070 = vmatpush.bf16.msra.mxu0 0
      %2071 = vmatpush.bf16.msra.mxu0 0
      %2072 = vmatpush.bf16.msra.mxu0 0
      %2073 = vmatpush.bf16.msra.mxu0 0
      %2074 = vmatpush.bf16.msra.mxu0 0
      %2075 = vmatpush.bf16.msra.mxu0 0
      %2076 = vmatpush.bf16.msra.mxu0 %v2006
      %2077 = vmatmul.bf16.gmra.mxu0 %v1991
      %v2078 = vpop.f32.mrf.mxu0
      %v2079 = vadd.f32 0.0, %v2078
      %v2080 = vpop.f32.mrf.mxu0
      %2081 = vdwg.mxu0
      %2082 = vmatpush.bf16.msra.mxu0 0
      %2083 = vmatpush.bf16.msra.mxu0 0
      %2084 = vmatpush.bf16.msra.mxu0 0
      %2085 = vmatpush.bf16.msra.mxu0 0
      %2086 = vmatpush.bf16.msra.mxu0 0
      %2087 = vmatpush.bf16.msra.mxu0 0
      %2088 = vmatpush.bf16.msra.mxu0 0
      %2089 = vmatpush.bf16.msra.mxu0 %v2009
      %2090 = vmatmul.bf16.gmra.mxu0 %v1991
      %v2091 = vpop.f32.mrf.mxu0
      %v2092 = vadd.f32 0.0, %v2091
      %v2093 = vpop.f32.mrf.mxu0
      %2094 = vdwg.mxu0
      %2095 = vmatpush.bf16.msra.mxu0 0
      %2096 = vmatpush.bf16.msra.mxu0 0
      %2097 = vmatpush.bf16.msra.mxu0 0
      %2098 = vmatpush.bf16.msra.mxu0 0
      %2099 = vmatpush.bf16.msra.mxu0 0
      %2100 = vmatpush.bf16.msra.mxu0 0
      %2101 = vmatpush.bf16.msra.mxu0 0
      %2102 = vmatpush.bf16.msra.mxu0 %v2012
      %2103 = vmatmul.bf16.gmra.mxu0 %v1991
      %v2104 = vpop.f32.mrf.mxu0
      %v2105 = vadd.f32 0.0, %v2104
      %v2106 = vpop.f32.mrf.mxu0
      %2107 = vdwg.mxu0
      %2108 = vmatpush.bf16.msra.mxu0 0
      %2109 = vmatpush.bf16.msra.mxu0 0
      %2110 = vmatpush.bf16.msra.mxu0 0
      %2111 = vmatpush.bf16.msra.mxu0 0
      %2112 = vmatpush.bf16.msra.mxu0 0
      %2113 = vmatpush.bf16.msra.mxu0 0
      %2114 = vmatpush.bf16.msra.mxu0 0
      %2115 = vmatpush.bf16.msra.mxu0 %v2015
      %2116 = vmatmul.bf16.gmra.mxu0 %v1991
      %v2117 = vpop.f32.mrf.mxu0
      %v2118 = vadd.f32 0.0, %v2117
      %v2119 = vpop.f32.mrf.mxu0
      %2120 = vdwg.mxu0
      %v2121 = vadd.f32 %v1893, %v2027
      %v2122 = vadd.f32 %v1894, %v2040
      %v2123 = vadd.f32 %v1895, %v2053
      %v2124 = vadd.f32 %v1896, %v2066
      %v2125 = vadd.f32 %v1897, %v2079
      %v2126 = vadd.f32 %v1898, %v2092
      %v2127 = vadd.f32 %v1899, %v2105
      %v2128 = vadd.f32 %v1900, %v2118
      %s2129 = scalar_lea.vmem %s4, 28
      %v2130 = vld [vmem:[%s2129] sm:$0xf]
      %v2131 = vpack.c.bf16 %v1664, %v1664
      %v2132 = vpack.c.bf16 %v1665, %v1665
      %v2133 = vpack.c.bf16 %v1666, %v1666
      %v2134 = vpack.c.bf16 %v1667, %v1667
      %v2135 = vpack.c.bf16 %v1668, %v1668
      %v2136 = vpack.c.bf16 %v1669, %v1669
      %v2137 = vpack.c.bf16 %v1670, %v1670
      %v2138 = vpack.c.bf16 %v1671, %v1671
      %v2139 = vpack.c.bf16 %v1672, %v1672
      %2149 = vrot.lane.b32.xlu0 %v2131, 96
      %v2150 = vpop.permute.xlu0 %2149
      %2151 = vrot.lane.b32.xlu0 %v2132, 96
      %v2152 = vpop.permute.xlu0 %2151
      %2153 = vrot.lane.b32.xlu0 %v2133, 96
      %v2154 = vpop.permute.xlu0 %2153
      %2155 = vrot.lane.b32.xlu0 %v2134, 96
      %v2156 = vpop.permute.xlu0 %2155
      %2157 = vrot.lane.b32.xlu0 %v2135, 96
      %v2158 = vpop.permute.xlu0 %2157
      %2159 = vrot.lane.b32.xlu0 %v2136, 96
      %v2160 = vpop.permute.xlu0 %2159
      %2161 = vrot.lane.b32.xlu0 %v2137, 96
      %v2162 = vpop.permute.xlu0 %2161
      %2163 = vrot.lane.b32.xlu0 %v2138, 96
      %v2164 = vpop.permute.xlu0 %2163
      %2165 = vrot.lane.b32.xlu0 %v2139, 96
      %v2166 = vpop.permute.xlu0 %2165
      %vm2167 = vcmask 785408
      %v2168 = vsel %vm2167, %v2150, %v2152
      %v2169 = vsel %vm2167, %v2152, %v2154
      %v2170 = vsel %vm2167, %v2154, %v2156
      %v2171 = vsel %vm2167, %v2156, %v2158
      %v2172 = vsel %vm2167, %v2158, %v2160
      %v2173 = vsel %vm2167, %v2160, %v2162
      %v2174 = vsel %vm2167, %v2162, %v2164
      %v2175 = vsel %vm2167, %v2164, %v2166
      %v2177 = vsel %vm758, %v2130, 0
      %v2180 = vsel %vm762, %v2168, 0
      %v2183 = vsel %vm762, %v2169, 0
      %v2186 = vsel %vm762, %v2170, 0
      %v2189 = vsel %vm762, %v2171, 0
      %v2192 = vsel %vm762, %v2172, 0
      %v2195 = vsel %vm762, %v2173, 0
      %v2198 = vsel %vm762, %v2174, 0
      %v2201 = vsel %vm762, %v2175, 0
      %2203 = vmatpush.bf16.msra.mxu0 0
      %2204 = vmatpush.bf16.msra.mxu0 0
      %2205 = vmatpush.bf16.msra.mxu0 0
      %2206 = vmatpush.bf16.msra.mxu0 0
      %2207 = vmatpush.bf16.msra.mxu0 0
      %2208 = vmatpush.bf16.msra.mxu0 0
      %2209 = vmatpush.bf16.msra.mxu0 0
      %2210 = vmatpush.bf16.msra.mxu0 %v2180
      %2211 = vmatmul.bf16.gmra.mxu0 %v2177
      %v2212 = vpop.f32.mrf.mxu0
      %v2213 = vadd.f32 0.0, %v2212
      %v2214 = vpop.f32.mrf.mxu0
      %2215 = vdwg.mxu0
      %2216 = vmatpush.bf16.msra.mxu0 0
      %2217 = vmatpush.bf16.msra.mxu0 0
      %2218 = vmatpush.bf16.msra.mxu0 0
      %2219 = vmatpush.bf16.msra.mxu0 0
      %2220 = vmatpush.bf16.msra.mxu0 0
      %2221 = vmatpush.bf16.msra.mxu0 0
      %2222 = vmatpush.bf16.msra.mxu0 0
      %2223 = vmatpush.bf16.msra.mxu0 %v2183
      %2224 = vmatmul.bf16.gmra.mxu0 %v2177
      %v2225 = vpop.f32.mrf.mxu0
      %v2226 = vadd.f32 0.0, %v2225
      %v2227 = vpop.f32.mrf.mxu0
      %2228 = vdwg.mxu0
      %2229 = vmatpush.bf16.msra.mxu0 0
      %2230 = vmatpush.bf16.msra.mxu0 0
      %2231 = vmatpush.bf16.msra.mxu0 0
      %2232 = vmatpush.bf16.msra.mxu0 0
      %2233 = vmatpush.bf16.msra.mxu0 0
      %2234 = vmatpush.bf16.msra.mxu0 0
      %2235 = vmatpush.bf16.msra.mxu0 0
      %2236 = vmatpush.bf16.msra.mxu0 %v2186
      %2237 = vmatmul.bf16.gmra.mxu0 %v2177
      %v2238 = vpop.f32.mrf.mxu0
      %v2239 = vadd.f32 0.0, %v2238
      %v2240 = vpop.f32.mrf.mxu0
      %2241 = vdwg.mxu0
      %2242 = vmatpush.bf16.msra.mxu0 0
      %2243 = vmatpush.bf16.msra.mxu0 0
      %2244 = vmatpush.bf16.msra.mxu0 0
      %2245 = vmatpush.bf16.msra.mxu0 0
      %2246 = vmatpush.bf16.msra.mxu0 0
      %2247 = vmatpush.bf16.msra.mxu0 0
      %2248 = vmatpush.bf16.msra.mxu0 0
      %2249 = vmatpush.bf16.msra.mxu0 %v2189
      %2250 = vmatmul.bf16.gmra.mxu0 %v2177
      %v2251 = vpop.f32.mrf.mxu0
      %v2252 = vadd.f32 0.0, %v2251
      %v2253 = vpop.f32.mrf.mxu0
      %2254 = vdwg.mxu0
      %2255 = vmatpush.bf16.msra.mxu0 0
      %2256 = vmatpush.bf16.msra.mxu0 0
      %2257 = vmatpush.bf16.msra.mxu0 0
      %2258 = vmatpush.bf16.msra.mxu0 0
      %2259 = vmatpush.bf16.msra.mxu0 0
      %2260 = vmatpush.bf16.msra.mxu0 0
      %2261 = vmatpush.bf16.msra.mxu0 0
      %2262 = vmatpush.bf16.msra.mxu0 %v2192
      %2263 = vmatmul.bf16.gmra.mxu0 %v2177
      %v2264 = vpop.f32.mrf.mxu0
      %v2265 = vadd.f32 0.0, %v2264
      %v2266 = vpop.f32.mrf.mxu0
      %2267 = vdwg.mxu0
      %2268 = vmatpush.bf16.msra.mxu0 0
      %2269 = vmatpush.bf16.msra.mxu0 0
      %2270 = vmatpush.bf16.msra.mxu0 0
      %2271 = vmatpush.bf16.msra.mxu0 0
      %2272 = vmatpush.bf16.msra.mxu0 0
      %2273 = vmatpush.bf16.msra.mxu0 0
      %2274 = vmatpush.bf16.msra.mxu0 0
      %2275 = vmatpush.bf16.msra.mxu0 %v2195
      %2276 = vmatmul.bf16.gmra.mxu0 %v2177
      %v2277 = vpop.f32.mrf.mxu0
      %v2278 = vadd.f32 0.0, %v2277
      %v2279 = vpop.f32.mrf.mxu0
      %2280 = vdwg.mxu0
      %2281 = vmatpush.bf16.msra.mxu0 0
      %2282 = vmatpush.bf16.msra.mxu0 0
      %2283 = vmatpush.bf16.msra.mxu0 0
      %2284 = vmatpush.bf16.msra.mxu0 0
      %2285 = vmatpush.bf16.msra.mxu0 0
      %2286 = vmatpush.bf16.msra.mxu0 0
      %2287 = vmatpush.bf16.msra.mxu0 0
      %2288 = vmatpush.bf16.msra.mxu0 %v2198
      %2289 = vmatmul.bf16.gmra.mxu0 %v2177
      %v2290 = vpop.f32.mrf.mxu0
      %v2291 = vadd.f32 0.0, %v2290
      %v2292 = vpop.f32.mrf.mxu0
      %2293 = vdwg.mxu0
      %2294 = vmatpush.bf16.msra.mxu0 0
      %2295 = vmatpush.bf16.msra.mxu0 0
      %2296 = vmatpush.bf16.msra.mxu0 0
      %2297 = vmatpush.bf16.msra.mxu0 0
      %2298 = vmatpush.bf16.msra.mxu0 0
      %2299 = vmatpush.bf16.msra.mxu0 0
      %2300 = vmatpush.bf16.msra.mxu0 0
      %2301 = vmatpush.bf16.msra.mxu0 %v2201
      %2302 = vmatmul.bf16.gmra.mxu0 %v2177
      %v2303 = vpop.f32.mrf.mxu0
      %v2304 = vadd.f32 0.0, %v2303
      %v2305 = vpop.f32.mrf.mxu0
      %2306 = vdwg.mxu0
      %v2307 = vadd.f32 %v2121, %v2213
      %v2308 = vadd.f32 %v2122, %v2226
      %v2309 = vadd.f32 %v2123, %v2239
      %v2310 = vadd.f32 %v2124, %v2252
      %v2311 = vadd.f32 %v2125, %v2265
      %v2312 = vadd.f32 %v2126, %v2278
      %v2313 = vadd.f32 %v2127, %v2291
      %v2314 = vadd.f32 %v2128, %v2304
      %2315 = vrot.lane.b32.xlu0 %v1059, 33
      %v2316 = vpop.permute.xlu0 %2315
      %2317 = vrot.lane.b32.xlu0 %v1060, 33
      %v2318 = vpop.permute.xlu0 %2317
      %2319 = vrot.lane.b32.xlu0 %v1061, 33
      %v2320 = vpop.permute.xlu0 %2319
      %2321 = vrot.lane.b32.xlu0 %v1062, 33
      %v2322 = vpop.permute.xlu0 %2321
      %2323 = vrot.lane.b32.xlu0 %v1063, 33
      %v2324 = vpop.permute.xlu0 %2323
      %2325 = vrot.lane.b32.xlu0 %v1064, 33
      %v2326 = vpop.permute.xlu0 %2325
      %2327 = vrot.lane.b32.xlu0 %v1065, 33
      %v2328 = vpop.permute.xlu0 %2327
      %2329 = vrot.lane.b32.xlu0 %v1066, 33
      %v2330 = vpop.permute.xlu0 %2329
      %vm2331 = vcmask 269312
      %v2332 = vsel %vm2331, %v2316, %v2318
      %v2333 = vsel %vm2331, %v2318, %v2320
      %v2334 = vsel %vm2331, %v2320, %v2322
      %v2335 = vsel %vm2331, %v2322, %v2324
      %v2336 = vsel %vm2331, %v2324, %v2326
      %v2337 = vsel %vm2331, %v2326, %v2328
      %v2338 = vsel %vm2331, %v2328, %v2330
      %v2348 = vmul.f32 %v1664, %v2316
      %v2349 = vmul.f32 %v1665, %v2332
      %v2350 = vmul.f32 %v1666, %v2333
      %v2351 = vmul.f32 %v1667, %v2334
      %v2352 = vmul.f32 %v1668, %v2335
      %v2353 = vmul.f32 %v1669, %v2336
      %v2354 = vmul.f32 %v1670, %v2337
      %v2355 = vmul.f32 %v1671, %v2338
      %v2356 = vmul.f32 %v1672, %v2330
      %s2357 = scalar_lea.vmem %s4, 32
      %v2358 = vld [vmem:[%s2357] sm:$0xf]
      %v2359 = vpack.c.bf16 %v2348, %v2348
      %v2360 = vpack.c.bf16 %v2349, %v2349
      %v2361 = vpack.c.bf16 %v2350, %v2350
      %v2362 = vpack.c.bf16 %v2351, %v2351
      %v2363 = vpack.c.bf16 %v2352, %v2352
      %v2364 = vpack.c.bf16 %v2353, %v2353
      %v2365 = vpack.c.bf16 %v2354, %v2354
      %v2366 = vpack.c.bf16 %v2355, %v2355
      %v2367 = vpack.c.bf16 %v2356, %v2356
      %2377 = vrot.lane.b32.xlu0 %v2359, 95
      %v2378 = vpop.permute.xlu0 %2377
      %2379 = vrot.lane.b32.xlu0 %v2360, 95
      %v2380 = vpop.permute.xlu0 %2379
      %2381 = vrot.lane.b32.xlu0 %v2361, 95
      %v2382 = vpop.permute.xlu0 %2381
      %2383 = vrot.lane.b32.xlu0 %v2362, 95
      %v2384 = vpop.permute.xlu0 %2383
      %2385 = vrot.lane.b32.xlu0 %v2363, 95
      %v2386 = vpop.permute.xlu0 %2385
      %2387 = vrot.lane.b32.xlu0 %v2364, 95
      %v2388 = vpop.permute.xlu0 %2387
      %2389 = vrot.lane.b32.xlu0 %v2365, 95
      %v2390 = vpop.permute.xlu0 %2389
      %2391 = vrot.lane.b32.xlu0 %v2366, 95
      %v2392 = vpop.permute.xlu0 %2391
      %2393 = vrot.lane.b32.xlu0 %v2367, 95
      %v2394 = vpop.permute.xlu0 %2393
      %vm2395 = vcmask 777216
      %v2396 = vsel %vm2395, %v2378, %v2380
      %v2397 = vsel %vm2395, %v2380, %v2382
      %v2398 = vsel %vm2395, %v2382, %v2384
      %v2399 = vsel %vm2395, %v2384, %v2386
      %v2400 = vsel %vm2395, %v2386, %v2388
      %v2401 = vsel %vm2395, %v2388, %v2390
      %v2402 = vsel %vm2395, %v2390, %v2392
      %v2403 = vsel %vm2395, %v2392, %v2394
      %v2405 = vsel %vm758, %v2358, 0
      %v2408 = vsel %vm762, %v2396, 0
      %v2411 = vsel %vm762, %v2397, 0
      %v2414 = vsel %vm762, %v2398, 0
      %v2417 = vsel %vm762, %v2399, 0
      %v2420 = vsel %vm762, %v2400, 0
      %v2423 = vsel %vm762, %v2401, 0
      %v2426 = vsel %vm762, %v2402, 0
      %v2429 = vsel %vm762, %v2403, 0
      %2431 = vmatpush.bf16.msra.mxu0 0
      %2432 = vmatpush.bf16.msra.mxu0 0
      %2433 = vmatpush.bf16.msra.mxu0 0
      %2434 = vmatpush.bf16.msra.mxu0 0
      %2435 = vmatpush.bf16.msra.mxu0 0
      %2436 = vmatpush.bf16.msra.mxu0 0
      %2437 = vmatpush.bf16.msra.mxu0 0
      %2438 = vmatpush.bf16.msra.mxu0 %v2408
      %2439 = vmatmul.bf16.gmra.mxu0 %v2405
      %v2440 = vpop.f32.mrf.mxu0
      %v2441 = vadd.f32 0.0, %v2440
      %v2442 = vpop.f32.mrf.mxu0
      %2443 = vdwg.mxu0
      %2444 = vmatpush.bf16.msra.mxu0 0
      %2445 = vmatpush.bf16.msra.mxu0 0
      %2446 = vmatpush.bf16.msra.mxu0 0
      %2447 = vmatpush.bf16.msra.mxu0 0
      %2448 = vmatpush.bf16.msra.mxu0 0
      %2449 = vmatpush.bf16.msra.mxu0 0
      %2450 = vmatpush.bf16.msra.mxu0 0
      %2451 = vmatpush.bf16.msra.mxu0 %v2411
      %2452 = vmatmul.bf16.gmra.mxu0 %v2405
      %v2453 = vpop.f32.mrf.mxu0
      %v2454 = vadd.f32 0.0, %v2453
      %v2455 = vpop.f32.mrf.mxu0
      %2456 = vdwg.mxu0
      %2457 = vmatpush.bf16.msra.mxu0 0
      %2458 = vmatpush.bf16.msra.mxu0 0
      %2459 = vmatpush.bf16.msra.mxu0 0
      %2460 = vmatpush.bf16.msra.mxu0 0
      %2461 = vmatpush.bf16.msra.mxu0 0
      %2462 = vmatpush.bf16.msra.mxu0 0
      %2463 = vmatpush.bf16.msra.mxu0 0
      %2464 = vmatpush.bf16.msra.mxu0 %v2414
      %2465 = vmatmul.bf16.gmra.mxu0 %v2405
      %v2466 = vpop.f32.mrf.mxu0
      %v2467 = vadd.f32 0.0, %v2466
      %v2468 = vpop.f32.mrf.mxu0
      %2469 = vdwg.mxu0
      %2470 = vmatpush.bf16.msra.mxu0 0
      %2471 = vmatpush.bf16.msra.mxu0 0
      %2472 = vmatpush.bf16.msra.mxu0 0
      %2473 = vmatpush.bf16.msra.mxu0 0
      %2474 = vmatpush.bf16.msra.mxu0 0
      %2475 = vmatpush.bf16.msra.mxu0 0
      %2476 = vmatpush.bf16.msra.mxu0 0
      %2477 = vmatpush.bf16.msra.mxu0 %v2417
      %2478 = vmatmul.bf16.gmra.mxu0 %v2405
      %v2479 = vpop.f32.mrf.mxu0
      %v2480 = vadd.f32 0.0, %v2479
      %v2481 = vpop.f32.mrf.mxu0
      %2482 = vdwg.mxu0
      %2483 = vmatpush.bf16.msra.mxu0 0
      %2484 = vmatpush.bf16.msra.mxu0 0
      %2485 = vmatpush.bf16.msra.mxu0 0
      %2486 = vmatpush.bf16.msra.mxu0 0
      %2487 = vmatpush.bf16.msra.mxu0 0
      %2488 = vmatpush.bf16.msra.mxu0 0
      %2489 = vmatpush.bf16.msra.mxu0 0
      %2490 = vmatpush.bf16.msra.mxu0 %v2420
      %2491 = vmatmul.bf16.gmra.mxu0 %v2405
      %v2492 = vpop.f32.mrf.mxu0
      %v2493 = vadd.f32 0.0, %v2492
      %v2494 = vpop.f32.mrf.mxu0
      %2495 = vdwg.mxu0
      %2496 = vmatpush.bf16.msra.mxu0 0
      %2497 = vmatpush.bf16.msra.mxu0 0
      %2498 = vmatpush.bf16.msra.mxu0 0
      %2499 = vmatpush.bf16.msra.mxu0 0
      %2500 = vmatpush.bf16.msra.mxu0 0
      %2501 = vmatpush.bf16.msra.mxu0 0
      %2502 = vmatpush.bf16.msra.mxu0 0
      %2503 = vmatpush.bf16.msra.mxu0 %v2423
      %2504 = vmatmul.bf16.gmra.mxu0 %v2405
      %v2505 = vpop.f32.mrf.mxu0
      %v2506 = vadd.f32 0.0, %v2505
      %v2507 = vpop.f32.mrf.mxu0
      %2508 = vdwg.mxu0
      %2509 = vmatpush.bf16.msra.mxu0 0
      %2510 = vmatpush.bf16.msra.mxu0 0
      %2511 = vmatpush.bf16.msra.mxu0 0
      %2512 = vmatpush.bf16.msra.mxu0 0
      %2513 = vmatpush.bf16.msra.mxu0 0
      %2514 = vmatpush.bf16.msra.mxu0 0
      %2515 = vmatpush.bf16.msra.mxu0 0
      %2516 = vmatpush.bf16.msra.mxu0 %v2426
      %2517 = vmatmul.bf16.gmra.mxu0 %v2405
      %v2518 = vpop.f32.mrf.mxu0
      %v2519 = vadd.f32 0.0, %v2518
      %v2520 = vpop.f32.mrf.mxu0
      %2521 = vdwg.mxu0
      %2522 = vmatpush.bf16.msra.mxu0 0
      %2523 = vmatpush.bf16.msra.mxu0 0
      %2524 = vmatpush.bf16.msra.mxu0 0
      %2525 = vmatpush.bf16.msra.mxu0 0
      %2526 = vmatpush.bf16.msra.mxu0 0
      %2527 = vmatpush.bf16.msra.mxu0 0
      %2528 = vmatpush.bf16.msra.mxu0 0
      %2529 = vmatpush.bf16.msra.mxu0 %v2429
      %2530 = vmatmul.bf16.gmra.mxu0 %v2405
      %v2531 = vpop.f32.mrf.mxu0
      %v2532 = vadd.f32 0.0, %v2531
      %v2533 = vpop.f32.mrf.mxu0
      %2534 = vdwg.mxu0
      %v2535 = vadd.f32 %v2307, %v2441
      %v2536 = vadd.f32 %v2308, %v2454
      %v2537 = vadd.f32 %v2309, %v2467
      %v2538 = vadd.f32 %v2310, %v2480
      %v2539 = vadd.f32 %v2311, %v2493
      %v2540 = vadd.f32 %v2312, %v2506
      %v2541 = vadd.f32 %v2313, %v2519
      %v2542 = vadd.f32 %v2314, %v2532
      %v2543 = vld [vmem:[%s5] sm:$0xff]
      %2545 = vset.pattern.permute.xlu0 0
      %2546 = vperm.xlu0 %2545, %v2543
      %v2547 = vpop.permute.xlu0 %2546
      %v2549 = vadd.f32 %v2535, %v2547
      %v2550 = vadd.f32 %v2536, %v2547
      %v2551 = vadd.f32 %v2537, %v2547
      %v2552 = vadd.f32 %v2538, %v2547
      %v2553 = vadd.f32 %v2539, %v2547
      %v2554 = vadd.f32 %v2540, %v2547
      %v2555 = vadd.f32 %v2541, %v2547
      %v2556 = vadd.f32 %v2542, %v2547
      %v2557 = vmax.f32 %v2549, 0.0
      %v2558 = vmax.f32 %v2550, 0.0
      %v2559 = vmax.f32 %v2551, 0.0
      %v2560 = vmax.f32 %v2552, 0.0
      %v2561 = vmax.f32 %v2553, 0.0
      %v2562 = vmax.f32 %v2554, 0.0
      %v2563 = vmax.f32 %v2555, 0.0
      %v2564 = vmax.f32 %v2556, 0.0
      %2565 = vst [vmem:[#allocation2 + $0x8] sm:$0xff] %v2557
      %2566 = vst [vmem:[#allocation2 + $0x10] sm:$0xff] %v2558
      %2567 = vst [vmem:[#allocation2 + $0x18] sm:$0xff] %v2559
      %2568 = vst [vmem:[#allocation2 + $0x20] sm:$0xff] %v2560
      %2569 = vst [vmem:[#allocation2 + $0x28] sm:$0xff] %v2561
      %2570 = vst [vmem:[#allocation2 + $0x30] sm:$0xff] %v2562
      %2571 = vst [vmem:[#allocation2 + $0x38] sm:$0xff] %v2563
      %2572 = vst [vmem:[#allocation2 + $0x40] sm:$0xff] %v2564
      %v2573 = vld [vmem:[#allocation2] sm:$0xff]
      %v2574 = vld [vmem:[#allocation2 + $0x8] sm:$0xff]
      %v2575 = vld [vmem:[#allocation2 + $0x10] sm:$0xff]
      %v2576 = vld [vmem:[#allocation2 + $0x18] sm:$0xff]
      %v2577 = vld [vmem:[#allocation2 + $0x20] sm:$0xff]
      %v2578 = vld [vmem:[#allocation2 + $0x28] sm:$0xff]
      %v2579 = vld [vmem:[#allocation2 + $0x30] sm:$0xff]
      %v2580 = vld [vmem:[#allocation2 + $0x38] sm:$0xff]
      %v2581 = vld [vmem:[#allocation2 + $0x40] sm:$0xff]
      %v2582 = vmul.f32 %v2573, %v660
      %v2583 = vmul.f32 %v2574, %v676
      %v2584 = vmul.f32 %v2575, %v677
      %v2585 = vmul.f32 %v2576, %v678
      %v2586 = vmul.f32 %v2577, %v679
      %v2587 = vmul.f32 %v2578, %v680
      %v2588 = vmul.f32 %v2579, %v681
      %v2589 = vmul.f32 %v2580, %v682
      %v2590 = vmul.f32 %v2581, %v674
      %v2591 = vld [vmem:[%s6] sm:$0xf]
      %v2592 = vpack.c.bf16 %v2582, %v2582
      %v2593 = vpack.c.bf16 %v2583, %v2583
      %v2594 = vpack.c.bf16 %v2584, %v2584
      %v2595 = vpack.c.bf16 %v2585, %v2585
      %v2596 = vpack.c.bf16 %v2586, %v2586
      %v2597 = vpack.c.bf16 %v2587, %v2587
      %v2598 = vpack.c.bf16 %v2588, %v2588
      %v2599 = vpack.c.bf16 %v2589, %v2589
      %v2600 = vpack.c.bf16 %v2590, %v2590
      %s2601 = scalar_lea.vmem %s6, 4
      %v2602 = vld [vmem:[%s2601] sm:$0xf]
      %v2603 = vpack.c.bf16 %v2573, %v2573
      %v2604 = vpack.c.bf16 %v2574, %v2574
      %v2605 = vpack.c.bf16 %v2575, %v2575
      %v2606 = vpack.c.bf16 %v2576, %v2576
      %v2607 = vpack.c.bf16 %v2577, %v2577
      %v2608 = vpack.c.bf16 %v2578, %v2578
      %v2609 = vpack.c.bf16 %v2579, %v2579
      %v2610 = vpack.c.bf16 %v2580, %v2580
      %v2611 = vpack.c.bf16 %v2581, %v2581
      %2621 = vrot.lane.b32.xlu0 %v2603, 32
      %v2622 = vpop.permute.xlu0 %2621
      %2623 = vrot.lane.b32.xlu0 %v2604, 32
      %v2624 = vpop.permute.xlu0 %2623
      %2625 = vrot.lane.b32.xlu0 %v2605, 32
      %v2626 = vpop.permute.xlu0 %2625
      %2627 = vrot.lane.b32.xlu0 %v2606, 32
      %v2628 = vpop.permute.xlu0 %2627
      %2629 = vrot.lane.b32.xlu0 %v2607, 32
      %v2630 = vpop.permute.xlu0 %2629
      %2631 = vrot.lane.b32.xlu0 %v2608, 32
      %v2632 = vpop.permute.xlu0 %2631
      %2633 = vrot.lane.b32.xlu0 %v2609, 32
      %v2634 = vpop.permute.xlu0 %2633
      %2635 = vrot.lane.b32.xlu0 %v2610, 32
      %v2636 = vpop.permute.xlu0 %2635
      %2637 = vrot.lane.b32.xlu0 %v2611, 32
      %v2638 = vpop.permute.xlu0 %2637
      %v2639 = vsel %vm749, %v2622, %v2624
      %v2640 = vsel %vm749, %v2624, %v2626
      %v2641 = vsel %vm749, %v2626, %v2628
      %v2642 = vsel %vm749, %v2628, %v2630
      %v2643 = vsel %vm749, %v2630, %v2632
      %v2644 = vsel %vm749, %v2632, %v2634
      %v2645 = vsel %vm749, %v2634, %v2636
      %v2646 = vsel %vm749, %v2636, %v2638
      %v2648 = vsel %vm758, %v2602, 0
      %v2651 = vsel %vm762, %v2639, 0
      %v2654 = vsel %vm762, %v2640, 0
      %v2657 = vsel %vm762, %v2641, 0
      %v2660 = vsel %vm762, %v2642, 0
      %v2663 = vsel %vm762, %v2643, 0
      %v2666 = vsel %vm762, %v2644, 0
      %v2669 = vsel %vm762, %v2645, 0
      %v2672 = vsel %vm762, %v2646, 0
      %2674 = vmatpush.bf16.msra.mxu0 0
      %2675 = vmatpush.bf16.msra.mxu0 0
      %2676 = vmatpush.bf16.msra.mxu0 0
      %2677 = vmatpush.bf16.msra.mxu0 0
      %2678 = vmatpush.bf16.msra.mxu0 0
      %2679 = vmatpush.bf16.msra.mxu0 0
      %2680 = vmatpush.bf16.msra.mxu0 0
      %2681 = vmatpush.bf16.msra.mxu0 %v2651
      %2682 = vmatmul.bf16.gmra.mxu0 %v2648
      %v2683 = vpop.f32.mrf.mxu0
      %v2684 = vadd.f32 0.0, %v2683
      %v2685 = vpop.f32.mrf.mxu0
      %2686 = vdwg.mxu0
      %2687 = vmatpush.bf16.msra.mxu0 0
      %2688 = vmatpush.bf16.msra.mxu0 0
      %2689 = vmatpush.bf16.msra.mxu0 0
      %2690 = vmatpush.bf16.msra.mxu0 0
      %2691 = vmatpush.bf16.msra.mxu0 0
      %2692 = vmatpush.bf16.msra.mxu0 0
      %2693 = vmatpush.bf16.msra.mxu0 0
      %2694 = vmatpush.bf16.msra.mxu0 %v2654
      %2695 = vmatmul.bf16.gmra.mxu0 %v2648
      %v2696 = vpop.f32.mrf.mxu0
      %v2697 = vadd.f32 0.0, %v2696
      %v2698 = vpop.f32.mrf.mxu0
      %2699 = vdwg.mxu0
      %2700 = vmatpush.bf16.msra.mxu0 0
      %2701 = vmatpush.bf16.msra.mxu0 0
      %2702 = vmatpush.bf16.msra.mxu0 0
      %2703 = vmatpush.bf16.msra.mxu0 0
      %2704 = vmatpush.bf16.msra.mxu0 0
      %2705 = vmatpush.bf16.msra.mxu0 0
      %2706 = vmatpush.bf16.msra.mxu0 0
      %2707 = vmatpush.bf16.msra.mxu0 %v2657
      %2708 = vmatmul.bf16.gmra.mxu0 %v2648
      %v2709 = vpop.f32.mrf.mxu0
      %v2710 = vadd.f32 0.0, %v2709
      %v2711 = vpop.f32.mrf.mxu0
      %2712 = vdwg.mxu0
      %2713 = vmatpush.bf16.msra.mxu0 0
      %2714 = vmatpush.bf16.msra.mxu0 0
      %2715 = vmatpush.bf16.msra.mxu0 0
      %2716 = vmatpush.bf16.msra.mxu0 0
      %2717 = vmatpush.bf16.msra.mxu0 0
      %2718 = vmatpush.bf16.msra.mxu0 0
      %2719 = vmatpush.bf16.msra.mxu0 0
      %2720 = vmatpush.bf16.msra.mxu0 %v2660
      %2721 = vmatmul.bf16.gmra.mxu0 %v2648
      %v2722 = vpop.f32.mrf.mxu0
      %v2723 = vadd.f32 0.0, %v2722
      %v2724 = vpop.f32.mrf.mxu0
      %2725 = vdwg.mxu0
      %2726 = vmatpush.bf16.msra.mxu0 0
      %2727 = vmatpush.bf16.msra.mxu0 0
      %2728 = vmatpush.bf16.msra.mxu0 0
      %2729 = vmatpush.bf16.msra.mxu0 0
      %2730 = vmatpush.bf16.msra.mxu0 0
      %2731 = vmatpush.bf16.msra.mxu0 0
      %2732 = vmatpush.bf16.msra.mxu0 0
      %2733 = vmatpush.bf16.msra.mxu0 %v2663
      %2734 = vmatmul.bf16.gmra.mxu0 %v2648
      %v2735 = vpop.f32.mrf.mxu0
      %v2736 = vadd.f32 0.0, %v2735
      %v2737 = vpop.f32.mrf.mxu0
      %2738 = vdwg.mxu0
      %2739 = vmatpush.bf16.msra.mxu0 0
      %2740 = vmatpush.bf16.msra.mxu0 0
      %2741 = vmatpush.bf16.msra.mxu0 0
      %2742 = vmatpush.bf16.msra.mxu0 0
      %2743 = vmatpush.bf16.msra.mxu0 0
      %2744 = vmatpush.bf16.msra.mxu0 0
      %2745 = vmatpush.bf16.msra.mxu0 0
      %2746 = vmatpush.bf16.msra.mxu0 %v2666
      %2747 = vmatmul.bf16.gmra.mxu0 %v2648
      %v2748 = vpop.f32.mrf.mxu0
      %v2749 = vadd.f32 0.0, %v2748
      %v2750 = vpop.f32.mrf.mxu0
      %2751 = vdwg.mxu0
      %2752 = vmatpush.bf16.msra.mxu0 0
      %2753 = vmatpush.bf16.msra.mxu0 0
      %2754 = vmatpush.bf16.msra.mxu0 0
      %2755 = vmatpush.bf16.msra.mxu0 0
      %2756 = vmatpush.bf16.msra.mxu0 0
      %2757 = vmatpush.bf16.msra.mxu0 0
      %2758 = vmatpush.bf16.msra.mxu0 0
      %2759 = vmatpush.bf16.msra.mxu0 %v2669
      %2760 = vmatmul.bf16.gmra.mxu0 %v2648
      %v2761 = vpop.f32.mrf.mxu0
      %v2762 = vadd.f32 0.0, %v2761
      %v2763 = vpop.f32.mrf.mxu0
      %2764 = vdwg.mxu0
      %2765 = vmatpush.bf16.msra.mxu0 0
      %2766 = vmatpush.bf16.msra.mxu0 0
      %2767 = vmatpush.bf16.msra.mxu0 0
      %2768 = vmatpush.bf16.msra.mxu0 0
      %2769 = vmatpush.bf16.msra.mxu0 0
      %2770 = vmatpush.bf16.msra.mxu0 0
      %2771 = vmatpush.bf16.msra.mxu0 0
      %2772 = vmatpush.bf16.msra.mxu0 %v2672
      %2773 = vmatmul.bf16.gmra.mxu0 %v2648
      %v2774 = vpop.f32.mrf.mxu0
      %v2775 = vadd.f32 0.0, %v2774
      %v2776 = vpop.f32.mrf.mxu0
      %2777 = vdwg.mxu0
      %2787 = vrot.lane.b32.xlu0 %v2592, 33
      %v2788 = vpop.permute.xlu0 %2787
      %2789 = vrot.lane.b32.xlu0 %v2593, 33
      %v2790 = vpop.permute.xlu0 %2789
      %2791 = vrot.lane.b32.xlu0 %v2594, 33
      %v2792 = vpop.permute.xlu0 %2791
      %2793 = vrot.lane.b32.xlu0 %v2595, 33
      %v2794 = vpop.permute.xlu0 %2793
      %2795 = vrot.lane.b32.xlu0 %v2596, 33
      %v2796 = vpop.permute.xlu0 %2795
      %2797 = vrot.lane.b32.xlu0 %v2597, 33
      %v2798 = vpop.permute.xlu0 %2797
      %2799 = vrot.lane.b32.xlu0 %v2598, 33
      %v2800 = vpop.permute.xlu0 %2799
      %2801 = vrot.lane.b32.xlu0 %v2599, 33
      %v2802 = vpop.permute.xlu0 %2801
      %2803 = vrot.lane.b32.xlu0 %v2600, 33
      %v2804 = vpop.permute.xlu0 %2803
      %v2805 = vsel %vm918, %v2788, %v2790
      %v2806 = vsel %vm918, %v2790, %v2792
      %v2807 = vsel %vm918, %v2792, %v2794
      %v2808 = vsel %vm918, %v2794, %v2796
      %v2809 = vsel %vm918, %v2796, %v2798
      %v2810 = vsel %vm918, %v2798, %v2800
      %v2811 = vsel %vm918, %v2800, %v2802
      %v2812 = vsel %vm918, %v2802, %v2804
      %v2814 = vsel %vm758, %v2591, 0
      %v2817 = vsel %vm762, %v2805, 0
      %v2820 = vsel %vm762, %v2806, 0
      %v2823 = vsel %vm762, %v2807, 0
      %v2826 = vsel %vm762, %v2808, 0
      %v2829 = vsel %vm762, %v2809, 0
      %v2832 = vsel %vm762, %v2810, 0
      %v2835 = vsel %vm762, %v2811, 0
      %v2838 = vsel %vm762, %v2812, 0
      %2840 = vmatpush.bf16.msra.mxu0 0
      %2841 = vmatpush.bf16.msra.mxu0 0
      %2842 = vmatpush.bf16.msra.mxu0 0
      %2843 = vmatpush.bf16.msra.mxu0 0
      %2844 = vmatpush.bf16.msra.mxu0 0
      %2845 = vmatpush.bf16.msra.mxu0 0
      %2846 = vmatpush.bf16.msra.mxu0 0
      %2847 = vmatpush.bf16.msra.mxu0 %v2817
      %2848 = vmatmul.bf16.gmra.mxu0 %v2814
      %v2849 = vpop.f32.mrf.mxu0
      %v2850 = vadd.f32 %v2684, %v2849
      %v2851 = vpop.f32.mrf.mxu0
      %2852 = vdwg.mxu0
      %2853 = vmatpush.bf16.msra.mxu0 0
      %2854 = vmatpush.bf16.msra.mxu0 0
      %2855 = vmatpush.bf16.msra.mxu0 0
      %2856 = vmatpush.bf16.msra.mxu0 0
      %2857 = vmatpush.bf16.msra.mxu0 0
      %2858 = vmatpush.bf16.msra.mxu0 0
      %2859 = vmatpush.bf16.msra.mxu0 0
      %2860 = vmatpush.bf16.msra.mxu0 %v2820
      %2861 = vmatmul.bf16.gmra.mxu0 %v2814
      %v2862 = vpop.f32.mrf.mxu0
      %v2863 = vadd.f32 %v2697, %v2862
      %v2864 = vpop.f32.mrf.mxu0
      %2865 = vdwg.mxu0
      %2866 = vmatpush.bf16.msra.mxu0 0
      %2867 = vmatpush.bf16.msra.mxu0 0
      %2868 = vmatpush.bf16.msra.mxu0 0
      %2869 = vmatpush.bf16.msra.mxu0 0
      %2870 = vmatpush.bf16.msra.mxu0 0
      %2871 = vmatpush.bf16.msra.mxu0 0
      %2872 = vmatpush.bf16.msra.mxu0 0
      %2873 = vmatpush.bf16.msra.mxu0 %v2823
      %2874 = vmatmul.bf16.gmra.mxu0 %v2814
      %v2875 = vpop.f32.mrf.mxu0
      %v2876 = vadd.f32 %v2710, %v2875
      %v2877 = vpop.f32.mrf.mxu0
      %2878 = vdwg.mxu0
      %2879 = vmatpush.bf16.msra.mxu0 0
      %2880 = vmatpush.bf16.msra.mxu0 0
      %2881 = vmatpush.bf16.msra.mxu0 0
      %2882 = vmatpush.bf16.msra.mxu0 0
      %2883 = vmatpush.bf16.msra.mxu0 0
      %2884 = vmatpush.bf16.msra.mxu0 0
      %2885 = vmatpush.bf16.msra.mxu0 0
      %2886 = vmatpush.bf16.msra.mxu0 %v2826
      %2887 = vmatmul.bf16.gmra.mxu0 %v2814
      %v2888 = vpop.f32.mrf.mxu0
      %v2889 = vadd.f32 %v2723, %v2888
      %v2890 = vpop.f32.mrf.mxu0
      %2891 = vdwg.mxu0
      %2892 = vmatpush.bf16.msra.mxu0 0
      %2893 = vmatpush.bf16.msra.mxu0 0
      %2894 = vmatpush.bf16.msra.mxu0 0
      %2895 = vmatpush.bf16.msra.mxu0 0
      %2896 = vmatpush.bf16.msra.mxu0 0
      %2897 = vmatpush.bf16.msra.mxu0 0
      %2898 = vmatpush.bf16.msra.mxu0 0
      %2899 = vmatpush.bf16.msra.mxu0 %v2829
      %2900 = vmatmul.bf16.gmra.mxu0 %v2814
      %v2901 = vpop.f32.mrf.mxu0
      %v2902 = vadd.f32 %v2736, %v2901
      %v2903 = vpop.f32.mrf.mxu0
      %2904 = vdwg.mxu0
      %2905 = vmatpush.bf16.msra.mxu0 0
      %2906 = vmatpush.bf16.msra.mxu0 0
      %2907 = vmatpush.bf16.msra.mxu0 0
      %2908 = vmatpush.bf16.msra.mxu0 0
      %2909 = vmatpush.bf16.msra.mxu0 0
      %2910 = vmatpush.bf16.msra.mxu0 0
      %2911 = vmatpush.bf16.msra.mxu0 0
      %2912 = vmatpush.bf16.msra.mxu0 %v2832
      %2913 = vmatmul.bf16.gmra.mxu0 %v2814
      %v2914 = vpop.f32.mrf.mxu0
      %v2915 = vadd.f32 %v2749, %v2914
      %v2916 = vpop.f32.mrf.mxu0
      %2917 = vdwg.mxu0
      %2918 = vmatpush.bf16.msra.mxu0 0
      %2919 = vmatpush.bf16.msra.mxu0 0
      %2920 = vmatpush.bf16.msra.mxu0 0
      %2921 = vmatpush.bf16.msra.mxu0 0
      %2922 = vmatpush.bf16.msra.mxu0 0
      %2923 = vmatpush.bf16.msra.mxu0 0
      %2924 = vmatpush.bf16.msra.mxu0 0
      %2925 = vmatpush.bf16.msra.mxu0 %v2835
      %2926 = vmatmul.bf16.gmra.mxu0 %v2814
      %v2927 = vpop.f32.mrf.mxu0
      %v2928 = vadd.f32 %v2762, %v2927
      %v2929 = vpop.f32.mrf.mxu0
      %2930 = vdwg.mxu0
      %2931 = vmatpush.bf16.msra.mxu0 0
      %2932 = vmatpush.bf16.msra.mxu0 0
      %2933 = vmatpush.bf16.msra.mxu0 0
      %2934 = vmatpush.bf16.msra.mxu0 0
      %2935 = vmatpush.bf16.msra.mxu0 0
      %2936 = vmatpush.bf16.msra.mxu0 0
      %2937 = vmatpush.bf16.msra.mxu0 0
      %2938 = vmatpush.bf16.msra.mxu0 %v2838
      %2939 = vmatmul.bf16.gmra.mxu0 %v2814
      %v2940 = vpop.f32.mrf.mxu0
      %v2941 = vadd.f32 %v2775, %v2940
      %v2942 = vpop.f32.mrf.mxu0
      %2943 = vdwg.mxu0
      %v2944 = vmul.f32 %v2573, %v1068
      %v2945 = vmul.f32 %v2574, %v1084
      %v2946 = vmul.f32 %v2575, %v1085
      %v2947 = vmul.f32 %v2576, %v1086
      %v2948 = vmul.f32 %v2577, %v1087
      %v2949 = vmul.f32 %v2578, %v1088
      %v2950 = vmul.f32 %v2579, %v1089
      %v2951 = vmul.f32 %v2580, %v1090
      %v2952 = vmul.f32 %v2581, %v1082
      %s2953 = scalar_lea.vmem %s6, 8
      %v2954 = vld [vmem:[%s2953] sm:$0xf]
      %v2955 = vpack.c.bf16 %v2944, %v2944
      %v2956 = vpack.c.bf16 %v2945, %v2945
      %v2957 = vpack.c.bf16 %v2946, %v2946
      %v2958 = vpack.c.bf16 %v2947, %v2947
      %v2959 = vpack.c.bf16 %v2948, %v2948
      %v2960 = vpack.c.bf16 %v2949, %v2949
      %v2961 = vpack.c.bf16 %v2950, %v2950
      %v2962 = vpack.c.bf16 %v2951, %v2951
      %v2963 = vpack.c.bf16 %v2952, %v2952
      %2973 = vrot.lane.b32.xlu0 %v2955, 31
      %v2974 = vpop.permute.xlu0 %2973
      %2975 = vrot.lane.b32.xlu0 %v2956, 31
      %v2976 = vpop.permute.xlu0 %2975
      %2977 = vrot.lane.b32.xlu0 %v2957, 31
      %v2978 = vpop.permute.xlu0 %2977
      %2979 = vrot.lane.b32.xlu0 %v2958, 31
      %v2980 = vpop.permute.xlu0 %2979
      %2981 = vrot.lane.b32.xlu0 %v2959, 31
      %v2982 = vpop.permute.xlu0 %2981
      %2983 = vrot.lane.b32.xlu0 %v2960, 31
      %v2984 = vpop.permute.xlu0 %2983
      %2985 = vrot.lane.b32.xlu0 %v2961, 31
      %v2986 = vpop.permute.xlu0 %2985
      %2987 = vrot.lane.b32.xlu0 %v2962, 31
      %v2988 = vpop.permute.xlu0 %2987
      %2989 = vrot.lane.b32.xlu0 %v2963, 31
      %v2990 = vpop.permute.xlu0 %2989
      %v2991 = vsel %vm1147, %v2974, %v2976
      %v2992 = vsel %vm1147, %v2976, %v2978
      %v2993 = vsel %vm1147, %v2978, %v2980
      %v2994 = vsel %vm1147, %v2980, %v2982
      %v2995 = vsel %vm1147, %v2982, %v2984
      %v2996 = vsel %vm1147, %v2984, %v2986
      %v2997 = vsel %vm1147, %v2986, %v2988
      %v2998 = vsel %vm1147, %v2988, %v2990
      %v3000 = vsel %vm758, %v2954, 0
      %v3003 = vsel %vm762, %v2991, 0
      %v3006 = vsel %vm762, %v2992, 0
      %v3009 = vsel %vm762, %v2993, 0
      %v3012 = vsel %vm762, %v2994, 0
      %v3015 = vsel %vm762, %v2995, 0
      %v3018 = vsel %vm762, %v2996, 0
      %v3021 = vsel %vm762, %v2997, 0
      %v3024 = vsel %vm762, %v2998, 0
      %3026 = vmatpush.bf16.msra.mxu0 0
      %3027 = vmatpush.bf16.msra.mxu0 0
      %3028 = vmatpush.bf16.msra.mxu0 0
      %3029 = vmatpush.bf16.msra.mxu0 0
      %3030 = vmatpush.bf16.msra.mxu0 0
      %3031 = vmatpush.bf16.msra.mxu0 0
      %3032 = vmatpush.bf16.msra.mxu0 0
      %3033 = vmatpush.bf16.msra.mxu0 %v3003
      %3034 = vmatmul.bf16.gmra.mxu0 %v3000
      %v3035 = vpop.f32.mrf.mxu0
      %v3036 = vadd.f32 0.0, %v3035
      %v3037 = vpop.f32.mrf.mxu0
      %3038 = vdwg.mxu0
      %3039 = vmatpush.bf16.msra.mxu0 0
      %3040 = vmatpush.bf16.msra.mxu0 0
      %3041 = vmatpush.bf16.msra.mxu0 0
      %3042 = vmatpush.bf16.msra.mxu0 0
      %3043 = vmatpush.bf16.msra.mxu0 0
      %3044 = vmatpush.bf16.msra.mxu0 0
      %3045 = vmatpush.bf16.msra.mxu0 0
      %3046 = vmatpush.bf16.msra.mxu0 %v3006
      %3047 = vmatmul.bf16.gmra.mxu0 %v3000
      %v3048 = vpop.f32.mrf.mxu0
      %v3049 = vadd.f32 0.0, %v3048
      %v3050 = vpop.f32.mrf.mxu0
      %3051 = vdwg.mxu0
      %3052 = vmatpush.bf16.msra.mxu0 0
      %3053 = vmatpush.bf16.msra.mxu0 0
      %3054 = vmatpush.bf16.msra.mxu0 0
      %3055 = vmatpush.bf16.msra.mxu0 0
      %3056 = vmatpush.bf16.msra.mxu0 0
      %3057 = vmatpush.bf16.msra.mxu0 0
      %3058 = vmatpush.bf16.msra.mxu0 0
      %3059 = vmatpush.bf16.msra.mxu0 %v3009
      %3060 = vmatmul.bf16.gmra.mxu0 %v3000
      %v3061 = vpop.f32.mrf.mxu0
      %v3062 = vadd.f32 0.0, %v3061
      %v3063 = vpop.f32.mrf.mxu0
      %3064 = vdwg.mxu0
      %3065 = vmatpush.bf16.msra.mxu0 0
      %3066 = vmatpush.bf16.msra.mxu0 0
      %3067 = vmatpush.bf16.msra.mxu0 0
      %3068 = vmatpush.bf16.msra.mxu0 0
      %3069 = vmatpush.bf16.msra.mxu0 0
      %3070 = vmatpush.bf16.msra.mxu0 0
      %3071 = vmatpush.bf16.msra.mxu0 0
      %3072 = vmatpush.bf16.msra.mxu0 %v3012
      %3073 = vmatmul.bf16.gmra.mxu0 %v3000
      %v3074 = vpop.f32.mrf.mxu0
      %v3075 = vadd.f32 0.0, %v3074
      %v3076 = vpop.f32.mrf.mxu0
      %3077 = vdwg.mxu0
      %3078 = vmatpush.bf16.msra.mxu0 0
      %3079 = vmatpush.bf16.msra.mxu0 0
      %3080 = vmatpush.bf16.msra.mxu0 0
      %3081 = vmatpush.bf16.msra.mxu0 0
      %3082 = vmatpush.bf16.msra.mxu0 0
      %3083 = vmatpush.bf16.msra.mxu0 0
      %3084 = vmatpush.bf16.msra.mxu0 0
      %3085 = vmatpush.bf16.msra.mxu0 %v3015
      %3086 = vmatmul.bf16.gmra.mxu0 %v3000
      %v3087 = vpop.f32.mrf.mxu0
      %v3088 = vadd.f32 0.0, %v3087
      %v3089 = vpop.f32.mrf.mxu0
      %3090 = vdwg.mxu0
      %3091 = vmatpush.bf16.msra.mxu0 0
      %3092 = vmatpush.bf16.msra.mxu0 0
      %3093 = vmatpush.bf16.msra.mxu0 0
      %3094 = vmatpush.bf16.msra.mxu0 0
      %3095 = vmatpush.bf16.msra.mxu0 0
      %3096 = vmatpush.bf16.msra.mxu0 0
      %3097 = vmatpush.bf16.msra.mxu0 0
      %3098 = vmatpush.bf16.msra.mxu0 %v3018
      %3099 = vmatmul.bf16.gmra.mxu0 %v3000
      %v3100 = vpop.f32.mrf.mxu0
      %v3101 = vadd.f32 0.0, %v3100
      %v3102 = vpop.f32.mrf.mxu0
      %3103 = vdwg.mxu0
      %3104 = vmatpush.bf16.msra.mxu0 0
      %3105 = vmatpush.bf16.msra.mxu0 0
      %3106 = vmatpush.bf16.msra.mxu0 0
      %3107 = vmatpush.bf16.msra.mxu0 0
      %3108 = vmatpush.bf16.msra.mxu0 0
      %3109 = vmatpush.bf16.msra.mxu0 0
      %3110 = vmatpush.bf16.msra.mxu0 0
      %3111 = vmatpush.bf16.msra.mxu0 %v3021
      %3112 = vmatmul.bf16.gmra.mxu0 %v3000
      %v3113 = vpop.f32.mrf.mxu0
      %v3114 = vadd.f32 0.0, %v3113
      %v3115 = vpop.f32.mrf.mxu0
      %3116 = vdwg.mxu0
      %3117 = vmatpush.bf16.msra.mxu0 0
      %3118 = vmatpush.bf16.msra.mxu0 0
      %3119 = vmatpush.bf16.msra.mxu0 0
      %3120 = vmatpush.bf16.msra.mxu0 0
      %3121 = vmatpush.bf16.msra.mxu0 0
      %3122 = vmatpush.bf16.msra.mxu0 0
      %3123 = vmatpush.bf16.msra.mxu0 0
      %3124 = vmatpush.bf16.msra.mxu0 %v3024
      %3125 = vmatmul.bf16.gmra.mxu0 %v3000
      %v3126 = vpop.f32.mrf.mxu0
      %v3127 = vadd.f32 0.0, %v3126
      %v3128 = vpop.f32.mrf.mxu0
      %3129 = vdwg.mxu0
      %v3130 = vadd.f32 %v2850, %v3036
      %v3131 = vadd.f32 %v2863, %v3049
      %v3132 = vadd.f32 %v2876, %v3062
      %v3133 = vadd.f32 %v2889, %v3075
      %v3134 = vadd.f32 %v2902, %v3088
      %v3135 = vadd.f32 %v2915, %v3101
      %v3136 = vadd.f32 %v2928, %v3114
      %v3137 = vadd.f32 %v2941, %v3127
      %v3138 = vmul.f32 %v2573, %v1296
      %v3139 = vmul.f32 %v2574, %v1312
      %v3140 = vmul.f32 %v2575, %v1313
      %v3141 = vmul.f32 %v2576, %v1314
      %v3142 = vmul.f32 %v2577, %v1315
      %v3143 = vmul.f32 %v2578, %v1316
      %v3144 = vmul.f32 %v2579, %v1317
      %v3145 = vmul.f32 %v2580, %v1318
      %v3146 = vmul.f32 %v2581, %v1310
      %s3147 = scalar_lea.vmem %s6, 12
      %v3148 = vld [vmem:[%s3147] sm:$0xf]
      %v3149 = vpack.c.bf16 %v3138, %v3138
      %v3150 = vpack.c.bf16 %v3139, %v3139
      %v3151 = vpack.c.bf16 %v3140, %v3140
      %v3152 = vpack.c.bf16 %v3141, %v3141
      %v3153 = vpack.c.bf16 %v3142, %v3142
      %v3154 = vpack.c.bf16 %v3143, %v3143
      %v3155 = vpack.c.bf16 %v3144, %v3144
      %v3156 = vpack.c.bf16 %v3145, %v3145
      %v3157 = vpack.c.bf16 %v3146, %v3146
      %3167 = vrot.lane.b32.xlu0 %v3149, 1
      %v3168 = vpop.permute.xlu0 %3167
      %3169 = vrot.lane.b32.xlu0 %v3150, 1
      %v3170 = vpop.permute.xlu0 %3169
      %3171 = vrot.lane.b32.xlu0 %v3151, 1
      %v3172 = vpop.permute.xlu0 %3171
      %3173 = vrot.lane.b32.xlu0 %v3152, 1
      %v3174 = vpop.permute.xlu0 %3173
      %3175 = vrot.lane.b32.xlu0 %v3153, 1
      %v3176 = vpop.permute.xlu0 %3175
      %3177 = vrot.lane.b32.xlu0 %v3154, 1
      %v3178 = vpop.permute.xlu0 %3177
      %3179 = vrot.lane.b32.xlu0 %v3155, 1
      %v3180 = vpop.permute.xlu0 %3179
      %3181 = vrot.lane.b32.xlu0 %v3156, 1
      %v3182 = vpop.permute.xlu0 %3181
      %3183 = vrot.lane.b32.xlu0 %v3157, 1
      %v3184 = vpop.permute.xlu0 %3183
      %v3185 = vsel %vm1375, %v3168, %v3170
      %v3186 = vsel %vm1375, %v3170, %v3172
      %v3187 = vsel %vm1375, %v3172, %v3174
      %v3188 = vsel %vm1375, %v3174, %v3176
      %v3189 = vsel %vm1375, %v3176, %v3178
      %v3190 = vsel %vm1375, %v3178, %v3180
      %v3191 = vsel %vm1375, %v3180, %v3182
      %v3192 = vsel %vm1375, %v3182, %v3184
      %v3194 = vsel %vm758, %v3148, 0
      %v3197 = vsel %vm762, %v3185, 0
      %v3200 = vsel %vm762, %v3186, 0
      %v3203 = vsel %vm762, %v3187, 0
      %v3206 = vsel %vm762, %v3188, 0
      %v3209 = vsel %vm762, %v3189, 0
      %v3212 = vsel %vm762, %v3190, 0
      %v3215 = vsel %vm762, %v3191, 0
      %v3218 = vsel %vm762, %v3192, 0
      %3220 = vmatpush.bf16.msra.mxu0 0
      %3221 = vmatpush.bf16.msra.mxu0 0
      %3222 = vmatpush.bf16.msra.mxu0 0
      %3223 = vmatpush.bf16.msra.mxu0 0
      %3224 = vmatpush.bf16.msra.mxu0 0
      %3225 = vmatpush.bf16.msra.mxu0 0
      %3226 = vmatpush.bf16.msra.mxu0 0
      %3227 = vmatpush.bf16.msra.mxu0 %v3197
      %3228 = vmatmul.bf16.gmra.mxu0 %v3194
      %v3229 = vpop.f32.mrf.mxu0
      %v3230 = vadd.f32 0.0, %v3229
      %v3231 = vpop.f32.mrf.mxu0
      %3232 = vdwg.mxu0
      %3233 = vmatpush.bf16.msra.mxu0 0
      %3234 = vmatpush.bf16.msra.mxu0 0
      %3235 = vmatpush.bf16.msra.mxu0 0
      %3236 = vmatpush.bf16.msra.mxu0 0
      %3237 = vmatpush.bf16.msra.mxu0 0
      %3238 = vmatpush.bf16.msra.mxu0 0
      %3239 = vmatpush.bf16.msra.mxu0 0
      %3240 = vmatpush.bf16.msra.mxu0 %v3200
      %3241 = vmatmul.bf16.gmra.mxu0 %v3194
      %v3242 = vpop.f32.mrf.mxu0
      %v3243 = vadd.f32 0.0, %v3242
      %v3244 = vpop.f32.mrf.mxu0
      %3245 = vdwg.mxu0
      %3246 = vmatpush.bf16.msra.mxu0 0
      %3247 = vmatpush.bf16.msra.mxu0 0
      %3248 = vmatpush.bf16.msra.mxu0 0
      %3249 = vmatpush.bf16.msra.mxu0 0
      %3250 = vmatpush.bf16.msra.mxu0 0
      %3251 = vmatpush.bf16.msra.mxu0 0
      %3252 = vmatpush.bf16.msra.mxu0 0
      %3253 = vmatpush.bf16.msra.mxu0 %v3203
      %3254 = vmatmul.bf16.gmra.mxu0 %v3194
      %v3255 = vpop.f32.mrf.mxu0
      %v3256 = vadd.f32 0.0, %v3255
      %v3257 = vpop.f32.mrf.mxu0
      %3258 = vdwg.mxu0
      %3259 = vmatpush.bf16.msra.mxu0 0
      %3260 = vmatpush.bf16.msra.mxu0 0
      %3261 = vmatpush.bf16.msra.mxu0 0
      %3262 = vmatpush.bf16.msra.mxu0 0
      %3263 = vmatpush.bf16.msra.mxu0 0
      %3264 = vmatpush.bf16.msra.mxu0 0
      %3265 = vmatpush.bf16.msra.mxu0 0
      %3266 = vmatpush.bf16.msra.mxu0 %v3206
      %3267 = vmatmul.bf16.gmra.mxu0 %v3194
      %v3268 = vpop.f32.mrf.mxu0
      %v3269 = vadd.f32 0.0, %v3268
      %v3270 = vpop.f32.mrf.mxu0
      %3271 = vdwg.mxu0
      %3272 = vmatpush.bf16.msra.mxu0 0
      %3273 = vmatpush.bf16.msra.mxu0 0
      %3274 = vmatpush.bf16.msra.mxu0 0
      %3275 = vmatpush.bf16.msra.mxu0 0
      %3276 = vmatpush.bf16.msra.mxu0 0
      %3277 = vmatpush.bf16.msra.mxu0 0
      %3278 = vmatpush.bf16.msra.mxu0 0
      %3279 = vmatpush.bf16.msra.mxu0 %v3209
      %3280 = vmatmul.bf16.gmra.mxu0 %v3194
      %v3281 = vpop.f32.mrf.mxu0
      %v3282 = vadd.f32 0.0, %v3281
      %v3283 = vpop.f32.mrf.mxu0
      %3284 = vdwg.mxu0
      %3285 = vmatpush.bf16.msra.mxu0 0
      %3286 = vmatpush.bf16.msra.mxu0 0
      %3287 = vmatpush.bf16.msra.mxu0 0
      %3288 = vmatpush.bf16.msra.mxu0 0
      %3289 = vmatpush.bf16.msra.mxu0 0
      %3290 = vmatpush.bf16.msra.mxu0 0
      %3291 = vmatpush.bf16.msra.mxu0 0
      %3292 = vmatpush.bf16.msra.mxu0 %v3212
      %3293 = vmatmul.bf16.gmra.mxu0 %v3194
      %v3294 = vpop.f32.mrf.mxu0
      %v3295 = vadd.f32 0.0, %v3294
      %v3296 = vpop.f32.mrf.mxu0
      %3297 = vdwg.mxu0
      %3298 = vmatpush.bf16.msra.mxu0 0
      %3299 = vmatpush.bf16.msra.mxu0 0
      %3300 = vmatpush.bf16.msra.mxu0 0
      %3301 = vmatpush.bf16.msra.mxu0 0
      %3302 = vmatpush.bf16.msra.mxu0 0
      %3303 = vmatpush.bf16.msra.mxu0 0
      %3304 = vmatpush.bf16.msra.mxu0 0
      %3305 = vmatpush.bf16.msra.mxu0 %v3215
      %3306 = vmatmul.bf16.gmra.mxu0 %v3194
      %v3307 = vpop.f32.mrf.mxu0
      %v3308 = vadd.f32 0.0, %v3307
      %v3309 = vpop.f32.mrf.mxu0
      %3310 = vdwg.mxu0
      %3311 = vmatpush.bf16.msra.mxu0 0
      %3312 = vmatpush.bf16.msra.mxu0 0
      %3313 = vmatpush.bf16.msra.mxu0 0
      %3314 = vmatpush.bf16.msra.mxu0 0
      %3315 = vmatpush.bf16.msra.mxu0 0
      %3316 = vmatpush.bf16.msra.mxu0 0
      %3317 = vmatpush.bf16.msra.mxu0 0
      %3318 = vmatpush.bf16.msra.mxu0 %v3218
      %3319 = vmatmul.bf16.gmra.mxu0 %v3194
      %v3320 = vpop.f32.mrf.mxu0
      %v3321 = vadd.f32 0.0, %v3320
      %v3322 = vpop.f32.mrf.mxu0
      %3323 = vdwg.mxu0
      %v3324 = vadd.f32 %v3130, %v3230
      %v3325 = vadd.f32 %v3131, %v3243
      %v3326 = vadd.f32 %v3132, %v3256
      %v3327 = vadd.f32 %v3133, %v3269
      %v3328 = vadd.f32 %v3134, %v3282
      %v3329 = vadd.f32 %v3135, %v3295
      %v3330 = vadd.f32 %v3136, %v3308
      %v3331 = vadd.f32 %v3137, %v3321
      %s3332 = scalar_lea.vmem %s6, 16
      %v3333 = vld [vmem:[%s3332] sm:$0xf]
      %v3335 = vsel %vm758, %v3333, 0
      %v3338 = vsel %vm762, %v2604, 0
      %v3341 = vsel %vm762, %v2605, 0
      %v3344 = vsel %vm762, %v2606, 0
      %v3347 = vsel %vm762, %v2607, 0
      %v3350 = vsel %vm762, %v2608, 0
      %v3353 = vsel %vm762, %v2609, 0
      %v3356 = vsel %vm762, %v2610, 0
      %v3359 = vsel %vm762, %v2611, 0
      %3361 = vmatpush.bf16.msra.mxu0 0
      %3362 = vmatpush.bf16.msra.mxu0 0
      %3363 = vmatpush.bf16.msra.mxu0 0
      %3364 = vmatpush.bf16.msra.mxu0 0
      %3365 = vmatpush.bf16.msra.mxu0 0
      %3366 = vmatpush.bf16.msra.mxu0 0
      %3367 = vmatpush.bf16.msra.mxu0 0
      %3368 = vmatpush.bf16.msra.mxu0 %v3338
      %3369 = vmatmul.bf16.gmra.mxu0 %v3335
      %v3370 = vpop.f32.mrf.mxu0
      %v3371 = vadd.f32 0.0, %v3370
      %v3372 = vpop.f32.mrf.mxu0
      %3373 = vdwg.mxu0
      %3374 = vmatpush.bf16.msra.mxu0 0
      %3375 = vmatpush.bf16.msra.mxu0 0
      %3376 = vmatpush.bf16.msra.mxu0 0
      %3377 = vmatpush.bf16.msra.mxu0 0
      %3378 = vmatpush.bf16.msra.mxu0 0
      %3379 = vmatpush.bf16.msra.mxu0 0
      %3380 = vmatpush.bf16.msra.mxu0 0
      %3381 = vmatpush.bf16.msra.mxu0 %v3341
      %3382 = vmatmul.bf16.gmra.mxu0 %v3335
      %v3383 = vpop.f32.mrf.mxu0
      %v3384 = vadd.f32 0.0, %v3383
      %v3385 = vpop.f32.mrf.mxu0
      %3386 = vdwg.mxu0
      %3387 = vmatpush.bf16.msra.mxu0 0
      %3388 = vmatpush.bf16.msra.mxu0 0
      %3389 = vmatpush.bf16.msra.mxu0 0
      %3390 = vmatpush.bf16.msra.mxu0 0
      %3391 = vmatpush.bf16.msra.mxu0 0
      %3392 = vmatpush.bf16.msra.mxu0 0
      %3393 = vmatpush.bf16.msra.mxu0 0
      %3394 = vmatpush.bf16.msra.mxu0 %v3344
      %3395 = vmatmul.bf16.gmra.mxu0 %v3335
      %v3396 = vpop.f32.mrf.mxu0
      %v3397 = vadd.f32 0.0, %v3396
      %v3398 = vpop.f32.mrf.mxu0
      %3399 = vdwg.mxu0
      %3400 = vmatpush.bf16.msra.mxu0 0
      %3401 = vmatpush.bf16.msra.mxu0 0
      %3402 = vmatpush.bf16.msra.mxu0 0
      %3403 = vmatpush.bf16.msra.mxu0 0
      %3404 = vmatpush.bf16.msra.mxu0 0
      %3405 = vmatpush.bf16.msra.mxu0 0
      %3406 = vmatpush.bf16.msra.mxu0 0
      %3407 = vmatpush.bf16.msra.mxu0 %v3347
      %3408 = vmatmul.bf16.gmra.mxu0 %v3335
      %v3409 = vpop.f32.mrf.mxu0
      %v3410 = vadd.f32 0.0, %v3409
      %v3411 = vpop.f32.mrf.mxu0
      %3412 = vdwg.mxu0
      %3413 = vmatpush.bf16.msra.mxu0 0
      %3414 = vmatpush.bf16.msra.mxu0 0
      %3415 = vmatpush.bf16.msra.mxu0 0
      %3416 = vmatpush.bf16.msra.mxu0 0
      %3417 = vmatpush.bf16.msra.mxu0 0
      %3418 = vmatpush.bf16.msra.mxu0 0
      %3419 = vmatpush.bf16.msra.mxu0 0
      %3420 = vmatpush.bf16.msra.mxu0 %v3350
      %3421 = vmatmul.bf16.gmra.mxu0 %v3335
      %v3422 = vpop.f32.mrf.mxu0
      %v3423 = vadd.f32 0.0, %v3422
      %v3424 = vpop.f32.mrf.mxu0
      %3425 = vdwg.mxu0
      %3426 = vmatpush.bf16.msra.mxu0 0
      %3427 = vmatpush.bf16.msra.mxu0 0
      %3428 = vmatpush.bf16.msra.mxu0 0
      %3429 = vmatpush.bf16.msra.mxu0 0
      %3430 = vmatpush.bf16.msra.mxu0 0
      %3431 = vmatpush.bf16.msra.mxu0 0
      %3432 = vmatpush.bf16.msra.mxu0 0
      %3433 = vmatpush.bf16.msra.mxu0 %v3353
      %3434 = vmatmul.bf16.gmra.mxu0 %v3335
      %v3435 = vpop.f32.mrf.mxu0
      %v3436 = vadd.f32 0.0, %v3435
      %v3437 = vpop.f32.mrf.mxu0
      %3438 = vdwg.mxu0
      %3439 = vmatpush.bf16.msra.mxu0 0
      %3440 = vmatpush.bf16.msra.mxu0 0
      %3441 = vmatpush.bf16.msra.mxu0 0
      %3442 = vmatpush.bf16.msra.mxu0 0
      %3443 = vmatpush.bf16.msra.mxu0 0
      %3444 = vmatpush.bf16.msra.mxu0 0
      %3445 = vmatpush.bf16.msra.mxu0 0
      %3446 = vmatpush.bf16.msra.mxu0 %v3356
      %3447 = vmatmul.bf16.gmra.mxu0 %v3335
      %v3448 = vpop.f32.mrf.mxu0
      %v3449 = vadd.f32 0.0, %v3448
      %v3450 = vpop.f32.mrf.mxu0
      %3451 = vdwg.mxu0
      %3452 = vmatpush.bf16.msra.mxu0 0
      %3453 = vmatpush.bf16.msra.mxu0 0
      %3454 = vmatpush.bf16.msra.mxu0 0
      %3455 = vmatpush.bf16.msra.mxu0 0
      %3456 = vmatpush.bf16.msra.mxu0 0
      %3457 = vmatpush.bf16.msra.mxu0 0
      %3458 = vmatpush.bf16.msra.mxu0 0
      %3459 = vmatpush.bf16.msra.mxu0 %v3359
      %3460 = vmatmul.bf16.gmra.mxu0 %v3335
      %v3461 = vpop.f32.mrf.mxu0
      %v3462 = vadd.f32 0.0, %v3461
      %v3463 = vpop.f32.mrf.mxu0
      %3464 = vdwg.mxu0
      %v3465 = vadd.f32 %v3324, %v3371
      %v3466 = vadd.f32 %v3325, %v3384
      %v3467 = vadd.f32 %v3326, %v3397
      %v3468 = vadd.f32 %v3327, %v3410
      %v3469 = vadd.f32 %v3328, %v3423
      %v3470 = vadd.f32 %v3329, %v3436
      %v3471 = vadd.f32 %v3330, %v3449
      %v3472 = vadd.f32 %v3331, %v3462
      %v3473 = vld [vmem:[#allocation2 + $0x8] sm:$0xff]
      %v3474 = vld [vmem:[#allocation2 + $0x10] sm:$0xff]
      %v3475 = vld [vmem:[#allocation2 + $0x18] sm:$0xff]
      %v3476 = vld [vmem:[#allocation2 + $0x20] sm:$0xff]
      %v3477 = vld [vmem:[#allocation2 + $0x28] sm:$0xff]
      %v3478 = vld [vmem:[#allocation2 + $0x30] sm:$0xff]
      %v3479 = vld [vmem:[#allocation2 + $0x38] sm:$0xff]
      %v3480 = vld [vmem:[#allocation2 + $0x40] sm:$0xff]
      %v3481 = vld [vmem:[#allocation2 + $0x48] sm:$0xff]
      %v3482 = vmul.f32 %v3473, %v1674
      %v3483 = vmul.f32 %v3474, %v1690
      %v3484 = vmul.f32 %v3475, %v1691
      %v3485 = vmul.f32 %v3476, %v1692
      %v3486 = vmul.f32 %v3477, %v1693
      %v3487 = vmul.f32 %v3478, %v1694
      %v3488 = vmul.f32 %v3479, %v1695
      %v3489 = vmul.f32 %v3480, %v1696
      %v3490 = vmul.f32 %v3481, %v1688
      %s3491 = scalar_lea.vmem %s6, 20
      %v3492 = vld [vmem:[%s3491] sm:$0xf]
      %v3493 = vpack.c.bf16 %v3482, %v3482
      %v3494 = vpack.c.bf16 %v3483, %v3483
      %v3495 = vpack.c.bf16 %v3484, %v3484
      %v3496 = vpack.c.bf16 %v3485, %v3485
      %v3497 = vpack.c.bf16 %v3486, %v3486
      %v3498 = vpack.c.bf16 %v3487, %v3487
      %v3499 = vpack.c.bf16 %v3488, %v3488
      %v3500 = vpack.c.bf16 %v3489, %v3489
      %v3501 = vpack.c.bf16 %v3490, %v3490
      %3511 = vrot.lane.b32.xlu0 %v3493, 127
      %v3512 = vpop.permute.xlu0 %3511
      %3513 = vrot.lane.b32.xlu0 %v3494, 127
      %v3514 = vpop.permute.xlu0 %3513
      %3515 = vrot.lane.b32.xlu0 %v3495, 127
      %v3516 = vpop.permute.xlu0 %3515
      %3517 = vrot.lane.b32.xlu0 %v3496, 127
      %v3518 = vpop.permute.xlu0 %3517
      %3519 = vrot.lane.b32.xlu0 %v3497, 127
      %v3520 = vpop.permute.xlu0 %3519
      %3521 = vrot.lane.b32.xlu0 %v3498, 127
      %v3522 = vpop.permute.xlu0 %3521
      %3523 = vrot.lane.b32.xlu0 %v3499, 127
      %v3524 = vpop.permute.xlu0 %3523
      %3525 = vrot.lane.b32.xlu0 %v3500, 127
      %v3526 = vpop.permute.xlu0 %3525
      %3527 = vrot.lane.b32.xlu0 %v3501, 127
      %v3528 = vpop.permute.xlu0 %3527
      %v3529 = vsel %vm1753, %v3512, %v3514
      %v3530 = vsel %vm1753, %v3514, %v3516
      %v3531 = vsel %vm1753, %v3516, %v3518
      %v3532 = vsel %vm1753, %v3518, %v3520
      %v3533 = vsel %vm1753, %v3520, %v3522
      %v3534 = vsel %vm1753, %v3522, %v3524
      %v3535 = vsel %vm1753, %v3524, %v3526
      %v3536 = vsel %vm1753, %v3526, %v3528
      %v3538 = vsel %vm758, %v3492, 0
      %v3541 = vsel %vm762, %v3529, 0
      %v3544 = vsel %vm762, %v3530, 0
      %v3547 = vsel %vm762, %v3531, 0
      %v3550 = vsel %vm762, %v3532, 0
      %v3553 = vsel %vm762, %v3533, 0
      %v3556 = vsel %vm762, %v3534, 0
      %v3559 = vsel %vm762, %v3535, 0
      %v3562 = vsel %vm762, %v3536, 0
      %3564 = vmatpush.bf16.msra.mxu0 0
      %3565 = vmatpush.bf16.msra.mxu0 0
      %3566 = vmatpush.bf16.msra.mxu0 0
      %3567 = vmatpush.bf16.msra.mxu0 0
      %3568 = vmatpush.bf16.msra.mxu0 0
      %3569 = vmatpush.bf16.msra.mxu0 0
      %3570 = vmatpush.bf16.msra.mxu0 0
      %3571 = vmatpush.bf16.msra.mxu0 %v3541
      %3572 = vmatmul.bf16.gmra.mxu0 %v3538
      %v3573 = vpop.f32.mrf.mxu0
      %v3574 = vadd.f32 0.0, %v3573
      %v3575 = vpop.f32.mrf.mxu0
      %3576 = vdwg.mxu0
      %3577 = vmatpush.bf16.msra.mxu0 0
      %3578 = vmatpush.bf16.msra.mxu0 0
      %3579 = vmatpush.bf16.msra.mxu0 0
      %3580 = vmatpush.bf16.msra.mxu0 0
      %3581 = vmatpush.bf16.msra.mxu0 0
      %3582 = vmatpush.bf16.msra.mxu0 0
      %3583 = vmatpush.bf16.msra.mxu0 0
      %3584 = vmatpush.bf16.msra.mxu0 %v3544
      %3585 = vmatmul.bf16.gmra.mxu0 %v3538
      %v3586 = vpop.f32.mrf.mxu0
      %v3587 = vadd.f32 0.0, %v3586
      %v3588 = vpop.f32.mrf.mxu0
      %3589 = vdwg.mxu0
      %3590 = vmatpush.bf16.msra.mxu0 0
      %3591 = vmatpush.bf16.msra.mxu0 0
      %3592 = vmatpush.bf16.msra.mxu0 0
      %3593 = vmatpush.bf16.msra.mxu0 0
      %3594 = vmatpush.bf16.msra.mxu0 0
      %3595 = vmatpush.bf16.msra.mxu0 0
      %3596 = vmatpush.bf16.msra.mxu0 0
      %3597 = vmatpush.bf16.msra.mxu0 %v3547
      %3598 = vmatmul.bf16.gmra.mxu0 %v3538
      %v3599 = vpop.f32.mrf.mxu0
      %v3600 = vadd.f32 0.0, %v3599
      %v3601 = vpop.f32.mrf.mxu0
      %3602 = vdwg.mxu0
      %3603 = vmatpush.bf16.msra.mxu0 0
      %3604 = vmatpush.bf16.msra.mxu0 0
      %3605 = vmatpush.bf16.msra.mxu0 0
      %3606 = vmatpush.bf16.msra.mxu0 0
      %3607 = vmatpush.bf16.msra.mxu0 0
      %3608 = vmatpush.bf16.msra.mxu0 0
      %3609 = vmatpush.bf16.msra.mxu0 0
      %3610 = vmatpush.bf16.msra.mxu0 %v3550
      %3611 = vmatmul.bf16.gmra.mxu0 %v3538
      %v3612 = vpop.f32.mrf.mxu0
      %v3613 = vadd.f32 0.0, %v3612
      %v3614 = vpop.f32.mrf.mxu0
      %3615 = vdwg.mxu0
      %3616 = vmatpush.bf16.msra.mxu0 0
      %3617 = vmatpush.bf16.msra.mxu0 0
      %3618 = vmatpush.bf16.msra.mxu0 0
      %3619 = vmatpush.bf16.msra.mxu0 0
      %3620 = vmatpush.bf16.msra.mxu0 0
      %3621 = vmatpush.bf16.msra.mxu0 0
      %3622 = vmatpush.bf16.msra.mxu0 0
      %3623 = vmatpush.bf16.msra.mxu0 %v3553
      %3624 = vmatmul.bf16.gmra.mxu0 %v3538
      %v3625 = vpop.f32.mrf.mxu0
      %v3626 = vadd.f32 0.0, %v3625
      %v3627 = vpop.f32.mrf.mxu0
      %3628 = vdwg.mxu0
      %3629 = vmatpush.bf16.msra.mxu0 0
      %3630 = vmatpush.bf16.msra.mxu0 0
      %3631 = vmatpush.bf16.msra.mxu0 0
      %3632 = vmatpush.bf16.msra.mxu0 0
      %3633 = vmatpush.bf16.msra.mxu0 0
      %3634 = vmatpush.bf16.msra.mxu0 0
      %3635 = vmatpush.bf16.msra.mxu0 0
      %3636 = vmatpush.bf16.msra.mxu0 %v3556
      %3637 = vmatmul.bf16.gmra.mxu0 %v3538
      %v3638 = vpop.f32.mrf.mxu0
      %v3639 = vadd.f32 0.0, %v3638
      %v3640 = vpop.f32.mrf.mxu0
      %3641 = vdwg.mxu0
      %3642 = vmatpush.bf16.msra.mxu0 0
      %3643 = vmatpush.bf16.msra.mxu0 0
      %3644 = vmatpush.bf16.msra.mxu0 0
      %3645 = vmatpush.bf16.msra.mxu0 0
      %3646 = vmatpush.bf16.msra.mxu0 0
      %3647 = vmatpush.bf16.msra.mxu0 0
      %3648 = vmatpush.bf16.msra.mxu0 0
      %3649 = vmatpush.bf16.msra.mxu0 %v3559
      %3650 = vmatmul.bf16.gmra.mxu0 %v3538
      %v3651 = vpop.f32.mrf.mxu0
      %v3652 = vadd.f32 0.0, %v3651
      %v3653 = vpop.f32.mrf.mxu0
      %3654 = vdwg.mxu0
      %3655 = vmatpush.bf16.msra.mxu0 0
      %3656 = vmatpush.bf16.msra.mxu0 0
      %3657 = vmatpush.bf16.msra.mxu0 0
      %3658 = vmatpush.bf16.msra.mxu0 0
      %3659 = vmatpush.bf16.msra.mxu0 0
      %3660 = vmatpush.bf16.msra.mxu0 0
      %3661 = vmatpush.bf16.msra.mxu0 0
      %3662 = vmatpush.bf16.msra.mxu0 %v3562
      %3663 = vmatmul.bf16.gmra.mxu0 %v3538
      %v3664 = vpop.f32.mrf.mxu0
      %v3665 = vadd.f32 0.0, %v3664
      %v3666 = vpop.f32.mrf.mxu0
      %3667 = vdwg.mxu0
      %v3668 = vadd.f32 %v3465, %v3574
      %v3669 = vadd.f32 %v3466, %v3587
      %v3670 = vadd.f32 %v3467, %v3600
      %v3671 = vadd.f32 %v3468, %v3613
      %v3672 = vadd.f32 %v3469, %v3626
      %v3673 = vadd.f32 %v3470, %v3639
      %v3674 = vadd.f32 %v3471, %v3652
      %v3675 = vadd.f32 %v3472, %v3665
      %v3676 = vmul.f32 %v3473, %v1902
      %v3677 = vmul.f32 %v3474, %v1918
      %v3678 = vmul.f32 %v3475, %v1919
      %v3679 = vmul.f32 %v3476, %v1920
      %v3680 = vmul.f32 %v3477, %v1921
      %v3681 = vmul.f32 %v3478, %v1922
      %v3682 = vmul.f32 %v3479, %v1923
      %v3683 = vmul.f32 %v3480, %v1924
      %v3684 = vmul.f32 %v3481, %v1916
      %s3685 = scalar_lea.vmem %s6, 24
      %v3686 = vld [vmem:[%s3685] sm:$0xf]
      %v3687 = vpack.c.bf16 %v3676, %v3676
      %v3688 = vpack.c.bf16 %v3677, %v3677
      %v3689 = vpack.c.bf16 %v3678, %v3678
      %v3690 = vpack.c.bf16 %v3679, %v3679
      %v3691 = vpack.c.bf16 %v3680, %v3680
      %v3692 = vpack.c.bf16 %v3681, %v3681
      %v3693 = vpack.c.bf16 %v3682, %v3682
      %v3694 = vpack.c.bf16 %v3683, %v3683
      %v3695 = vpack.c.bf16 %v3684, %v3684
      %3705 = vrot.lane.b32.xlu0 %v3687, 97
      %v3706 = vpop.permute.xlu0 %3705
      %3707 = vrot.lane.b32.xlu0 %v3688, 97
      %v3708 = vpop.permute.xlu0 %3707
      %3709 = vrot.lane.b32.xlu0 %v3689, 97
      %v3710 = vpop.permute.xlu0 %3709
      %3711 = vrot.lane.b32.xlu0 %v3690, 97
      %v3712 = vpop.permute.xlu0 %3711
      %3713 = vrot.lane.b32.xlu0 %v3691, 97
      %v3714 = vpop.permute.xlu0 %3713
      %3715 = vrot.lane.b32.xlu0 %v3692, 97
      %v3716 = vpop.permute.xlu0 %3715
      %3717 = vrot.lane.b32.xlu0 %v3693, 97
      %v3718 = vpop.permute.xlu0 %3717
      %3719 = vrot.lane.b32.xlu0 %v3694, 97
      %v3720 = vpop.permute.xlu0 %3719
      %3721 = vrot.lane.b32.xlu0 %v3695, 97
      %v3722 = vpop.permute.xlu0 %3721
      %v3723 = vsel %vm1981, %v3706, %v3708
      %v3724 = vsel %vm1981, %v3708, %v3710
      %v3725 = vsel %vm1981, %v3710, %v3712
      %v3726 = vsel %vm1981, %v3712, %v3714
      %v3727 = vsel %vm1981, %v3714, %v3716
      %v3728 = vsel %vm1981, %v3716, %v3718
      %v3729 = vsel %vm1981, %v3718, %v3720
      %v3730 = vsel %vm1981, %v3720, %v3722
      %v3732 = vsel %vm758, %v3686, 0
      %v3735 = vsel %vm762, %v3723, 0
      %v3738 = vsel %vm762, %v3724, 0
      %v3741 = vsel %vm762, %v3725, 0
      %v3744 = vsel %vm762, %v3726, 0
      %v3747 = vsel %vm762, %v3727, 0
      %v3750 = vsel %vm762, %v3728, 0
      %v3753 = vsel %vm762, %v3729, 0
      %v3756 = vsel %vm762, %v3730, 0
      %3758 = vmatpush.bf16.msra.mxu0 0
      %3759 = vmatpush.bf16.msra.mxu0 0
      %3760 = vmatpush.bf16.msra.mxu0 0
      %3761 = vmatpush.bf16.msra.mxu0 0
      %3762 = vmatpush.bf16.msra.mxu0 0
      %3763 = vmatpush.bf16.msra.mxu0 0
      %3764 = vmatpush.bf16.msra.mxu0 0
      %3765 = vmatpush.bf16.msra.mxu0 %v3735
      %3766 = vmatmul.bf16.gmra.mxu0 %v3732
      %v3767 = vpop.f32.mrf.mxu0
      %v3768 = vadd.f32 0.0, %v3767
      %v3769 = vpop.f32.mrf.mxu0
      %3770 = vdwg.mxu0
      %3771 = vmatpush.bf16.msra.mxu0 0
      %3772 = vmatpush.bf16.msra.mxu0 0
      %3773 = vmatpush.bf16.msra.mxu0 0
      %3774 = vmatpush.bf16.msra.mxu0 0
      %3775 = vmatpush.bf16.msra.mxu0 0
      %3776 = vmatpush.bf16.msra.mxu0 0
      %3777 = vmatpush.bf16.msra.mxu0 0
      %3778 = vmatpush.bf16.msra.mxu0 %v3738
      %3779 = vmatmul.bf16.gmra.mxu0 %v3732
      %v3780 = vpop.f32.mrf.mxu0
      %v3781 = vadd.f32 0.0, %v3780
      %v3782 = vpop.f32.mrf.mxu0
      %3783 = vdwg.mxu0
      %3784 = vmatpush.bf16.msra.mxu0 0
      %3785 = vmatpush.bf16.msra.mxu0 0
      %3786 = vmatpush.bf16.msra.mxu0 0
      %3787 = vmatpush.bf16.msra.mxu0 0
      %3788 = vmatpush.bf16.msra.mxu0 0
      %3789 = vmatpush.bf16.msra.mxu0 0
      %3790 = vmatpush.bf16.msra.mxu0 0
      %3791 = vmatpush.bf16.msra.mxu0 %v3741
      %3792 = vmatmul.bf16.gmra.mxu0 %v3732
      %v3793 = vpop.f32.mrf.mxu0
      %v3794 = vadd.f32 0.0, %v3793
      %v3795 = vpop.f32.mrf.mxu0
      %3796 = vdwg.mxu0
      %3797 = vmatpush.bf16.msra.mxu0 0
      %3798 = vmatpush.bf16.msra.mxu0 0
      %3799 = vmatpush.bf16.msra.mxu0 0
      %3800 = vmatpush.bf16.msra.mxu0 0
      %3801 = vmatpush.bf16.msra.mxu0 0
      %3802 = vmatpush.bf16.msra.mxu0 0
      %3803 = vmatpush.bf16.msra.mxu0 0
      %3804 = vmatpush.bf16.msra.mxu0 %v3744
      %3805 = vmatmul.bf16.gmra.mxu0 %v3732
      %v3806 = vpop.f32.mrf.mxu0
      %v3807 = vadd.f32 0.0, %v3806
      %v3808 = vpop.f32.mrf.mxu0
      %3809 = vdwg.mxu0
      %3810 = vmatpush.bf16.msra.mxu0 0
      %3811 = vmatpush.bf16.msra.mxu0 0
      %3812 = vmatpush.bf16.msra.mxu0 0
      %3813 = vmatpush.bf16.msra.mxu0 0
      %3814 = vmatpush.bf16.msra.mxu0 0
      %3815 = vmatpush.bf16.msra.mxu0 0
      %3816 = vmatpush.bf16.msra.mxu0 0
      %3817 = vmatpush.bf16.msra.mxu0 %v3747
      %3818 = vmatmul.bf16.gmra.mxu0 %v3732
      %v3819 = vpop.f32.mrf.mxu0
      %v3820 = vadd.f32 0.0, %v3819
      %v3821 = vpop.f32.mrf.mxu0
      %3822 = vdwg.mxu0
      %3823 = vmatpush.bf16.msra.mxu0 0
      %3824 = vmatpush.bf16.msra.mxu0 0
      %3825 = vmatpush.bf16.msra.mxu0 0
      %3826 = vmatpush.bf16.msra.mxu0 0
      %3827 = vmatpush.bf16.msra.mxu0 0
      %3828 = vmatpush.bf16.msra.mxu0 0
      %3829 = vmatpush.bf16.msra.mxu0 0
      %3830 = vmatpush.bf16.msra.mxu0 %v3750
      %3831 = vmatmul.bf16.gmra.mxu0 %v3732
      %v3832 = vpop.f32.mrf.mxu0
      %v3833 = vadd.f32 0.0, %v3832
      %v3834 = vpop.f32.mrf.mxu0
      %3835 = vdwg.mxu0
      %3836 = vmatpush.bf16.msra.mxu0 0
      %3837 = vmatpush.bf16.msra.mxu0 0
      %3838 = vmatpush.bf16.msra.mxu0 0
      %3839 = vmatpush.bf16.msra.mxu0 0
      %3840 = vmatpush.bf16.msra.mxu0 0
      %3841 = vmatpush.bf16.msra.mxu0 0
      %3842 = vmatpush.bf16.msra.mxu0 0
      %3843 = vmatpush.bf16.msra.mxu0 %v3753
      %3844 = vmatmul.bf16.gmra.mxu0 %v3732
      %v3845 = vpop.f32.mrf.mxu0
      %v3846 = vadd.f32 0.0, %v3845
      %v3847 = vpop.f32.mrf.mxu0
      %3848 = vdwg.mxu0
      %3849 = vmatpush.bf16.msra.mxu0 0
      %3850 = vmatpush.bf16.msra.mxu0 0
      %3851 = vmatpush.bf16.msra.mxu0 0
      %3852 = vmatpush.bf16.msra.mxu0 0
      %3853 = vmatpush.bf16.msra.mxu0 0
      %3854 = vmatpush.bf16.msra.mxu0 0
      %3855 = vmatpush.bf16.msra.mxu0 0
      %3856 = vmatpush.bf16.msra.mxu0 %v3756
      %3857 = vmatmul.bf16.gmra.mxu0 %v3732
      %v3858 = vpop.f32.mrf.mxu0
      %v3859 = vadd.f32 0.0, %v3858
      %v3860 = vpop.f32.mrf.mxu0
      %3861 = vdwg.mxu0
      %v3862 = vadd.f32 %v3668, %v3768
      %v3863 = vadd.f32 %v3669, %v3781
      %v3864 = vadd.f32 %v3670, %v3794
      %v3865 = vadd.f32 %v3671, %v3807
      %v3866 = vadd.f32 %v3672, %v3820
      %v3867 = vadd.f32 %v3673, %v3833
      %v3868 = vadd.f32 %v3674, %v3846
      %v3869 = vadd.f32 %v3675, %v3859
      %s3870 = scalar_lea.vmem %s6, 28
      %v3871 = vld [vmem:[%s3870] sm:$0xf]
      %v3872 = vpack.c.bf16 %v3473, %v3473
      %v3873 = vpack.c.bf16 %v3474, %v3474
      %v3874 = vpack.c.bf16 %v3475, %v3475
      %v3875 = vpack.c.bf16 %v3476, %v3476
      %v3876 = vpack.c.bf16 %v3477, %v3477
      %v3877 = vpack.c.bf16 %v3478, %v3478
      %v3878 = vpack.c.bf16 %v3479, %v3479
      %v3879 = vpack.c.bf16 %v3480, %v3480
      %v3880 = vpack.c.bf16 %v3481, %v3481
      %3890 = vrot.lane.b32.xlu0 %v3872, 96
      %v3891 = vpop.permute.xlu0 %3890
      %3892 = vrot.lane.b32.xlu0 %v3873, 96
      %v3893 = vpop.permute.xlu0 %3892
      %3894 = vrot.lane.b32.xlu0 %v3874, 96
      %v3895 = vpop.permute.xlu0 %3894
      %3896 = vrot.lane.b32.xlu0 %v3875, 96
      %v3897 = vpop.permute.xlu0 %3896
      %3898 = vrot.lane.b32.xlu0 %v3876, 96
      %v3899 = vpop.permute.xlu0 %3898
      %3900 = vrot.lane.b32.xlu0 %v3877, 96
      %v3901 = vpop.permute.xlu0 %3900
      %3902 = vrot.lane.b32.xlu0 %v3878, 96
      %v3903 = vpop.permute.xlu0 %3902
      %3904 = vrot.lane.b32.xlu0 %v3879, 96
      %v3905 = vpop.permute.xlu0 %3904
      %3906 = vrot.lane.b32.xlu0 %v3880, 96
      %v3907 = vpop.permute.xlu0 %3906
      %v3908 = vsel %vm2167, %v3891, %v3893
      %v3909 = vsel %vm2167, %v3893, %v3895
      %v3910 = vsel %vm2167, %v3895, %v3897
      %v3911 = vsel %vm2167, %v3897, %v3899
      %v3912 = vsel %vm2167, %v3899, %v3901
      %v3913 = vsel %vm2167, %v3901, %v3903
      %v3914 = vsel %vm2167, %v3903, %v3905
      %v3915 = vsel %vm2167, %v3905, %v3907
      %v3917 = vsel %vm758, %v3871, 0
      %v3920 = vsel %vm762, %v3908, 0
      %v3923 = vsel %vm762, %v3909, 0
      %v3926 = vsel %vm762, %v3910, 0
      %v3929 = vsel %vm762, %v3911, 0
      %v3932 = vsel %vm762, %v3912, 0
      %v3935 = vsel %vm762, %v3913, 0
      %v3938 = vsel %vm762, %v3914, 0
      %v3941 = vsel %vm762, %v3915, 0
      %3943 = vmatpush.bf16.msra.mxu0 0
      %3944 = vmatpush.bf16.msra.mxu0 0
      %3945 = vmatpush.bf16.msra.mxu0 0
      %3946 = vmatpush.bf16.msra.mxu0 0
      %3947 = vmatpush.bf16.msra.mxu0 0
      %3948 = vmatpush.bf16.msra.mxu0 0
      %3949 = vmatpush.bf16.msra.mxu0 0
      %3950 = vmatpush.bf16.msra.mxu0 %v3920
      %3951 = vmatmul.bf16.gmra.mxu0 %v3917
      %v3952 = vpop.f32.mrf.mxu0
      %v3953 = vadd.f32 0.0, %v3952
      %v3954 = vpop.f32.mrf.mxu0
      %3955 = vdwg.mxu0
      %3956 = vmatpush.bf16.msra.mxu0 0
      %3957 = vmatpush.bf16.msra.mxu0 0
      %3958 = vmatpush.bf16.msra.mxu0 0
      %3959 = vmatpush.bf16.msra.mxu0 0
      %3960 = vmatpush.bf16.msra.mxu0 0
      %3961 = vmatpush.bf16.msra.mxu0 0
      %3962 = vmatpush.bf16.msra.mxu0 0
      %3963 = vmatpush.bf16.msra.mxu0 %v3923
      %3964 = vmatmul.bf16.gmra.mxu0 %v3917
      %v3965 = vpop.f32.mrf.mxu0
      %v3966 = vadd.f32 0.0, %v3965
      %v3967 = vpop.f32.mrf.mxu0
      %3968 = vdwg.mxu0
      %3969 = vmatpush.bf16.msra.mxu0 0
      %3970 = vmatpush.bf16.msra.mxu0 0
      %3971 = vmatpush.bf16.msra.mxu0 0
      %3972 = vmatpush.bf16.msra.mxu0 0
      %3973 = vmatpush.bf16.msra.mxu0 0
      %3974 = vmatpush.bf16.msra.mxu0 0
      %3975 = vmatpush.bf16.msra.mxu0 0
      %3976 = vmatpush.bf16.msra.mxu0 %v3926
      %3977 = vmatmul.bf16.gmra.mxu0 %v3917
      %v3978 = vpop.f32.mrf.mxu0
      %v3979 = vadd.f32 0.0, %v3978
      %v3980 = vpop.f32.mrf.mxu0
      %3981 = vdwg.mxu0
      %3982 = vmatpush.bf16.msra.mxu0 0
      %3983 = vmatpush.bf16.msra.mxu0 0
      %3984 = vmatpush.bf16.msra.mxu0 0
      %3985 = vmatpush.bf16.msra.mxu0 0
      %3986 = vmatpush.bf16.msra.mxu0 0
      %3987 = vmatpush.bf16.msra.mxu0 0
      %3988 = vmatpush.bf16.msra.mxu0 0
      %3989 = vmatpush.bf16.msra.mxu0 %v3929
      %3990 = vmatmul.bf16.gmra.mxu0 %v3917
      %v3991 = vpop.f32.mrf.mxu0
      %v3992 = vadd.f32 0.0, %v3991
      %v3993 = vpop.f32.mrf.mxu0
      %3994 = vdwg.mxu0
      %3995 = vmatpush.bf16.msra.mxu0 0
      %3996 = vmatpush.bf16.msra.mxu0 0
      %3997 = vmatpush.bf16.msra.mxu0 0
      %3998 = vmatpush.bf16.msra.mxu0 0
      %3999 = vmatpush.bf16.msra.mxu0 0
      %4000 = vmatpush.bf16.msra.mxu0 0
      %4001 = vmatpush.bf16.msra.mxu0 0
      %4002 = vmatpush.bf16.msra.mxu0 %v3932
      %4003 = vmatmul.bf16.gmra.mxu0 %v3917
      %v4004 = vpop.f32.mrf.mxu0
      %v4005 = vadd.f32 0.0, %v4004
      %v4006 = vpop.f32.mrf.mxu0
      %4007 = vdwg.mxu0
      %4008 = vmatpush.bf16.msra.mxu0 0
      %4009 = vmatpush.bf16.msra.mxu0 0
      %4010 = vmatpush.bf16.msra.mxu0 0
      %4011 = vmatpush.bf16.msra.mxu0 0
      %4012 = vmatpush.bf16.msra.mxu0 0
      %4013 = vmatpush.bf16.msra.mxu0 0
      %4014 = vmatpush.bf16.msra.mxu0 0
      %4015 = vmatpush.bf16.msra.mxu0 %v3935
      %4016 = vmatmul.bf16.gmra.mxu0 %v3917
      %v4017 = vpop.f32.mrf.mxu0
      %v4018 = vadd.f32 0.0, %v4017
      %v4019 = vpop.f32.mrf.mxu0
      %4020 = vdwg.mxu0
      %4021 = vmatpush.bf16.msra.mxu0 0
      %4022 = vmatpush.bf16.msra.mxu0 0
      %4023 = vmatpush.bf16.msra.mxu0 0
      %4024 = vmatpush.bf16.msra.mxu0 0
      %4025 = vmatpush.bf16.msra.mxu0 0
      %4026 = vmatpush.bf16.msra.mxu0 0
      %4027 = vmatpush.bf16.msra.mxu0 0
      %4028 = vmatpush.bf16.msra.mxu0 %v3938
      %4029 = vmatmul.bf16.gmra.mxu0 %v3917
      %v4030 = vpop.f32.mrf.mxu0
      %v4031 = vadd.f32 0.0, %v4030
      %v4032 = vpop.f32.mrf.mxu0
      %4033 = vdwg.mxu0
      %4034 = vmatpush.bf16.msra.mxu0 0
      %4035 = vmatpush.bf16.msra.mxu0 0
      %4036 = vmatpush.bf16.msra.mxu0 0
      %4037 = vmatpush.bf16.msra.mxu0 0
      %4038 = vmatpush.bf16.msra.mxu0 0
      %4039 = vmatpush.bf16.msra.mxu0 0
      %4040 = vmatpush.bf16.msra.mxu0 0
      %4041 = vmatpush.bf16.msra.mxu0 %v3941
      %4042 = vmatmul.bf16.gmra.mxu0 %v3917
      %v4043 = vpop.f32.mrf.mxu0
      %v4044 = vadd.f32 0.0, %v4043
      %v4045 = vpop.f32.mrf.mxu0
      %4046 = vdwg.mxu0
      %v4047 = vadd.f32 %v3862, %v3953
      %v4048 = vadd.f32 %v3863, %v3966
      %v4049 = vadd.f32 %v3864, %v3979
      %v4050 = vadd.f32 %v3865, %v3992
      %v4051 = vadd.f32 %v3866, %v4005
      %v4052 = vadd.f32 %v3867, %v4018
      %v4053 = vadd.f32 %v3868, %v4031
      %v4054 = vadd.f32 %v3869, %v4044
      %v4055 = vmul.f32 %v3473, %v2316
      %v4056 = vmul.f32 %v3474, %v2332
      %v4057 = vmul.f32 %v3475, %v2333
      %v4058 = vmul.f32 %v3476, %v2334
      %v4059 = vmul.f32 %v3477, %v2335
      %v4060 = vmul.f32 %v3478, %v2336
      %v4061 = vmul.f32 %v3479, %v2337
      %v4062 = vmul.f32 %v3480, %v2338
      %v4063 = vmul.f32 %v3481, %v2330
      %s4064 = scalar_lea.vmem %s6, 32
      %v4065 = vld [vmem:[%s4064] sm:$0xf]
      %v4066 = vpack.c.bf16 %v4055, %v4055
      %v4067 = vpack.c.bf16 %v4056, %v4056
      %v4068 = vpack.c.bf16 %v4057, %v4057
      %v4069 = vpack.c.bf16 %v4058, %v4058
      %v4070 = vpack.c.bf16 %v4059, %v4059
      %v4071 = vpack.c.bf16 %v4060, %v4060
      %v4072 = vpack.c.bf16 %v4061, %v4061
      %v4073 = vpack.c.bf16 %v4062, %v4062
      %v4074 = vpack.c.bf16 %v4063, %v4063
      %4084 = vrot.lane.b32.xlu0 %v4066, 95
      %v4085 = vpop.permute.xlu0 %4084
      %4086 = vrot.lane.b32.xlu0 %v4067, 95
      %v4087 = vpop.permute.xlu0 %4086
      %4088 = vrot.lane.b32.xlu0 %v4068, 95
      %v4089 = vpop.permute.xlu0 %4088
      %4090 = vrot.lane.b32.xlu0 %v4069, 95
      %v4091 = vpop.permute.xlu0 %4090
      %4092 = vrot.lane.b32.xlu0 %v4070, 95
      %v4093 = vpop.permute.xlu0 %4092
      %4094 = vrot.lane.b32.xlu0 %v4071, 95
      %v4095 = vpop.permute.xlu0 %4094
      %4096 = vrot.lane.b32.xlu0 %v4072, 95
      %v4097 = vpop.permute.xlu0 %4096
      %4098 = vrot.lane.b32.xlu0 %v4073, 95
      %v4099 = vpop.permute.xlu0 %4098
      %4100 = vrot.lane.b32.xlu0 %v4074, 95
      %v4101 = vpop.permute.xlu0 %4100
      %v4102 = vsel %vm2395, %v4085, %v4087
      %v4103 = vsel %vm2395, %v4087, %v4089
      %v4104 = vsel %vm2395, %v4089, %v4091
      %v4105 = vsel %vm2395, %v4091, %v4093
      %v4106 = vsel %vm2395, %v4093, %v4095
      %v4107 = vsel %vm2395, %v4095, %v4097
      %v4108 = vsel %vm2395, %v4097, %v4099
      %v4109 = vsel %vm2395, %v4099, %v4101
      %v4111 = vsel %vm758, %v4065, 0
      %v4114 = vsel %vm762, %v4102, 0
      %v4117 = vsel %vm762, %v4103, 0
      %v4120 = vsel %vm762, %v4104, 0
      %v4123 = vsel %vm762, %v4105, 0
      %v4126 = vsel %vm762, %v4106, 0
      %v4129 = vsel %vm762, %v4107, 0
      %v4132 = vsel %vm762, %v4108, 0
      %v4135 = vsel %vm762, %v4109, 0
      %4137 = vmatpush.bf16.msra.mxu0 0
      %4138 = vmatpush.bf16.msra.mxu0 0
      %4139 = vmatpush.bf16.msra.mxu0 0
      %4140 = vmatpush.bf16.msra.mxu0 0
      %4141 = vmatpush.bf16.msra.mxu0 0
      %4142 = vmatpush.bf16.msra.mxu0 0
      %4143 = vmatpush.bf16.msra.mxu0 0
      %4144 = vmatpush.bf16.msra.mxu0 %v4114
      %4145 = vmatmul.bf16.gmra.mxu0 %v4111
      %v4146 = vpop.f32.mrf.mxu0
      %v4147 = vadd.f32 0.0, %v4146
      %v4148 = vpop.f32.mrf.mxu0
      %4149 = vdwg.mxu0
      %4150 = vmatpush.bf16.msra.mxu0 0
      %4151 = vmatpush.bf16.msra.mxu0 0
      %4152 = vmatpush.bf16.msra.mxu0 0
      %4153 = vmatpush.bf16.msra.mxu0 0
      %4154 = vmatpush.bf16.msra.mxu0 0
      %4155 = vmatpush.bf16.msra.mxu0 0
      %4156 = vmatpush.bf16.msra.mxu0 0
      %4157 = vmatpush.bf16.msra.mxu0 %v4117
      %4158 = vmatmul.bf16.gmra.mxu0 %v4111
      %v4159 = vpop.f32.mrf.mxu0
      %v4160 = vadd.f32 0.0, %v4159
      %v4161 = vpop.f32.mrf.mxu0
      %4162 = vdwg.mxu0
      %4163 = vmatpush.bf16.msra.mxu0 0
      %4164 = vmatpush.bf16.msra.mxu0 0
      %4165 = vmatpush.bf16.msra.mxu0 0
      %4166 = vmatpush.bf16.msra.mxu0 0
      %4167 = vmatpush.bf16.msra.mxu0 0
      %4168 = vmatpush.bf16.msra.mxu0 0
      %4169 = vmatpush.bf16.msra.mxu0 0
      %4170 = vmatpush.bf16.msra.mxu0 %v4120
      %4171 = vmatmul.bf16.gmra.mxu0 %v4111
      %v4172 = vpop.f32.mrf.mxu0
      %v4173 = vadd.f32 0.0, %v4172
      %v4174 = vpop.f32.mrf.mxu0
      %4175 = vdwg.mxu0
      %4176 = vmatpush.bf16.msra.mxu0 0
      %4177 = vmatpush.bf16.msra.mxu0 0
      %4178 = vmatpush.bf16.msra.mxu0 0
      %4179 = vmatpush.bf16.msra.mxu0 0
      %4180 = vmatpush.bf16.msra.mxu0 0
      %4181 = vmatpush.bf16.msra.mxu0 0
      %4182 = vmatpush.bf16.msra.mxu0 0
      %4183 = vmatpush.bf16.msra.mxu0 %v4123
      %4184 = vmatmul.bf16.gmra.mxu0 %v4111
      %v4185 = vpop.f32.mrf.mxu0
      %v4186 = vadd.f32 0.0, %v4185
      %v4187 = vpop.f32.mrf.mxu0
      %4188 = vdwg.mxu0
      %4189 = vmatpush.bf16.msra.mxu0 0
      %4190 = vmatpush.bf16.msra.mxu0 0
      %4191 = vmatpush.bf16.msra.mxu0 0
      %4192 = vmatpush.bf16.msra.mxu0 0
      %4193 = vmatpush.bf16.msra.mxu0 0
      %4194 = vmatpush.bf16.msra.mxu0 0
      %4195 = vmatpush.bf16.msra.mxu0 0
      %4196 = vmatpush.bf16.msra.mxu0 %v4126
      %4197 = vmatmul.bf16.gmra.mxu0 %v4111
      %v4198 = vpop.f32.mrf.mxu0
      %v4199 = vadd.f32 0.0, %v4198
      %v4200 = vpop.f32.mrf.mxu0
      %4201 = vdwg.mxu0
      %4202 = vmatpush.bf16.msra.mxu0 0
      %4203 = vmatpush.bf16.msra.mxu0 0
      %4204 = vmatpush.bf16.msra.mxu0 0
      %4205 = vmatpush.bf16.msra.mxu0 0
      %4206 = vmatpush.bf16.msra.mxu0 0
      %4207 = vmatpush.bf16.msra.mxu0 0
      %4208 = vmatpush.bf16.msra.mxu0 0
      %4209 = vmatpush.bf16.msra.mxu0 %v4129
      %4210 = vmatmul.bf16.gmra.mxu0 %v4111
      %v4211 = vpop.f32.mrf.mxu0
      %v4212 = vadd.f32 0.0, %v4211
      %v4213 = vpop.f32.mrf.mxu0
      %4214 = vdwg.mxu0
      %4215 = vmatpush.bf16.msra.mxu0 0
      %4216 = vmatpush.bf16.msra.mxu0 0
      %4217 = vmatpush.bf16.msra.mxu0 0
      %4218 = vmatpush.bf16.msra.mxu0 0
      %4219 = vmatpush.bf16.msra.mxu0 0
      %4220 = vmatpush.bf16.msra.mxu0 0
      %4221 = vmatpush.bf16.msra.mxu0 0
      %4222 = vmatpush.bf16.msra.mxu0 %v4132
      %4223 = vmatmul.bf16.gmra.mxu0 %v4111
      %v4224 = vpop.f32.mrf.mxu0
      %v4225 = vadd.f32 0.0, %v4224
      %v4226 = vpop.f32.mrf.mxu0
      %4227 = vdwg.mxu0
      %4228 = vmatpush.bf16.msra.mxu0 0
      %4229 = vmatpush.bf16.msra.mxu0 0
      %4230 = vmatpush.bf16.msra.mxu0 0
      %4231 = vmatpush.bf16.msra.mxu0 0
      %4232 = vmatpush.bf16.msra.mxu0 0
      %4233 = vmatpush.bf16.msra.mxu0 0
      %4234 = vmatpush.bf16.msra.mxu0 0
      %4235 = vmatpush.bf16.msra.mxu0 %v4135
      %4236 = vmatmul.bf16.gmra.mxu0 %v4111
      %v4237 = vpop.f32.mrf.mxu0
      %v4238 = vadd.f32 0.0, %v4237
      %v4239 = vpop.f32.mrf.mxu0
      %4240 = vdwg.mxu0
      %v4241 = vadd.f32 %v4047, %v4147
      %v4242 = vadd.f32 %v4048, %v4160
      %v4243 = vadd.f32 %v4049, %v4173
      %v4244 = vadd.f32 %v4050, %v4186
      %v4245 = vadd.f32 %v4051, %v4199
      %v4246 = vadd.f32 %v4052, %v4212
      %v4247 = vadd.f32 %v4053, %v4225
      %v4248 = vadd.f32 %v4054, %v4238
      %v4249 = vld [vmem:[%s7] sm:$0xff]
      %4251 = vset.pattern.permute.xlu0 0
      %4252 = vperm.xlu0 %4251, %v4249
      %v4253 = vpop.permute.xlu0 %4252
      %v4255 = vadd.f32 %v4241, %v4253
      %v4256 = vadd.f32 %v4242, %v4253
      %v4257 = vadd.f32 %v4243, %v4253
      %v4258 = vadd.f32 %v4244, %v4253
      %v4259 = vadd.f32 %v4245, %v4253
      %v4260 = vadd.f32 %v4246, %v4253
      %v4261 = vadd.f32 %v4247, %v4253
      %v4262 = vadd.f32 %v4248, %v4253
      %v4263 = vmax.f32 %v4255, 0.0
      %v4264 = vmax.f32 %v4256, 0.0
      %v4265 = vmax.f32 %v4257, 0.0
      %v4266 = vmax.f32 %v4258, 0.0
      %v4267 = vmax.f32 %v4259, 0.0
      %v4268 = vmax.f32 %v4260, 0.0
      %v4269 = vmax.f32 %v4261, 0.0
      %v4270 = vmax.f32 %v4262, 0.0
      %4271 = vst [vmem:[#allocation2 + $0x8] sm:$0xff] %v4263
      %4272 = vst [vmem:[#allocation2 + $0x10] sm:$0xff] %v4264
      %4273 = vst [vmem:[#allocation2 + $0x18] sm:$0xff] %v4265
      %4274 = vst [vmem:[#allocation2 + $0x20] sm:$0xff] %v4266
      %4275 = vst [vmem:[#allocation2 + $0x28] sm:$0xff] %v4267
      %4276 = vst [vmem:[#allocation2 + $0x30] sm:$0xff] %v4268
      %4277 = vst [vmem:[#allocation2 + $0x38] sm:$0xff] %v4269
      %4278 = vst [vmem:[#allocation2 + $0x40] sm:$0xff] %v4270
      %v4279 = vld [vmem:[#allocation2] sm:$0xff]
      %v4280 = vld [vmem:[#allocation2 + $0x8] sm:$0xff]
      %v4281 = vld [vmem:[#allocation2 + $0x10] sm:$0xff]
      %v4282 = vld [vmem:[#allocation2 + $0x18] sm:$0xff]
      %v4283 = vld [vmem:[#allocation2 + $0x20] sm:$0xff]
      %v4284 = vld [vmem:[#allocation2 + $0x28] sm:$0xff]
      %v4285 = vld [vmem:[#allocation2 + $0x30] sm:$0xff]
      %v4286 = vld [vmem:[#allocation2 + $0x38] sm:$0xff]
      %v4287 = vld [vmem:[#allocation2 + $0x40] sm:$0xff]
      %v4288 = vmul.f32 %v4279, %v660
      %v4289 = vmul.f32 %v4280, %v676
      %v4290 = vmul.f32 %v4281, %v677
      %v4291 = vmul.f32 %v4282, %v678
      %v4292 = vmul.f32 %v4283, %v679
      %v4293 = vmul.f32 %v4284, %v680
      %v4294 = vmul.f32 %v4285, %v681
      %v4295 = vmul.f32 %v4286, %v682
      %v4296 = vmul.f32 %v4287, %v674
      %v4297 = vld [vmem:[%s8] sm:$0xf]
      %v4298 = vld [vmem:[%s8 + $0x4] sm:$0xf]
      %v4299 = vld [vmem:[%s8 + $0x8] sm:$0xf]
      %v4300 = vld [vmem:[%s8 + $0xc] sm:$0xf]
      %v4301 = vld [vmem:[%s8 + $0x10] sm:$0xf]
      %v4302 = vld [vmem:[%s8 + $0x14] sm:$0xf]
      %v4303 = vld [vmem:[%s8 + $0x18] sm:$0xf]
      %v4304 = vld [vmem:[%s8 + $0x1c] sm:$0xf]
      %v4305 = vpack.c.bf16 %v4288, %v4288
      %v4306 = vpack.c.bf16 %v4289, %v4289
      %v4307 = vpack.c.bf16 %v4290, %v4290
      %v4308 = vpack.c.bf16 %v4291, %v4291
      %v4309 = vpack.c.bf16 %v4292, %v4292
      %v4310 = vpack.c.bf16 %v4293, %v4293
      %v4311 = vpack.c.bf16 %v4294, %v4294
      %v4312 = vpack.c.bf16 %v4295, %v4295
      %v4313 = vpack.c.bf16 %v4296, %v4296
      %s4314 = scalar_lea.vmem %s8, 32
      %v4315 = vld [vmem:[%s4314] sm:$0xf]
      %v4316 = vld [vmem:[%s4314 + $0x4] sm:$0xf]
      %v4317 = vld [vmem:[%s4314 + $0x8] sm:$0xf]
      %v4318 = vld [vmem:[%s4314 + $0xc] sm:$0xf]
      %v4319 = vld [vmem:[%s4314 + $0x10] sm:$0xf]
      %v4320 = vld [vmem:[%s4314 + $0x14] sm:$0xf]
      %v4321 = vld [vmem:[%s4314 + $0x18] sm:$0xf]
      %v4322 = vld [vmem:[%s4314 + $0x1c] sm:$0xf]
      %v4323 = vpack.c.bf16 %v4279, %v4279
      %v4324 = vpack.c.bf16 %v4280, %v4280
      %v4325 = vpack.c.bf16 %v4281, %v4281
      %v4326 = vpack.c.bf16 %v4282, %v4282
      %v4327 = vpack.c.bf16 %v4283, %v4283
      %v4328 = vpack.c.bf16 %v4284, %v4284
      %v4329 = vpack.c.bf16 %v4285, %v4285
      %v4330 = vpack.c.bf16 %v4286, %v4286
      %v4331 = vpack.c.bf16 %v4287, %v4287
      %v4340 = vunpack.c.l.b16 %v4315
      %v4341 = vunpack.c.l.b16 %v4316
      %v4342 = vunpack.c.l.b16 %v4317
      %v4343 = vunpack.c.l.b16 %v4318
      %v4344 = vunpack.c.l.b16 %v4319
      %v4345 = vunpack.c.l.b16 %v4320
      %v4346 = vunpack.c.l.b16 %v4321
      %v4347 = vunpack.c.l.b16 %v4322
      %v4348 = vpack.c.b16 %v4341, %v4340
      %v4349 = vpack.c.b16 %v4343, %v4342
      %v4350 = vpack.c.b16 %v4345, %v4344
      %v4351 = vpack.c.b16 %v4347, %v4346
      %4361 = vrot.lane.b32.xlu0 %v4323, 32
      %v4362 = vpop.permute.xlu0 %4361
      %4363 = vrot.lane.b32.xlu0 %v4324, 32
      %v4364 = vpop.permute.xlu0 %4363
      %4365 = vrot.lane.b32.xlu0 %v4325, 32
      %v4366 = vpop.permute.xlu0 %4365
      %4367 = vrot.lane.b32.xlu0 %v4326, 32
      %v4368 = vpop.permute.xlu0 %4367
      %4369 = vrot.lane.b32.xlu0 %v4327, 32
      %v4370 = vpop.permute.xlu0 %4369
      %4371 = vrot.lane.b32.xlu0 %v4328, 32
      %v4372 = vpop.permute.xlu0 %4371
      %4373 = vrot.lane.b32.xlu0 %v4329, 32
      %v4374 = vpop.permute.xlu0 %4373
      %4375 = vrot.lane.b32.xlu0 %v4330, 32
      %v4376 = vpop.permute.xlu0 %4375
      %4377 = vrot.lane.b32.xlu0 %v4331, 32
      %v4378 = vpop.permute.xlu0 %4377
      %v4379 = vsel %vm749, %v4362, %v4364
      %v4380 = vsel %vm749, %v4364, %v4366
      %v4381 = vsel %vm749, %v4366, %v4368
      %v4382 = vsel %vm749, %v4368, %v4370
      %v4383 = vsel %vm749, %v4370, %v4372
      %v4384 = vsel %vm749, %v4372, %v4374
      %v4385 = vsel %vm749, %v4374, %v4376
      %v4386 = vsel %vm749, %v4376, %v4378
      %v4388 = vsel %vm758, %v4348, 0
      %v4391 = vsel %vm758, %v4349, 0
      %v4394 = vsel %vm758, %v4350, 0
      %v4397 = vsel %vm758, %v4351, 0
      %v4400 = vsel %vm762, %v4379, 0
      %v4403 = vsel %vm762, %v4380, 0
      %v4406 = vsel %vm762, %v4381, 0
      %v4409 = vsel %vm762, %v4382, 0
      %v4412 = vsel %vm762, %v4383, 0
      %v4415 = vsel %vm762, %v4384, 0
      %v4418 = vsel %vm762, %v4385, 0
      %v4421 = vsel %vm762, %v4386, 0
      %4423 = vmatpush.bf16.msra.mxu0 0
      %4424 = vmatpush.bf16.msra.mxu0 0
      %4425 = vmatpush.bf16.msra.mxu0 0
      %4426 = vmatpush.bf16.msra.mxu0 0
      %4427 = vmatpush.bf16.msra.mxu0 0
      %4428 = vmatpush.bf16.msra.mxu0 0
      %4429 = vmatpush.bf16.msra.mxu0 0
      %4430 = vmatpush.bf16.msra.mxu0 %v4400
      %4431 = vmatmul.bf16.gmra.mxu0 %v4388
      %v4432 = vpop.f32.mrf.mxu0
      %v4433 = vadd.f32 0.0, %v4432
      %v4434 = vpop.f32.mrf.mxu0
      %v4435 = vadd.f32 0.0, %v4434
      %4436 = vmatmul.bf16.gmra.mxu0 %v4391
      %v4437 = vpop.f32.mrf.mxu0
      %v4438 = vadd.f32 0.0, %v4437
      %v4439 = vpop.f32.mrf.mxu0
      %v4440 = vadd.f32 0.0, %v4439
      %4441 = vmatmul.bf16.gmra.mxu0 %v4394
      %v4442 = vpop.f32.mrf.mxu0
      %v4443 = vadd.f32 0.0, %v4442
      %v4444 = vpop.f32.mrf.mxu0
      %v4445 = vadd.f32 0.0, %v4444
      %4446 = vmatmul.bf16.gmra.mxu0 %v4397
      %v4447 = vpop.f32.mrf.mxu0
      %v4448 = vadd.f32 0.0, %v4447
      %v4449 = vpop.f32.mrf.mxu0
      %v4450 = vadd.f32 0.0, %v4449
      %4451 = vdwg.mxu0
      %4452 = vmatpush.bf16.msra.mxu0 0
      %4453 = vmatpush.bf16.msra.mxu0 0
      %4454 = vmatpush.bf16.msra.mxu0 0
      %4455 = vmatpush.bf16.msra.mxu0 0
      %4456 = vmatpush.bf16.msra.mxu0 0
      %4457 = vmatpush.bf16.msra.mxu0 0
      %4458 = vmatpush.bf16.msra.mxu0 0
      %4459 = vmatpush.bf16.msra.mxu0 %v4403
      %4460 = vmatmul.bf16.gmra.mxu0 %v4388
      %v4461 = vpop.f32.mrf.mxu0
      %v4462 = vadd.f32 0.0, %v4461
      %v4463 = vpop.f32.mrf.mxu0
      %v4464 = vadd.f32 0.0, %v4463
      %4465 = vmatmul.bf16.gmra.mxu0 %v4391
      %v4466 = vpop.f32.mrf.mxu0
      %v4467 = vadd.f32 0.0, %v4466
      %v4468 = vpop.f32.mrf.mxu0
      %v4469 = vadd.f32 0.0, %v4468
      %4470 = vmatmul.bf16.gmra.mxu0 %v4394
      %v4471 = vpop.f32.mrf.mxu0
      %v4472 = vadd.f32 0.0, %v4471
      %v4473 = vpop.f32.mrf.mxu0
      %v4474 = vadd.f32 0.0, %v4473
      %4475 = vmatmul.bf16.gmra.mxu0 %v4397
      %v4476 = vpop.f32.mrf.mxu0
      %v4477 = vadd.f32 0.0, %v4476
      %v4478 = vpop.f32.mrf.mxu0
      %v4479 = vadd.f32 0.0, %v4478
      %4480 = vdwg.mxu0
      %4481 = vmatpush.bf16.msra.mxu0 0
      %4482 = vmatpush.bf16.msra.mxu0 0
      %4483 = vmatpush.bf16.msra.mxu0 0
      %4484 = vmatpush.bf16.msra.mxu0 0
      %4485 = vmatpush.bf16.msra.mxu0 0
      %4486 = vmatpush.bf16.msra.mxu0 0
      %4487 = vmatpush.bf16.msra.mxu0 0
      %4488 = vmatpush.bf16.msra.mxu0 %v4406
      %4489 = vmatmul.bf16.gmra.mxu0 %v4388
      %v4490 = vpop.f32.mrf.mxu0
      %v4491 = vadd.f32 0.0, %v4490
      %v4492 = vpop.f32.mrf.mxu0
      %v4493 = vadd.f32 0.0, %v4492
      %4494 = vmatmul.bf16.gmra.mxu0 %v4391
      %v4495 = vpop.f32.mrf.mxu0
      %v4496 = vadd.f32 0.0, %v4495
      %v4497 = vpop.f32.mrf.mxu0
      %v4498 = vadd.f32 0.0, %v4497
      %4499 = vmatmul.bf16.gmra.mxu0 %v4394
      %v4500 = vpop.f32.mrf.mxu0
      %v4501 = vadd.f32 0.0, %v4500
      %v4502 = vpop.f32.mrf.mxu0
      %v4503 = vadd.f32 0.0, %v4502
      %4504 = vmatmul.bf16.gmra.mxu0 %v4397
      %v4505 = vpop.f32.mrf.mxu0
      %v4506 = vadd.f32 0.0, %v4505
      %v4507 = vpop.f32.mrf.mxu0
      %v4508 = vadd.f32 0.0, %v4507
      %4509 = vdwg.mxu0
      %4510 = vmatpush.bf16.msra.mxu0 0
      %4511 = vmatpush.bf16.msra.mxu0 0
      %4512 = vmatpush.bf16.msra.mxu0 0
      %4513 = vmatpush.bf16.msra.mxu0 0
      %4514 = vmatpush.bf16.msra.mxu0 0
      %4515 = vmatpush.bf16.msra.mxu0 0
      %4516 = vmatpush.bf16.msra.mxu0 0
      %4517 = vmatpush.bf16.msra.mxu0 %v4409
      %4518 = vmatmul.bf16.gmra.mxu0 %v4388
      %v4519 = vpop.f32.mrf.mxu0
      %v4520 = vadd.f32 0.0, %v4519
      %v4521 = vpop.f32.mrf.mxu0
      %v4522 = vadd.f32 0.0, %v4521
      %4523 = vmatmul.bf16.gmra.mxu0 %v4391
      %v4524 = vpop.f32.mrf.mxu0
      %v4525 = vadd.f32 0.0, %v4524
      %v4526 = vpop.f32.mrf.mxu0
      %v4527 = vadd.f32 0.0, %v4526
      %4528 = vmatmul.bf16.gmra.mxu0 %v4394
      %v4529 = vpop.f32.mrf.mxu0
      %v4530 = vadd.f32 0.0, %v4529
      %v4531 = vpop.f32.mrf.mxu0
      %v4532 = vadd.f32 0.0, %v4531
      %4533 = vmatmul.bf16.gmra.mxu0 %v4397
      %v4534 = vpop.f32.mrf.mxu0
      %v4535 = vadd.f32 0.0, %v4534
      %v4536 = vpop.f32.mrf.mxu0
      %v4537 = vadd.f32 0.0, %v4536
      %4538 = vdwg.mxu0
      %4539 = vmatpush.bf16.msra.mxu0 0
      %4540 = vmatpush.bf16.msra.mxu0 0
      %4541 = vmatpush.bf16.msra.mxu0 0
      %4542 = vmatpush.bf16.msra.mxu0 0
      %4543 = vmatpush.bf16.msra.mxu0 0
      %4544 = vmatpush.bf16.msra.mxu0 0
      %4545 = vmatpush.bf16.msra.mxu0 0
      %4546 = vmatpush.bf16.msra.mxu0 %v4412
      %4547 = vmatmul.bf16.gmra.mxu0 %v4388
      %v4548 = vpop.f32.mrf.mxu0
      %v4549 = vadd.f32 0.0, %v4548
      %v4550 = vpop.f32.mrf.mxu0
      %v4551 = vadd.f32 0.0, %v4550
      %4552 = vmatmul.bf16.gmra.mxu0 %v4391
      %v4553 = vpop.f32.mrf.mxu0
      %v4554 = vadd.f32 0.0, %v4553
      %v4555 = vpop.f32.mrf.mxu0
      %v4556 = vadd.f32 0.0, %v4555
      %4557 = vmatmul.bf16.gmra.mxu0 %v4394
      %v4558 = vpop.f32.mrf.mxu0
      %v4559 = vadd.f32 0.0, %v4558
      %v4560 = vpop.f32.mrf.mxu0
      %v4561 = vadd.f32 0.0, %v4560
      %4562 = vmatmul.bf16.gmra.mxu0 %v4397
      %v4563 = vpop.f32.mrf.mxu0
      %v4564 = vadd.f32 0.0, %v4563
      %v4565 = vpop.f32.mrf.mxu0
      %v4566 = vadd.f32 0.0, %v4565
      %4567 = vdwg.mxu0
      %4568 = vmatpush.bf16.msra.mxu0 0
      %4569 = vmatpush.bf16.msra.mxu0 0
      %4570 = vmatpush.bf16.msra.mxu0 0
      %4571 = vmatpush.bf16.msra.mxu0 0
      %4572 = vmatpush.bf16.msra.mxu0 0
      %4573 = vmatpush.bf16.msra.mxu0 0
      %4574 = vmatpush.bf16.msra.mxu0 0
      %4575 = vmatpush.bf16.msra.mxu0 %v4415
      %4576 = vmatmul.bf16.gmra.mxu0 %v4388
      %v4577 = vpop.f32.mrf.mxu0
      %v4578 = vadd.f32 0.0, %v4577
      %v4579 = vpop.f32.mrf.mxu0
      %v4580 = vadd.f32 0.0, %v4579
      %4581 = vmatmul.bf16.gmra.mxu0 %v4391
      %v4582 = vpop.f32.mrf.mxu0
      %v4583 = vadd.f32 0.0, %v4582
      %v4584 = vpop.f32.mrf.mxu0
      %v4585 = vadd.f32 0.0, %v4584
      %4586 = vmatmul.bf16.gmra.mxu0 %v4394
      %v4587 = vpop.f32.mrf.mxu0
      %v4588 = vadd.f32 0.0, %v4587
      %v4589 = vpop.f32.mrf.mxu0
      %v4590 = vadd.f32 0.0, %v4589
      %4591 = vmatmul.bf16.gmra.mxu0 %v4397
      %v4592 = vpop.f32.mrf.mxu0
      %v4593 = vadd.f32 0.0, %v4592
      %v4594 = vpop.f32.mrf.mxu0
      %v4595 = vadd.f32 0.0, %v4594
      %4596 = vdwg.mxu0
      %4597 = vmatpush.bf16.msra.mxu0 0
      %4598 = vmatpush.bf16.msra.mxu0 0
      %4599 = vmatpush.bf16.msra.mxu0 0
      %4600 = vmatpush.bf16.msra.mxu0 0
      %4601 = vmatpush.bf16.msra.mxu0 0
      %4602 = vmatpush.bf16.msra.mxu0 0
      %4603 = vmatpush.bf16.msra.mxu0 0
      %4604 = vmatpush.bf16.msra.mxu0 %v4418
      %4605 = vmatmul.bf16.gmra.mxu0 %v4388
      %v4606 = vpop.f32.mrf.mxu0
      %v4607 = vadd.f32 0.0, %v4606
      %v4608 = vpop.f32.mrf.mxu0
      %v4609 = vadd.f32 0.0, %v4608
      %4610 = vmatmul.bf16.gmra.mxu0 %v4391
      %v4611 = vpop.f32.mrf.mxu0
      %v4612 = vadd.f32 0.0, %v4611
      %v4613 = vpop.f32.mrf.mxu0
      %v4614 = vadd.f32 0.0, %v4613
      %4615 = vmatmul.bf16.gmra.mxu0 %v4394
      %v4616 = vpop.f32.mrf.mxu0
      %v4617 = vadd.f32 0.0, %v4616
      %v4618 = vpop.f32.mrf.mxu0
      %v4619 = vadd.f32 0.0, %v4618
      %4620 = vmatmul.bf16.gmra.mxu0 %v4397
      %v4621 = vpop.f32.mrf.mxu0
      %v4622 = vadd.f32 0.0, %v4621
      %v4623 = vpop.f32.mrf.mxu0
      %v4624 = vadd.f32 0.0, %v4623
      %4625 = vdwg.mxu0
      %4626 = vmatpush.bf16.msra.mxu0 0
      %4627 = vmatpush.bf16.msra.mxu0 0
      %4628 = vmatpush.bf16.msra.mxu0 0
      %4629 = vmatpush.bf16.msra.mxu0 0
      %4630 = vmatpush.bf16.msra.mxu0 0
      %4631 = vmatpush.bf16.msra.mxu0 0
      %4632 = vmatpush.bf16.msra.mxu0 0
      %4633 = vmatpush.bf16.msra.mxu0 %v4421
      %4634 = vmatmul.bf16.gmra.mxu0 %v4388
      %v4635 = vpop.f32.mrf.mxu0
      %v4636 = vadd.f32 0.0, %v4635
      %v4637 = vpop.f32.mrf.mxu0
      %v4638 = vadd.f32 0.0, %v4637
      %4639 = vmatmul.bf16.gmra.mxu0 %v4391
      %v4640 = vpop.f32.mrf.mxu0
      %v4641 = vadd.f32 0.0, %v4640
      %v4642 = vpop.f32.mrf.mxu0
      %v4643 = vadd.f32 0.0, %v4642
      %4644 = vmatmul.bf16.gmra.mxu0 %v4394
      %v4645 = vpop.f32.mrf.mxu0
      %v4646 = vadd.f32 0.0, %v4645
      %v4647 = vpop.f32.mrf.mxu0
      %v4648 = vadd.f32 0.0, %v4647
      %4649 = vmatmul.bf16.gmra.mxu0 %v4397
      %v4650 = vpop.f32.mrf.mxu0
      %v4651 = vadd.f32 0.0, %v4650
      %v4652 = vpop.f32.mrf.mxu0
      %v4653 = vadd.f32 0.0, %v4652
      %4654 = vdwg.mxu0
      %v4663 = vunpack.c.l.b16 %v4297
      %v4664 = vunpack.c.l.b16 %v4298
      %v4665 = vunpack.c.l.b16 %v4299
      %v4666 = vunpack.c.l.b16 %v4300
      %v4667 = vunpack.c.l.b16 %v4301
      %v4668 = vunpack.c.l.b16 %v4302
      %v4669 = vunpack.c.l.b16 %v4303
      %v4670 = vunpack.c.l.b16 %v4304
      %v4671 = vpack.c.b16 %v4664, %v4663
      %v4672 = vpack.c.b16 %v4666, %v4665
      %v4673 = vpack.c.b16 %v4668, %v4667
      %v4674 = vpack.c.b16 %v4670, %v4669
      %4684 = vrot.lane.b32.xlu0 %v4305, 33
      %v4685 = vpop.permute.xlu0 %4684
      %4686 = vrot.lane.b32.xlu0 %v4306, 33
      %v4687 = vpop.permute.xlu0 %4686
      %4688 = vrot.lane.b32.xlu0 %v4307, 33
      %v4689 = vpop.permute.xlu0 %4688
      %4690 = vrot.lane.b32.xlu0 %v4308, 33
      %v4691 = vpop.permute.xlu0 %4690
      %4692 = vrot.lane.b32.xlu0 %v4309, 33
      %v4693 = vpop.permute.xlu0 %4692
      %4694 = vrot.lane.b32.xlu0 %v4310, 33
      %v4695 = vpop.permute.xlu0 %4694
      %4696 = vrot.lane.b32.xlu0 %v4311, 33
      %v4697 = vpop.permute.xlu0 %4696
      %4698 = vrot.lane.b32.xlu0 %v4312, 33
      %v4699 = vpop.permute.xlu0 %4698
      %4700 = vrot.lane.b32.xlu0 %v4313, 33
      %v4701 = vpop.permute.xlu0 %4700
      %v4702 = vsel %vm918, %v4685, %v4687
      %v4703 = vsel %vm918, %v4687, %v4689
      %v4704 = vsel %vm918, %v4689, %v4691
      %v4705 = vsel %vm918, %v4691, %v4693
      %v4706 = vsel %vm918, %v4693, %v4695
      %v4707 = vsel %vm918, %v4695, %v4697
      %v4708 = vsel %vm918, %v4697, %v4699
      %v4709 = vsel %vm918, %v4699, %v4701
      %v4711 = vsel %vm758, %v4671, 0
      %v4714 = vsel %vm758, %v4672, 0
      %v4717 = vsel %vm758, %v4673, 0
      %v4720 = vsel %vm758, %v4674, 0
      %v4723 = vsel %vm762, %v4702, 0
      %v4726 = vsel %vm762, %v4703, 0
      %v4729 = vsel %vm762, %v4704, 0
      %v4732 = vsel %vm762, %v4705, 0
      %v4735 = vsel %vm762, %v4706, 0
      %v4738 = vsel %vm762, %v4707, 0
      %v4741 = vsel %vm762, %v4708, 0
      %v4744 = vsel %vm762, %v4709, 0
      %4746 = vmatpush.bf16.msra.mxu0 0
      %4747 = vmatpush.bf16.msra.mxu0 0
      %4748 = vmatpush.bf16.msra.mxu0 0
      %4749 = vmatpush.bf16.msra.mxu0 0
      %4750 = vmatpush.bf16.msra.mxu0 0
      %4751 = vmatpush.bf16.msra.mxu0 0
      %4752 = vmatpush.bf16.msra.mxu0 0
      %4753 = vmatpush.bf16.msra.mxu0 %v4723
      %4754 = vmatmul.bf16.gmra.mxu0 %v4711
      %v4755 = vpop.f32.mrf.mxu0
      %v4756 = vadd.f32 %v4433, %v4755
      %v4757 = vpop.f32.mrf.mxu0
      %v4758 = vadd.f32 %v4435, %v4757
      %4759 = vmatmul.bf16.gmra.mxu0 %v4714
      %v4760 = vpop.f32.mrf.mxu0
      %v4761 = vadd.f32 %v4438, %v4760
      %v4762 = vpop.f32.mrf.mxu0
      %v4763 = vadd.f32 %v4440, %v4762
      %4764 = vmatmul.bf16.gmra.mxu0 %v4717
      %v4765 = vpop.f32.mrf.mxu0
      %v4766 = vadd.f32 %v4443, %v4765
      %v4767 = vpop.f32.mrf.mxu0
      %v4768 = vadd.f32 %v4445, %v4767
      %4769 = vmatmul.bf16.gmra.mxu0 %v4720
      %v4770 = vpop.f32.mrf.mxu0
      %v4771 = vadd.f32 %v4448, %v4770
      %v4772 = vpop.f32.mrf.mxu0
      %v4773 = vadd.f32 %v4450, %v4772
      %4774 = vdwg.mxu0
      %4775 = vmatpush.bf16.msra.mxu0 0
      %4776 = vmatpush.bf16.msra.mxu0 0
      %4777 = vmatpush.bf16.msra.mxu0 0
      %4778 = vmatpush.bf16.msra.mxu0 0
      %4779 = vmatpush.bf16.msra.mxu0 0
      %4780 = vmatpush.bf16.msra.mxu0 0
      %4781 = vmatpush.bf16.msra.mxu0 0
      %4782 = vmatpush.bf16.msra.mxu0 %v4726
      %4783 = vmatmul.bf16.gmra.mxu0 %v4711
      %v4784 = vpop.f32.mrf.mxu0
      %v4785 = vadd.f32 %v4462, %v4784
      %v4786 = vpop.f32.mrf.mxu0
      %v4787 = vadd.f32 %v4464, %v4786
      %4788 = vmatmul.bf16.gmra.mxu0 %v4714
      %v4789 = vpop.f32.mrf.mxu0
      %v4790 = vadd.f32 %v4467, %v4789
      %v4791 = vpop.f32.mrf.mxu0
      %v4792 = vadd.f32 %v4469, %v4791
      %4793 = vmatmul.bf16.gmra.mxu0 %v4717
      %v4794 = vpop.f32.mrf.mxu0
      %v4795 = vadd.f32 %v4472, %v4794
      %v4796 = vpop.f32.mrf.mxu0
      %v4797 = vadd.f32 %v4474, %v4796
      %4798 = vmatmul.bf16.gmra.mxu0 %v4720
      %v4799 = vpop.f32.mrf.mxu0
      %v4800 = vadd.f32 %v4477, %v4799
      %v4801 = vpop.f32.mrf.mxu0
      %v4802 = vadd.f32 %v4479, %v4801
      %4803 = vdwg.mxu0
      %4804 = vmatpush.bf16.msra.mxu0 0
      %4805 = vmatpush.bf16.msra.mxu0 0
      %4806 = vmatpush.bf16.msra.mxu0 0
      %4807 = vmatpush.bf16.msra.mxu0 0
      %4808 = vmatpush.bf16.msra.mxu0 0
      %4809 = vmatpush.bf16.msra.mxu0 0
      %4810 = vmatpush.bf16.msra.mxu0 0
      %4811 = vmatpush.bf16.msra.mxu0 %v4729
      %4812 = vmatmul.bf16.gmra.mxu0 %v4711
      %v4813 = vpop.f32.mrf.mxu0
      %v4814 = vadd.f32 %v4491, %v4813
      %v4815 = vpop.f32.mrf.mxu0
      %v4816 = vadd.f32 %v4493, %v4815
      %4817 = vmatmul.bf16.gmra.mxu0 %v4714
      %v4818 = vpop.f32.mrf.mxu0
      %v4819 = vadd.f32 %v4496, %v4818
      %v4820 = vpop.f32.mrf.mxu0
      %v4821 = vadd.f32 %v4498, %v4820
      %4822 = vmatmul.bf16.gmra.mxu0 %v4717
      %v4823 = vpop.f32.mrf.mxu0
      %v4824 = vadd.f32 %v4501, %v4823
      %v4825 = vpop.f32.mrf.mxu0
      %v4826 = vadd.f32 %v4503, %v4825
      %4827 = vmatmul.bf16.gmra.mxu0 %v4720
      %v4828 = vpop.f32.mrf.mxu0
      %v4829 = vadd.f32 %v4506, %v4828
      %v4830 = vpop.f32.mrf.mxu0
      %v4831 = vadd.f32 %v4508, %v4830
      %4832 = vdwg.mxu0
      %4833 = vmatpush.bf16.msra.mxu0 0
      %4834 = vmatpush.bf16.msra.mxu0 0
      %4835 = vmatpush.bf16.msra.mxu0 0
      %4836 = vmatpush.bf16.msra.mxu0 0
      %4837 = vmatpush.bf16.msra.mxu0 0
      %4838 = vmatpush.bf16.msra.mxu0 0
      %4839 = vmatpush.bf16.msra.mxu0 0
      %4840 = vmatpush.bf16.msra.mxu0 %v4732
      %4841 = vmatmul.bf16.gmra.mxu0 %v4711
      %v4842 = vpop.f32.mrf.mxu0
      %v4843 = vadd.f32 %v4520, %v4842
      %v4844 = vpop.f32.mrf.mxu0
      %v4845 = vadd.f32 %v4522, %v4844
      %4846 = vmatmul.bf16.gmra.mxu0 %v4714
      %v4847 = vpop.f32.mrf.mxu0
      %v4848 = vadd.f32 %v4525, %v4847
      %v4849 = vpop.f32.mrf.mxu0
      %v4850 = vadd.f32 %v4527, %v4849
      %4851 = vmatmul.bf16.gmra.mxu0 %v4717
      %v4852 = vpop.f32.mrf.mxu0
      %v4853 = vadd.f32 %v4530, %v4852
      %v4854 = vpop.f32.mrf.mxu0
      %v4855 = vadd.f32 %v4532, %v4854
      %4856 = vmatmul.bf16.gmra.mxu0 %v4720
      %v4857 = vpop.f32.mrf.mxu0
      %v4858 = vadd.f32 %v4535, %v4857
      %v4859 = vpop.f32.mrf.mxu0
      %v4860 = vadd.f32 %v4537, %v4859
      %4861 = vdwg.mxu0
      %4862 = vmatpush.bf16.msra.mxu0 0
      %4863 = vmatpush.bf16.msra.mxu0 0
      %4864 = vmatpush.bf16.msra.mxu0 0
      %4865 = vmatpush.bf16.msra.mxu0 0
      %4866 = vmatpush.bf16.msra.mxu0 0
      %4867 = vmatpush.bf16.msra.mxu0 0
      %4868 = vmatpush.bf16.msra.mxu0 0
      %4869 = vmatpush.bf16.msra.mxu0 %v4735
      %4870 = vmatmul.bf16.gmra.mxu0 %v4711
      %v4871 = vpop.f32.mrf.mxu0
      %v4872 = vadd.f32 %v4549, %v4871
      %v4873 = vpop.f32.mrf.mxu0
      %v4874 = vadd.f32 %v4551, %v4873
      %4875 = vmatmul.bf16.gmra.mxu0 %v4714
      %v4876 = vpop.f32.mrf.mxu0
      %v4877 = vadd.f32 %v4554, %v4876
      %v4878 = vpop.f32.mrf.mxu0
      %v4879 = vadd.f32 %v4556, %v4878
      %4880 = vmatmul.bf16.gmra.mxu0 %v4717
      %v4881 = vpop.f32.mrf.mxu0
      %v4882 = vadd.f32 %v4559, %v4881
      %v4883 = vpop.f32.mrf.mxu0
      %v4884 = vadd.f32 %v4561, %v4883
      %4885 = vmatmul.bf16.gmra.mxu0 %v4720
      %v4886 = vpop.f32.mrf.mxu0
      %v4887 = vadd.f32 %v4564, %v4886
      %v4888 = vpop.f32.mrf.mxu0
      %v4889 = vadd.f32 %v4566, %v4888
      %4890 = vdwg.mxu0
      %4891 = vmatpush.bf16.msra.mxu0 0
      %4892 = vmatpush.bf16.msra.mxu0 0
      %4893 = vmatpush.bf16.msra.mxu0 0
      %4894 = vmatpush.bf16.msra.mxu0 0
      %4895 = vmatpush.bf16.msra.mxu0 0
      %4896 = vmatpush.bf16.msra.mxu0 0
      %4897 = vmatpush.bf16.msra.mxu0 0
      %4898 = vmatpush.bf16.msra.mxu0 %v4738
      %4899 = vmatmul.bf16.gmra.mxu0 %v4711
      %v4900 = vpop.f32.mrf.mxu0
      %v4901 = vadd.f32 %v4578, %v4900
      %v4902 = vpop.f32.mrf.mxu0
      %v4903 = vadd.f32 %v4580, %v4902
      %4904 = vmatmul.bf16.gmra.mxu0 %v4714
      %v4905 = vpop.f32.mrf.mxu0
      %v4906 = vadd.f32 %v4583, %v4905
      %v4907 = vpop.f32.mrf.mxu0
      %v4908 = vadd.f32 %v4585, %v4907
      %4909 = vmatmul.bf16.gmra.mxu0 %v4717
      %v4910 = vpop.f32.mrf.mxu0
      %v4911 = vadd.f32 %v4588, %v4910
      %v4912 = vpop.f32.mrf.mxu0
      %v4913 = vadd.f32 %v4590, %v4912
      %4914 = vmatmul.bf16.gmra.mxu0 %v4720
      %v4915 = vpop.f32.mrf.mxu0
      %v4916 = vadd.f32 %v4593, %v4915
      %v4917 = vpop.f32.mrf.mxu0
      %v4918 = vadd.f32 %v4595, %v4917
      %4919 = vdwg.mxu0
      %4920 = vmatpush.bf16.msra.mxu0 0
      %4921 = vmatpush.bf16.msra.mxu0 0
      %4922 = vmatpush.bf16.msra.mxu0 0
      %4923 = vmatpush.bf16.msra.mxu0 0
      %4924 = vmatpush.bf16.msra.mxu0 0
      %4925 = vmatpush.bf16.msra.mxu0 0
      %4926 = vmatpush.bf16.msra.mxu0 0
      %4927 = vmatpush.bf16.msra.mxu0 %v4741
      %4928 = vmatmul.bf16.gmra.mxu0 %v4711
      %v4929 = vpop.f32.mrf.mxu0
      %v4930 = vadd.f32 %v4607, %v4929
      %v4931 = vpop.f32.mrf.mxu0
      %v4932 = vadd.f32 %v4609, %v4931
      %4933 = vmatmul.bf16.gmra.mxu0 %v4714
      %v4934 = vpop.f32.mrf.mxu0
      %v4935 = vadd.f32 %v4612, %v4934
      %v4936 = vpop.f32.mrf.mxu0
      %v4937 = vadd.f32 %v4614, %v4936
      %4938 = vmatmul.bf16.gmra.mxu0 %v4717
      %v4939 = vpop.f32.mrf.mxu0
      %v4940 = vadd.f32 %v4617, %v4939
      %v4941 = vpop.f32.mrf.mxu0
      %v4942 = vadd.f32 %v4619, %v4941
      %4943 = vmatmul.bf16.gmra.mxu0 %v4720
      %v4944 = vpop.f32.mrf.mxu0
      %v4945 = vadd.f32 %v4622, %v4944
      %v4946 = vpop.f32.mrf.mxu0
      %v4947 = vadd.f32 %v4624, %v4946
      %4948 = vdwg.mxu0
      %4949 = vmatpush.bf16.msra.mxu0 0
      %4950 = vmatpush.bf16.msra.mxu0 0
      %4951 = vmatpush.bf16.msra.mxu0 0
      %4952 = vmatpush.bf16.msra.mxu0 0
      %4953 = vmatpush.bf16.msra.mxu0 0
      %4954 = vmatpush.bf16.msra.mxu0 0
      %4955 = vmatpush.bf16.msra.mxu0 0
      %4956 = vmatpush.bf16.msra.mxu0 %v4744
      %4957 = vmatmul.bf16.gmra.mxu0 %v4711
      %v4958 = vpop.f32.mrf.mxu0
      %v4959 = vadd.f32 %v4636, %v4958
      %v4960 = vpop.f32.mrf.mxu0
      %v4961 = vadd.f32 %v4638, %v4960
      %4962 = vmatmul.bf16.gmra.mxu0 %v4714
      %v4963 = vpop.f32.mrf.mxu0
      %v4964 = vadd.f32 %v4641, %v4963
      %v4965 = vpop.f32.mrf.mxu0
      %v4966 = vadd.f32 %v4643, %v4965
      %4967 = vmatmul.bf16.gmra.mxu0 %v4717
      %v4968 = vpop.f32.mrf.mxu0
      %v4969 = vadd.f32 %v4646, %v4968
      %v4970 = vpop.f32.mrf.mxu0
      %v4971 = vadd.f32 %v4648, %v4970
      %4972 = vmatmul.bf16.gmra.mxu0 %v4720
      %v4973 = vpop.f32.mrf.mxu0
      %v4974 = vadd.f32 %v4651, %v4973
      %v4975 = vpop.f32.mrf.mxu0
      %v4976 = vadd.f32 %v4653, %v4975
      %4977 = vdwg.mxu0
      %v4978 = vmul.f32 %v4279, %v1068
      %v4979 = vmul.f32 %v4280, %v1084
      %v4980 = vmul.f32 %v4281, %v1085
      %v4981 = vmul.f32 %v4282, %v1086
      %v4982 = vmul.f32 %v4283, %v1087
      %v4983 = vmul.f32 %v4284, %v1088
      %v4984 = vmul.f32 %v4285, %v1089
      %v4985 = vmul.f32 %v4286, %v1090
      %v4986 = vmul.f32 %v4287, %v1082
      %s4987 = scalar_lea.vmem %s8, 64
      %v4988 = vld [vmem:[%s4987] sm:$0xf]
      %v4989 = vld [vmem:[%s4987 + $0x4] sm:$0xf]
      %v4990 = vld [vmem:[%s4987 + $0x8] sm:$0xf]
      %v4991 = vld [vmem:[%s4987 + $0xc] sm:$0xf]
      %v4992 = vld [vmem:[%s4987 + $0x10] sm:$0xf]
      %v4993 = vld [vmem:[%s4987 + $0x14] sm:$0xf]
      %v4994 = vld [vmem:[%s4987 + $0x18] sm:$0xf]
      %v4995 = vld [vmem:[%s4987 + $0x1c] sm:$0xf]
      %v4996 = vpack.c.bf16 %v4978, %v4978
      %v4997 = vpack.c.bf16 %v4979, %v4979
      %v4998 = vpack.c.bf16 %v4980, %v4980
      %v4999 = vpack.c.bf16 %v4981, %v4981
      %v5000 = vpack.c.bf16 %v4982, %v4982
      %v5001 = vpack.c.bf16 %v4983, %v4983
      %v5002 = vpack.c.bf16 %v4984, %v4984
      %v5003 = vpack.c.bf16 %v4985, %v4985
      %v5004 = vpack.c.bf16 %v4986, %v4986
      %v5013 = vunpack.c.l.b16 %v4988
      %v5014 = vunpack.c.l.b16 %v4989
      %v5015 = vunpack.c.l.b16 %v4990
      %v5016 = vunpack.c.l.b16 %v4991
      %v5017 = vunpack.c.l.b16 %v4992
      %v5018 = vunpack.c.l.b16 %v4993
      %v5019 = vunpack.c.l.b16 %v4994
      %v5020 = vunpack.c.l.b16 %v4995
      %v5021 = vpack.c.b16 %v5014, %v5013
      %v5022 = vpack.c.b16 %v5016, %v5015
      %v5023 = vpack.c.b16 %v5018, %v5017
      %v5024 = vpack.c.b16 %v5020, %v5019
      %5034 = vrot.lane.b32.xlu0 %v4996, 31
      %v5035 = vpop.permute.xlu0 %5034
      %5036 = vrot.lane.b32.xlu0 %v4997, 31
      %v5037 = vpop.permute.xlu0 %5036
      %5038 = vrot.lane.b32.xlu0 %v4998, 31
      %v5039 = vpop.permute.xlu0 %5038
      %5040 = vrot.lane.b32.xlu0 %v4999, 31
      %v5041 = vpop.permute.xlu0 %5040
      %5042 = vrot.lane.b32.xlu0 %v5000, 31
      %v5043 = vpop.permute.xlu0 %5042
      %5044 = vrot.lane.b32.xlu0 %v5001, 31
      %v5045 = vpop.permute.xlu0 %5044
      %5046 = vrot.lane.b32.xlu0 %v5002, 31
      %v5047 = vpop.permute.xlu0 %5046
      %5048 = vrot.lane.b32.xlu0 %v5003, 31
      %v5049 = vpop.permute.xlu0 %5048
      %5050 = vrot.lane.b32.xlu0 %v5004, 31
      %v5051 = vpop.permute.xlu0 %5050
      %v5052 = vsel %vm1147, %v5035, %v5037
      %v5053 = vsel %vm1147, %v5037, %v5039
      %v5054 = vsel %vm1147, %v5039, %v5041
      %v5055 = vsel %vm1147, %v5041, %v5043
      %v5056 = vsel %vm1147, %v5043, %v5045
      %v5057 = vsel %vm1147, %v5045, %v5047
      %v5058 = vsel %vm1147, %v5047, %v5049
      %v5059 = vsel %vm1147, %v5049, %v5051
      %v5061 = vsel %vm758, %v5021, 0
      %v5064 = vsel %vm758, %v5022, 0
      %v5067 = vsel %vm758, %v5023, 0
      %v5070 = vsel %vm758, %v5024, 0
      %v5073 = vsel %vm762, %v5052, 0
      %v5076 = vsel %vm762, %v5053, 0
      %v5079 = vsel %vm762, %v5054, 0
      %v5082 = vsel %vm762, %v5055, 0
      %v5085 = vsel %vm762, %v5056, 0
      %v5088 = vsel %vm762, %v5057, 0
      %v5091 = vsel %vm762, %v5058, 0
      %v5094 = vsel %vm762, %v5059, 0
      %5096 = vmatpush.bf16.msra.mxu0 0
      %5097 = vmatpush.bf16.msra.mxu0 0
      %5098 = vmatpush.bf16.msra.mxu0 0
      %5099 = vmatpush.bf16.msra.mxu0 0
      %5100 = vmatpush.bf16.msra.mxu0 0
      %5101 = vmatpush.bf16.msra.mxu0 0
      %5102 = vmatpush.bf16.msra.mxu0 0
      %5103 = vmatpush.bf16.msra.mxu0 %v5073
      %5104 = vmatmul.bf16.gmra.mxu0 %v5061
      %v5105 = vpop.f32.mrf.mxu0
      %v5106 = vadd.f32 0.0, %v5105
      %v5107 = vpop.f32.mrf.mxu0
      %v5108 = vadd.f32 0.0, %v5107
      %5109 = vmatmul.bf16.gmra.mxu0 %v5064
      %v5110 = vpop.f32.mrf.mxu0
      %v5111 = vadd.f32 0.0, %v5110
      %v5112 = vpop.f32.mrf.mxu0
      %v5113 = vadd.f32 0.0, %v5112
      %5114 = vmatmul.bf16.gmra.mxu0 %v5067
      %v5115 = vpop.f32.mrf.mxu0
      %v5116 = vadd.f32 0.0, %v5115
      %v5117 = vpop.f32.mrf.mxu0
      %v5118 = vadd.f32 0.0, %v5117
      %5119 = vmatmul.bf16.gmra.mxu0 %v5070
      %v5120 = vpop.f32.mrf.mxu0
      %v5121 = vadd.f32 0.0, %v5120
      %v5122 = vpop.f32.mrf.mxu0
      %v5123 = vadd.f32 0.0, %v5122
      %5124 = vdwg.mxu0
      %5125 = vmatpush.bf16.msra.mxu0 0
      %5126 = vmatpush.bf16.msra.mxu0 0
      %5127 = vmatpush.bf16.msra.mxu0 0
      %5128 = vmatpush.bf16.msra.mxu0 0
      %5129 = vmatpush.bf16.msra.mxu0 0
      %5130 = vmatpush.bf16.msra.mxu0 0
      %5131 = vmatpush.bf16.msra.mxu0 0
      %5132 = vmatpush.bf16.msra.mxu0 %v5076
      %5133 = vmatmul.bf16.gmra.mxu0 %v5061
      %v5134 = vpop.f32.mrf.mxu0
      %v5135 = vadd.f32 0.0, %v5134
      %v5136 = vpop.f32.mrf.mxu0
      %v5137 = vadd.f32 0.0, %v5136
      %5138 = vmatmul.bf16.gmra.mxu0 %v5064
      %v5139 = vpop.f32.mrf.mxu0
      %v5140 = vadd.f32 0.0, %v5139
      %v5141 = vpop.f32.mrf.mxu0
      %v5142 = vadd.f32 0.0, %v5141
      %5143 = vmatmul.bf16.gmra.mxu0 %v5067
      %v5144 = vpop.f32.mrf.mxu0
      %v5145 = vadd.f32 0.0, %v5144
      %v5146 = vpop.f32.mrf.mxu0
      %v5147 = vadd.f32 0.0, %v5146
      %5148 = vmatmul.bf16.gmra.mxu0 %v5070
      %v5149 = vpop.f32.mrf.mxu0
      %v5150 = vadd.f32 0.0, %v5149
      %v5151 = vpop.f32.mrf.mxu0
      %v5152 = vadd.f32 0.0, %v5151
      %5153 = vdwg.mxu0
      %5154 = vmatpush.bf16.msra.mxu0 0
      %5155 = vmatpush.bf16.msra.mxu0 0
      %5156 = vmatpush.bf16.msra.mxu0 0
      %5157 = vmatpush.bf16.msra.mxu0 0
      %5158 = vmatpush.bf16.msra.mxu0 0
      %5159 = vmatpush.bf16.msra.mxu0 0
      %5160 = vmatpush.bf16.msra.mxu0 0
      %5161 = vmatpush.bf16.msra.mxu0 %v5079
      %5162 = vmatmul.bf16.gmra.mxu0 %v5061
      %v5163 = vpop.f32.mrf.mxu0
      %v5164 = vadd.f32 0.0, %v5163
      %v5165 = vpop.f32.mrf.mxu0
      %v5166 = vadd.f32 0.0, %v5165
      %5167 = vmatmul.bf16.gmra.mxu0 %v5064
      %v5168 = vpop.f32.mrf.mxu0
      %v5169 = vadd.f32 0.0, %v5168
      %v5170 = vpop.f32.mrf.mxu0
      %v5171 = vadd.f32 0.0, %v5170
      %5172 = vmatmul.bf16.gmra.mxu0 %v5067
      %v5173 = vpop.f32.mrf.mxu0
      %v5174 = vadd.f32 0.0, %v5173
      %v5175 = vpop.f32.mrf.mxu0
      %v5176 = vadd.f32 0.0, %v5175
      %5177 = vmatmul.bf16.gmra.mxu0 %v5070
      %v5178 = vpop.f32.mrf.mxu0
      %v5179 = vadd.f32 0.0, %v5178
      %v5180 = vpop.f32.mrf.mxu0
      %v5181 = vadd.f32 0.0, %v5180
      %5182 = vdwg.mxu0
      %5183 = vmatpush.bf16.msra.mxu0 0
      %5184 = vmatpush.bf16.msra.mxu0 0
      %5185 = vmatpush.bf16.msra.mxu0 0
      %5186 = vmatpush.bf16.msra.mxu0 0
      %5187 = vmatpush.bf16.msra.mxu0 0
      %5188 = vmatpush.bf16.msra.mxu0 0
      %5189 = vmatpush.bf16.msra.mxu0 0
      %5190 = vmatpush.bf16.msra.mxu0 %v5082
      %5191 = vmatmul.bf16.gmra.mxu0 %v5061
      %v5192 = vpop.f32.mrf.mxu0
      %v5193 = vadd.f32 0.0, %v5192
      %v5194 = vpop.f32.mrf.mxu0
      %v5195 = vadd.f32 0.0, %v5194
      %5196 = vmatmul.bf16.gmra.mxu0 %v5064
      %v5197 = vpop.f32.mrf.mxu0
      %v5198 = vadd.f32 0.0, %v5197
      %v5199 = vpop.f32.mrf.mxu0
      %v5200 = vadd.f32 0.0, %v5199
      %5201 = vmatmul.bf16.gmra.mxu0 %v5067
      %v5202 = vpop.f32.mrf.mxu0
      %v5203 = vadd.f32 0.0, %v5202
      %v5204 = vpop.f32.mrf.mxu0
      %v5205 = vadd.f32 0.0, %v5204
      %5206 = vmatmul.bf16.gmra.mxu0 %v5070
      %v5207 = vpop.f32.mrf.mxu0
      %v5208 = vadd.f32 0.0, %v5207
      %v5209 = vpop.f32.mrf.mxu0
      %v5210 = vadd.f32 0.0, %v5209
      %5211 = vdwg.mxu0
      %5212 = vmatpush.bf16.msra.mxu0 0
      %5213 = vmatpush.bf16.msra.mxu0 0
      %5214 = vmatpush.bf16.msra.mxu0 0
      %5215 = vmatpush.bf16.msra.mxu0 0
      %5216 = vmatpush.bf16.msra.mxu0 0
      %5217 = vmatpush.bf16.msra.mxu0 0
      %5218 = vmatpush.bf16.msra.mxu0 0
      %5219 = vmatpush.bf16.msra.mxu0 %v5085
      %5220 = vmatmul.bf16.gmra.mxu0 %v5061
      %v5221 = vpop.f32.mrf.mxu0
      %v5222 = vadd.f32 0.0, %v5221
      %v5223 = vpop.f32.mrf.mxu0
      %v5224 = vadd.f32 0.0, %v5223
      %5225 = vmatmul.bf16.gmra.mxu0 %v5064
      %v5226 = vpop.f32.mrf.mxu0
      %v5227 = vadd.f32 0.0, %v5226
      %v5228 = vpop.f32.mrf.mxu0
      %v5229 = vadd.f32 0.0, %v5228
      %5230 = vmatmul.bf16.gmra.mxu0 %v5067
      %v5231 = vpop.f32.mrf.mxu0
      %v5232 = vadd.f32 0.0, %v5231
      %v5233 = vpop.f32.mrf.mxu0
      %v5234 = vadd.f32 0.0, %v5233
      %5235 = vmatmul.bf16.gmra.mxu0 %v5070
      %v5236 = vpop.f32.mrf.mxu0
      %v5237 = vadd.f32 0.0, %v5236
      %v5238 = vpop.f32.mrf.mxu0
      %v5239 = vadd.f32 0.0, %v5238
      %5240 = vdwg.mxu0
      %5241 = vmatpush.bf16.msra.mxu0 0
      %5242 = vmatpush.bf16.msra.mxu0 0
      %5243 = vmatpush.bf16.msra.mxu0 0
      %5244 = vmatpush.bf16.msra.mxu0 0
      %5245 = vmatpush.bf16.msra.mxu0 0
      %5246 = vmatpush.bf16.msra.mxu0 0
      %5247 = vmatpush.bf16.msra.mxu0 0
      %5248 = vmatpush.bf16.msra.mxu0 %v5088
      %5249 = vmatmul.bf16.gmra.mxu0 %v5061
      %v5250 = vpop.f32.mrf.mxu0
      %v5251 = vadd.f32 0.0, %v5250
      %v5252 = vpop.f32.mrf.mxu0
      %v5253 = vadd.f32 0.0, %v5252
      %5254 = vmatmul.bf16.gmra.mxu0 %v5064
      %v5255 = vpop.f32.mrf.mxu0
      %v5256 = vadd.f32 0.0, %v5255
      %v5257 = vpop.f32.mrf.mxu0
      %v5258 = vadd.f32 0.0, %v5257
      %5259 = vmatmul.bf16.gmra.mxu0 %v5067
      %v5260 = vpop.f32.mrf.mxu0
      %v5261 = vadd.f32 0.0, %v5260
      %v5262 = vpop.f32.mrf.mxu0
      %v5263 = vadd.f32 0.0, %v5262
      %5264 = vmatmul.bf16.gmra.mxu0 %v5070
      %v5265 = vpop.f32.mrf.mxu0
      %v5266 = vadd.f32 0.0, %v5265
      %v5267 = vpop.f32.mrf.mxu0
      %v5268 = vadd.f32 0.0, %v5267
      %5269 = vdwg.mxu0
      %5270 = vmatpush.bf16.msra.mxu0 0
      %5271 = vmatpush.bf16.msra.mxu0 0
      %5272 = vmatpush.bf16.msra.mxu0 0
      %5273 = vmatpush.bf16.msra.mxu0 0
      %5274 = vmatpush.bf16.msra.mxu0 0
      %5275 = vmatpush.bf16.msra.mxu0 0
      %5276 = vmatpush.bf16.msra.mxu0 0
      %5277 = vmatpush.bf16.msra.mxu0 %v5091
      %5278 = vmatmul.bf16.gmra.mxu0 %v5061
      %v5279 = vpop.f32.mrf.mxu0
      %v5280 = vadd.f32 0.0, %v5279
      %v5281 = vpop.f32.mrf.mxu0
      %v5282 = vadd.f32 0.0, %v5281
      %5283 = vmatmul.bf16.gmra.mxu0 %v5064
      %v5284 = vpop.f32.mrf.mxu0
      %v5285 = vadd.f32 0.0, %v5284
      %v5286 = vpop.f32.mrf.mxu0
      %v5287 = vadd.f32 0.0, %v5286
      %5288 = vmatmul.bf16.gmra.mxu0 %v5067
      %v5289 = vpop.f32.mrf.mxu0
      %v5290 = vadd.f32 0.0, %v5289
      %v5291 = vpop.f32.mrf.mxu0
      %v5292 = vadd.f32 0.0, %v5291
      %5293 = vmatmul.bf16.gmra.mxu0 %v5070
      %v5294 = vpop.f32.mrf.mxu0
      %v5295 = vadd.f32 0.0, %v5294
      %v5296 = vpop.f32.mrf.mxu0
      %v5297 = vadd.f32 0.0, %v5296
      %5298 = vdwg.mxu0
      %5299 = vmatpush.bf16.msra.mxu0 0
      %5300 = vmatpush.bf16.msra.mxu0 0
      %5301 = vmatpush.bf16.msra.mxu0 0
      %5302 = vmatpush.bf16.msra.mxu0 0
      %5303 = vmatpush.bf16.msra.mxu0 0
      %5304 = vmatpush.bf16.msra.mxu0 0
      %5305 = vmatpush.bf16.msra.mxu0 0
      %5306 = vmatpush.bf16.msra.mxu0 %v5094
      %5307 = vmatmul.bf16.gmra.mxu0 %v5061
      %v5308 = vpop.f32.mrf.mxu0
      %v5309 = vadd.f32 0.0, %v5308
      %v5310 = vpop.f32.mrf.mxu0
      %v5311 = vadd.f32 0.0, %v5310
      %5312 = vmatmul.bf16.gmra.mxu0 %v5064
      %v5313 = vpop.f32.mrf.mxu0
      %v5314 = vadd.f32 0.0, %v5313
      %v5315 = vpop.f32.mrf.mxu0
      %v5316 = vadd.f32 0.0, %v5315
      %5317 = vmatmul.bf16.gmra.mxu0 %v5067
      %v5318 = vpop.f32.mrf.mxu0
      %v5319 = vadd.f32 0.0, %v5318
      %v5320 = vpop.f32.mrf.mxu0
      %v5321 = vadd.f32 0.0, %v5320
      %5322 = vmatmul.bf16.gmra.mxu0 %v5070
      %v5323 = vpop.f32.mrf.mxu0
      %v5324 = vadd.f32 0.0, %v5323
      %v5325 = vpop.f32.mrf.mxu0
      %v5326 = vadd.f32 0.0, %v5325
      %5327 = vdwg.mxu0
      %v5328 = vadd.f32 %v4756, %v5106
      %v5329 = vadd.f32 %v4785, %v5135
      %v5330 = vadd.f32 %v4814, %v5164
      %v5331 = vadd.f32 %v4843, %v5193
      %v5332 = vadd.f32 %v4872, %v5222
      %v5333 = vadd.f32 %v4901, %v5251
      %v5334 = vadd.f32 %v4930, %v5280
      %v5335 = vadd.f32 %v4959, %v5309
      %v5336 = vadd.f32 %v4758, %v5108
      %v5337 = vadd.f32 %v4787, %v5137
      %v5338 = vadd.f32 %v4816, %v5166
      %v5339 = vadd.f32 %v4845, %v5195
      %v5340 = vadd.f32 %v4874, %v5224
      %v5341 = vadd.f32 %v4903, %v5253
      %v5342 = vadd.f32 %v4932, %v5282
      %v5343 = vadd.f32 %v4961, %v5311
      %v5344 = vadd.f32 %v4761, %v5111
      %v5345 = vadd.f32 %v4790, %v5140
      %v5346 = vadd.f32 %v4819, %v5169
      %v5347 = vadd.f32 %v4848, %v5198
      %v5348 = vadd.f32 %v4877, %v5227
      %v5349 = vadd.f32 %v4906, %v5256
      %v5350 = vadd.f32 %v4935, %v5285
      %v5351 = vadd.f32 %v4964, %v5314
      %v5352 = vadd.f32 %v4763, %v5113
      %v5353 = vadd.f32 %v4792, %v5142
      %v5354 = vadd.f32 %v4821, %v5171
      %v5355 = vadd.f32 %v4850, %v5200
      %v5356 = vadd.f32 %v4879, %v5229
      %v5357 = vadd.f32 %v4908, %v5258
      %v5358 = vadd.f32 %v4937, %v5287
      %v5359 = vadd.f32 %v4966, %v5316
      %v5360 = vadd.f32 %v4766, %v5116
      %v5361 = vadd.f32 %v4795, %v5145
      %v5362 = vadd.f32 %v4824, %v5174
      %v5363 = vadd.f32 %v4853, %v5203
      %v5364 = vadd.f32 %v4882, %v5232
      %v5365 = vadd.f32 %v4911, %v5261
      %v5366 = vadd.f32 %v4940, %v5290
      %v5367 = vadd.f32 %v4969, %v5319
      %v5368 = vadd.f32 %v4768, %v5118
      %v5369 = vadd.f32 %v4797, %v5147
      %v5370 = vadd.f32 %v4826, %v5176
      %v5371 = vadd.f32 %v4855, %v5205
      %v5372 = vadd.f32 %v4884, %v5234
      %v5373 = vadd.f32 %v4913, %v5263
      %v5374 = vadd.f32 %v4942, %v5292
      %v5375 = vadd.f32 %v4971, %v5321
      %v5376 = vadd.f32 %v4771, %v5121
      %v5377 = vadd.f32 %v4800, %v5150
      %v5378 = vadd.f32 %v4829, %v5179
      %v5379 = vadd.f32 %v4858, %v5208
      %v5380 = vadd.f32 %v4887, %v5237
      %v5381 = vadd.f32 %v4916, %v5266
      %v5382 = vadd.f32 %v4945, %v5295
      %v5383 = vadd.f32 %v4974, %v5324
      %v5384 = vadd.f32 %v4773, %v5123
      %v5385 = vadd.f32 %v4802, %v5152
      %v5386 = vadd.f32 %v4831, %v5181
      %v5387 = vadd.f32 %v4860, %v5210
      %v5388 = vadd.f32 %v4889, %v5239
      %v5389 = vadd.f32 %v4918, %v5268
      %v5390 = vadd.f32 %v4947, %v5297
      %v5391 = vadd.f32 %v4976, %v5326
      %v5392 = vmul.f32 %v4279, %v1296
      %v5393 = vmul.f32 %v4280, %v1312
      %v5394 = vmul.f32 %v4281, %v1313
      %v5395 = vmul.f32 %v4282, %v1314
      %v5396 = vmul.f32 %v4283, %v1315
      %v5397 = vmul.f32 %v4284, %v1316
      %v5398 = vmul.f32 %v4285, %v1317
      %v5399 = vmul.f32 %v4286, %v1318
      %v5400 = vmul.f32 %v4287, %v1310
      %s5401 = scalar_lea.vmem %s8, 96
      %v5402 = vld [vmem:[%s5401] sm:$0xf]
      %v5403 = vld [vmem:[%s5401 + $0x4] sm:$0xf]
      %v5404 = vld [vmem:[%s5401 + $0x8] sm:$0xf]
      %v5405 = vld [vmem:[%s5401 + $0xc] sm:$0xf]
      %v5406 = vld [vmem:[%s5401 + $0x10] sm:$0xf]
      %v5407 = vld [vmem:[%s5401 + $0x14] sm:$0xf]
      %v5408 = vld [vmem:[%s5401 + $0x18] sm:$0xf]
      %v5409 = vld [vmem:[%s5401 + $0x1c] sm:$0xf]
      %v5410 = vpack.c.bf16 %v5392, %v5392
      %v5411 = vpack.c.bf16 %v5393, %v5393
      %v5412 = vpack.c.bf16 %v5394, %v5394
      %v5413 = vpack.c.bf16 %v5395, %v5395
      %v5414 = vpack.c.bf16 %v5396, %v5396
      %v5415 = vpack.c.bf16 %v5397, %v5397
      %v5416 = vpack.c.bf16 %v5398, %v5398
      %v5417 = vpack.c.bf16 %v5399, %v5399
      %v5418 = vpack.c.bf16 %v5400, %v5400
      %v5427 = vunpack.c.l.b16 %v5402
      %v5428 = vunpack.c.l.b16 %v5403
      %v5429 = vunpack.c.l.b16 %v5404
      %v5430 = vunpack.c.l.b16 %v5405
      %v5431 = vunpack.c.l.b16 %v5406
      %v5432 = vunpack.c.l.b16 %v5407
      %v5433 = vunpack.c.l.b16 %v5408
      %v5434 = vunpack.c.l.b16 %v5409
      %v5435 = vpack.c.b16 %v5428, %v5427
      %v5436 = vpack.c.b16 %v5430, %v5429
      %v5437 = vpack.c.b16 %v5432, %v5431
      %v5438 = vpack.c.b16 %v5434, %v5433
      %5448 = vrot.lane.b32.xlu0 %v5410, 1
      %v5449 = vpop.permute.xlu0 %5448
      %5450 = vrot.lane.b32.xlu0 %v5411, 1
      %v5451 = vpop.permute.xlu0 %5450
      %5452 = vrot.lane.b32.xlu0 %v5412, 1
      %v5453 = vpop.permute.xlu0 %5452
      %5454 = vrot.lane.b32.xlu0 %v5413, 1
      %v5455 = vpop.permute.xlu0 %5454
      %5456 = vrot.lane.b32.xlu0 %v5414, 1
      %v5457 = vpop.permute.xlu0 %5456
      %5458 = vrot.lane.b32.xlu0 %v5415, 1
      %v5459 = vpop.permute.xlu0 %5458
      %5460 = vrot.lane.b32.xlu0 %v5416, 1
      %v5461 = vpop.permute.xlu0 %5460
      %5462 = vrot.lane.b32.xlu0 %v5417, 1
      %v5463 = vpop.permute.xlu0 %5462
      %5464 = vrot.lane.b32.xlu0 %v5418, 1
      %v5465 = vpop.permute.xlu0 %5464
      %v5466 = vsel %vm1375, %v5449, %v5451
      %v5467 = vsel %vm1375, %v5451, %v5453
      %v5468 = vsel %vm1375, %v5453, %v5455
      %v5469 = vsel %vm1375, %v5455, %v5457
      %v5470 = vsel %vm1375, %v5457, %v5459
      %v5471 = vsel %vm1375, %v5459, %v5461
      %v5472 = vsel %vm1375, %v5461, %v5463
      %v5473 = vsel %vm1375, %v5463, %v5465
      %v5475 = vsel %vm758, %v5435, 0
      %v5478 = vsel %vm758, %v5436, 0
      %v5481 = vsel %vm758, %v5437, 0
      %v5484 = vsel %vm758, %v5438, 0
      %v5487 = vsel %vm762, %v5466, 0
      %v5490 = vsel %vm762, %v5467, 0
      %v5493 = vsel %vm762, %v5468, 0
      %v5496 = vsel %vm762, %v5469, 0
      %v5499 = vsel %vm762, %v5470, 0
      %v5502 = vsel %vm762, %v5471, 0
      %v5505 = vsel %vm762, %v5472, 0
      %v5508 = vsel %vm762, %v5473, 0
      %5510 = vmatpush.bf16.msra.mxu0 0
      %5511 = vmatpush.bf16.msra.mxu0 0
      %5512 = vmatpush.bf16.msra.mxu0 0
      %5513 = vmatpush.bf16.msra.mxu0 0
      %5514 = vmatpush.bf16.msra.mxu0 0
      %5515 = vmatpush.bf16.msra.mxu0 0
      %5516 = vmatpush.bf16.msra.mxu0 0
      %5517 = vmatpush.bf16.msra.mxu0 %v5487
      %5518 = vmatmul.bf16.gmra.mxu0 %v5475
      %v5519 = vpop.f32.mrf.mxu0
      %v5520 = vadd.f32 0.0, %v5519
      %v5521 = vpop.f32.mrf.mxu0
      %v5522 = vadd.f32 0.0, %v5521
      %5523 = vmatmul.bf16.gmra.mxu0 %v5478
      %v5524 = vpop.f32.mrf.mxu0
      %v5525 = vadd.f32 0.0, %v5524
      %v5526 = vpop.f32.mrf.mxu0
      %v5527 = vadd.f32 0.0, %v5526
      %5528 = vmatmul.bf16.gmra.mxu0 %v5481
      %v5529 = vpop.f32.mrf.mxu0
      %v5530 = vadd.f32 0.0, %v5529
      %v5531 = vpop.f32.mrf.mxu0
      %v5532 = vadd.f32 0.0, %v5531
      %5533 = vmatmul.bf16.gmra.mxu0 %v5484
      %v5534 = vpop.f32.mrf.mxu0
      %v5535 = vadd.f32 0.0, %v5534
      %v5536 = vpop.f32.mrf.mxu0
      %v5537 = vadd.f32 0.0, %v5536
      %5538 = vdwg.mxu0
      %5539 = vmatpush.bf16.msra.mxu0 0
      %5540 = vmatpush.bf16.msra.mxu0 0
      %5541 = vmatpush.bf16.msra.mxu0 0
      %5542 = vmatpush.bf16.msra.mxu0 0
      %5543 = vmatpush.bf16.msra.mxu0 0
      %5544 = vmatpush.bf16.msra.mxu0 0
      %5545 = vmatpush.bf16.msra.mxu0 0
      %5546 = vmatpush.bf16.msra.mxu0 %v5490
      %5547 = vmatmul.bf16.gmra.mxu0 %v5475
      %v5548 = vpop.f32.mrf.mxu0
      %v5549 = vadd.f32 0.0, %v5548
      %v5550 = vpop.f32.mrf.mxu0
      %v5551 = vadd.f32 0.0, %v5550
      %5552 = vmatmul.bf16.gmra.mxu0 %v5478
      %v5553 = vpop.f32.mrf.mxu0
      %v5554 = vadd.f32 0.0, %v5553
      %v5555 = vpop.f32.mrf.mxu0
      %v5556 = vadd.f32 0.0, %v5555
      %5557 = vmatmul.bf16.gmra.mxu0 %v5481
      %v5558 = vpop.f32.mrf.mxu0
      %v5559 = vadd.f32 0.0, %v5558
      %v5560 = vpop.f32.mrf.mxu0
      %v5561 = vadd.f32 0.0, %v5560
      %5562 = vmatmul.bf16.gmra.mxu0 %v5484
      %v5563 = vpop.f32.mrf.mxu0
      %v5564 = vadd.f32 0.0, %v5563
      %v5565 = vpop.f32.mrf.mxu0
      %v5566 = vadd.f32 0.0, %v5565
      %5567 = vdwg.mxu0
      %5568 = vmatpush.bf16.msra.mxu0 0
      %5569 = vmatpush.bf16.msra.mxu0 0
      %5570 = vmatpush.bf16.msra.mxu0 0
      %5571 = vmatpush.bf16.msra.mxu0 0
      %5572 = vmatpush.bf16.msra.mxu0 0
      %5573 = vmatpush.bf16.msra.mxu0 0
      %5574 = vmatpush.bf16.msra.mxu0 0
      %5575 = vmatpush.bf16.msra.mxu0 %v5493
      %5576 = vmatmul.bf16.gmra.mxu0 %v5475
      %v5577 = vpop.f32.mrf.mxu0
      %v5578 = vadd.f32 0.0, %v5577
      %v5579 = vpop.f32.mrf.mxu0
      %v5580 = vadd.f32 0.0, %v5579
      %5581 = vmatmul.bf16.gmra.mxu0 %v5478
      %v5582 = vpop.f32.mrf.mxu0
      %v5583 = vadd.f32 0.0, %v5582
      %v5584 = vpop.f32.mrf.mxu0
      %v5585 = vadd.f32 0.0, %v5584
      %5586 = vmatmul.bf16.gmra.mxu0 %v5481
      %v5587 = vpop.f32.mrf.mxu0
      %v5588 = vadd.f32 0.0, %v5587
      %v5589 = vpop.f32.mrf.mxu0
      %v5590 = vadd.f32 0.0, %v5589
      %5591 = vmatmul.bf16.gmra.mxu0 %v5484
      %v5592 = vpop.f32.mrf.mxu0
      %v5593 = vadd.f32 0.0, %v5592
      %v5594 = vpop.f32.mrf.mxu0
      %v5595 = vadd.f32 0.0, %v5594
      %5596 = vdwg.mxu0
      %5597 = vmatpush.bf16.msra.mxu0 0
      %5598 = vmatpush.bf16.msra.mxu0 0
      %5599 = vmatpush.bf16.msra.mxu0 0
      %5600 = vmatpush.bf16.msra.mxu0 0
      %5601 = vmatpush.bf16.msra.mxu0 0
      %5602 = vmatpush.bf16.msra.mxu0 0
      %5603 = vmatpush.bf16.msra.mxu0 0
      %5604 = vmatpush.bf16.msra.mxu0 %v5496
      %5605 = vmatmul.bf16.gmra.mxu0 %v5475
      %v5606 = vpop.f32.mrf.mxu0
      %v5607 = vadd.f32 0.0, %v5606
      %v5608 = vpop.f32.mrf.mxu0
      %v5609 = vadd.f32 0.0, %v5608
      %5610 = vmatmul.bf16.gmra.mxu0 %v5478
      %v5611 = vpop.f32.mrf.mxu0
      %v5612 = vadd.f32 0.0, %v5611
      %v5613 = vpop.f32.mrf.mxu0
      %v5614 = vadd.f32 0.0, %v5613
      %5615 = vmatmul.bf16.gmra.mxu0 %v5481
      %v5616 = vpop.f32.mrf.mxu0
      %v5617 = vadd.f32 0.0, %v5616
      %v5618 = vpop.f32.mrf.mxu0
      %v5619 = vadd.f32 0.0, %v5618
      %5620 = vmatmul.bf16.gmra.mxu0 %v5484
      %v5621 = vpop.f32.mrf.mxu0
      %v5622 = vadd.f32 0.0, %v5621
      %v5623 = vpop.f32.mrf.mxu0
      %v5624 = vadd.f32 0.0, %v5623
      %5625 = vdwg.mxu0
      %5626 = vmatpush.bf16.msra.mxu0 0
      %5627 = vmatpush.bf16.msra.mxu0 0
      %5628 = vmatpush.bf16.msra.mxu0 0
      %5629 = vmatpush.bf16.msra.mxu0 0
      %5630 = vmatpush.bf16.msra.mxu0 0
      %5631 = vmatpush.bf16.msra.mxu0 0
      %5632 = vmatpush.bf16.msra.mxu0 0
      %5633 = vmatpush.bf16.msra.mxu0 %v5499
      %5634 = vmatmul.bf16.gmra.mxu0 %v5475
      %v5635 = vpop.f32.mrf.mxu0
      %v5636 = vadd.f32 0.0, %v5635
      %v5637 = vpop.f32.mrf.mxu0
      %v5638 = vadd.f32 0.0, %v5637
      %5639 = vmatmul.bf16.gmra.mxu0 %v5478
      %v5640 = vpop.f32.mrf.mxu0
      %v5641 = vadd.f32 0.0, %v5640
      %v5642 = vpop.f32.mrf.mxu0
      %v5643 = vadd.f32 0.0, %v5642
      %5644 = vmatmul.bf16.gmra.mxu0 %v5481
      %v5645 = vpop.f32.mrf.mxu0
      %v5646 = vadd.f32 0.0, %v5645
      %v5647 = vpop.f32.mrf.mxu0
      %v5648 = vadd.f32 0.0, %v5647
      %5649 = vmatmul.bf16.gmra.mxu0 %v5484
      %v5650 = vpop.f32.mrf.mxu0
      %v5651 = vadd.f32 0.0, %v5650
      %v5652 = vpop.f32.mrf.mxu0
      %v5653 = vadd.f32 0.0, %v5652
      %5654 = vdwg.mxu0
      %5655 = vmatpush.bf16.msra.mxu0 0
      %5656 = vmatpush.bf16.msra.mxu0 0
      %5657 = vmatpush.bf16.msra.mxu0 0
      %5658 = vmatpush.bf16.msra.mxu0 0
      %5659 = vmatpush.bf16.msra.mxu0 0
      %5660 = vmatpush.bf16.msra.mxu0 0
      %5661 = vmatpush.bf16.msra.mxu0 0
      %5662 = vmatpush.bf16.msra.mxu0 %v5502
      %5663 = vmatmul.bf16.gmra.mxu0 %v5475
      %v5664 = vpop.f32.mrf.mxu0
      %v5665 = vadd.f32 0.0, %v5664
      %v5666 = vpop.f32.mrf.mxu0
      %v5667 = vadd.f32 0.0, %v5666
      %5668 = vmatmul.bf16.gmra.mxu0 %v5478
      %v5669 = vpop.f32.mrf.mxu0
      %v5670 = vadd.f32 0.0, %v5669
      %v5671 = vpop.f32.mrf.mxu0
      %v5672 = vadd.f32 0.0, %v5671
      %5673 = vmatmul.bf16.gmra.mxu0 %v5481
      %v5674 = vpop.f32.mrf.mxu0
      %v5675 = vadd.f32 0.0, %v5674
      %v5676 = vpop.f32.mrf.mxu0
      %v5677 = vadd.f32 0.0, %v5676
      %5678 = vmatmul.bf16.gmra.mxu0 %v5484
      %v5679 = vpop.f32.mrf.mxu0
      %v5680 = vadd.f32 0.0, %v5679
      %v5681 = vpop.f32.mrf.mxu0
      %v5682 = vadd.f32 0.0, %v5681
      %5683 = vdwg.mxu0
      %5684 = vmatpush.bf16.msra.mxu0 0
      %5685 = vmatpush.bf16.msra.mxu0 0
      %5686 = vmatpush.bf16.msra.mxu0 0
      %5687 = vmatpush.bf16.msra.mxu0 0
      %5688 = vmatpush.bf16.msra.mxu0 0
      %5689 = vmatpush.bf16.msra.mxu0 0
      %5690 = vmatpush.bf16.msra.mxu0 0
      %5691 = vmatpush.bf16.msra.mxu0 %v5505
      %5692 = vmatmul.bf16.gmra.mxu0 %v5475
      %v5693 = vpop.f32.mrf.mxu0
      %v5694 = vadd.f32 0.0, %v5693
      %v5695 = vpop.f32.mrf.mxu0
      %v5696 = vadd.f32 0.0, %v5695
      %5697 = vmatmul.bf16.gmra.mxu0 %v5478
      %v5698 = vpop.f32.mrf.mxu0
      %v5699 = vadd.f32 0.0, %v5698
      %v5700 = vpop.f32.mrf.mxu0
      %v5701 = vadd.f32 0.0, %v5700
      %5702 = vmatmul.bf16.gmra.mxu0 %v5481
      %v5703 = vpop.f32.mrf.mxu0
      %v5704 = vadd.f32 0.0, %v5703
      %v5705 = vpop.f32.mrf.mxu0
      %v5706 = vadd.f32 0.0, %v5705
      %5707 = vmatmul.bf16.gmra.mxu0 %v5484
      %v5708 = vpop.f32.mrf.mxu0
      %v5709 = vadd.f32 0.0, %v5708
      %v5710 = vpop.f32.mrf.mxu0
      %v5711 = vadd.f32 0.0, %v5710
      %5712 = vdwg.mxu0
      %5713 = vmatpush.bf16.msra.mxu0 0
      %5714 = vmatpush.bf16.msra.mxu0 0
      %5715 = vmatpush.bf16.msra.mxu0 0
      %5716 = vmatpush.bf16.msra.mxu0 0
      %5717 = vmatpush.bf16.msra.mxu0 0
      %5718 = vmatpush.bf16.msra.mxu0 0
      %5719 = vmatpush.bf16.msra.mxu0 0
      %5720 = vmatpush.bf16.msra.mxu0 %v5508
      %5721 = vmatmul.bf16.gmra.mxu0 %v5475
      %v5722 = vpop.f32.mrf.mxu0
      %v5723 = vadd.f32 0.0, %v5722
      %v5724 = vpop.f32.mrf.mxu0
      %v5725 = vadd.f32 0.0, %v5724
      %5726 = vmatmul.bf16.gmra.mxu0 %v5478
      %v5727 = vpop.f32.mrf.mxu0
      %v5728 = vadd.f32 0.0, %v5727
      %v5729 = vpop.f32.mrf.mxu0
      %v5730 = vadd.f32 0.0, %v5729
      %5731 = vmatmul.bf16.gmra.mxu0 %v5481
      %v5732 = vpop.f32.mrf.mxu0
      %v5733 = vadd.f32 0.0, %v5732
      %v5734 = vpop.f32.mrf.mxu0
      %v5735 = vadd.f32 0.0, %v5734
      %5736 = vmatmul.bf16.gmra.mxu0 %v5484
      %v5737 = vpop.f32.mrf.mxu0
      %v5738 = vadd.f32 0.0, %v5737
      %v5739 = vpop.f32.mrf.mxu0
      %v5740 = vadd.f32 0.0, %v5739
      %5741 = vdwg.mxu0
      %v5742 = vadd.f32 %v5328, %v5520
      %v5743 = vadd.f32 %v5329, %v5549
      %v5744 = vadd.f32 %v5330, %v5578
      %v5745 = vadd.f32 %v5331, %v5607
      %v5746 = vadd.f32 %v5332, %v5636
      %v5747 = vadd.f32 %v5333, %v5665
      %v5748 = vadd.f32 %v5334, %v5694
      %v5749 = vadd.f32 %v5335, %v5723
      %v5750 = vadd.f32 %v5336, %v5522
      %v5751 = vadd.f32 %v5337, %v5551
      %v5752 = vadd.f32 %v5338, %v5580
      %v5753 = vadd.f32 %v5339, %v5609
      %v5754 = vadd.f32 %v5340, %v5638
      %v5755 = vadd.f32 %v5341, %v5667
      %v5756 = vadd.f32 %v5342, %v5696
      %v5757 = vadd.f32 %v5343, %v5725
      %v5758 = vadd.f32 %v5344, %v5525
      %v5759 = vadd.f32 %v5345, %v5554
      %v5760 = vadd.f32 %v5346, %v5583
      %v5761 = vadd.f32 %v5347, %v5612
      %v5762 = vadd.f32 %v5348, %v5641
      %v5763 = vadd.f32 %v5349, %v5670
      %v5764 = vadd.f32 %v5350, %v5699
      %v5765 = vadd.f32 %v5351, %v5728
      %v5766 = vadd.f32 %v5352, %v5527
      %v5767 = vadd.f32 %v5353, %v5556
      %v5768 = vadd.f32 %v5354, %v5585
      %v5769 = vadd.f32 %v5355, %v5614
      %v5770 = vadd.f32 %v5356, %v5643
      %v5771 = vadd.f32 %v5357, %v5672
      %v5772 = vadd.f32 %v5358, %v5701
      %v5773 = vadd.f32 %v5359, %v5730
      %v5774 = vadd.f32 %v5360, %v5530
      %v5775 = vadd.f32 %v5361, %v5559
      %v5776 = vadd.f32 %v5362, %v5588
      %v5777 = vadd.f32 %v5363, %v5617
      %v5778 = vadd.f32 %v5364, %v5646
      %v5779 = vadd.f32 %v5365, %v5675
      %v5780 = vadd.f32 %v5366, %v5704
      %v5781 = vadd.f32 %v5367, %v5733
      %v5782 = vadd.f32 %v5368, %v5532
      %v5783 = vadd.f32 %v5369, %v5561
      %v5784 = vadd.f32 %v5370, %v5590
      %v5785 = vadd.f32 %v5371, %v5619
      %v5786 = vadd.f32 %v5372, %v5648
      %v5787 = vadd.f32 %v5373, %v5677
      %v5788 = vadd.f32 %v5374, %v5706
      %v5789 = vadd.f32 %v5375, %v5735
      %v5790 = vadd.f32 %v5376, %v5535
      %v5791 = vadd.f32 %v5377, %v5564
      %v5792 = vadd.f32 %v5378, %v5593
      %v5793 = vadd.f32 %v5379, %v5622
      %v5794 = vadd.f32 %v5380, %v5651
      %v5795 = vadd.f32 %v5381, %v5680
      %v5796 = vadd.f32 %v5382, %v5709
      %v5797 = vadd.f32 %v5383, %v5738
      %v5798 = vadd.f32 %v5384, %v5537
      %v5799 = vadd.f32 %v5385, %v5566
      %v5800 = vadd.f32 %v5386, %v5595
      %v5801 = vadd.f32 %v5387, %v5624
      %v5802 = vadd.f32 %v5388, %v5653
      %v5803 = vadd.f32 %v5389, %v5682
      %v5804 = vadd.f32 %v5390, %v5711
      %v5805 = vadd.f32 %v5391, %v5740
      %s5806 = scalar_lea.vmem %s8, 128
      %v5807 = vld [vmem:[%s5806] sm:$0xf]
      %v5808 = vld [vmem:[%s5806 + $0x4] sm:$0xf]
      %v5809 = vld [vmem:[%s5806 + $0x8] sm:$0xf]
      %v5810 = vld [vmem:[%s5806 + $0xc] sm:$0xf]
      %v5811 = vld [vmem:[%s5806 + $0x10] sm:$0xf]
      %v5812 = vld [vmem:[%s5806 + $0x14] sm:$0xf]
      %v5813 = vld [vmem:[%s5806 + $0x18] sm:$0xf]
      %v5814 = vld [vmem:[%s5806 + $0x1c] sm:$0xf]
      %v5823 = vunpack.c.l.b16 %v5807
      %v5824 = vunpack.c.l.b16 %v5808
      %v5825 = vunpack.c.l.b16 %v5809
      %v5826 = vunpack.c.l.b16 %v5810
      %v5827 = vunpack.c.l.b16 %v5811
      %v5828 = vunpack.c.l.b16 %v5812
      %v5829 = vunpack.c.l.b16 %v5813
      %v5830 = vunpack.c.l.b16 %v5814
      %v5831 = vpack.c.b16 %v5824, %v5823
      %v5832 = vpack.c.b16 %v5826, %v5825
      %v5833 = vpack.c.b16 %v5828, %v5827
      %v5834 = vpack.c.b16 %v5830, %v5829
      %v5836 = vsel %vm758, %v5831, 0
      %v5839 = vsel %vm758, %v5832, 0
      %v5842 = vsel %vm758, %v5833, 0
      %v5845 = vsel %vm758, %v5834, 0
      %v5848 = vsel %vm762, %v4324, 0
      %v5851 = vsel %vm762, %v4325, 0
      %v5854 = vsel %vm762, %v4326, 0
      %v5857 = vsel %vm762, %v4327, 0
      %v5860 = vsel %vm762, %v4328, 0
      %v5863 = vsel %vm762, %v4329, 0
      %v5866 = vsel %vm762, %v4330, 0
      %v5869 = vsel %vm762, %v4331, 0
      %5871 = vmatpush.bf16.msra.mxu0 0
      %5872 = vmatpush.bf16.msra.mxu0 0
      %5873 = vmatpush.bf16.msra.mxu0 0
      %5874 = vmatpush.bf16.msra.mxu0 0
      %5875 = vmatpush.bf16.msra.mxu0 0
      %5876 = vmatpush.bf16.msra.mxu0 0
      %5877 = vmatpush.bf16.msra.mxu0 0
      %5878 = vmatpush.bf16.msra.mxu0 %v5848
      %5879 = vmatmul.bf16.gmra.mxu0 %v5836
      %v5880 = vpop.f32.mrf.mxu0
      %v5881 = vadd.f32 0.0, %v5880
      %v5882 = vpop.f32.mrf.mxu0
      %v5883 = vadd.f32 0.0, %v5882
      %5884 = vmatmul.bf16.gmra.mxu0 %v5839
      %v5885 = vpop.f32.mrf.mxu0
      %v5886 = vadd.f32 0.0, %v5885
      %v5887 = vpop.f32.mrf.mxu0
      %v5888 = vadd.f32 0.0, %v5887
      %5889 = vmatmul.bf16.gmra.mxu0 %v5842
      %v5890 = vpop.f32.mrf.mxu0
      %v5891 = vadd.f32 0.0, %v5890
      %v5892 = vpop.f32.mrf.mxu0
      %v5893 = vadd.f32 0.0, %v5892
      %5894 = vmatmul.bf16.gmra.mxu0 %v5845
      %v5895 = vpop.f32.mrf.mxu0
      %v5896 = vadd.f32 0.0, %v5895
      %v5897 = vpop.f32.mrf.mxu0
      %v5898 = vadd.f32 0.0, %v5897
      %5899 = vdwg.mxu0
      %5900 = vmatpush.bf16.msra.mxu0 0
      %5901 = vmatpush.bf16.msra.mxu0 0
      %5902 = vmatpush.bf16.msra.mxu0 0
      %5903 = vmatpush.bf16.msra.mxu0 0
      %5904 = vmatpush.bf16.msra.mxu0 0
      %5905 = vmatpush.bf16.msra.mxu0 0
      %5906 = vmatpush.bf16.msra.mxu0 0
      %5907 = vmatpush.bf16.msra.mxu0 %v5851
      %5908 = vmatmul.bf16.gmra.mxu0 %v5836
      %v5909 = vpop.f32.mrf.mxu0
      %v5910 = vadd.f32 0.0, %v5909
      %v5911 = vpop.f32.mrf.mxu0
      %v5912 = vadd.f32 0.0, %v5911
      %5913 = vmatmul.bf16.gmra.mxu0 %v5839
      %v5914 = vpop.f32.mrf.mxu0
      %v5915 = vadd.f32 0.0, %v5914
      %v5916 = vpop.f32.mrf.mxu0
      %v5917 = vadd.f32 0.0, %v5916
      %5918 = vmatmul.bf16.gmra.mxu0 %v5842
      %v5919 = vpop.f32.mrf.mxu0
      %v5920 = vadd.f32 0.0, %v5919
      %v5921 = vpop.f32.mrf.mxu0
      %v5922 = vadd.f32 0.0, %v5921
      %5923 = vmatmul.bf16.gmra.mxu0 %v5845
      %v5924 = vpop.f32.mrf.mxu0
      %v5925 = vadd.f32 0.0, %v5924
      %v5926 = vpop.f32.mrf.mxu0
      %v5927 = vadd.f32 0.0, %v5926
      %5928 = vdwg.mxu0
      %5929 = vmatpush.bf16.msra.mxu0 0
      %5930 = vmatpush.bf16.msra.mxu0 0
      %5931 = vmatpush.bf16.msra.mxu0 0
      %5932 = vmatpush.bf16.msra.mxu0 0
      %5933 = vmatpush.bf16.msra.mxu0 0
      %5934 = vmatpush.bf16.msra.mxu0 0
      %5935 = vmatpush.bf16.msra.mxu0 0
      %5936 = vmatpush.bf16.msra.mxu0 %v5854
      %5937 = vmatmul.bf16.gmra.mxu0 %v5836
      %v5938 = vpop.f32.mrf.mxu0
      %v5939 = vadd.f32 0.0, %v5938
      %v5940 = vpop.f32.mrf.mxu0
      %v5941 = vadd.f32 0.0, %v5940
      %5942 = vmatmul.bf16.gmra.mxu0 %v5839
      %v5943 = vpop.f32.mrf.mxu0
      %v5944 = vadd.f32 0.0, %v5943
      %v5945 = vpop.f32.mrf.mxu0
      %v5946 = vadd.f32 0.0, %v5945
      %5947 = vmatmul.bf16.gmra.mxu0 %v5842
      %v5948 = vpop.f32.mrf.mxu0
      %v5949 = vadd.f32 0.0, %v5948
      %v5950 = vpop.f32.mrf.mxu0
      %v5951 = vadd.f32 0.0, %v5950
      %5952 = vmatmul.bf16.gmra.mxu0 %v5845
      %v5953 = vpop.f32.mrf.mxu0
      %v5954 = vadd.f32 0.0, %v5953
      %v5955 = vpop.f32.mrf.mxu0
      %v5956 = vadd.f32 0.0, %v5955
      %5957 = vdwg.mxu0
      %5958 = vmatpush.bf16.msra.mxu0 0
      %5959 = vmatpush.bf16.msra.mxu0 0
      %5960 = vmatpush.bf16.msra.mxu0 0
      %5961 = vmatpush.bf16.msra.mxu0 0
      %5962 = vmatpush.bf16.msra.mxu0 0
      %5963 = vmatpush.bf16.msra.mxu0 0
      %5964 = vmatpush.bf16.msra.mxu0 0
      %5965 = vmatpush.bf16.msra.mxu0 %v5857
      %5966 = vmatmul.bf16.gmra.mxu0 %v5836
      %v5967 = vpop.f32.mrf.mxu0
      %v5968 = vadd.f32 0.0, %v5967
      %v5969 = vpop.f32.mrf.mxu0
      %v5970 = vadd.f32 0.0, %v5969
      %5971 = vmatmul.bf16.gmra.mxu0 %v5839
      %v5972 = vpop.f32.mrf.mxu0
      %v5973 = vadd.f32 0.0, %v5972
      %v5974 = vpop.f32.mrf.mxu0
      %v5975 = vadd.f32 0.0, %v5974
      %5976 = vmatmul.bf16.gmra.mxu0 %v5842
      %v5977 = vpop.f32.mrf.mxu0
      %v5978 = vadd.f32 0.0, %v5977
      %v5979 = vpop.f32.mrf.mxu0
      %v5980 = vadd.f32 0.0, %v5979
      %5981 = vmatmul.bf16.gmra.mxu0 %v5845
      %v5982 = vpop.f32.mrf.mxu0
      %v5983 = vadd.f32 0.0, %v5982
      %v5984 = vpop.f32.mrf.mxu0
      %v5985 = vadd.f32 0.0, %v5984
      %5986 = vdwg.mxu0
      %5987 = vmatpush.bf16.msra.mxu0 0
      %5988 = vmatpush.bf16.msra.mxu0 0
      %5989 = vmatpush.bf16.msra.mxu0 0
      %5990 = vmatpush.bf16.msra.mxu0 0
      %5991 = vmatpush.bf16.msra.mxu0 0
      %5992 = vmatpush.bf16.msra.mxu0 0
      %5993 = vmatpush.bf16.msra.mxu0 0
      %5994 = vmatpush.bf16.msra.mxu0 %v5860
      %5995 = vmatmul.bf16.gmra.mxu0 %v5836
      %v5996 = vpop.f32.mrf.mxu0
      %v5997 = vadd.f32 0.0, %v5996
      %v5998 = vpop.f32.mrf.mxu0
      %v5999 = vadd.f32 0.0, %v5998
      %6000 = vmatmul.bf16.gmra.mxu0 %v5839
      %v6001 = vpop.f32.mrf.mxu0
      %v6002 = vadd.f32 0.0, %v6001
      %v6003 = vpop.f32.mrf.mxu0
      %v6004 = vadd.f32 0.0, %v6003
      %6005 = vmatmul.bf16.gmra.mxu0 %v5842
      %v6006 = vpop.f32.mrf.mxu0
      %v6007 = vadd.f32 0.0, %v6006
      %v6008 = vpop.f32.mrf.mxu0
      %v6009 = vadd.f32 0.0, %v6008
      %6010 = vmatmul.bf16.gmra.mxu0 %v5845
      %v6011 = vpop.f32.mrf.mxu0
      %v6012 = vadd.f32 0.0, %v6011
      %v6013 = vpop.f32.mrf.mxu0
      %v6014 = vadd.f32 0.0, %v6013
      %6015 = vdwg.mxu0
      %6016 = vmatpush.bf16.msra.mxu0 0
      %6017 = vmatpush.bf16.msra.mxu0 0
      %6018 = vmatpush.bf16.msra.mxu0 0
      %6019 = vmatpush.bf16.msra.mxu0 0
      %6020 = vmatpush.bf16.msra.mxu0 0
      %6021 = vmatpush.bf16.msra.mxu0 0
      %6022 = vmatpush.bf16.msra.mxu0 0
      %6023 = vmatpush.bf16.msra.mxu0 %v5863
      %6024 = vmatmul.bf16.gmra.mxu0 %v5836
      %v6025 = vpop.f32.mrf.mxu0
      %v6026 = vadd.f32 0.0, %v6025
      %v6027 = vpop.f32.mrf.mxu0
      %v6028 = vadd.f32 0.0, %v6027
      %6029 = vmatmul.bf16.gmra.mxu0 %v5839
      %v6030 = vpop.f32.mrf.mxu0
      %v6031 = vadd.f32 0.0, %v6030
      %v6032 = vpop.f32.mrf.mxu0
      %v6033 = vadd.f32 0.0, %v6032
      %6034 = vmatmul.bf16.gmra.mxu0 %v5842
      %v6035 = vpop.f32.mrf.mxu0
      %v6036 = vadd.f32 0.0, %v6035
      %v6037 = vpop.f32.mrf.mxu0
      %v6038 = vadd.f32 0.0, %v6037
      %6039 = vmatmul.bf16.gmra.mxu0 %v5845
      %v6040 = vpop.f32.mrf.mxu0
      %v6041 = vadd.f32 0.0, %v6040
      %v6042 = vpop.f32.mrf.mxu0
      %v6043 = vadd.f32 0.0, %v6042
      %6044 = vdwg.mxu0
      %6045 = vmatpush.bf16.msra.mxu0 0
      %6046 = vmatpush.bf16.msra.mxu0 0
      %6047 = vmatpush.bf16.msra.mxu0 0
      %6048 = vmatpush.bf16.msra.mxu0 0
      %6049 = vmatpush.bf16.msra.mxu0 0
      %6050 = vmatpush.bf16.msra.mxu0 0
      %6051 = vmatpush.bf16.msra.mxu0 0
      %6052 = vmatpush.bf16.msra.mxu0 %v5866
      %6053 = vmatmul.bf16.gmra.mxu0 %v5836
      %v6054 = vpop.f32.mrf.mxu0
      %v6055 = vadd.f32 0.0, %v6054
      %v6056 = vpop.f32.mrf.mxu0
      %v6057 = vadd.f32 0.0, %v6056
      %6058 = vmatmul.bf16.gmra.mxu0 %v5839
      %v6059 = vpop.f32.mrf.mxu0
      %v6060 = vadd.f32 0.0, %v6059
      %v6061 = vpop.f32.mrf.mxu0
      %v6062 = vadd.f32 0.0, %v6061
      %6063 = vmatmul.bf16.gmra.mxu0 %v5842
      %v6064 = vpop.f32.mrf.mxu0
      %v6065 = vadd.f32 0.0, %v6064
      %v6066 = vpop.f32.mrf.mxu0
      %v6067 = vadd.f32 0.0, %v6066
      %6068 = vmatmul.bf16.gmra.mxu0 %v5845
      %v6069 = vpop.f32.mrf.mxu0
      %v6070 = vadd.f32 0.0, %v6069
      %v6071 = vpop.f32.mrf.mxu0
      %v6072 = vadd.f32 0.0, %v6071
      %6073 = vdwg.mxu0
      %6074 = vmatpush.bf16.msra.mxu0 0
      %6075 = vmatpush.bf16.msra.mxu0 0
      %6076 = vmatpush.bf16.msra.mxu0 0
      %6077 = vmatpush.bf16.msra.mxu0 0
      %6078 = vmatpush.bf16.msra.mxu0 0
      %6079 = vmatpush.bf16.msra.mxu0 0
      %6080 = vmatpush.bf16.msra.mxu0 0
      %6081 = vmatpush.bf16.msra.mxu0 %v5869
      %6082 = vmatmul.bf16.gmra.mxu0 %v5836
      %v6083 = vpop.f32.mrf.mxu0
      %v6084 = vadd.f32 0.0, %v6083
      %v6085 = vpop.f32.mrf.mxu0
      %v6086 = vadd.f32 0.0, %v6085
      %6087 = vmatmul.bf16.gmra.mxu0 %v5839
      %v6088 = vpop.f32.mrf.mxu0
      %v6089 = vadd.f32 0.0, %v6088
      %v6090 = vpop.f32.mrf.mxu0
      %v6091 = vadd.f32 0.0, %v6090
      %6092 = vmatmul.bf16.gmra.mxu0 %v5842
      %v6093 = vpop.f32.mrf.mxu0
      %v6094 = vadd.f32 0.0, %v6093
      %v6095 = vpop.f32.mrf.mxu0
      %v6096 = vadd.f32 0.0, %v6095
      %6097 = vmatmul.bf16.gmra.mxu0 %v5845
      %v6098 = vpop.f32.mrf.mxu0
      %v6099 = vadd.f32 0.0, %v6098
      %v6100 = vpop.f32.mrf.mxu0
      %v6101 = vadd.f32 0.0, %v6100
      %6102 = vdwg.mxu0
      %v6103 = vadd.f32 %v5742, %v5881
      %v6104 = vadd.f32 %v5743, %v5910
      %v6105 = vadd.f32 %v5744, %v5939
      %v6106 = vadd.f32 %v5745, %v5968
      %v6107 = vadd.f32 %v5746, %v5997
      %v6108 = vadd.f32 %v5747, %v6026
      %v6109 = vadd.f32 %v5748, %v6055
      %v6110 = vadd.f32 %v5749, %v6084
      %v6111 = vadd.f32 %v5750, %v5883
      %v6112 = vadd.f32 %v5751, %v5912
      %v6113 = vadd.f32 %v5752, %v5941
      %v6114 = vadd.f32 %v5753, %v5970
      %v6115 = vadd.f32 %v5754, %v5999
      %v6116 = vadd.f32 %v5755, %v6028
      %v6117 = vadd.f32 %v5756, %v6057
      %v6118 = vadd.f32 %v5757, %v6086
      %v6119 = vadd.f32 %v5758, %v5886
      %v6120 = vadd.f32 %v5759, %v5915
      %v6121 = vadd.f32 %v5760, %v5944
      %v6122 = vadd.f32 %v5761, %v5973
      %v6123 = vadd.f32 %v5762, %v6002
      %v6124 = vadd.f32 %v5763, %v6031
      %v6125 = vadd.f32 %v5764, %v6060
      %v6126 = vadd.f32 %v5765, %v6089
      %v6127 = vadd.f32 %v5766, %v5888
      %v6128 = vadd.f32 %v5767, %v5917
      %v6129 = vadd.f32 %v5768, %v5946
      %v6130 = vadd.f32 %v5769, %v5975
      %v6131 = vadd.f32 %v5770, %v6004
      %v6132 = vadd.f32 %v5771, %v6033
      %v6133 = vadd.f32 %v5772, %v6062
      %v6134 = vadd.f32 %v5773, %v6091
      %v6135 = vadd.f32 %v5774, %v5891
      %v6136 = vadd.f32 %v5775, %v5920
      %v6137 = vadd.f32 %v5776, %v5949
      %v6138 = vadd.f32 %v5777, %v5978
      %v6139 = vadd.f32 %v5778, %v6007
      %v6140 = vadd.f32 %v5779, %v6036
      %v6141 = vadd.f32 %v5780, %v6065
      %v6142 = vadd.f32 %v5781, %v6094
      %v6143 = vadd.f32 %v5782, %v5893
      %v6144 = vadd.f32 %v5783, %v5922
      %v6145 = vadd.f32 %v5784, %v5951
      %v6146 = vadd.f32 %v5785, %v5980
      %v6147 = vadd.f32 %v5786, %v6009
      %v6148 = vadd.f32 %v5787, %v6038
      %v6149 = vadd.f32 %v5788, %v6067
      %v6150 = vadd.f32 %v5789, %v6096
      %v6151 = vadd.f32 %v5790, %v5896
      %v6152 = vadd.f32 %v5791, %v5925
      %v6153 = vadd.f32 %v5792, %v5954
      %v6154 = vadd.f32 %v5793, %v5983
      %v6155 = vadd.f32 %v5794, %v6012
      %v6156 = vadd.f32 %v5795, %v6041
      %v6157 = vadd.f32 %v5796, %v6070
      %v6158 = vadd.f32 %v5797, %v6099
      %v6159 = vadd.f32 %v5798, %v5898
      %v6160 = vadd.f32 %v5799, %v5927
      %v6161 = vadd.f32 %v5800, %v5956
      %v6162 = vadd.f32 %v5801, %v5985
      %v6163 = vadd.f32 %v5802, %v6014
      %v6164 = vadd.f32 %v5803, %v6043
      %v6165 = vadd.f32 %v5804, %v6072
      %v6166 = vadd.f32 %v5805, %v6101
      %v6167 = vld [vmem:[#allocation2 + $0x8] sm:$0xff]
      %v6168 = vld [vmem:[#allocation2 + $0x10] sm:$0xff]
      %v6169 = vld [vmem:[#allocation2 + $0x18] sm:$0xff]
      %v6170 = vld [vmem:[#allocation2 + $0x20] sm:$0xff]
      %v6171 = vld [vmem:[#allocation2 + $0x28] sm:$0xff]
      %v6172 = vld [vmem:[#allocation2 + $0x30] sm:$0xff]
      %v6173 = vld [vmem:[#allocation2 + $0x38] sm:$0xff]
      %v6174 = vld [vmem:[#allocation2 + $0x40] sm:$0xff]
      %v6175 = vld [vmem:[#allocation2 + $0x48] sm:$0xff]
      %v6176 = vmul.f32 %v6167, %v1674
      %v6177 = vmul.f32 %v6168, %v1690
      %v6178 = vmul.f32 %v6169, %v1691
      %v6179 = vmul.f32 %v6170, %v1692
      %v6180 = vmul.f32 %v6171, %v1693
      %v6181 = vmul.f32 %v6172, %v1694
      %v6182 = vmul.f32 %v6173, %v1695
      %v6183 = vmul.f32 %v6174, %v1696
      %v6184 = vmul.f32 %v6175, %v1688
      %s6185 = scalar_lea.vmem %s8, 160
      %v6186 = vld [vmem:[%s6185] sm:$0xf]
      %v6187 = vld [vmem:[%s6185 + $0x4] sm:$0xf]
      %v6188 = vld [vmem:[%s6185 + $0x8] sm:$0xf]
      %v6189 = vld [vmem:[%s6185 + $0xc] sm:$0xf]
      %v6190 = vld [vmem:[%s6185 + $0x10] sm:$0xf]
      %v6191 = vld [vmem:[%s6185 + $0x14] sm:$0xf]
      %v6192 = vld [vmem:[%s6185 + $0x18] sm:$0xf]
      %v6193 = vld [vmem:[%s6185 + $0x1c] sm:$0xf]
      %v6194 = vpack.c.bf16 %v6176, %v6176
      %v6195 = vpack.c.bf16 %v6177, %v6177
      %v6196 = vpack.c.bf16 %v6178, %v6178
      %v6197 = vpack.c.bf16 %v6179, %v6179
      %v6198 = vpack.c.bf16 %v6180, %v6180
      %v6199 = vpack.c.bf16 %v6181, %v6181
      %v6200 = vpack.c.bf16 %v6182, %v6182
      %v6201 = vpack.c.bf16 %v6183, %v6183
      %v6202 = vpack.c.bf16 %v6184, %v6184
      %v6211 = vunpack.c.l.b16 %v6186
      %v6212 = vunpack.c.l.b16 %v6187
      %v6213 = vunpack.c.l.b16 %v6188
      %v6214 = vunpack.c.l.b16 %v6189
      %v6215 = vunpack.c.l.b16 %v6190
      %v6216 = vunpack.c.l.b16 %v6191
      %v6217 = vunpack.c.l.b16 %v6192
      %v6218 = vunpack.c.l.b16 %v6193
      %v6219 = vpack.c.b16 %v6212, %v6211
      %v6220 = vpack.c.b16 %v6214, %v6213
      %v6221 = vpack.c.b16 %v6216, %v6215
      %v6222 = vpack.c.b16 %v6218, %v6217
      %6232 = vrot.lane.b32.xlu0 %v6194, 127
      %v6233 = vpop.permute.xlu0 %6232
      %6234 = vrot.lane.b32.xlu0 %v6195, 127
      %v6235 = vpop.permute.xlu0 %6234
      %6236 = vrot.lane.b32.xlu0 %v6196, 127
      %v6237 = vpop.permute.xlu0 %6236
      %6238 = vrot.lane.b32.xlu0 %v6197, 127
      %v6239 = vpop.permute.xlu0 %6238
      %6240 = vrot.lane.b32.xlu0 %v6198, 127
      %v6241 = vpop.permute.xlu0 %6240
      %6242 = vrot.lane.b32.xlu0 %v6199, 127
      %v6243 = vpop.permute.xlu0 %6242
      %6244 = vrot.lane.b32.xlu0 %v6200, 127
      %v6245 = vpop.permute.xlu0 %6244
      %6246 = vrot.lane.b32.xlu0 %v6201, 127
      %v6247 = vpop.permute.xlu0 %6246
      %6248 = vrot.lane.b32.xlu0 %v6202, 127
      %v6249 = vpop.permute.xlu0 %6248
      %v6250 = vsel %vm1753, %v6233, %v6235
      %v6251 = vsel %vm1753, %v6235, %v6237
      %v6252 = vsel %vm1753, %v6237, %v6239
      %v6253 = vsel %vm1753, %v6239, %v6241
      %v6254 = vsel %vm1753, %v6241, %v6243
      %v6255 = vsel %vm1753, %v6243, %v6245
      %v6256 = vsel %vm1753, %v6245, %v6247
      %v6257 = vsel %vm1753, %v6247, %v6249
      %v6259 = vsel %vm758, %v6219, 0
      %v6262 = vsel %vm758, %v6220, 0
      %v6265 = vsel %vm758, %v6221, 0
      %v6268 = vsel %vm758, %v6222, 0
      %v6271 = vsel %vm762, %v6250, 0
      %v6274 = vsel %vm762, %v6251, 0
      %v6277 = vsel %vm762, %v6252, 0
      %v6280 = vsel %vm762, %v6253, 0
      %v6283 = vsel %vm762, %v6254, 0
      %v6286 = vsel %vm762, %v6255, 0
      %v6289 = vsel %vm762, %v6256, 0
      %v6292 = vsel %vm762, %v6257, 0
      %6294 = vmatpush.bf16.msra.mxu0 0
      %6295 = vmatpush.bf16.msra.mxu0 0
      %6296 = vmatpush.bf16.msra.mxu0 0
      %6297 = vmatpush.bf16.msra.mxu0 0
      %6298 = vmatpush.bf16.msra.mxu0 0
      %6299 = vmatpush.bf16.msra.mxu0 0
      %6300 = vmatpush.bf16.msra.mxu0 0
      %6301 = vmatpush.bf16.msra.mxu0 %v6271
      %6302 = vmatmul.bf16.gmra.mxu0 %v6259
      %v6303 = vpop.f32.mrf.mxu0
      %v6304 = vadd.f32 0.0, %v6303
      %v6305 = vpop.f32.mrf.mxu0
      %v6306 = vadd.f32 0.0, %v6305
      %6307 = vmatmul.bf16.gmra.mxu0 %v6262
      %v6308 = vpop.f32.mrf.mxu0
      %v6309 = vadd.f32 0.0, %v6308
      %v6310 = vpop.f32.mrf.mxu0
      %v6311 = vadd.f32 0.0, %v6310
      %6312 = vmatmul.bf16.gmra.mxu0 %v6265
      %v6313 = vpop.f32.mrf.mxu0
      %v6314 = vadd.f32 0.0, %v6313
      %v6315 = vpop.f32.mrf.mxu0
      %v6316 = vadd.f32 0.0, %v6315
      %6317 = vmatmul.bf16.gmra.mxu0 %v6268
      %v6318 = vpop.f32.mrf.mxu0
      %v6319 = vadd.f32 0.0, %v6318
      %v6320 = vpop.f32.mrf.mxu0
      %v6321 = vadd.f32 0.0, %v6320
      %6322 = vdwg.mxu0
      %6323 = vmatpush.bf16.msra.mxu0 0
      %6324 = vmatpush.bf16.msra.mxu0 0
      %6325 = vmatpush.bf16.msra.mxu0 0
      %6326 = vmatpush.bf16.msra.mxu0 0
      %6327 = vmatpush.bf16.msra.mxu0 0
      %6328 = vmatpush.bf16.msra.mxu0 0
      %6329 = vmatpush.bf16.msra.mxu0 0
      %6330 = vmatpush.bf16.msra.mxu0 %v6274
      %6331 = vmatmul.bf16.gmra.mxu0 %v6259
      %v6332 = vpop.f32.mrf.mxu0
      %v6333 = vadd.f32 0.0, %v6332
      %v6334 = vpop.f32.mrf.mxu0
      %v6335 = vadd.f32 0.0, %v6334
      %6336 = vmatmul.bf16.gmra.mxu0 %v6262
      %v6337 = vpop.f32.mrf.mxu0
      %v6338 = vadd.f32 0.0, %v6337
      %v6339 = vpop.f32.mrf.mxu0
      %v6340 = vadd.f32 0.0, %v6339
      %6341 = vmatmul.bf16.gmra.mxu0 %v6265
      %v6342 = vpop.f32.mrf.mxu0
      %v6343 = vadd.f32 0.0, %v6342
      %v6344 = vpop.f32.mrf.mxu0
      %v6345 = vadd.f32 0.0, %v6344
      %6346 = vmatmul.bf16.gmra.mxu0 %v6268
      %v6347 = vpop.f32.mrf.mxu0
      %v6348 = vadd.f32 0.0, %v6347
      %v6349 = vpop.f32.mrf.mxu0
      %v6350 = vadd.f32 0.0, %v6349
      %6351 = vdwg.mxu0
      %6352 = vmatpush.bf16.msra.mxu0 0
      %6353 = vmatpush.bf16.msra.mxu0 0
      %6354 = vmatpush.bf16.msra.mxu0 0
      %6355 = vmatpush.bf16.msra.mxu0 0
      %6356 = vmatpush.bf16.msra.mxu0 0
      %6357 = vmatpush.bf16.msra.mxu0 0
      %6358 = vmatpush.bf16.msra.mxu0 0
      %6359 = vmatpush.bf16.msra.mxu0 %v6277
      %6360 = vmatmul.bf16.gmra.mxu0 %v6259
      %v6361 = vpop.f32.mrf.mxu0
      %v6362 = vadd.f32 0.0, %v6361
      %v6363 = vpop.f32.mrf.mxu0
      %v6364 = vadd.f32 0.0, %v6363
      %6365 = vmatmul.bf16.gmra.mxu0 %v6262
      %v6366 = vpop.f32.mrf.mxu0
      %v6367 = vadd.f32 0.0, %v6366
      %v6368 = vpop.f32.mrf.mxu0
      %v6369 = vadd.f32 0.0, %v6368
      %6370 = vmatmul.bf16.gmra.mxu0 %v6265
      %v6371 = vpop.f32.mrf.mxu0
      %v6372 = vadd.f32 0.0, %v6371
      %v6373 = vpop.f32.mrf.mxu0
      %v6374 = vadd.f32 0.0, %v6373
      %6375 = vmatmul.bf16.gmra.mxu0 %v6268
      %v6376 = vpop.f32.mrf.mxu0
      %v6377 = vadd.f32 0.0, %v6376
      %v6378 = vpop.f32.mrf.mxu0
      %v6379 = vadd.f32 0.0, %v6378
      %6380 = vdwg.mxu0
      %6381 = vmatpush.bf16.msra.mxu0 0
      %6382 = vmatpush.bf16.msra.mxu0 0
      %6383 = vmatpush.bf16.msra.mxu0 0
      %6384 = vmatpush.bf16.msra.mxu0 0
      %6385 = vmatpush.bf16.msra.mxu0 0
      %6386 = vmatpush.bf16.msra.mxu0 0
      %6387 = vmatpush.bf16.msra.mxu0 0
      %6388 = vmatpush.bf16.msra.mxu0 %v6280
      %6389 = vmatmul.bf16.gmra.mxu0 %v6259
      %v6390 = vpop.f32.mrf.mxu0
      %v6391 = vadd.f32 0.0, %v6390
      %v6392 = vpop.f32.mrf.mxu0
      %v6393 = vadd.f32 0.0, %v6392
      %6394 = vmatmul.bf16.gmra.mxu0 %v6262
      %v6395 = vpop.f32.mrf.mxu0
      %v6396 = vadd.f32 0.0, %v6395
      %v6397 = vpop.f32.mrf.mxu0
      %v6398 = vadd.f32 0.0, %v6397
      %6399 = vmatmul.bf16.gmra.mxu0 %v6265
      %v6400 = vpop.f32.mrf.mxu0
      %v6401 = vadd.f32 0.0, %v6400
      %v6402 = vpop.f32.mrf.mxu0
      %v6403 = vadd.f32 0.0, %v6402
      %6404 = vmatmul.bf16.gmra.mxu0 %v6268
      %v6405 = vpop.f32.mrf.mxu0
      %v6406 = vadd.f32 0.0, %v6405
      %v6407 = vpop.f32.mrf.mxu0
      %v6408 = vadd.f32 0.0, %v6407
      %6409 = vdwg.mxu0
      %6410 = vmatpush.bf16.msra.mxu0 0
      %6411 = vmatpush.bf16.msra.mxu0 0
      %6412 = vmatpush.bf16.msra.mxu0 0
      %6413 = vmatpush.bf16.msra.mxu0 0
      %6414 = vmatpush.bf16.msra.mxu0 0
      %6415 = vmatpush.bf16.msra.mxu0 0
      %6416 = vmatpush.bf16.msra.mxu0 0
      %6417 = vmatpush.bf16.msra.mxu0 %v6283
      %6418 = vmatmul.bf16.gmra.mxu0 %v6259
      %v6419 = vpop.f32.mrf.mxu0
      %v6420 = vadd.f32 0.0, %v6419
      %v6421 = vpop.f32.mrf.mxu0
      %v6422 = vadd.f32 0.0, %v6421
      %6423 = vmatmul.bf16.gmra.mxu0 %v6262
      %v6424 = vpop.f32.mrf.mxu0
      %v6425 = vadd.f32 0.0, %v6424
      %v6426 = vpop.f32.mrf.mxu0
      %v6427 = vadd.f32 0.0, %v6426
      %6428 = vmatmul.bf16.gmra.mxu0 %v6265
      %v6429 = vpop.f32.mrf.mxu0
      %v6430 = vadd.f32 0.0, %v6429
      %v6431 = vpop.f32.mrf.mxu0
      %v6432 = vadd.f32 0.0, %v6431
      %6433 = vmatmul.bf16.gmra.mxu0 %v6268
      %v6434 = vpop.f32.mrf.mxu0
      %v6435 = vadd.f32 0.0, %v6434
      %v6436 = vpop.f32.mrf.mxu0
      %v6437 = vadd.f32 0.0, %v6436
      %6438 = vdwg.mxu0
      %6439 = vmatpush.bf16.msra.mxu0 0
      %6440 = vmatpush.bf16.msra.mxu0 0
      %6441 = vmatpush.bf16.msra.mxu0 0
      %6442 = vmatpush.bf16.msra.mxu0 0
      %6443 = vmatpush.bf16.msra.mxu0 0
      %6444 = vmatpush.bf16.msra.mxu0 0
      %6445 = vmatpush.bf16.msra.mxu0 0
      %6446 = vmatpush.bf16.msra.mxu0 %v6286
      %6447 = vmatmul.bf16.gmra.mxu0 %v6259
      %v6448 = vpop.f32.mrf.mxu0
      %v6449 = vadd.f32 0.0, %v6448
      %v6450 = vpop.f32.mrf.mxu0
      %v6451 = vadd.f32 0.0, %v6450
      %6452 = vmatmul.bf16.gmra.mxu0 %v6262
      %v6453 = vpop.f32.mrf.mxu0
      %v6454 = vadd.f32 0.0, %v6453
      %v6455 = vpop.f32.mrf.mxu0
      %v6456 = vadd.f32 0.0, %v6455
      %6457 = vmatmul.bf16.gmra.mxu0 %v6265
      %v6458 = vpop.f32.mrf.mxu0
      %v6459 = vadd.f32 0.0, %v6458
      %v6460 = vpop.f32.mrf.mxu0
      %v6461 = vadd.f32 0.0, %v6460
      %6462 = vmatmul.bf16.gmra.mxu0 %v6268
      %v6463 = vpop.f32.mrf.mxu0
      %v6464 = vadd.f32 0.0, %v6463
      %v6465 = vpop.f32.mrf.mxu0
      %v6466 = vadd.f32 0.0, %v6465
      %6467 = vdwg.mxu0
      %6468 = vmatpush.bf16.msra.mxu0 0
      %6469 = vmatpush.bf16.msra.mxu0 0
      %6470 = vmatpush.bf16.msra.mxu0 0
      %6471 = vmatpush.bf16.msra.mxu0 0
      %6472 = vmatpush.bf16.msra.mxu0 0
      %6473 = vmatpush.bf16.msra.mxu0 0
      %6474 = vmatpush.bf16.msra.mxu0 0
      %6475 = vmatpush.bf16.msra.mxu0 %v6289
      %6476 = vmatmul.bf16.gmra.mxu0 %v6259
      %v6477 = vpop.f32.mrf.mxu0
      %v6478 = vadd.f32 0.0, %v6477
      %v6479 = vpop.f32.mrf.mxu0
      %v6480 = vadd.f32 0.0, %v6479
      %6481 = vmatmul.bf16.gmra.mxu0 %v6262
      %v6482 = vpop.f32.mrf.mxu0
      %v6483 = vadd.f32 0.0, %v6482
      %v6484 = vpop.f32.mrf.mxu0
      %v6485 = vadd.f32 0.0, %v6484
      %6486 = vmatmul.bf16.gmra.mxu0 %v6265
      %v6487 = vpop.f32.mrf.mxu0
      %v6488 = vadd.f32 0.0, %v6487
      %v6489 = vpop.f32.mrf.mxu0
      %v6490 = vadd.f32 0.0, %v6489
      %6491 = vmatmul.bf16.gmra.mxu0 %v6268
      %v6492 = vpop.f32.mrf.mxu0
      %v6493 = vadd.f32 0.0, %v6492
      %v6494 = vpop.f32.mrf.mxu0
      %v6495 = vadd.f32 0.0, %v6494
      %6496 = vdwg.mxu0
      %6497 = vmatpush.bf16.msra.mxu0 0
      %6498 = vmatpush.bf16.msra.mxu0 0
      %6499 = vmatpush.bf16.msra.mxu0 0
      %6500 = vmatpush.bf16.msra.mxu0 0
      %6501 = vmatpush.bf16.msra.mxu0 0
      %6502 = vmatpush.bf16.msra.mxu0 0
      %6503 = vmatpush.bf16.msra.mxu0 0
      %6504 = vmatpush.bf16.msra.mxu0 %v6292
      %6505 = vmatmul.bf16.gmra.mxu0 %v6259
      %v6506 = vpop.f32.mrf.mxu0
      %v6507 = vadd.f32 0.0, %v6506
      %v6508 = vpop.f32.mrf.mxu0
      %v6509 = vadd.f32 0.0, %v6508
      %6510 = vmatmul.bf16.gmra.mxu0 %v6262
      %v6511 = vpop.f32.mrf.mxu0
      %v6512 = vadd.f32 0.0, %v6511
      %v6513 = vpop.f32.mrf.mxu0
      %v6514 = vadd.f32 0.0, %v6513
      %6515 = vmatmul.bf16.gmra.mxu0 %v6265
      %v6516 = vpop.f32.mrf.mxu0
      %v6517 = vadd.f32 0.0, %v6516
      %v6518 = vpop.f32.mrf.mxu0
      %v6519 = vadd.f32 0.0, %v6518
      %6520 = vmatmul.bf16.gmra.mxu0 %v6268
      %v6521 = vpop.f32.mrf.mxu0
      %v6522 = vadd.f32 0.0, %v6521
      %v6523 = vpop.f32.mrf.mxu0
      %v6524 = vadd.f32 0.0, %v6523
      %6525 = vdwg.mxu0
      %v6526 = vadd.f32 %v6103, %v6304
      %v6527 = vadd.f32 %v6104, %v6333
      %v6528 = vadd.f32 %v6105, %v6362
      %v6529 = vadd.f32 %v6106, %v6391
      %v6530 = vadd.f32 %v6107, %v6420
      %v6531 = vadd.f32 %v6108, %v6449
      %v6532 = vadd.f32 %v6109, %v6478
      %v6533 = vadd.f32 %v6110, %v6507
      %v6534 = vadd.f32 %v6111, %v6306
      %v6535 = vadd.f32 %v6112, %v6335
      %v6536 = vadd.f32 %v6113, %v6364
      %v6537 = vadd.f32 %v6114, %v6393
      %v6538 = vadd.f32 %v6115, %v6422
      %v6539 = vadd.f32 %v6116, %v6451
      %v6540 = vadd.f32 %v6117, %v6480
      %v6541 = vadd.f32 %v6118, %v6509
      %v6542 = vadd.f32 %v6119, %v6309
      %v6543 = vadd.f32 %v6120, %v6338
      %v6544 = vadd.f32 %v6121, %v6367
      %v6545 = vadd.f32 %v6122, %v6396
      %v6546 = vadd.f32 %v6123, %v6425
      %v6547 = vadd.f32 %v6124, %v6454
      %v6548 = vadd.f32 %v6125, %v6483
      %v6549 = vadd.f32 %v6126, %v6512
      %v6550 = vadd.f32 %v6127, %v6311
      %v6551 = vadd.f32 %v6128, %v6340
      %v6552 = vadd.f32 %v6129, %v6369
      %v6553 = vadd.f32 %v6130, %v6398
      %v6554 = vadd.f32 %v6131, %v6427
      %v6555 = vadd.f32 %v6132, %v6456
      %v6556 = vadd.f32 %v6133, %v6485
      %v6557 = vadd.f32 %v6134, %v6514
      %v6558 = vadd.f32 %v6135, %v6314
      %v6559 = vadd.f32 %v6136, %v6343
      %v6560 = vadd.f32 %v6137, %v6372
      %v6561 = vadd.f32 %v6138, %v6401
      %v6562 = vadd.f32 %v6139, %v6430
      %v6563 = vadd.f32 %v6140, %v6459
      %v6564 = vadd.f32 %v6141, %v6488
      %v6565 = vadd.f32 %v6142, %v6517
      %v6566 = vadd.f32 %v6143, %v6316
      %v6567 = vadd.f32 %v6144, %v6345
      %v6568 = vadd.f32 %v6145, %v6374
      %v6569 = vadd.f32 %v6146, %v6403
      %v6570 = vadd.f32 %v6147, %v6432
      %v6571 = vadd.f32 %v6148, %v6461
      %v6572 = vadd.f32 %v6149, %v6490
      %v6573 = vadd.f32 %v6150, %v6519
      %v6574 = vadd.f32 %v6151, %v6319
      %v6575 = vadd.f32 %v6152, %v6348
      %v6576 = vadd.f32 %v6153, %v6377
      %v6577 = vadd.f32 %v6154, %v6406
      %v6578 = vadd.f32 %v6155, %v6435
      %v6579 = vadd.f32 %v6156, %v6464
      %v6580 = vadd.f32 %v6157, %v6493
      %v6581 = vadd.f32 %v6158, %v6522
      %v6582 = vadd.f32 %v6159, %v6321
      %v6583 = vadd.f32 %v6160, %v6350
      %v6584 = vadd.f32 %v6161, %v6379
      %v6585 = vadd.f32 %v6162, %v6408
      %v6586 = vadd.f32 %v6163, %v6437
      %v6587 = vadd.f32 %v6164, %v6466
      %v6588 = vadd.f32 %v6165, %v6495
      %v6589 = vadd.f32 %v6166, %v6524
      %v6590 = vmul.f32 %v6167, %v1902
      %v6591 = vmul.f32 %v6168, %v1918
      %v6592 = vmul.f32 %v6169, %v1919
      %v6593 = vmul.f32 %v6170, %v1920
      %v6594 = vmul.f32 %v6171, %v1921
      %v6595 = vmul.f32 %v6172, %v1922
      %v6596 = vmul.f32 %v6173, %v1923
      %v6597 = vmul.f32 %v6174, %v1924
      %v6598 = vmul.f32 %v6175, %v1916
      %s6599 = scalar_lea.vmem %s8, 192
      %v6600 = vld [vmem:[%s6599] sm:$0xf]
      %v6601 = vld [vmem:[%s6599 + $0x4] sm:$0xf]
      %v6602 = vld [vmem:[%s6599 + $0x8] sm:$0xf]
      %v6603 = vld [vmem:[%s6599 + $0xc] sm:$0xf]
      %v6604 = vld [vmem:[%s6599 + $0x10] sm:$0xf]
      %v6605 = vld [vmem:[%s6599 + $0x14] sm:$0xf]
      %v6606 = vld [vmem:[%s6599 + $0x18] sm:$0xf]
      %v6607 = vld [vmem:[%s6599 + $0x1c] sm:$0xf]
      %v6608 = vpack.c.bf16 %v6590, %v6590
      %v6609 = vpack.c.bf16 %v6591, %v6591
      %v6610 = vpack.c.bf16 %v6592, %v6592
      %v6611 = vpack.c.bf16 %v6593, %v6593
      %v6612 = vpack.c.bf16 %v6594, %v6594
      %v6613 = vpack.c.bf16 %v6595, %v6595
      %v6614 = vpack.c.bf16 %v6596, %v6596
      %v6615 = vpack.c.bf16 %v6597, %v6597
      %v6616 = vpack.c.bf16 %v6598, %v6598
      %v6625 = vunpack.c.l.b16 %v6600
      %v6626 = vunpack.c.l.b16 %v6601
      %v6627 = vunpack.c.l.b16 %v6602
      %v6628 = vunpack.c.l.b16 %v6603
      %v6629 = vunpack.c.l.b16 %v6604
      %v6630 = vunpack.c.l.b16 %v6605
      %v6631 = vunpack.c.l.b16 %v6606
      %v6632 = vunpack.c.l.b16 %v6607
      %v6633 = vpack.c.b16 %v6626, %v6625
      %v6634 = vpack.c.b16 %v6628, %v6627
      %v6635 = vpack.c.b16 %v6630, %v6629
      %v6636 = vpack.c.b16 %v6632, %v6631
      %6646 = vrot.lane.b32.xlu0 %v6608, 97
      %v6647 = vpop.permute.xlu0 %6646
      %6648 = vrot.lane.b32.xlu0 %v6609, 97
      %v6649 = vpop.permute.xlu0 %6648
      %6650 = vrot.lane.b32.xlu0 %v6610, 97
      %v6651 = vpop.permute.xlu0 %6650
      %6652 = vrot.lane.b32.xlu0 %v6611, 97
      %v6653 = vpop.permute.xlu0 %6652
      %6654 = vrot.lane.b32.xlu0 %v6612, 97
      %v6655 = vpop.permute.xlu0 %6654
      %6656 = vrot.lane.b32.xlu0 %v6613, 97
      %v6657 = vpop.permute.xlu0 %6656
      %6658 = vrot.lane.b32.xlu0 %v6614, 97
      %v6659 = vpop.permute.xlu0 %6658
      %6660 = vrot.lane.b32.xlu0 %v6615, 97
      %v6661 = vpop.permute.xlu0 %6660
      %6662 = vrot.lane.b32.xlu0 %v6616, 97
      %v6663 = vpop.permute.xlu0 %6662
      %v6664 = vsel %vm1981, %v6647, %v6649
      %v6665 = vsel %vm1981, %v6649, %v6651
      %v6666 = vsel %vm1981, %v6651, %v6653
      %v6667 = vsel %vm1981, %v6653, %v6655
      %v6668 = vsel %vm1981, %v6655, %v6657
      %v6669 = vsel %vm1981, %v6657, %v6659
      %v6670 = vsel %vm1981, %v6659, %v6661
      %v6671 = vsel %vm1981, %v6661, %v6663
      %v6673 = vsel %vm758, %v6633, 0
      %v6676 = vsel %vm758, %v6634, 0
      %v6679 = vsel %vm758, %v6635, 0
      %v6682 = vsel %vm758, %v6636, 0
      %v6685 = vsel %vm762, %v6664, 0
      %v6688 = vsel %vm762, %v6665, 0
      %v6691 = vsel %vm762, %v6666, 0
      %v6694 = vsel %vm762, %v6667, 0
      %v6697 = vsel %vm762, %v6668, 0
      %v6700 = vsel %vm762, %v6669, 0
      %v6703 = vsel %vm762, %v6670, 0
      %v6706 = vsel %vm762, %v6671, 0
      %6708 = vmatpush.bf16.msra.mxu0 0
      %6709 = vmatpush.bf16.msra.mxu0 0
      %6710 = vmatpush.bf16.msra.mxu0 0
      %6711 = vmatpush.bf16.msra.mxu0 0
      %6712 = vmatpush.bf16.msra.mxu0 0
      %6713 = vmatpush.bf16.msra.mxu0 0
      %6714 = vmatpush.bf16.msra.mxu0 0
      %6715 = vmatpush.bf16.msra.mxu0 %v6685
      %6716 = vmatmul.bf16.gmra.mxu0 %v6673
      %v6717 = vpop.f32.mrf.mxu0
      %v6718 = vadd.f32 0.0, %v6717
      %v6719 = vpop.f32.mrf.mxu0
      %v6720 = vadd.f32 0.0, %v6719
      %6721 = vmatmul.bf16.gmra.mxu0 %v6676
      %v6722 = vpop.f32.mrf.mxu0
      %v6723 = vadd.f32 0.0, %v6722
      %v6724 = vpop.f32.mrf.mxu0
      %v6725 = vadd.f32 0.0, %v6724
      %6726 = vmatmul.bf16.gmra.mxu0 %v6679
      %v6727 = vpop.f32.mrf.mxu0
      %v6728 = vadd.f32 0.0, %v6727
      %v6729 = vpop.f32.mrf.mxu0
      %v6730 = vadd.f32 0.0, %v6729
      %6731 = vmatmul.bf16.gmra.mxu0 %v6682
      %v6732 = vpop.f32.mrf.mxu0
      %v6733 = vadd.f32 0.0, %v6732
      %v6734 = vpop.f32.mrf.mxu0
      %v6735 = vadd.f32 0.0, %v6734
      %6736 = vdwg.mxu0
      %6737 = vmatpush.bf16.msra.mxu0 0
      %6738 = vmatpush.bf16.msra.mxu0 0
      %6739 = vmatpush.bf16.msra.mxu0 0
      %6740 = vmatpush.bf16.msra.mxu0 0
      %6741 = vmatpush.bf16.msra.mxu0 0
      %6742 = vmatpush.bf16.msra.mxu0 0
      %6743 = vmatpush.bf16.msra.mxu0 0
      %6744 = vmatpush.bf16.msra.mxu0 %v6688
      %6745 = vmatmul.bf16.gmra.mxu0 %v6673
      %v6746 = vpop.f32.mrf.mxu0
      %v6747 = vadd.f32 0.0, %v6746
      %v6748 = vpop.f32.mrf.mxu0
      %v6749 = vadd.f32 0.0, %v6748
      %6750 = vmatmul.bf16.gmra.mxu0 %v6676
      %v6751 = vpop.f32.mrf.mxu0
      %v6752 = vadd.f32 0.0, %v6751
      %v6753 = vpop.f32.mrf.mxu0
      %v6754 = vadd.f32 0.0, %v6753
      %6755 = vmatmul.bf16.gmra.mxu0 %v6679
      %v6756 = vpop.f32.mrf.mxu0
      %v6757 = vadd.f32 0.0, %v6756
      %v6758 = vpop.f32.mrf.mxu0
      %v6759 = vadd.f32 0.0, %v6758
      %6760 = vmatmul.bf16.gmra.mxu0 %v6682
      %v6761 = vpop.f32.mrf.mxu0
      %v6762 = vadd.f32 0.0, %v6761
      %v6763 = vpop.f32.mrf.mxu0
      %v6764 = vadd.f32 0.0, %v6763
      %6765 = vdwg.mxu0
      %6766 = vmatpush.bf16.msra.mxu0 0
      %6767 = vmatpush.bf16.msra.mxu0 0
      %6768 = vmatpush.bf16.msra.mxu0 0
      %6769 = vmatpush.bf16.msra.mxu0 0
      %6770 = vmatpush.bf16.msra.mxu0 0
      %6771 = vmatpush.bf16.msra.mxu0 0
      %6772 = vmatpush.bf16.msra.mxu0 0
      %6773 = vmatpush.bf16.msra.mxu0 %v6691
      %6774 = vmatmul.bf16.gmra.mxu0 %v6673
      %v6775 = vpop.f32.mrf.mxu0
      %v6776 = vadd.f32 0.0, %v6775
      %v6777 = vpop.f32.mrf.mxu0
      %v6778 = vadd.f32 0.0, %v6777
      %6779 = vmatmul.bf16.gmra.mxu0 %v6676
      %v6780 = vpop.f32.mrf.mxu0
      %v6781 = vadd.f32 0.0, %v6780
      %v6782 = vpop.f32.mrf.mxu0
      %v6783 = vadd.f32 0.0, %v6782
      %6784 = vmatmul.bf16.gmra.mxu0 %v6679
      %v6785 = vpop.f32.mrf.mxu0
      %v6786 = vadd.f32 0.0, %v6785
      %v6787 = vpop.f32.mrf.mxu0
      %v6788 = vadd.f32 0.0, %v6787
      %6789 = vmatmul.bf16.gmra.mxu0 %v6682
      %v6790 = vpop.f32.mrf.mxu0
      %v6791 = vadd.f32 0.0, %v6790
      %v6792 = vpop.f32.mrf.mxu0
      %v6793 = vadd.f32 0.0, %v6792
      %6794 = vdwg.mxu0
      %6795 = vmatpush.bf16.msra.mxu0 0
      %6796 = vmatpush.bf16.msra.mxu0 0
      %6797 = vmatpush.bf16.msra.mxu0 0
      %6798 = vmatpush.bf16.msra.mxu0 0
      %6799 = vmatpush.bf16.msra.mxu0 0
      %6800 = vmatpush.bf16.msra.mxu0 0
      %6801 = vmatpush.bf16.msra.mxu0 0
      %6802 = vmatpush.bf16.msra.mxu0 %v6694
      %6803 = vmatmul.bf16.gmra.mxu0 %v6673
      %v6804 = vpop.f32.mrf.mxu0
      %v6805 = vadd.f32 0.0, %v6804
      %v6806 = vpop.f32.mrf.mxu0
      %v6807 = vadd.f32 0.0, %v6806
      %6808 = vmatmul.bf16.gmra.mxu0 %v6676
      %v6809 = vpop.f32.mrf.mxu0
      %v6810 = vadd.f32 0.0, %v6809
      %v6811 = vpop.f32.mrf.mxu0
      %v6812 = vadd.f32 0.0, %v6811
      %6813 = vmatmul.bf16.gmra.mxu0 %v6679
      %v6814 = vpop.f32.mrf.mxu0
      %v6815 = vadd.f32 0.0, %v6814
      %v6816 = vpop.f32.mrf.mxu0
      %v6817 = vadd.f32 0.0, %v6816
      %6818 = vmatmul.bf16.gmra.mxu0 %v6682
      %v6819 = vpop.f32.mrf.mxu0
      %v6820 = vadd.f32 0.0, %v6819
      %v6821 = vpop.f32.mrf.mxu0
      %v6822 = vadd.f32 0.0, %v6821
      %6823 = vdwg.mxu0
      %6824 = vmatpush.bf16.msra.mxu0 0
      %6825 = vmatpush.bf16.msra.mxu0 0
      %6826 = vmatpush.bf16.msra.mxu0 0
      %6827 = vmatpush.bf16.msra.mxu0 0
      %6828 = vmatpush.bf16.msra.mxu0 0
      %6829 = vmatpush.bf16.msra.mxu0 0
      %6830 = vmatpush.bf16.msra.mxu0 0
      %6831 = vmatpush.bf16.msra.mxu0 %v6697
      %6832 = vmatmul.bf16.gmra.mxu0 %v6673
      %v6833 = vpop.f32.mrf.mxu0
      %v6834 = vadd.f32 0.0, %v6833
      %v6835 = vpop.f32.mrf.mxu0
      %v6836 = vadd.f32 0.0, %v6835
      %6837 = vmatmul.bf16.gmra.mxu0 %v6676
      %v6838 = vpop.f32.mrf.mxu0
      %v6839 = vadd.f32 0.0, %v6838
      %v6840 = vpop.f32.mrf.mxu0
      %v6841 = vadd.f32 0.0, %v6840
      %6842 = vmatmul.bf16.gmra.mxu0 %v6679
      %v6843 = vpop.f32.mrf.mxu0
      %v6844 = vadd.f32 0.0, %v6843
      %v6845 = vpop.f32.mrf.mxu0
      %v6846 = vadd.f32 0.0, %v6845
      %6847 = vmatmul.bf16.gmra.mxu0 %v6682
      %v6848 = vpop.f32.mrf.mxu0
      %v6849 = vadd.f32 0.0, %v6848
      %v6850 = vpop.f32.mrf.mxu0
      %v6851 = vadd.f32 0.0, %v6850
      %6852 = vdwg.mxu0
      %6853 = vmatpush.bf16.msra.mxu0 0
      %6854 = vmatpush.bf16.msra.mxu0 0
      %6855 = vmatpush.bf16.msra.mxu0 0
      %6856 = vmatpush.bf16.msra.mxu0 0
      %6857 = vmatpush.bf16.msra.mxu0 0
      %6858 = vmatpush.bf16.msra.mxu0 0
      %6859 = vmatpush.bf16.msra.mxu0 0
      %6860 = vmatpush.bf16.msra.mxu0 %v6700
      %6861 = vmatmul.bf16.gmra.mxu0 %v6673
      %v6862 = vpop.f32.mrf.mxu0
      %v6863 = vadd.f32 0.0, %v6862
      %v6864 = vpop.f32.mrf.mxu0
      %v6865 = vadd.f32 0.0, %v6864
      %6866 = vmatmul.bf16.gmra.mxu0 %v6676
      %v6867 = vpop.f32.mrf.mxu0
      %v6868 = vadd.f32 0.0, %v6867
      %v6869 = vpop.f32.mrf.mxu0
      %v6870 = vadd.f32 0.0, %v6869
      %6871 = vmatmul.bf16.gmra.mxu0 %v6679
      %v6872 = vpop.f32.mrf.mxu0
      %v6873 = vadd.f32 0.0, %v6872
      %v6874 = vpop.f32.mrf.mxu0
      %v6875 = vadd.f32 0.0, %v6874
      %6876 = vmatmul.bf16.gmra.mxu0 %v6682
      %v6877 = vpop.f32.mrf.mxu0
      %v6878 = vadd.f32 0.0, %v6877
      %v6879 = vpop.f32.mrf.mxu0
      %v6880 = vadd.f32 0.0, %v6879
      %6881 = vdwg.mxu0
      %6882 = vmatpush.bf16.msra.mxu0 0
      %6883 = vmatpush.bf16.msra.mxu0 0
      %6884 = vmatpush.bf16.msra.mxu0 0
      %6885 = vmatpush.bf16.msra.mxu0 0
      %6886 = vmatpush.bf16.msra.mxu0 0
      %6887 = vmatpush.bf16.msra.mxu0 0
      %6888 = vmatpush.bf16.msra.mxu0 0
      %6889 = vmatpush.bf16.msra.mxu0 %v6703
      %6890 = vmatmul.bf16.gmra.mxu0 %v6673
      %v6891 = vpop.f32.mrf.mxu0
      %v6892 = vadd.f32 0.0, %v6891
      %v6893 = vpop.f32.mrf.mxu0
      %v6894 = vadd.f32 0.0, %v6893
      %6895 = vmatmul.bf16.gmra.mxu0 %v6676
      %v6896 = vpop.f32.mrf.mxu0
      %v6897 = vadd.f32 0.0, %v6896
      %v6898 = vpop.f32.mrf.mxu0
      %v6899 = vadd.f32 0.0, %v6898
      %6900 = vmatmul.bf16.gmra.mxu0 %v6679
      %v6901 = vpop.f32.mrf.mxu0
      %v6902 = vadd.f32 0.0, %v6901
      %v6903 = vpop.f32.mrf.mxu0
      %v6904 = vadd.f32 0.0, %v6903
      %6905 = vmatmul.bf16.gmra.mxu0 %v6682
      %v6906 = vpop.f32.mrf.mxu0
      %v6907 = vadd.f32 0.0, %v6906
      %v6908 = vpop.f32.mrf.mxu0
      %v6909 = vadd.f32 0.0, %v6908
      %6910 = vdwg.mxu0
      %6911 = vmatpush.bf16.msra.mxu0 0
      %6912 = vmatpush.bf16.msra.mxu0 0
      %6913 = vmatpush.bf16.msra.mxu0 0
      %6914 = vmatpush.bf16.msra.mxu0 0
      %6915 = vmatpush.bf16.msra.mxu0 0
      %6916 = vmatpush.bf16.msra.mxu0 0
      %6917 = vmatpush.bf16.msra.mxu0 0
      %6918 = vmatpush.bf16.msra.mxu0 %v6706
      %6919 = vmatmul.bf16.gmra.mxu0 %v6673
      %v6920 = vpop.f32.mrf.mxu0
      %v6921 = vadd.f32 0.0, %v6920
      %v6922 = vpop.f32.mrf.mxu0
      %v6923 = vadd.f32 0.0, %v6922
      %6924 = vmatmul.bf16.gmra.mxu0 %v6676
      %v6925 = vpop.f32.mrf.mxu0
      %v6926 = vadd.f32 0.0, %v6925
      %v6927 = vpop.f32.mrf.mxu0
      %v6928 = vadd.f32 0.0, %v6927
      %6929 = vmatmul.bf16.gmra.mxu0 %v6679
      %v6930 = vpop.f32.mrf.mxu0
      %v6931 = vadd.f32 0.0, %v6930
      %v6932 = vpop.f32.mrf.mxu0
      %v6933 = vadd.f32 0.0, %v6932
      %6934 = vmatmul.bf16.gmra.mxu0 %v6682
      %v6935 = vpop.f32.mrf.mxu0
      %v6936 = vadd.f32 0.0, %v6935
      %v6937 = vpop.f32.mrf.mxu0
      %v6938 = vadd.f32 0.0, %v6937
      %6939 = vdwg.mxu0
      %v6940 = vadd.f32 %v6526, %v6718
      %v6941 = vadd.f32 %v6527, %v6747
      %v6942 = vadd.f32 %v6528, %v6776
      %v6943 = vadd.f32 %v6529, %v6805
      %v6944 = vadd.f32 %v6530, %v6834
      %v6945 = vadd.f32 %v6531, %v6863
      %v6946 = vadd.f32 %v6532, %v6892
      %v6947 = vadd.f32 %v6533, %v6921
      %v6948 = vadd.f32 %v6534, %v6720
      %v6949 = vadd.f32 %v6535, %v6749
      %v6950 = vadd.f32 %v6536, %v6778
      %v6951 = vadd.f32 %v6537, %v6807
      %v6952 = vadd.f32 %v6538, %v6836
      %v6953 = vadd.f32 %v6539, %v6865
      %v6954 = vadd.f32 %v6540, %v6894
      %v6955 = vadd.f32 %v6541, %v6923
      %v6956 = vadd.f32 %v6542, %v6723
      %v6957 = vadd.f32 %v6543, %v6752
      %v6958 = vadd.f32 %v6544, %v6781
      %v6959 = vadd.f32 %v6545, %v6810
      %v6960 = vadd.f32 %v6546, %v6839
      %v6961 = vadd.f32 %v6547, %v6868
      %v6962 = vadd.f32 %v6548, %v6897
      %v6963 = vadd.f32 %v6549, %v6926
      %v6964 = vadd.f32 %v6550, %v6725
      %v6965 = vadd.f32 %v6551, %v6754
      %v6966 = vadd.f32 %v6552, %v6783
      %v6967 = vadd.f32 %v6553, %v6812
      %v6968 = vadd.f32 %v6554, %v6841
      %v6969 = vadd.f32 %v6555, %v6870
      %v6970 = vadd.f32 %v6556, %v6899
      %v6971 = vadd.f32 %v6557, %v6928
      %v6972 = vadd.f32 %v6558, %v6728
      %v6973 = vadd.f32 %v6559, %v6757
      %v6974 = vadd.f32 %v6560, %v6786
      %v6975 = vadd.f32 %v6561, %v6815
      %v6976 = vadd.f32 %v6562, %v6844
      %v6977 = vadd.f32 %v6563, %v6873
      %v6978 = vadd.f32 %v6564, %v6902
      %v6979 = vadd.f32 %v6565, %v6931
      %v6980 = vadd.f32 %v6566, %v6730
      %v6981 = vadd.f32 %v6567, %v6759
      %v6982 = vadd.f32 %v6568, %v6788
      %v6983 = vadd.f32 %v6569, %v6817
      %v6984 = vadd.f32 %v6570, %v6846
      %v6985 = vadd.f32 %v6571, %v6875
      %v6986 = vadd.f32 %v6572, %v6904
      %v6987 = vadd.f32 %v6573, %v6933
      %v6988 = vadd.f32 %v6574, %v6733
      %v6989 = vadd.f32 %v6575, %v6762
      %v6990 = vadd.f32 %v6576, %v6791
      %v6991 = vadd.f32 %v6577, %v6820
      %v6992 = vadd.f32 %v6578, %v6849
      %v6993 = vadd.f32 %v6579, %v6878
      %v6994 = vadd.f32 %v6580, %v6907
      %v6995 = vadd.f32 %v6581, %v6936
      %v6996 = vadd.f32 %v6582, %v6735
      %v6997 = vadd.f32 %v6583, %v6764
      %v6998 = vadd.f32 %v6584, %v6793
      %v6999 = vadd.f32 %v6585, %v6822
      %v7000 = vadd.f32 %v6586, %v6851
      %v7001 = vadd.f32 %v6587, %v6880
      %v7002 = vadd.f32 %v6588, %v6909
      %v7003 = vadd.f32 %v6589, %v6938
      %s7004 = scalar_lea.vmem %s8, 224
      %v7005 = vld [vmem:[%s7004] sm:$0xf]
      %v7006 = vld [vmem:[%s7004 + $0x4] sm:$0xf]
      %v7007 = vld [vmem:[%s7004 + $0x8] sm:$0xf]
      %v7008 = vld [vmem:[%s7004 + $0xc] sm:$0xf]
      %v7009 = vld [vmem:[%s7004 + $0x10] sm:$0xf]
      %v7010 = vld [vmem:[%s7004 + $0x14] sm:$0xf]
      %v7011 = vld [vmem:[%s7004 + $0x18] sm:$0xf]
      %v7012 = vld [vmem:[%s7004 + $0x1c] sm:$0xf]
      %v7013 = vpack.c.bf16 %v6167, %v6167
      %v7014 = vpack.c.bf16 %v6168, %v6168
      %v7015 = vpack.c.bf16 %v6169, %v6169
      %v7016 = vpack.c.bf16 %v6170, %v6170
      %v7017 = vpack.c.bf16 %v6171, %v6171
      %v7018 = vpack.c.bf16 %v6172, %v6172
      %v7019 = vpack.c.bf16 %v6173, %v6173
      %v7020 = vpack.c.bf16 %v6174, %v6174
      %v7021 = vpack.c.bf16 %v6175, %v6175
      %v7030 = vunpack.c.l.b16 %v7005
      %v7031 = vunpack.c.l.b16 %v7006
      %v7032 = vunpack.c.l.b16 %v7007
      %v7033 = vunpack.c.l.b16 %v7008
      %v7034 = vunpack.c.l.b16 %v7009
      %v7035 = vunpack.c.l.b16 %v7010
      %v7036 = vunpack.c.l.b16 %v7011
      %v7037 = vunpack.c.l.b16 %v7012
      %v7038 = vpack.c.b16 %v7031, %v7030
      %v7039 = vpack.c.b16 %v7033, %v7032
      %v7040 = vpack.c.b16 %v7035, %v7034
      %v7041 = vpack.c.b16 %v7037, %v7036
      %7051 = vrot.lane.b32.xlu0 %v7013, 96
      %v7052 = vpop.permute.xlu0 %7051
      %7053 = vrot.lane.b32.xlu0 %v7014, 96
      %v7054 = vpop.permute.xlu0 %7053
      %7055 = vrot.lane.b32.xlu0 %v7015, 96
      %v7056 = vpop.permute.xlu0 %7055
      %7057 = vrot.lane.b32.xlu0 %v7016, 96
      %v7058 = vpop.permute.xlu0 %7057
      %7059 = vrot.lane.b32.xlu0 %v7017, 96
      %v7060 = vpop.permute.xlu0 %7059
      %7061 = vrot.lane.b32.xlu0 %v7018, 96
      %v7062 = vpop.permute.xlu0 %7061
      %7063 = vrot.lane.b32.xlu0 %v7019, 96
      %v7064 = vpop.permute.xlu0 %7063
      %7065 = vrot.lane.b32.xlu0 %v7020, 96
      %v7066 = vpop.permute.xlu0 %7065
      %7067 = vrot.lane.b32.xlu0 %v7021, 96
      %v7068 = vpop.permute.xlu0 %7067
      %v7069 = vsel %vm2167, %v7052, %v7054
      %v7070 = vsel %vm2167, %v7054, %v7056
      %v7071 = vsel %vm2167, %v7056, %v7058
      %v7072 = vsel %vm2167, %v7058, %v7060
      %v7073 = vsel %vm2167, %v7060, %v7062
      %v7074 = vsel %vm2167, %v7062, %v7064
      %v7075 = vsel %vm2167, %v7064, %v7066
      %v7076 = vsel %vm2167, %v7066, %v7068
      %v7078 = vsel %vm758, %v7038, 0
      %v7081 = vsel %vm758, %v7039, 0
      %v7084 = vsel %vm758, %v7040, 0
      %v7087 = vsel %vm758, %v7041, 0
      %v7090 = vsel %vm762, %v7069, 0
      %v7093 = vsel %vm762, %v7070, 0
      %v7096 = vsel %vm762, %v7071, 0
      %v7099 = vsel %vm762, %v7072, 0
      %v7102 = vsel %vm762, %v7073, 0
      %v7105 = vsel %vm762, %v7074, 0
      %v7108 = vsel %vm762, %v7075, 0
      %v7111 = vsel %vm762, %v7076, 0
      %7113 = vmatpush.bf16.msra.mxu0 0
      %7114 = vmatpush.bf16.msra.mxu0 0
      %7115 = vmatpush.bf16.msra.mxu0 0
      %7116 = vmatpush.bf16.msra.mxu0 0
      %7117 = vmatpush.bf16.msra.mxu0 0
      %7118 = vmatpush.bf16.msra.mxu0 0
      %7119 = vmatpush.bf16.msra.mxu0 0
      %7120 = vmatpush.bf16.msra.mxu0 %v7090
      %7121 = vmatmul.bf16.gmra.mxu0 %v7078
      %v7122 = vpop.f32.mrf.mxu0
      %v7123 = vadd.f32 0.0, %v7122
      %v7124 = vpop.f32.mrf.mxu0
      %v7125 = vadd.f32 0.0, %v7124
      %7126 = vmatmul.bf16.gmra.mxu0 %v7081
      %v7127 = vpop.f32.mrf.mxu0
      %v7128 = vadd.f32 0.0, %v7127
      %v7129 = vpop.f32.mrf.mxu0
      %v7130 = vadd.f32 0.0, %v7129
      %7131 = vmatmul.bf16.gmra.mxu0 %v7084
      %v7132 = vpop.f32.mrf.mxu0
      %v7133 = vadd.f32 0.0, %v7132
      %v7134 = vpop.f32.mrf.mxu0
      %v7135 = vadd.f32 0.0, %v7134
      %7136 = vmatmul.bf16.gmra.mxu0 %v7087
      %v7137 = vpop.f32.mrf.mxu0
      %v7138 = vadd.f32 0.0, %v7137
      %v7139 = vpop.f32.mrf.mxu0
      %v7140 = vadd.f32 0.0, %v7139
      %7141 = vdwg.mxu0
      %7142 = vmatpush.bf16.msra.mxu0 0
      %7143 = vmatpush.bf16.msra.mxu0 0
      %7144 = vmatpush.bf16.msra.mxu0 0
      %7145 = vmatpush.bf16.msra.mxu0 0
      %7146 = vmatpush.bf16.msra.mxu0 0
      %7147 = vmatpush.bf16.msra.mxu0 0
      %7148 = vmatpush.bf16.msra.mxu0 0
      %7149 = vmatpush.bf16.msra.mxu0 %v7093
      %7150 = vmatmul.bf16.gmra.mxu0 %v7078
      %v7151 = vpop.f32.mrf.mxu0
      %v7152 = vadd.f32 0.0, %v7151
      %v7153 = vpop.f32.mrf.mxu0
      %v7154 = vadd.f32 0.0, %v7153
      %7155 = vmatmul.bf16.gmra.mxu0 %v7081
      %v7156 = vpop.f32.mrf.mxu0
      %v7157 = vadd.f32 0.0, %v7156
      %v7158 = vpop.f32.mrf.mxu0
      %v7159 = vadd.f32 0.0, %v7158
      %7160 = vmatmul.bf16.gmra.mxu0 %v7084
      %v7161 = vpop.f32.mrf.mxu0
      %v7162 = vadd.f32 0.0, %v7161
      %v7163 = vpop.f32.mrf.mxu0
      %v7164 = vadd.f32 0.0, %v7163
      %7165 = vmatmul.bf16.gmra.mxu0 %v7087
      %v7166 = vpop.f32.mrf.mxu0
      %v7167 = vadd.f32 0.0, %v7166
      %v7168 = vpop.f32.mrf.mxu0
      %v7169 = vadd.f32 0.0, %v7168
      %7170 = vdwg.mxu0
      %7171 = vmatpush.bf16.msra.mxu0 0
      %7172 = vmatpush.bf16.msra.mxu0 0
      %7173 = vmatpush.bf16.msra.mxu0 0
      %7174 = vmatpush.bf16.msra.mxu0 0
      %7175 = vmatpush.bf16.msra.mxu0 0
      %7176 = vmatpush.bf16.msra.mxu0 0
      %7177 = vmatpush.bf16.msra.mxu0 0
      %7178 = vmatpush.bf16.msra.mxu0 %v7096
      %7179 = vmatmul.bf16.gmra.mxu0 %v7078
      %v7180 = vpop.f32.mrf.mxu0
      %v7181 = vadd.f32 0.0, %v7180
      %v7182 = vpop.f32.mrf.mxu0
      %v7183 = vadd.f32 0.0, %v7182
      %7184 = vmatmul.bf16.gmra.mxu0 %v7081
      %v7185 = vpop.f32.mrf.mxu0
      %v7186 = vadd.f32 0.0, %v7185
      %v7187 = vpop.f32.mrf.mxu0
      %v7188 = vadd.f32 0.0, %v7187
      %7189 = vmatmul.bf16.gmra.mxu0 %v7084
      %v7190 = vpop.f32.mrf.mxu0
      %v7191 = vadd.f32 0.0, %v7190
      %v7192 = vpop.f32.mrf.mxu0
      %v7193 = vadd.f32 0.0, %v7192
      %7194 = vmatmul.bf16.gmra.mxu0 %v7087
      %v7195 = vpop.f32.mrf.mxu0
      %v7196 = vadd.f32 0.0, %v7195
      %v7197 = vpop.f32.mrf.mxu0
      %v7198 = vadd.f32 0.0, %v7197
      %7199 = vdwg.mxu0
      %7200 = vmatpush.bf16.msra.mxu0 0
      %7201 = vmatpush.bf16.msra.mxu0 0
      %7202 = vmatpush.bf16.msra.mxu0 0
      %7203 = vmatpush.bf16.msra.mxu0 0
      %7204 = vmatpush.bf16.msra.mxu0 0
      %7205 = vmatpush.bf16.msra.mxu0 0
      %7206 = vmatpush.bf16.msra.mxu0 0
      %7207 = vmatpush.bf16.msra.mxu0 %v7099
      %7208 = vmatmul.bf16.gmra.mxu0 %v7078
      %v7209 = vpop.f32.mrf.mxu0
      %v7210 = vadd.f32 0.0, %v7209
      %v7211 = vpop.f32.mrf.mxu0
      %v7212 = vadd.f32 0.0, %v7211
      %7213 = vmatmul.bf16.gmra.mxu0 %v7081
      %v7214 = vpop.f32.mrf.mxu0
      %v7215 = vadd.f32 0.0, %v7214
      %v7216 = vpop.f32.mrf.mxu0
      %v7217 = vadd.f32 0.0, %v7216
      %7218 = vmatmul.bf16.gmra.mxu0 %v7084
      %v7219 = vpop.f32.mrf.mxu0
      %v7220 = vadd.f32 0.0, %v7219
      %v7221 = vpop.f32.mrf.mxu0
      %v7222 = vadd.f32 0.0, %v7221
      %7223 = vmatmul.bf16.gmra.mxu0 %v7087
      %v7224 = vpop.f32.mrf.mxu0
      %v7225 = vadd.f32 0.0, %v7224
      %v7226 = vpop.f32.mrf.mxu0
      %v7227 = vadd.f32 0.0, %v7226
      %7228 = vdwg.mxu0
      %7229 = vmatpush.bf16.msra.mxu0 0
      %7230 = vmatpush.bf16.msra.mxu0 0
      %7231 = vmatpush.bf16.msra.mxu0 0
      %7232 = vmatpush.bf16.msra.mxu0 0
      %7233 = vmatpush.bf16.msra.mxu0 0
      %7234 = vmatpush.bf16.msra.mxu0 0
      %7235 = vmatpush.bf16.msra.mxu0 0
      %7236 = vmatpush.bf16.msra.mxu0 %v7102
      %7237 = vmatmul.bf16.gmra.mxu0 %v7078
      %v7238 = vpop.f32.mrf.mxu0
      %v7239 = vadd.f32 0.0, %v7238
      %v7240 = vpop.f32.mrf.mxu0
      %v7241 = vadd.f32 0.0, %v7240
      %7242 = vmatmul.bf16.gmra.mxu0 %v7081
      %v7243 = vpop.f32.mrf.mxu0
      %v7244 = vadd.f32 0.0, %v7243
      %v7245 = vpop.f32.mrf.mxu0
      %v7246 = vadd.f32 0.0, %v7245
      %7247 = vmatmul.bf16.gmra.mxu0 %v7084
      %v7248 = vpop.f32.mrf.mxu0
      %v7249 = vadd.f32 0.0, %v7248
      %v7250 = vpop.f32.mrf.mxu0
      %v7251 = vadd.f32 0.0, %v7250
      %7252 = vmatmul.bf16.gmra.mxu0 %v7087
      %v7253 = vpop.f32.mrf.mxu0
      %v7254 = vadd.f32 0.0, %v7253
      %v7255 = vpop.f32.mrf.mxu0
      %v7256 = vadd.f32 0.0, %v7255
      %7257 = vdwg.mxu0
      %7258 = vmatpush.bf16.msra.mxu0 0
      %7259 = vmatpush.bf16.msra.mxu0 0
      %7260 = vmatpush.bf16.msra.mxu0 0
      %7261 = vmatpush.bf16.msra.mxu0 0
      %7262 = vmatpush.bf16.msra.mxu0 0
      %7263 = vmatpush.bf16.msra.mxu0 0
      %7264 = vmatpush.bf16.msra.mxu0 0
      %7265 = vmatpush.bf16.msra.mxu0 %v7105
      %7266 = vmatmul.bf16.gmra.mxu0 %v7078
      %v7267 = vpop.f32.mrf.mxu0
      %v7268 = vadd.f32 0.0, %v7267
      %v7269 = vpop.f32.mrf.mxu0
      %v7270 = vadd.f32 0.0, %v7269
      %7271 = vmatmul.bf16.gmra.mxu0 %v7081
      %v7272 = vpop.f32.mrf.mxu0
      %v7273 = vadd.f32 0.0, %v7272
      %v7274 = vpop.f32.mrf.mxu0
      %v7275 = vadd.f32 0.0, %v7274
      %7276 = vmatmul.bf16.gmra.mxu0 %v7084
      %v7277 = vpop.f32.mrf.mxu0
      %v7278 = vadd.f32 0.0, %v7277
      %v7279 = vpop.f32.mrf.mxu0
      %v7280 = vadd.f32 0.0, %v7279
      %7281 = vmatmul.bf16.gmra.mxu0 %v7087
      %v7282 = vpop.f32.mrf.mxu0
      %v7283 = vadd.f32 0.0, %v7282
      %v7284 = vpop.f32.mrf.mxu0
      %v7285 = vadd.f32 0.0, %v7284
      %7286 = vdwg.mxu0
      %7287 = vmatpush.bf16.msra.mxu0 0
      %7288 = vmatpush.bf16.msra.mxu0 0
      %7289 = vmatpush.bf16.msra.mxu0 0
      %7290 = vmatpush.bf16.msra.mxu0 0
      %7291 = vmatpush.bf16.msra.mxu0 0
      %7292 = vmatpush.bf16.msra.mxu0 0
      %7293 = vmatpush.bf16.msra.mxu0 0
      %7294 = vmatpush.bf16.msra.mxu0 %v7108
      %7295 = vmatmul.bf16.gmra.mxu0 %v7078
      %v7296 = vpop.f32.mrf.mxu0
      %v7297 = vadd.f32 0.0, %v7296
      %v7298 = vpop.f32.mrf.mxu0
      %v7299 = vadd.f32 0.0, %v7298
      %7300 = vmatmul.bf16.gmra.mxu0 %v7081
      %v7301 = vpop.f32.mrf.mxu0
      %v7302 = vadd.f32 0.0, %v7301
      %v7303 = vpop.f32.mrf.mxu0
      %v7304 = vadd.f32 0.0, %v7303
      %7305 = vmatmul.bf16.gmra.mxu0 %v7084
      %v7306 = vpop.f32.mrf.mxu0
      %v7307 = vadd.f32 0.0, %v7306
      %v7308 = vpop.f32.mrf.mxu0
      %v7309 = vadd.f32 0.0, %v7308
      %7310 = vmatmul.bf16.gmra.mxu0 %v7087
      %v7311 = vpop.f32.mrf.mxu0
      %v7312 = vadd.f32 0.0, %v7311
      %v7313 = vpop.f32.mrf.mxu0
      %v7314 = vadd.f32 0.0, %v7313
      %7315 = vdwg.mxu0
      %7316 = vmatpush.bf16.msra.mxu0 0
      %7317 = vmatpush.bf16.msra.mxu0 0
      %7318 = vmatpush.bf16.msra.mxu0 0
      %7319 = vmatpush.bf16.msra.mxu0 0
      %7320 = vmatpush.bf16.msra.mxu0 0
      %7321 = vmatpush.bf16.msra.mxu0 0
      %7322 = vmatpush.bf16.msra.mxu0 0
      %7323 = vmatpush.bf16.msra.mxu0 %v7111
      %7324 = vmatmul.bf16.gmra.mxu0 %v7078
      %v7325 = vpop.f32.mrf.mxu0
      %v7326 = vadd.f32 0.0, %v7325
      %v7327 = vpop.f32.mrf.mxu0
      %v7328 = vadd.f32 0.0, %v7327
      %7329 = vmatmul.bf16.gmra.mxu0 %v7081
      %v7330 = vpop.f32.mrf.mxu0
      %v7331 = vadd.f32 0.0, %v7330
      %v7332 = vpop.f32.mrf.mxu0
      %v7333 = vadd.f32 0.0, %v7332
      %7334 = vmatmul.bf16.gmra.mxu0 %v7084
      %v7335 = vpop.f32.mrf.mxu0
      %v7336 = vadd.f32 0.0, %v7335
      %v7337 = vpop.f32.mrf.mxu0
      %v7338 = vadd.f32 0.0, %v7337
      %7339 = vmatmul.bf16.gmra.mxu0 %v7087
      %v7340 = vpop.f32.mrf.mxu0
      %v7341 = vadd.f32 0.0, %v7340
      %v7342 = vpop.f32.mrf.mxu0
      %v7343 = vadd.f32 0.0, %v7342
      %7344 = vdwg.mxu0
      %v7345 = vadd.f32 %v6940, %v7123
      %v7346 = vadd.f32 %v6941, %v7152
      %v7347 = vadd.f32 %v6942, %v7181
      %v7348 = vadd.f32 %v6943, %v7210
      %v7349 = vadd.f32 %v6944, %v7239
      %v7350 = vadd.f32 %v6945, %v7268
      %v7351 = vadd.f32 %v6946, %v7297
      %v7352 = vadd.f32 %v6947, %v7326
      %v7353 = vadd.f32 %v6948, %v7125
      %v7354 = vadd.f32 %v6949, %v7154
      %v7355 = vadd.f32 %v6950, %v7183
      %v7356 = vadd.f32 %v6951, %v7212
      %v7357 = vadd.f32 %v6952, %v7241
      %v7358 = vadd.f32 %v6953, %v7270
      %v7359 = vadd.f32 %v6954, %v7299
      %v7360 = vadd.f32 %v6955, %v7328
      %v7361 = vadd.f32 %v6956, %v7128
      %v7362 = vadd.f32 %v6957, %v7157
      %v7363 = vadd.f32 %v6958, %v7186
      %v7364 = vadd.f32 %v6959, %v7215
      %v7365 = vadd.f32 %v6960, %v7244
      %v7366 = vadd.f32 %v6961, %v7273
      %v7367 = vadd.f32 %v6962, %v7302
      %v7368 = vadd.f32 %v6963, %v7331
      %v7369 = vadd.f32 %v6964, %v7130
      %v7370 = vadd.f32 %v6965, %v7159
      %v7371 = vadd.f32 %v6966, %v7188
      %v7372 = vadd.f32 %v6967, %v7217
      %v7373 = vadd.f32 %v6968, %v7246
      %v7374 = vadd.f32 %v6969, %v7275
      %v7375 = vadd.f32 %v6970, %v7304
      %v7376 = vadd.f32 %v6971, %v7333
      %v7377 = vadd.f32 %v6972, %v7133
      %v7378 = vadd.f32 %v6973, %v7162
      %v7379 = vadd.f32 %v6974, %v7191
      %v7380 = vadd.f32 %v6975, %v7220
      %v7381 = vadd.f32 %v6976, %v7249
      %v7382 = vadd.f32 %v6977, %v7278
      %v7383 = vadd.f32 %v6978, %v7307
      %v7384 = vadd.f32 %v6979, %v7336
      %v7385 = vadd.f32 %v6980, %v7135
      %v7386 = vadd.f32 %v6981, %v7164
      %v7387 = vadd.f32 %v6982, %v7193
      %v7388 = vadd.f32 %v6983, %v7222
      %v7389 = vadd.f32 %v6984, %v7251
      %v7390 = vadd.f32 %v6985, %v7280
      %v7391 = vadd.f32 %v6986, %v7309
      %v7392 = vadd.f32 %v6987, %v7338
      %v7393 = vadd.f32 %v6988, %v7138
      %v7394 = vadd.f32 %v6989, %v7167
      %v7395 = vadd.f32 %v6990, %v7196
      %v7396 = vadd.f32 %v6991, %v7225
      %v7397 = vadd.f32 %v6992, %v7254
      %v7398 = vadd.f32 %v6993, %v7283
      %v7399 = vadd.f32 %v6994, %v7312
      %v7400 = vadd.f32 %v6995, %v7341
      %v7401 = vadd.f32 %v6996, %v7140
      %v7402 = vadd.f32 %v6997, %v7169
      %v7403 = vadd.f32 %v6998, %v7198
      %v7404 = vadd.f32 %v6999, %v7227
      %v7405 = vadd.f32 %v7000, %v7256
      %v7406 = vadd.f32 %v7001, %v7285
      %v7407 = vadd.f32 %v7002, %v7314
      %v7408 = vadd.f32 %v7003, %v7343
      %v7409 = vmul.f32 %v6167, %v2316
      %v7410 = vmul.f32 %v6168, %v2332
      %v7411 = vmul.f32 %v6169, %v2333
      %v7412 = vmul.f32 %v6170, %v2334
      %v7413 = vmul.f32 %v6171, %v2335
      %v7414 = vmul.f32 %v6172, %v2336
      %v7415 = vmul.f32 %v6173, %v2337
      %v7416 = vmul.f32 %v6174, %v2338
      %v7417 = vmul.f32 %v6175, %v2330
      %s7418 = scalar_lea.vmem %s8, 256
      %v7419 = vld [vmem:[%s7418] sm:$0xf]
      %v7420 = vld [vmem:[%s7418 + $0x4] sm:$0xf]
      %v7421 = vld [vmem:[%s7418 + $0x8] sm:$0xf]
      %v7422 = vld [vmem:[%s7418 + $0xc] sm:$0xf]
      %v7423 = vld [vmem:[%s7418 + $0x10] sm:$0xf]
      %v7424 = vld [vmem:[%s7418 + $0x14] sm:$0xf]
      %v7425 = vld [vmem:[%s7418 + $0x18] sm:$0xf]
      %v7426 = vld [vmem:[%s7418 + $0x1c] sm:$0xf]
      %v7427 = vpack.c.bf16 %v7409, %v7409
      %v7428 = vpack.c.bf16 %v7410, %v7410
      %v7429 = vpack.c.bf16 %v7411, %v7411
      %v7430 = vpack.c.bf16 %v7412, %v7412
      %v7431 = vpack.c.bf16 %v7413, %v7413
      %v7432 = vpack.c.bf16 %v7414, %v7414
      %v7433 = vpack.c.bf16 %v7415, %v7415
      %v7434 = vpack.c.bf16 %v7416, %v7416
      %v7435 = vpack.c.bf16 %v7417, %v7417
      %v7444 = vunpack.c.l.b16 %v7419
      %v7445 = vunpack.c.l.b16 %v7420
      %v7446 = vunpack.c.l.b16 %v7421
      %v7447 = vunpack.c.l.b16 %v7422
      %v7448 = vunpack.c.l.b16 %v7423
      %v7449 = vunpack.c.l.b16 %v7424
      %v7450 = vunpack.c.l.b16 %v7425
      %v7451 = vunpack.c.l.b16 %v7426
      %v7452 = vpack.c.b16 %v7445, %v7444
      %v7453 = vpack.c.b16 %v7447, %v7446
      %v7454 = vpack.c.b16 %v7449, %v7448
      %v7455 = vpack.c.b16 %v7451, %v7450
      %7465 = vrot.lane.b32.xlu0 %v7427, 95
      %v7466 = vpop.permute.xlu0 %7465
      %7467 = vrot.lane.b32.xlu0 %v7428, 95
      %v7468 = vpop.permute.xlu0 %7467
      %7469 = vrot.lane.b32.xlu0 %v7429, 95
      %v7470 = vpop.permute.xlu0 %7469
      %7471 = vrot.lane.b32.xlu0 %v7430, 95
      %v7472 = vpop.permute.xlu0 %7471
      %7473 = vrot.lane.b32.xlu0 %v7431, 95
      %v7474 = vpop.permute.xlu0 %7473
      %7475 = vrot.lane.b32.xlu0 %v7432, 95
      %v7476 = vpop.permute.xlu0 %7475
      %7477 = vrot.lane.b32.xlu0 %v7433, 95
      %v7478 = vpop.permute.xlu0 %7477
      %7479 = vrot.lane.b32.xlu0 %v7434, 95
      %v7480 = vpop.permute.xlu0 %7479
      %7481 = vrot.lane.b32.xlu0 %v7435, 95
      %v7482 = vpop.permute.xlu0 %7481
      %v7483 = vsel %vm2395, %v7466, %v7468
      %v7484 = vsel %vm2395, %v7468, %v7470
      %v7485 = vsel %vm2395, %v7470, %v7472
      %v7486 = vsel %vm2395, %v7472, %v7474
      %v7487 = vsel %vm2395, %v7474, %v7476
      %v7488 = vsel %vm2395, %v7476, %v7478
      %v7489 = vsel %vm2395, %v7478, %v7480
      %v7490 = vsel %vm2395, %v7480, %v7482
      %v7492 = vsel %vm758, %v7452, 0
      %v7495 = vsel %vm758, %v7453, 0
      %v7498 = vsel %vm758, %v7454, 0
      %v7501 = vsel %vm758, %v7455, 0
      %v7504 = vsel %vm762, %v7483, 0
      %v7507 = vsel %vm762, %v7484, 0
      %v7510 = vsel %vm762, %v7485, 0
      %v7513 = vsel %vm762, %v7486, 0
      %v7516 = vsel %vm762, %v7487, 0
      %v7519 = vsel %vm762, %v7488, 0
      %v7522 = vsel %vm762, %v7489, 0
      %v7525 = vsel %vm762, %v7490, 0
      %7527 = vmatpush.bf16.msra.mxu0 0
      %7528 = vmatpush.bf16.msra.mxu0 0
      %7529 = vmatpush.bf16.msra.mxu0 0
      %7530 = vmatpush.bf16.msra.mxu0 0
      %7531 = vmatpush.bf16.msra.mxu0 0
      %7532 = vmatpush.bf16.msra.mxu0 0
      %7533 = vmatpush.bf16.msra.mxu0 0
      %7534 = vmatpush.bf16.msra.mxu0 %v7504
      %7535 = vmatmul.bf16.gmra.mxu0 %v7492
      %v7536 = vpop.f32.mrf.mxu0
      %v7537 = vadd.f32 0.0, %v7536
      %v7538 = vpop.f32.mrf.mxu0
      %v7539 = vadd.f32 0.0, %v7538
      %7540 = vmatmul.bf16.gmra.mxu0 %v7495
      %v7541 = vpop.f32.mrf.mxu0
      %v7542 = vadd.f32 0.0, %v7541
      %v7543 = vpop.f32.mrf.mxu0
      %v7544 = vadd.f32 0.0, %v7543
      %7545 = vmatmul.bf16.gmra.mxu0 %v7498
      %v7546 = vpop.f32.mrf.mxu0
      %v7547 = vadd.f32 0.0, %v7546
      %v7548 = vpop.f32.mrf.mxu0
      %v7549 = vadd.f32 0.0, %v7548
      %7550 = vmatmul.bf16.gmra.mxu0 %v7501
      %v7551 = vpop.f32.mrf.mxu0
      %v7552 = vadd.f32 0.0, %v7551
      %v7553 = vpop.f32.mrf.mxu0
      %v7554 = vadd.f32 0.0, %v7553
      %7555 = vdwg.mxu0
      %7556 = vmatpush.bf16.msra.mxu0 0
      %7557 = vmatpush.bf16.msra.mxu0 0
      %7558 = vmatpush.bf16.msra.mxu0 0
      %7559 = vmatpush.bf16.msra.mxu0 0
      %7560 = vmatpush.bf16.msra.mxu0 0
      %7561 = vmatpush.bf16.msra.mxu0 0
      %7562 = vmatpush.bf16.msra.mxu0 0
      %7563 = vmatpush.bf16.msra.mxu0 %v7507
      %7564 = vmatmul.bf16.gmra.mxu0 %v7492
      %v7565 = vpop.f32.mrf.mxu0
      %v7566 = vadd.f32 0.0, %v7565
      %v7567 = vpop.f32.mrf.mxu0
      %v7568 = vadd.f32 0.0, %v7567
      %7569 = vmatmul.bf16.gmra.mxu0 %v7495
      %v7570 = vpop.f32.mrf.mxu0
      %v7571 = vadd.f32 0.0, %v7570
      %v7572 = vpop.f32.mrf.mxu0
      %v7573 = vadd.f32 0.0, %v7572
      %7574 = vmatmul.bf16.gmra.mxu0 %v7498
      %v7575 = vpop.f32.mrf.mxu0
      %v7576 = vadd.f32 0.0, %v7575
      %v7577 = vpop.f32.mrf.mxu0
      %v7578 = vadd.f32 0.0, %v7577
      %7579 = vmatmul.bf16.gmra.mxu0 %v7501
      %v7580 = vpop.f32.mrf.mxu0
      %v7581 = vadd.f32 0.0, %v7580
      %v7582 = vpop.f32.mrf.mxu0
      %v7583 = vadd.f32 0.0, %v7582
      %7584 = vdwg.mxu0
      %7585 = vmatpush.bf16.msra.mxu0 0
      %7586 = vmatpush.bf16.msra.mxu0 0
      %7587 = vmatpush.bf16.msra.mxu0 0
      %7588 = vmatpush.bf16.msra.mxu0 0
      %7589 = vmatpush.bf16.msra.mxu0 0
      %7590 = vmatpush.bf16.msra.mxu0 0
      %7591 = vmatpush.bf16.msra.mxu0 0
      %7592 = vmatpush.bf16.msra.mxu0 %v7510
      %7593 = vmatmul.bf16.gmra.mxu0 %v7492
      %v7594 = vpop.f32.mrf.mxu0
      %v7595 = vadd.f32 0.0, %v7594
      %v7596 = vpop.f32.mrf.mxu0
      %v7597 = vadd.f32 0.0, %v7596
      %7598 = vmatmul.bf16.gmra.mxu0 %v7495
      %v7599 = vpop.f32.mrf.mxu0
      %v7600 = vadd.f32 0.0, %v7599
      %v7601 = vpop.f32.mrf.mxu0
      %v7602 = vadd.f32 0.0, %v7601
      %7603 = vmatmul.bf16.gmra.mxu0 %v7498
      %v7604 = vpop.f32.mrf.mxu0
      %v7605 = vadd.f32 0.0, %v7604
      %v7606 = vpop.f32.mrf.mxu0
      %v7607 = vadd.f32 0.0, %v7606
      %7608 = vmatmul.bf16.gmra.mxu0 %v7501
      %v7609 = vpop.f32.mrf.mxu0
      %v7610 = vadd.f32 0.0, %v7609
      %v7611 = vpop.f32.mrf.mxu0
      %v7612 = vadd.f32 0.0, %v7611
      %7613 = vdwg.mxu0
      %7614 = vmatpush.bf16.msra.mxu0 0
      %7615 = vmatpush.bf16.msra.mxu0 0
      %7616 = vmatpush.bf16.msra.mxu0 0
      %7617 = vmatpush.bf16.msra.mxu0 0
      %7618 = vmatpush.bf16.msra.mxu0 0
      %7619 = vmatpush.bf16.msra.mxu0 0
      %7620 = vmatpush.bf16.msra.mxu0 0
      %7621 = vmatpush.bf16.msra.mxu0 %v7513
      %7622 = vmatmul.bf16.gmra.mxu0 %v7492
      %v7623 = vpop.f32.mrf.mxu0
      %v7624 = vadd.f32 0.0, %v7623
      %v7625 = vpop.f32.mrf.mxu0
      %v7626 = vadd.f32 0.0, %v7625
      %7627 = vmatmul.bf16.gmra.mxu0 %v7495
      %v7628 = vpop.f32.mrf.mxu0
      %v7629 = vadd.f32 0.0, %v7628
      %v7630 = vpop.f32.mrf.mxu0
      %v7631 = vadd.f32 0.0, %v7630
      %7632 = vmatmul.bf16.gmra.mxu0 %v7498
      %v7633 = vpop.f32.mrf.mxu0
      %v7634 = vadd.f32 0.0, %v7633
      %v7635 = vpop.f32.mrf.mxu0
      %v7636 = vadd.f32 0.0, %v7635
      %7637 = vmatmul.bf16.gmra.mxu0 %v7501
      %v7638 = vpop.f32.mrf.mxu0
      %v7639 = vadd.f32 0.0, %v7638
      %v7640 = vpop.f32.mrf.mxu0
      %v7641 = vadd.f32 0.0, %v7640
      %7642 = vdwg.mxu0
      %7643 = vmatpush.bf16.msra.mxu0 0
      %7644 = vmatpush.bf16.msra.mxu0 0
      %7645 = vmatpush.bf16.msra.mxu0 0
      %7646 = vmatpush.bf16.msra.mxu0 0
      %7647 = vmatpush.bf16.msra.mxu0 0
      %7648 = vmatpush.bf16.msra.mxu0 0
      %7649 = vmatpush.bf16.msra.mxu0 0
      %7650 = vmatpush.bf16.msra.mxu0 %v7516
      %7651 = vmatmul.bf16.gmra.mxu0 %v7492
      %v7652 = vpop.f32.mrf.mxu0
      %v7653 = vadd.f32 0.0, %v7652
      %v7654 = vpop.f32.mrf.mxu0
      %v7655 = vadd.f32 0.0, %v7654
      %7656 = vmatmul.bf16.gmra.mxu0 %v7495
      %v7657 = vpop.f32.mrf.mxu0
      %v7658 = vadd.f32 0.0, %v7657
      %v7659 = vpop.f32.mrf.mxu0
      %v7660 = vadd.f32 0.0, %v7659
      %7661 = vmatmul.bf16.gmra.mxu0 %v7498
      %v7662 = vpop.f32.mrf.mxu0
      %v7663 = vadd.f32 0.0, %v7662
      %v7664 = vpop.f32.mrf.mxu0
      %v7665 = vadd.f32 0.0, %v7664
      %7666 = vmatmul.bf16.gmra.mxu0 %v7501
      %v7667 = vpop.f32.mrf.mxu0
      %v7668 = vadd.f32 0.0, %v7667
      %v7669 = vpop.f32.mrf.mxu0
      %v7670 = vadd.f32 0.0, %v7669
      %7671 = vdwg.mxu0
      %7672 = vmatpush.bf16.msra.mxu0 0
      %7673 = vmatpush.bf16.msra.mxu0 0
      %7674 = vmatpush.bf16.msra.mxu0 0
      %7675 = vmatpush.bf16.msra.mxu0 0
      %7676 = vmatpush.bf16.msra.mxu0 0
      %7677 = vmatpush.bf16.msra.mxu0 0
      %7678 = vmatpush.bf16.msra.mxu0 0
      %7679 = vmatpush.bf16.msra.mxu0 %v7519
      %7680 = vmatmul.bf16.gmra.mxu0 %v7492
      %v7681 = vpop.f32.mrf.mxu0
      %v7682 = vadd.f32 0.0, %v7681
      %v7683 = vpop.f32.mrf.mxu0
      %v7684 = vadd.f32 0.0, %v7683
      %7685 = vmatmul.bf16.gmra.mxu0 %v7495
      %v7686 = vpop.f32.mrf.mxu0
      %v7687 = vadd.f32 0.0, %v7686
      %v7688 = vpop.f32.mrf.mxu0
      %v7689 = vadd.f32 0.0, %v7688
      %7690 = vmatmul.bf16.gmra.mxu0 %v7498
      %v7691 = vpop.f32.mrf.mxu0
      %v7692 = vadd.f32 0.0, %v7691
      %v7693 = vpop.f32.mrf.mxu0
      %v7694 = vadd.f32 0.0, %v7693
      %7695 = vmatmul.bf16.gmra.mxu0 %v7501
      %v7696 = vpop.f32.mrf.mxu0
      %v7697 = vadd.f32 0.0, %v7696
      %v7698 = vpop.f32.mrf.mxu0
      %v7699 = vadd.f32 0.0, %v7698
      %7700 = vdwg.mxu0
      %7701 = vmatpush.bf16.msra.mxu0 0
      %7702 = vmatpush.bf16.msra.mxu0 0
      %7703 = vmatpush.bf16.msra.mxu0 0
      %7704 = vmatpush.bf16.msra.mxu0 0
      %7705 = vmatpush.bf16.msra.mxu0 0
      %7706 = vmatpush.bf16.msra.mxu0 0
      %7707 = vmatpush.bf16.msra.mxu0 0
      %7708 = vmatpush.bf16.msra.mxu0 %v7522
      %7709 = vmatmul.bf16.gmra.mxu0 %v7492
      %v7710 = vpop.f32.mrf.mxu0
      %v7711 = vadd.f32 0.0, %v7710
      %v7712 = vpop.f32.mrf.mxu0
      %v7713 = vadd.f32 0.0, %v7712
      %7714 = vmatmul.bf16.gmra.mxu0 %v7495
      %v7715 = vpop.f32.mrf.mxu0
      %v7716 = vadd.f32 0.0, %v7715
      %v7717 = vpop.f32.mrf.mxu0
      %v7718 = vadd.f32 0.0, %v7717
      %7719 = vmatmul.bf16.gmra.mxu0 %v7498
      %v7720 = vpop.f32.mrf.mxu0
      %v7721 = vadd.f32 0.0, %v7720
      %v7722 = vpop.f32.mrf.mxu0
      %v7723 = vadd.f32 0.0, %v7722
      %7724 = vmatmul.bf16.gmra.mxu0 %v7501
      %v7725 = vpop.f32.mrf.mxu0
      %v7726 = vadd.f32 0.0, %v7725
      %v7727 = vpop.f32.mrf.mxu0
      %v7728 = vadd.f32 0.0, %v7727
      %7729 = vdwg.mxu0
      %7730 = vmatpush.bf16.msra.mxu0 0
      %7731 = vmatpush.bf16.msra.mxu0 0
      %7732 = vmatpush.bf16.msra.mxu0 0
      %7733 = vmatpush.bf16.msra.mxu0 0
      %7734 = vmatpush.bf16.msra.mxu0 0
      %7735 = vmatpush.bf16.msra.mxu0 0
      %7736 = vmatpush.bf16.msra.mxu0 0
      %7737 = vmatpush.bf16.msra.mxu0 %v7525
      %7738 = vmatmul.bf16.gmra.mxu0 %v7492
      %v7739 = vpop.f32.mrf.mxu0
      %v7740 = vadd.f32 0.0, %v7739
      %v7741 = vpop.f32.mrf.mxu0
      %v7742 = vadd.f32 0.0, %v7741
      %7743 = vmatmul.bf16.gmra.mxu0 %v7495
      %v7744 = vpop.f32.mrf.mxu0
      %v7745 = vadd.f32 0.0, %v7744
      %v7746 = vpop.f32.mrf.mxu0
      %v7747 = vadd.f32 0.0, %v7746
      %7748 = vmatmul.bf16.gmra.mxu0 %v7498
      %v7749 = vpop.f32.mrf.mxu0
      %v7750 = vadd.f32 0.0, %v7749
      %v7751 = vpop.f32.mrf.mxu0
      %v7752 = vadd.f32 0.0, %v7751
      %7753 = vmatmul.bf16.gmra.mxu0 %v7501
      %v7754 = vpop.f32.mrf.mxu0
      %v7755 = vadd.f32 0.0, %v7754
      %v7756 = vpop.f32.mrf.mxu0
      %v7757 = vadd.f32 0.0, %v7756
      %7758 = vdwg.mxu0
      %v7759 = vadd.f32 %v7345, %v7537
      %v7760 = vadd.f32 %v7346, %v7566
      %v7761 = vadd.f32 %v7347, %v7595
      %v7762 = vadd.f32 %v7348, %v7624
      %v7763 = vadd.f32 %v7349, %v7653
      %v7764 = vadd.f32 %v7350, %v7682
      %v7765 = vadd.f32 %v7351, %v7711
      %v7766 = vadd.f32 %v7352, %v7740
      %v7767 = vadd.f32 %v7353, %v7539
      %v7768 = vadd.f32 %v7354, %v7568
      %v7769 = vadd.f32 %v7355, %v7597
      %v7770 = vadd.f32 %v7356, %v7626
      %v7771 = vadd.f32 %v7357, %v7655
      %v7772 = vadd.f32 %v7358, %v7684
      %v7773 = vadd.f32 %v7359, %v7713
      %v7774 = vadd.f32 %v7360, %v7742
      %v7775 = vadd.f32 %v7361, %v7542
      %v7776 = vadd.f32 %v7362, %v7571
      %v7777 = vadd.f32 %v7363, %v7600
      %v7778 = vadd.f32 %v7364, %v7629
      %v7779 = vadd.f32 %v7365, %v7658
      %v7780 = vadd.f32 %v7366, %v7687
      %v7781 = vadd.f32 %v7367, %v7716
      %v7782 = vadd.f32 %v7368, %v7745
      %v7783 = vadd.f32 %v7369, %v7544
      %v7784 = vadd.f32 %v7370, %v7573
      %v7785 = vadd.f32 %v7371, %v7602
      %v7786 = vadd.f32 %v7372, %v7631
      %v7787 = vadd.f32 %v7373, %v7660
      %v7788 = vadd.f32 %v7374, %v7689
      %v7789 = vadd.f32 %v7375, %v7718
      %v7790 = vadd.f32 %v7376, %v7747
      %v7791 = vadd.f32 %v7377, %v7547
      %v7792 = vadd.f32 %v7378, %v7576
      %v7793 = vadd.f32 %v7379, %v7605
      %v7794 = vadd.f32 %v7380, %v7634
      %v7795 = vadd.f32 %v7381, %v7663
      %v7796 = vadd.f32 %v7382, %v7692
      %v7797 = vadd.f32 %v7383, %v7721
      %v7798 = vadd.f32 %v7384, %v7750
      %v7799 = vadd.f32 %v7385, %v7549
      %v7800 = vadd.f32 %v7386, %v7578
      %v7801 = vadd.f32 %v7387, %v7607
      %v7802 = vadd.f32 %v7388, %v7636
      %v7803 = vadd.f32 %v7389, %v7665
      %v7804 = vadd.f32 %v7390, %v7694
      %v7805 = vadd.f32 %v7391, %v7723
      %v7806 = vadd.f32 %v7392, %v7752
      %v7807 = vadd.f32 %v7393, %v7552
      %v7808 = vadd.f32 %v7394, %v7581
      %v7809 = vadd.f32 %v7395, %v7610
      %v7810 = vadd.f32 %v7396, %v7639
      %v7811 = vadd.f32 %v7397, %v7668
      %v7812 = vadd.f32 %v7398, %v7697
      %v7813 = vadd.f32 %v7399, %v7726
      %v7814 = vadd.f32 %v7400, %v7755
      %v7815 = vadd.f32 %v7401, %v7554
      %v7816 = vadd.f32 %v7402, %v7583
      %v7817 = vadd.f32 %v7403, %v7612
      %v7818 = vadd.f32 %v7404, %v7641
      %v7819 = vadd.f32 %v7405, %v7670
      %v7820 = vadd.f32 %v7406, %v7699
      %v7821 = vadd.f32 %v7407, %v7728
      %v7822 = vadd.f32 %v7408, %v7757
      %v7823 = vld [vmem:[%s9] sm:$0xff]
      %v7824 = vld [vmem:[%s9 + $0x8] sm:$0xff]
      %v7825 = vld [vmem:[%s9 + $0x10] sm:$0xff]
      %v7826 = vld [vmem:[%s9 + $0x18] sm:$0xff]
      %v7827 = vld [vmem:[%s9 + $0x20] sm:$0xff]
      %v7828 = vld [vmem:[%s9 + $0x28] sm:$0xff]
      %v7829 = vld [vmem:[%s9 + $0x30] sm:$0xff]
      %v7830 = vld [vmem:[%s9 + $0x38] sm:$0xff]
      %7832 = vset.pattern.permute.xlu0 0
      %7833 = vperm.xlu0 %7832, %v7823
      %v7834 = vpop.permute.xlu0 %7833
      %7837 = vset.pattern.permute.xlu0 0
      %7838 = vperm.xlu0 %7837, %v7824
      %v7839 = vpop.permute.xlu0 %7838
      %7842 = vset.pattern.permute.xlu0 0
      %7843 = vperm.xlu0 %7842, %v7825
      %v7844 = vpop.permute.xlu0 %7843
      %7847 = vset.pattern.permute.xlu0 0
      %7848 = vperm.xlu0 %7847, %v7826
      %v7849 = vpop.permute.xlu0 %7848
      %7852 = vset.pattern.permute.xlu0 0
      %7853 = vperm.xlu0 %7852, %v7827
      %v7854 = vpop.permute.xlu0 %7853
      %7857 = vset.pattern.permute.xlu0 0
      %7858 = vperm.xlu0 %7857, %v7828
      %v7859 = vpop.permute.xlu0 %7858
      %7862 = vset.pattern.permute.xlu0 0
      %7863 = vperm.xlu0 %7862, %v7829
      %v7864 = vpop.permute.xlu0 %7863
      %7867 = vset.pattern.permute.xlu0 0
      %7868 = vperm.xlu0 %7867, %v7830
      %v7869 = vpop.permute.xlu0 %7868
      %v7871 = vadd.f32 %v7759, %v7834
      %v7872 = vadd.f32 %v7760, %v7834
      %v7873 = vadd.f32 %v7761, %v7834
      %v7874 = vadd.f32 %v7762, %v7834
      %v7875 = vadd.f32 %v7763, %v7834
      %v7876 = vadd.f32 %v7764, %v7834
      %v7877 = vadd.f32 %v7765, %v7834
      %v7878 = vadd.f32 %v7766, %v7834
      %v7879 = vadd.f32 %v7767, %v7839
      %v7880 = vadd.f32 %v7768, %v7839
      %v7881 = vadd.f32 %v7769, %v7839
      %v7882 = vadd.f32 %v7770, %v7839
      %v7883 = vadd.f32 %v7771, %v7839
      %v7884 = vadd.f32 %v7772, %v7839
      %v7885 = vadd.f32 %v7773, %v7839
      %v7886 = vadd.f32 %v7774, %v7839
      %v7887 = vadd.f32 %v7775, %v7844
      %v7888 = vadd.f32 %v7776, %v7844
      %v7889 = vadd.f32 %v7777, %v7844
      %v7890 = vadd.f32 %v7778, %v7844
      %v7891 = vadd.f32 %v7779, %v7844
      %v7892 = vadd.f32 %v7780, %v7844
      %v7893 = vadd.f32 %v7781, %v7844
      %v7894 = vadd.f32 %v7782, %v7844
      %v7895 = vadd.f32 %v7783, %v7849
      %v7896 = vadd.f32 %v7784, %v7849
      %v7897 = vadd.f32 %v7785, %v7849
      %v7898 = vadd.f32 %v7786, %v7849
      %v7899 = vadd.f32 %v7787, %v7849
      %v7900 = vadd.f32 %v7788, %v7849
      %v7901 = vadd.f32 %v7789, %v7849
      %v7902 = vadd.f32 %v7790, %v7849
      %v7903 = vadd.f32 %v7791, %v7854
      %v7904 = vadd.f32 %v7792, %v7854
      %v7905 = vadd.f32 %v7793, %v7854
      %v7906 = vadd.f32 %v7794, %v7854
      %v7907 = vadd.f32 %v7795, %v7854
      %v7908 = vadd.f32 %v7796, %v7854
      %v7909 = vadd.f32 %v7797, %v7854
      %v7910 = vadd.f32 %v7798, %v7854
      %v7911 = vadd.f32 %v7799, %v7859
      %v7912 = vadd.f32 %v7800, %v7859
      %v7913 = vadd.f32 %v7801, %v7859
      %v7914 = vadd.f32 %v7802, %v7859
      %v7915 = vadd.f32 %v7803, %v7859
      %v7916 = vadd.f32 %v7804, %v7859
      %v7917 = vadd.f32 %v7805, %v7859
      %v7918 = vadd.f32 %v7806, %v7859
      %v7919 = vadd.f32 %v7807, %v7864
      %v7920 = vadd.f32 %v7808, %v7864
      %v7921 = vadd.f32 %v7809, %v7864
      %v7922 = vadd.f32 %v7810, %v7864
      %v7923 = vadd.f32 %v7811, %v7864
      %v7924 = vadd.f32 %v7812, %v7864
      %v7925 = vadd.f32 %v7813, %v7864
      %v7926 = vadd.f32 %v7814, %v7864
      %v7927 = vadd.f32 %v7815, %v7869
      %v7928 = vadd.f32 %v7816, %v7869
      %v7929 = vadd.f32 %v7817, %v7869
      %v7930 = vadd.f32 %v7818, %v7869
      %v7931 = vadd.f32 %v7819, %v7869
      %v7932 = vadd.f32 %v7820, %v7869
      %v7933 = vadd.f32 %v7821, %v7869
      %v7934 = vadd.f32 %v7822, %v7869
      %v7935 = vxor.u32 %v7871, 2147483648
      %v7936 = vxor.u32 %v7872, 2147483648
      %v7937 = vxor.u32 %v7873, 2147483648
      %v7938 = vxor.u32 %v7874, 2147483648
      %v7939 = vxor.u32 %v7875, 2147483648
      %v7940 = vxor.u32 %v7876, 2147483648
      %v7941 = vxor.u32 %v7877, 2147483648
      %v7942 = vxor.u32 %v7878, 2147483648
      %v7943 = vxor.u32 %v7879, 2147483648
      %v7944 = vxor.u32 %v7880, 2147483648
      %v7945 = vxor.u32 %v7881, 2147483648
      %v7946 = vxor.u32 %v7882, 2147483648
      %v7947 = vxor.u32 %v7883, 2147483648
      %v7948 = vxor.u32 %v7884, 2147483648
      %v7949 = vxor.u32 %v7885, 2147483648
      %v7950 = vxor.u32 %v7886, 2147483648
      %v7951 = vxor.u32 %v7887, 2147483648
      %v7952 = vxor.u32 %v7888, 2147483648
      %v7953 = vxor.u32 %v7889, 2147483648
      %v7954 = vxor.u32 %v7890, 2147483648
      %v7955 = vxor.u32 %v7891, 2147483648
      %v7956 = vxor.u32 %v7892, 2147483648
      %v7957 = vxor.u32 %v7893, 2147483648
      %v7958 = vxor.u32 %v7894, 2147483648
      %v7959 = vxor.u32 %v7895, 2147483648
      %v7960 = vxor.u32 %v7896, 2147483648
      %v7961 = vxor.u32 %v7897, 2147483648
      %v7962 = vxor.u32 %v7898, 2147483648
      %v7963 = vxor.u32 %v7899, 2147483648
      %v7964 = vxor.u32 %v7900, 2147483648
      %v7965 = vxor.u32 %v7901, 2147483648
      %v7966 = vxor.u32 %v7902, 2147483648
      %v7967 = vxor.u32 %v7903, 2147483648
      %v7968 = vxor.u32 %v7904, 2147483648
      %v7969 = vxor.u32 %v7905, 2147483648
      %v7970 = vxor.u32 %v7906, 2147483648
      %v7971 = vxor.u32 %v7907, 2147483648
      %v7972 = vxor.u32 %v7908, 2147483648
      %v7973 = vxor.u32 %v7909, 2147483648
      %v7974 = vxor.u32 %v7910, 2147483648
      %v7975 = vxor.u32 %v7911, 2147483648
      %v7976 = vxor.u32 %v7912, 2147483648
      %v7977 = vxor.u32 %v7913, 2147483648
      %v7978 = vxor.u32 %v7914, 2147483648
      %v7979 = vxor.u32 %v7915, 2147483648
      %v7980 = vxor.u32 %v7916, 2147483648
      %v7981 = vxor.u32 %v7917, 2147483648
      %v7982 = vxor.u32 %v7918, 2147483648
      %v7983 = vxor.u32 %v7919, 2147483648
      %v7984 = vxor.u32 %v7920, 2147483648
      %v7985 = vxor.u32 %v7921, 2147483648
      %v7986 = vxor.u32 %v7922, 2147483648
      %v7987 = vxor.u32 %v7923, 2147483648
      %v7988 = vxor.u32 %v7924, 2147483648
      %v7989 = vxor.u32 %v7925, 2147483648
      %v7990 = vxor.u32 %v7926, 2147483648
      %v7991 = vxor.u32 %v7927, 2147483648
      %v7992 = vxor.u32 %v7928, 2147483648
      %v7993 = vxor.u32 %v7929, 2147483648
      %v7994 = vxor.u32 %v7930, 2147483648
      %v7995 = vxor.u32 %v7931, 2147483648
      %v7996 = vxor.u32 %v7932, 2147483648
      %v7997 = vxor.u32 %v7933, 2147483648
      %v7998 = vxor.u32 %v7934, 2147483648
      %v7999 = vmul.f32 %v7935, 1.442695
      %v8000 = vpow.pop %v7999
      %v8001 = vmul.f32 %v7936, 1.442695
      %v8002 = vpow.pop %v8001
      %v8003 = vmul.f32 %v7937, 1.442695
      %v8004 = vpow.pop %v8003
      %v8005 = vmul.f32 %v7938, 1.442695
      %v8006 = vpow.pop %v8005
      %v8007 = vmul.f32 %v7939, 1.442695
      %v8008 = vpow.pop %v8007
      %v8009 = vmul.f32 %v7940, 1.442695
      %v8010 = vpow.pop %v8009
      %v8011 = vmul.f32 %v7941, 1.442695
      %v8012 = vpow.pop %v8011
      %v8013 = vmul.f32 %v7942, 1.442695
      %v8014 = vpow.pop %v8013
      %v8015 = vmul.f32 %v7943, 1.442695
      %v8016 = vpow.pop %v8015
      %v8017 = vmul.f32 %v7944, 1.442695
      %v8018 = vpow.pop %v8017
      %v8019 = vmul.f32 %v7945, 1.442695
      %v8020 = vpow.pop %v8019
      %v8021 = vmul.f32 %v7946, 1.442695
      %v8022 = vpow.pop %v8021
      %v8023 = vmul.f32 %v7947, 1.442695
      %v8024 = vpow.pop %v8023
      %v8025 = vmul.f32 %v7948, 1.442695
      %v8026 = vpow.pop %v8025
      %v8027 = vmul.f32 %v7949, 1.442695
      %v8028 = vpow.pop %v8027
      %v8029 = vmul.f32 %v7950, 1.442695
      %v8030 = vpow.pop %v8029
      %v8031 = vmul.f32 %v7951, 1.442695
      %v8032 = vpow.pop %v8031
      %v8033 = vmul.f32 %v7952, 1.442695
      %v8034 = vpow.pop %v8033
      %v8035 = vmul.f32 %v7953, 1.442695
      %v8036 = vpow.pop %v8035
      %v8037 = vmul.f32 %v7954, 1.442695
      %v8038 = vpow.pop %v8037
      %v8039 = vmul.f32 %v7955, 1.442695
      %v8040 = vpow.pop %v8039
      %v8041 = vmul.f32 %v7956, 1.442695
      %v8042 = vpow.pop %v8041
      %v8043 = vmul.f32 %v7957, 1.442695
      %v8044 = vpow.pop %v8043
      %v8045 = vmul.f32 %v7958, 1.442695
      %v8046 = vpow.pop %v8045
      %v8047 = vmul.f32 %v7959, 1.442695
      %v8048 = vpow.pop %v8047
      %v8049 = vmul.f32 %v7960, 1.442695
      %v8050 = vpow.pop %v8049
      %v8051 = vmul.f32 %v7961, 1.442695
      %v8052 = vpow.pop %v8051
      %v8053 = vmul.f32 %v7962, 1.442695
      %v8054 = vpow.pop %v8053
      %v8055 = vmul.f32 %v7963, 1.442695
      %v8056 = vpow.pop %v8055
      %v8057 = vmul.f32 %v7964, 1.442695
      %v8058 = vpow.pop %v8057
      %v8059 = vmul.f32 %v7965, 1.442695
      %v8060 = vpow.pop %v8059
      %v8061 = vmul.f32 %v7966, 1.442695
      %v8062 = vpow.pop %v8061
      %v8063 = vmul.f32 %v7967, 1.442695
      %v8064 = vpow.pop %v8063
      %v8065 = vmul.f32 %v7968, 1.442695
      %v8066 = vpow.pop %v8065
      %v8067 = vmul.f32 %v7969, 1.442695
      %v8068 = vpow.pop %v8067
      %v8069 = vmul.f32 %v7970, 1.442695
      %v8070 = vpow.pop %v8069
      %v8071 = vmul.f32 %v7971, 1.442695
      %v8072 = vpow.pop %v8071
      %v8073 = vmul.f32 %v7972, 1.442695
      %v8074 = vpow.pop %v8073
      %v8075 = vmul.f32 %v7973, 1.442695
      %v8076 = vpow.pop %v8075
      %v8077 = vmul.f32 %v7974, 1.442695
      %v8078 = vpow.pop %v8077
      %v8079 = vmul.f32 %v7975, 1.442695
      %v8080 = vpow.pop %v8079
      %v8081 = vmul.f32 %v7976, 1.442695
      %v8082 = vpow.pop %v8081
      %v8083 = vmul.f32 %v7977, 1.442695
      %v8084 = vpow.pop %v8083
      %v8085 = vmul.f32 %v7978, 1.442695
      %v8086 = vpow.pop %v8085
      %v8087 = vmul.f32 %v7979, 1.442695
      %v8088 = vpow.pop %v8087
      %v8089 = vmul.f32 %v7980, 1.442695
      %v8090 = vpow.pop %v8089
      %v8091 = vmul.f32 %v7981, 1.442695
      %v8092 = vpow.pop %v8091
      %v8093 = vmul.f32 %v7982, 1.442695
      %v8094 = vpow.pop %v8093
      %v8095 = vmul.f32 %v7983, 1.442695
      %v8096 = vpow.pop %v8095
      %v8097 = vmul.f32 %v7984, 1.442695
      %v8098 = vpow.pop %v8097
      %v8099 = vmul.f32 %v7985, 1.442695
      %v8100 = vpow.pop %v8099
      %v8101 = vmul.f32 %v7986, 1.442695
      %v8102 = vpow.pop %v8101
      %v8103 = vmul.f32 %v7987, 1.442695
      %v8104 = vpow.pop %v8103
      %v8105 = vmul.f32 %v7988, 1.442695
      %v8106 = vpow.pop %v8105
      %v8107 = vmul.f32 %v7989, 1.442695
      %v8108 = vpow.pop %v8107
      %v8109 = vmul.f32 %v7990, 1.442695
      %v8110 = vpow.pop %v8109
      %v8111 = vmul.f32 %v7991, 1.442695
      %v8112 = vpow.pop %v8111
      %v8113 = vmul.f32 %v7992, 1.442695
      %v8114 = vpow.pop %v8113
      %v8115 = vmul.f32 %v7993, 1.442695
      %v8116 = vpow.pop %v8115
      %v8117 = vmul.f32 %v7994, 1.442695
      %v8118 = vpow.pop %v8117
      %v8119 = vmul.f32 %v7995, 1.442695
      %v8120 = vpow.pop %v8119
      %v8121 = vmul.f32 %v7996, 1.442695
      %v8122 = vpow.pop %v8121
      %v8123 = vmul.f32 %v7997, 1.442695
      %v8124 = vpow.pop %v8123
      %v8125 = vmul.f32 %v7998, 1.442695
      %v8126 = vpow.pop %v8125
      %v8127 = vadd.f32 %v8000, 1.0
      %v8128 = vadd.f32 %v8002, 1.0
      %v8129 = vadd.f32 %v8004, 1.0
      %v8130 = vadd.f32 %v8006, 1.0
      %v8131 = vadd.f32 %v8008, 1.0
      %v8132 = vadd.f32 %v8010, 1.0
      %v8133 = vadd.f32 %v8012, 1.0
      %v8134 = vadd.f32 %v8014, 1.0
      %v8135 = vadd.f32 %v8016, 1.0
      %v8136 = vadd.f32 %v8018, 1.0
      %v8137 = vadd.f32 %v8020, 1.0
      %v8138 = vadd.f32 %v8022, 1.0
      %v8139 = vadd.f32 %v8024, 1.0
      %v8140 = vadd.f32 %v8026, 1.0
      %v8141 = vadd.f32 %v8028, 1.0
      %v8142 = vadd.f32 %v8030, 1.0
      %v8143 = vadd.f32 %v8032, 1.0
      %v8144 = vadd.f32 %v8034, 1.0
      %v8145 = vadd.f32 %v8036, 1.0
      %v8146 = vadd.f32 %v8038, 1.0
      %v8147 = vadd.f32 %v8040, 1.0
      %v8148 = vadd.f32 %v8042, 1.0
      %v8149 = vadd.f32 %v8044, 1.0
      %v8150 = vadd.f32 %v8046, 1.0
      %v8151 = vadd.f32 %v8048, 1.0
      %v8152 = vadd.f32 %v8050, 1.0
      %v8153 = vadd.f32 %v8052, 1.0
      %v8154 = vadd.f32 %v8054, 1.0
      %v8155 = vadd.f32 %v8056, 1.0
      %v8156 = vadd.f32 %v8058, 1.0
      %v8157 = vadd.f32 %v8060, 1.0
      %v8158 = vadd.f32 %v8062, 1.0
      %v8159 = vadd.f32 %v8064, 1.0
      %v8160 = vadd.f32 %v8066, 1.0
      %v8161 = vadd.f32 %v8068, 1.0
      %v8162 = vadd.f32 %v8070, 1.0
      %v8163 = vadd.f32 %v8072, 1.0
      %v8164 = vadd.f32 %v8074, 1.0
      %v8165 = vadd.f32 %v8076, 1.0
      %v8166 = vadd.f32 %v8078, 1.0
      %v8167 = vadd.f32 %v8080, 1.0
      %v8168 = vadd.f32 %v8082, 1.0
      %v8169 = vadd.f32 %v8084, 1.0
      %v8170 = vadd.f32 %v8086, 1.0
      %v8171 = vadd.f32 %v8088, 1.0
      %v8172 = vadd.f32 %v8090, 1.0
      %v8173 = vadd.f32 %v8092, 1.0
      %v8174 = vadd.f32 %v8094, 1.0
      %v8175 = vadd.f32 %v8096, 1.0
      %v8176 = vadd.f32 %v8098, 1.0
      %v8177 = vadd.f32 %v8100, 1.0
      %v8178 = vadd.f32 %v8102, 1.0
      %v8179 = vadd.f32 %v8104, 1.0
      %v8180 = vadd.f32 %v8106, 1.0
      %v8181 = vadd.f32 %v8108, 1.0
      %v8182 = vadd.f32 %v8110, 1.0
      %v8183 = vadd.f32 %v8112, 1.0
      %v8184 = vadd.f32 %v8114, 1.0
      %v8185 = vadd.f32 %v8116, 1.0
      %v8186 = vadd.f32 %v8118, 1.0
      %v8187 = vadd.f32 %v8120, 1.0
      %v8188 = vadd.f32 %v8122, 1.0
      %v8189 = vadd.f32 %v8124, 1.0
      %v8190 = vadd.f32 %v8126, 1.0
      %v8191 = vrcp.pop %v8127
      %v8192 = vmul.f32 %v8127, %v8191
      %v8193 = vsub.f32 1.0, %v8192
      %v8194 = vmul.f32 %v8191, %v8193
      %v8195 = vadd.f32 %v8191, %v8194
      %vm8196 = vweird.f32 %v8127
      %vm8197 = vweird.f32 %v8191
      %vm8198 = vmor %vm8196, %vm8197
      %v8199 = vsel %vm8198, %v8191, %v8195
      %v8200 = vand.u32 2147483647, %v8127
      %vm8201 = vcmp.eq.f32.partialorder %v8200, 8.507059e+37
      %v8202 = vand.u32 %v8127, 2147483648
      %v8203 = vor.u32 1.1754944e-38, %v8202
      %v8204 = vsel %vm8201, %v8203, %v8199
      %v8205 = vmul.f32 1.0, %v8204
      %v8206 = vrcp.pop %v8128
      %v8207 = vmul.f32 %v8128, %v8206
      %v8208 = vsub.f32 1.0, %v8207
      %v8209 = vmul.f32 %v8206, %v8208
      %v8210 = vadd.f32 %v8206, %v8209
      %vm8211 = vweird.f32 %v8128
      %vm8212 = vweird.f32 %v8206
      %vm8213 = vmor %vm8211, %vm8212
      %v8214 = vsel %vm8213, %v8206, %v8210
      %v8215 = vand.u32 2147483647, %v8128
      %vm8216 = vcmp.eq.f32.partialorder %v8215, 8.507059e+37
      %v8217 = vand.u32 %v8128, 2147483648
      %v8218 = vor.u32 1.1754944e-38, %v8217
      %v8219 = vsel %vm8216, %v8218, %v8214
      %v8220 = vmul.f32 1.0, %v8219
      %v8221 = vrcp.pop %v8129
      %v8222 = vmul.f32 %v8129, %v8221
      %v8223 = vsub.f32 1.0, %v8222
      %v8224 = vmul.f32 %v8221, %v8223
      %v8225 = vadd.f32 %v8221, %v8224
      %vm8226 = vweird.f32 %v8129
      %vm8227 = vweird.f32 %v8221
      %vm8228 = vmor %vm8226, %vm8227
      %v8229 = vsel %vm8228, %v8221, %v8225
      %v8230 = vand.u32 2147483647, %v8129
      %vm8231 = vcmp.eq.f32.partialorder %v8230, 8.507059e+37
      %v8232 = vand.u32 %v8129, 2147483648
      %v8233 = vor.u32 1.1754944e-38, %v8232
      %v8234 = vsel %vm8231, %v8233, %v8229
      %v8235 = vmul.f32 1.0, %v8234
      %v8236 = vrcp.pop %v8130
      %v8237 = vmul.f32 %v8130, %v8236
      %v8238 = vsub.f32 1.0, %v8237
      %v8239 = vmul.f32 %v8236, %v8238
      %v8240 = vadd.f32 %v8236, %v8239
      %vm8241 = vweird.f32 %v8130
      %vm8242 = vweird.f32 %v8236
      %vm8243 = vmor %vm8241, %vm8242
      %v8244 = vsel %vm8243, %v8236, %v8240
      %v8245 = vand.u32 2147483647, %v8130
      %vm8246 = vcmp.eq.f32.partialorder %v8245, 8.507059e+37
      %v8247 = vand.u32 %v8130, 2147483648
      %v8248 = vor.u32 1.1754944e-38, %v8247
      %v8249 = vsel %vm8246, %v8248, %v8244
      %v8250 = vmul.f32 1.0, %v8249
      %v8251 = vrcp.pop %v8131
      %v8252 = vmul.f32 %v8131, %v8251
      %v8253 = vsub.f32 1.0, %v8252
      %v8254 = vmul.f32 %v8251, %v8253
      %v8255 = vadd.f32 %v8251, %v8254
      %vm8256 = vweird.f32 %v8131
      %vm8257 = vweird.f32 %v8251
      %vm8258 = vmor %vm8256, %vm8257
      %v8259 = vsel %vm8258, %v8251, %v8255
      %v8260 = vand.u32 2147483647, %v8131
      %vm8261 = vcmp.eq.f32.partialorder %v8260, 8.507059e+37
      %v8262 = vand.u32 %v8131, 2147483648
      %v8263 = vor.u32 1.1754944e-38, %v8262
      %v8264 = vsel %vm8261, %v8263, %v8259
      %v8265 = vmul.f32 1.0, %v8264
      %v8266 = vrcp.pop %v8132
      %v8267 = vmul.f32 %v8132, %v8266
      %v8268 = vsub.f32 1.0, %v8267
      %v8269 = vmul.f32 %v8266, %v8268
      %v8270 = vadd.f32 %v8266, %v8269
      %vm8271 = vweird.f32 %v8132
      %vm8272 = vweird.f32 %v8266
      %vm8273 = vmor %vm8271, %vm8272
      %v8274 = vsel %vm8273, %v8266, %v8270
      %v8275 = vand.u32 2147483647, %v8132
      %vm8276 = vcmp.eq.f32.partialorder %v8275, 8.507059e+37
      %v8277 = vand.u32 %v8132, 2147483648
      %v8278 = vor.u32 1.1754944e-38, %v8277
      %v8279 = vsel %vm8276, %v8278, %v8274
      %v8280 = vmul.f32 1.0, %v8279
      %v8281 = vrcp.pop %v8133
      %v8282 = vmul.f32 %v8133, %v8281
      %v8283 = vsub.f32 1.0, %v8282
      %v8284 = vmul.f32 %v8281, %v8283
      %v8285 = vadd.f32 %v8281, %v8284
      %vm8286 = vweird.f32 %v8133
      %vm8287 = vweird.f32 %v8281
      %vm8288 = vmor %vm8286, %vm8287
      %v8289 = vsel %vm8288, %v8281, %v8285
      %v8290 = vand.u32 2147483647, %v8133
      %vm8291 = vcmp.eq.f32.partialorder %v8290, 8.507059e+37
      %v8292 = vand.u32 %v8133, 2147483648
      %v8293 = vor.u32 1.1754944e-38, %v8292
      %v8294 = vsel %vm8291, %v8293, %v8289
      %v8295 = vmul.f32 1.0, %v8294
      %v8296 = vrcp.pop %v8134
      %v8297 = vmul.f32 %v8134, %v8296
      %v8298 = vsub.f32 1.0, %v8297
      %v8299 = vmul.f32 %v8296, %v8298
      %v8300 = vadd.f32 %v8296, %v8299
      %vm8301 = vweird.f32 %v8134
      %vm8302 = vweird.f32 %v8296
      %vm8303 = vmor %vm8301, %vm8302
      %v8304 = vsel %vm8303, %v8296, %v8300
      %v8305 = vand.u32 2147483647, %v8134
      %vm8306 = vcmp.eq.f32.partialorder %v8305, 8.507059e+37
      %v8307 = vand.u32 %v8134, 2147483648
      %v8308 = vor.u32 1.1754944e-38, %v8307
      %v8309 = vsel %vm8306, %v8308, %v8304
      %v8310 = vmul.f32 1.0, %v8309
      %v8311 = vrcp.pop %v8135
      %v8312 = vmul.f32 %v8135, %v8311
      %v8313 = vsub.f32 1.0, %v8312
      %v8314 = vmul.f32 %v8311, %v8313
      %v8315 = vadd.f32 %v8311, %v8314
      %vm8316 = vweird.f32 %v8135
      %vm8317 = vweird.f32 %v8311
      %vm8318 = vmor %vm8316, %vm8317
      %v8319 = vsel %vm8318, %v8311, %v8315
      %v8320 = vand.u32 2147483647, %v8135
      %vm8321 = vcmp.eq.f32.partialorder %v8320, 8.507059e+37
      %v8322 = vand.u32 %v8135, 2147483648
      %v8323 = vor.u32 1.1754944e-38, %v8322
      %v8324 = vsel %vm8321, %v8323, %v8319
      %v8325 = vmul.f32 1.0, %v8324
      %v8326 = vrcp.pop %v8136
      %v8327 = vmul.f32 %v8136, %v8326
      %v8328 = vsub.f32 1.0, %v8327
      %v8329 = vmul.f32 %v8326, %v8328
      %v8330 = vadd.f32 %v8326, %v8329
      %vm8331 = vweird.f32 %v8136
      %vm8332 = vweird.f32 %v8326
      %vm8333 = vmor %vm8331, %vm8332
      %v8334 = vsel %vm8333, %v8326, %v8330
      %v8335 = vand.u32 2147483647, %v8136
      %vm8336 = vcmp.eq.f32.partialorder %v8335, 8.507059e+37
      %v8337 = vand.u32 %v8136, 2147483648
      %v8338 = vor.u32 1.1754944e-38, %v8337
      %v8339 = vsel %vm8336, %v8338, %v8334
      %v8340 = vmul.f32 1.0, %v8339
      %v8341 = vrcp.pop %v8137
      %v8342 = vmul.f32 %v8137, %v8341
      %v8343 = vsub.f32 1.0, %v8342
      %v8344 = vmul.f32 %v8341, %v8343
      %v8345 = vadd.f32 %v8341, %v8344
      %vm8346 = vweird.f32 %v8137
      %vm8347 = vweird.f32 %v8341
      %vm8348 = vmor %vm8346, %vm8347
      %v8349 = vsel %vm8348, %v8341, %v8345
      %v8350 = vand.u32 2147483647, %v8137
      %vm8351 = vcmp.eq.f32.partialorder %v8350, 8.507059e+37
      %v8352 = vand.u32 %v8137, 2147483648
      %v8353 = vor.u32 1.1754944e-38, %v8352
      %v8354 = vsel %vm8351, %v8353, %v8349
      %v8355 = vmul.f32 1.0, %v8354
      %v8356 = vrcp.pop %v8138
      %v8357 = vmul.f32 %v8138, %v8356
      %v8358 = vsub.f32 1.0, %v8357
      %v8359 = vmul.f32 %v8356, %v8358
      %v8360 = vadd.f32 %v8356, %v8359
      %vm8361 = vweird.f32 %v8138
      %vm8362 = vweird.f32 %v8356
      %vm8363 = vmor %vm8361, %vm8362
      %v8364 = vsel %vm8363, %v8356, %v8360
      %v8365 = vand.u32 2147483647, %v8138
      %vm8366 = vcmp.eq.f32.partialorder %v8365, 8.507059e+37
      %v8367 = vand.u32 %v8138, 2147483648
      %v8368 = vor.u32 1.1754944e-38, %v8367
      %v8369 = vsel %vm8366, %v8368, %v8364
      %v8370 = vmul.f32 1.0, %v8369
      %v8371 = vrcp.pop %v8139
      %v8372 = vmul.f32 %v8139, %v8371
      %v8373 = vsub.f32 1.0, %v8372
      %v8374 = vmul.f32 %v8371, %v8373
      %v8375 = vadd.f32 %v8371, %v8374
      %vm8376 = vweird.f32 %v8139
      %vm8377 = vweird.f32 %v8371
      %vm8378 = vmor %vm8376, %vm8377
      %v8379 = vsel %vm8378, %v8371, %v8375
      %v8380 = vand.u32 2147483647, %v8139
      %vm8381 = vcmp.eq.f32.partialorder %v8380, 8.507059e+37
      %v8382 = vand.u32 %v8139, 2147483648
      %v8383 = vor.u32 1.1754944e-38, %v8382
      %v8384 = vsel %vm8381, %v8383, %v8379
      %v8385 = vmul.f32 1.0, %v8384
      %v8386 = vrcp.pop %v8140
      %v8387 = vmul.f32 %v8140, %v8386
      %v8388 = vsub.f32 1.0, %v8387
      %v8389 = vmul.f32 %v8386, %v8388
      %v8390 = vadd.f32 %v8386, %v8389
      %vm8391 = vweird.f32 %v8140
      %vm8392 = vweird.f32 %v8386
      %vm8393 = vmor %vm8391, %vm8392
      %v8394 = vsel %vm8393, %v8386, %v8390
      %v8395 = vand.u32 2147483647, %v8140
      %vm8396 = vcmp.eq.f32.partialorder %v8395, 8.507059e+37
      %v8397 = vand.u32 %v8140, 2147483648
      %v8398 = vor.u32 1.1754944e-38, %v8397
      %v8399 = vsel %vm8396, %v8398, %v8394
      %v8400 = vmul.f32 1.0, %v8399
      %v8401 = vrcp.pop %v8141
      %v8402 = vmul.f32 %v8141, %v8401
      %v8403 = vsub.f32 1.0, %v8402
      %v8404 = vmul.f32 %v8401, %v8403
      %v8405 = vadd.f32 %v8401, %v8404
      %vm8406 = vweird.f32 %v8141
      %vm8407 = vweird.f32 %v8401
      %vm8408 = vmor %vm8406, %vm8407
      %v8409 = vsel %vm8408, %v8401, %v8405
      %v8410 = vand.u32 2147483647, %v8141
      %vm8411 = vcmp.eq.f32.partialorder %v8410, 8.507059e+37
      %v8412 = vand.u32 %v8141, 2147483648
      %v8413 = vor.u32 1.1754944e-38, %v8412
      %v8414 = vsel %vm8411, %v8413, %v8409
      %v8415 = vmul.f32 1.0, %v8414
      %v8416 = vrcp.pop %v8142
      %v8417 = vmul.f32 %v8142, %v8416
      %v8418 = vsub.f32 1.0, %v8417
      %v8419 = vmul.f32 %v8416, %v8418
      %v8420 = vadd.f32 %v8416, %v8419
      %vm8421 = vweird.f32 %v8142
      %vm8422 = vweird.f32 %v8416
      %vm8423 = vmor %vm8421, %vm8422
      %v8424 = vsel %vm8423, %v8416, %v8420
      %v8425 = vand.u32 2147483647, %v8142
      %vm8426 = vcmp.eq.f32.partialorder %v8425, 8.507059e+37
      %v8427 = vand.u32 %v8142, 2147483648
      %v8428 = vor.u32 1.1754944e-38, %v8427
      %v8429 = vsel %vm8426, %v8428, %v8424
      %v8430 = vmul.f32 1.0, %v8429
      %v8431 = vrcp.pop %v8143
      %v8432 = vmul.f32 %v8143, %v8431
      %v8433 = vsub.f32 1.0, %v8432
      %v8434 = vmul.f32 %v8431, %v8433
      %v8435 = vadd.f32 %v8431, %v8434
      %vm8436 = vweird.f32 %v8143
      %vm8437 = vweird.f32 %v8431
      %vm8438 = vmor %vm8436, %vm8437
      %v8439 = vsel %vm8438, %v8431, %v8435
      %v8440 = vand.u32 2147483647, %v8143
      %vm8441 = vcmp.eq.f32.partialorder %v8440, 8.507059e+37
      %v8442 = vand.u32 %v8143, 2147483648
      %v8443 = vor.u32 1.1754944e-38, %v8442
      %v8444 = vsel %vm8441, %v8443, %v8439
      %v8445 = vmul.f32 1.0, %v8444
      %v8446 = vrcp.pop %v8144
      %v8447 = vmul.f32 %v8144, %v8446
      %v8448 = vsub.f32 1.0, %v8447
      %v8449 = vmul.f32 %v8446, %v8448
      %v8450 = vadd.f32 %v8446, %v8449
      %vm8451 = vweird.f32 %v8144
      %vm8452 = vweird.f32 %v8446
      %vm8453 = vmor %vm8451, %vm8452
      %v8454 = vsel %vm8453, %v8446, %v8450
      %v8455 = vand.u32 2147483647, %v8144
      %vm8456 = vcmp.eq.f32.partialorder %v8455, 8.507059e+37
      %v8457 = vand.u32 %v8144, 2147483648
      %v8458 = vor.u32 1.1754944e-38, %v8457
      %v8459 = vsel %vm8456, %v8458, %v8454
      %v8460 = vmul.f32 1.0, %v8459
      %v8461 = vrcp.pop %v8145
      %v8462 = vmul.f32 %v8145, %v8461
      %v8463 = vsub.f32 1.0, %v8462
      %v8464 = vmul.f32 %v8461, %v8463
      %v8465 = vadd.f32 %v8461, %v8464
      %vm8466 = vweird.f32 %v8145
      %vm8467 = vweird.f32 %v8461
      %vm8468 = vmor %vm8466, %vm8467
      %v8469 = vsel %vm8468, %v8461, %v8465
      %v8470 = vand.u32 2147483647, %v8145
      %vm8471 = vcmp.eq.f32.partialorder %v8470, 8.507059e+37
      %v8472 = vand.u32 %v8145, 2147483648
      %v8473 = vor.u32 1.1754944e-38, %v8472
      %v8474 = vsel %vm8471, %v8473, %v8469
      %v8475 = vmul.f32 1.0, %v8474
      %v8476 = vrcp.pop %v8146
      %v8477 = vmul.f32 %v8146, %v8476
      %v8478 = vsub.f32 1.0, %v8477
      %v8479 = vmul.f32 %v8476, %v8478
      %v8480 = vadd.f32 %v8476, %v8479
      %vm8481 = vweird.f32 %v8146
      %vm8482 = vweird.f32 %v8476
      %vm8483 = vmor %vm8481, %vm8482
      %v8484 = vsel %vm8483, %v8476, %v8480
      %v8485 = vand.u32 2147483647, %v8146
      %vm8486 = vcmp.eq.f32.partialorder %v8485, 8.507059e+37
      %v8487 = vand.u32 %v8146, 2147483648
      %v8488 = vor.u32 1.1754944e-38, %v8487
      %v8489 = vsel %vm8486, %v8488, %v8484
      %v8490 = vmul.f32 1.0, %v8489
      %v8491 = vrcp.pop %v8147
      %v8492 = vmul.f32 %v8147, %v8491
      %v8493 = vsub.f32 1.0, %v8492
      %v8494 = vmul.f32 %v8491, %v8493
      %v8495 = vadd.f32 %v8491, %v8494
      %vm8496 = vweird.f32 %v8147
      %vm8497 = vweird.f32 %v8491
      %vm8498 = vmor %vm8496, %vm8497
      %v8499 = vsel %vm8498, %v8491, %v8495
      %v8500 = vand.u32 2147483647, %v8147
      %vm8501 = vcmp.eq.f32.partialorder %v8500, 8.507059e+37
      %v8502 = vand.u32 %v8147, 2147483648
      %v8503 = vor.u32 1.1754944e-38, %v8502
      %v8504 = vsel %vm8501, %v8503, %v8499
      %v8505 = vmul.f32 1.0, %v8504
      %v8506 = vrcp.pop %v8148
      %v8507 = vmul.f32 %v8148, %v8506
      %v8508 = vsub.f32 1.0, %v8507
      %v8509 = vmul.f32 %v8506, %v8508
      %v8510 = vadd.f32 %v8506, %v8509
      %vm8511 = vweird.f32 %v8148
      %vm8512 = vweird.f32 %v8506
      %vm8513 = vmor %vm8511, %vm8512
      %v8514 = vsel %vm8513, %v8506, %v8510
      %v8515 = vand.u32 2147483647, %v8148
      %vm8516 = vcmp.eq.f32.partialorder %v8515, 8.507059e+37
      %v8517 = vand.u32 %v8148, 2147483648
      %v8518 = vor.u32 1.1754944e-38, %v8517
      %v8519 = vsel %vm8516, %v8518, %v8514
      %v8520 = vmul.f32 1.0, %v8519
      %v8521 = vrcp.pop %v8149
      %v8522 = vmul.f32 %v8149, %v8521
      %v8523 = vsub.f32 1.0, %v8522
      %v8524 = vmul.f32 %v8521, %v8523
      %v8525 = vadd.f32 %v8521, %v8524
      %vm8526 = vweird.f32 %v8149
      %vm8527 = vweird.f32 %v8521
      %vm8528 = vmor %vm8526, %vm8527
      %v8529 = vsel %vm8528, %v8521, %v8525
      %v8530 = vand.u32 2147483647, %v8149
      %vm8531 = vcmp.eq.f32.partialorder %v8530, 8.507059e+37
      %v8532 = vand.u32 %v8149, 2147483648
      %v8533 = vor.u32 1.1754944e-38, %v8532
      %v8534 = vsel %vm8531, %v8533, %v8529
      %v8535 = vmul.f32 1.0, %v8534
      %v8536 = vrcp.pop %v8150
      %v8537 = vmul.f32 %v8150, %v8536
      %v8538 = vsub.f32 1.0, %v8537
      %v8539 = vmul.f32 %v8536, %v8538
      %v8540 = vadd.f32 %v8536, %v8539
      %vm8541 = vweird.f32 %v8150
      %vm8542 = vweird.f32 %v8536
      %vm8543 = vmor %vm8541, %vm8542
      %v8544 = vsel %vm8543, %v8536, %v8540
      %v8545 = vand.u32 2147483647, %v8150
      %vm8546 = vcmp.eq.f32.partialorder %v8545, 8.507059e+37
      %v8547 = vand.u32 %v8150, 2147483648
      %v8548 = vor.u32 1.1754944e-38, %v8547
      %v8549 = vsel %vm8546, %v8548, %v8544
      %v8550 = vmul.f32 1.0, %v8549
      %v8551 = vrcp.pop %v8151
      %v8552 = vmul.f32 %v8151, %v8551
      %v8553 = vsub.f32 1.0, %v8552
      %v8554 = vmul.f32 %v8551, %v8553
      %v8555 = vadd.f32 %v8551, %v8554
      %vm8556 = vweird.f32 %v8151
      %vm8557 = vweird.f32 %v8551
      %vm8558 = vmor %vm8556, %vm8557
      %v8559 = vsel %vm8558, %v8551, %v8555
      %v8560 = vand.u32 2147483647, %v8151
      %vm8561 = vcmp.eq.f32.partialorder %v8560, 8.507059e+37
      %v8562 = vand.u32 %v8151, 2147483648
      %v8563 = vor.u32 1.1754944e-38, %v8562
      %v8564 = vsel %vm8561, %v8563, %v8559
      %v8565 = vmul.f32 1.0, %v8564
      %v8566 = vrcp.pop %v8152
      %v8567 = vmul.f32 %v8152, %v8566
      %v8568 = vsub.f32 1.0, %v8567
      %v8569 = vmul.f32 %v8566, %v8568
      %v8570 = vadd.f32 %v8566, %v8569
      %vm8571 = vweird.f32 %v8152
      %vm8572 = vweird.f32 %v8566
      %vm8573 = vmor %vm8571, %vm8572
      %v8574 = vsel %vm8573, %v8566, %v8570
      %v8575 = vand.u32 2147483647, %v8152
      %vm8576 = vcmp.eq.f32.partialorder %v8575, 8.507059e+37
      %v8577 = vand.u32 %v8152, 2147483648
      %v8578 = vor.u32 1.1754944e-38, %v8577
      %v8579 = vsel %vm8576, %v8578, %v8574
      %v8580 = vmul.f32 1.0, %v8579
      %v8581 = vrcp.pop %v8153
      %v8582 = vmul.f32 %v8153, %v8581
      %v8583 = vsub.f32 1.0, %v8582
      %v8584 = vmul.f32 %v8581, %v8583
      %v8585 = vadd.f32 %v8581, %v8584
      %vm8586 = vweird.f32 %v8153
      %vm8587 = vweird.f32 %v8581
      %vm8588 = vmor %vm8586, %vm8587
      %v8589 = vsel %vm8588, %v8581, %v8585
      %v8590 = vand.u32 2147483647, %v8153
      %vm8591 = vcmp.eq.f32.partialorder %v8590, 8.507059e+37
      %v8592 = vand.u32 %v8153, 2147483648
      %v8593 = vor.u32 1.1754944e-38, %v8592
      %v8594 = vsel %vm8591, %v8593, %v8589
      %v8595 = vmul.f32 1.0, %v8594
      %v8596 = vrcp.pop %v8154
      %v8597 = vmul.f32 %v8154, %v8596
      %v8598 = vsub.f32 1.0, %v8597
      %v8599 = vmul.f32 %v8596, %v8598
      %v8600 = vadd.f32 %v8596, %v8599
      %vm8601 = vweird.f32 %v8154
      %vm8602 = vweird.f32 %v8596
      %vm8603 = vmor %vm8601, %vm8602
      %v8604 = vsel %vm8603, %v8596, %v8600
      %v8605 = vand.u32 2147483647, %v8154
      %vm8606 = vcmp.eq.f32.partialorder %v8605, 8.507059e+37
      %v8607 = vand.u32 %v8154, 2147483648
      %v8608 = vor.u32 1.1754944e-38, %v8607
      %v8609 = vsel %vm8606, %v8608, %v8604
      %v8610 = vmul.f32 1.0, %v8609
      %v8611 = vrcp.pop %v8155
      %v8612 = vmul.f32 %v8155, %v8611
      %v8613 = vsub.f32 1.0, %v8612
      %v8614 = vmul.f32 %v8611, %v8613
      %v8615 = vadd.f32 %v8611, %v8614
      %vm8616 = vweird.f32 %v8155
      %vm8617 = vweird.f32 %v8611
      %vm8618 = vmor %vm8616, %vm8617
      %v8619 = vsel %vm8618, %v8611, %v8615
      %v8620 = vand.u32 2147483647, %v8155
      %vm8621 = vcmp.eq.f32.partialorder %v8620, 8.507059e+37
      %v8622 = vand.u32 %v8155, 2147483648
      %v8623 = vor.u32 1.1754944e-38, %v8622
      %v8624 = vsel %vm8621, %v8623, %v8619
      %v8625 = vmul.f32 1.0, %v8624
      %v8626 = vrcp.pop %v8156
      %v8627 = vmul.f32 %v8156, %v8626
      %v8628 = vsub.f32 1.0, %v8627
      %v8629 = vmul.f32 %v8626, %v8628
      %v8630 = vadd.f32 %v8626, %v8629
      %vm8631 = vweird.f32 %v8156
      %vm8632 = vweird.f32 %v8626
      %vm8633 = vmor %vm8631, %vm8632
      %v8634 = vsel %vm8633, %v8626, %v8630
      %v8635 = vand.u32 2147483647, %v8156
      %vm8636 = vcmp.eq.f32.partialorder %v8635, 8.507059e+37
      %v8637 = vand.u32 %v8156, 2147483648
      %v8638 = vor.u32 1.1754944e-38, %v8637
      %v8639 = vsel %vm8636, %v8638, %v8634
      %v8640 = vmul.f32 1.0, %v8639
      %v8641 = vrcp.pop %v8157
      %v8642 = vmul.f32 %v8157, %v8641
      %v8643 = vsub.f32 1.0, %v8642
      %v8644 = vmul.f32 %v8641, %v8643
      %v8645 = vadd.f32 %v8641, %v8644
      %vm8646 = vweird.f32 %v8157
      %vm8647 = vweird.f32 %v8641
      %vm8648 = vmor %vm8646, %vm8647
      %v8649 = vsel %vm8648, %v8641, %v8645
      %v8650 = vand.u32 2147483647, %v8157
      %vm8651 = vcmp.eq.f32.partialorder %v8650, 8.507059e+37
      %v8652 = vand.u32 %v8157, 2147483648
      %v8653 = vor.u32 1.1754944e-38, %v8652
      %v8654 = vsel %vm8651, %v8653, %v8649
      %v8655 = vmul.f32 1.0, %v8654
      %v8656 = vrcp.pop %v8158
      %v8657 = vmul.f32 %v8158, %v8656
      %v8658 = vsub.f32 1.0, %v8657
      %v8659 = vmul.f32 %v8656, %v8658
      %v8660 = vadd.f32 %v8656, %v8659
      %vm8661 = vweird.f32 %v8158
      %vm8662 = vweird.f32 %v8656
      %vm8663 = vmor %vm8661, %vm8662
      %v8664 = vsel %vm8663, %v8656, %v8660
      %v8665 = vand.u32 2147483647, %v8158
      %vm8666 = vcmp.eq.f32.partialorder %v8665, 8.507059e+37
      %v8667 = vand.u32 %v8158, 2147483648
      %v8668 = vor.u32 1.1754944e-38, %v8667
      %v8669 = vsel %vm8666, %v8668, %v8664
      %v8670 = vmul.f32 1.0, %v8669
      %v8671 = vrcp.pop %v8159
      %v8672 = vmul.f32 %v8159, %v8671
      %v8673 = vsub.f32 1.0, %v8672
      %v8674 = vmul.f32 %v8671, %v8673
      %v8675 = vadd.f32 %v8671, %v8674
      %vm8676 = vweird.f32 %v8159
      %vm8677 = vweird.f32 %v8671
      %vm8678 = vmor %vm8676, %vm8677
      %v8679 = vsel %vm8678, %v8671, %v8675
      %v8680 = vand.u32 2147483647, %v8159
      %vm8681 = vcmp.eq.f32.partialorder %v8680, 8.507059e+37
      %v8682 = vand.u32 %v8159, 2147483648
      %v8683 = vor.u32 1.1754944e-38, %v8682
      %v8684 = vsel %vm8681, %v8683, %v8679
      %v8685 = vmul.f32 1.0, %v8684
      %v8686 = vrcp.pop %v8160
      %v8687 = vmul.f32 %v8160, %v8686
      %v8688 = vsub.f32 1.0, %v8687
      %v8689 = vmul.f32 %v8686, %v8688
      %v8690 = vadd.f32 %v8686, %v8689
      %vm8691 = vweird.f32 %v8160
      %vm8692 = vweird.f32 %v8686
      %vm8693 = vmor %vm8691, %vm8692
      %v8694 = vsel %vm8693, %v8686, %v8690
      %v8695 = vand.u32 2147483647, %v8160
      %vm8696 = vcmp.eq.f32.partialorder %v8695, 8.507059e+37
      %v8697 = vand.u32 %v8160, 2147483648
      %v8698 = vor.u32 1.1754944e-38, %v8697
      %v8699 = vsel %vm8696, %v8698, %v8694
      %v8700 = vmul.f32 1.0, %v8699
      %v8701 = vrcp.pop %v8161
      %v8702 = vmul.f32 %v8161, %v8701
      %v8703 = vsub.f32 1.0, %v8702
      %v8704 = vmul.f32 %v8701, %v8703
      %v8705 = vadd.f32 %v8701, %v8704
      %vm8706 = vweird.f32 %v8161
      %vm8707 = vweird.f32 %v8701
      %vm8708 = vmor %vm8706, %vm8707
      %v8709 = vsel %vm8708, %v8701, %v8705
      %v8710 = vand.u32 2147483647, %v8161
      %vm8711 = vcmp.eq.f32.partialorder %v8710, 8.507059e+37
      %v8712 = vand.u32 %v8161, 2147483648
      %v8713 = vor.u32 1.1754944e-38, %v8712
      %v8714 = vsel %vm8711, %v8713, %v8709
      %v8715 = vmul.f32 1.0, %v8714
      %v8716 = vrcp.pop %v8162
      %v8717 = vmul.f32 %v8162, %v8716
      %v8718 = vsub.f32 1.0, %v8717
      %v8719 = vmul.f32 %v8716, %v8718
      %v8720 = vadd.f32 %v8716, %v8719
      %vm8721 = vweird.f32 %v8162
      %vm8722 = vweird.f32 %v8716
      %vm8723 = vmor %vm8721, %vm8722
      %v8724 = vsel %vm8723, %v8716, %v8720
      %v8725 = vand.u32 2147483647, %v8162
      %vm8726 = vcmp.eq.f32.partialorder %v8725, 8.507059e+37
      %v8727 = vand.u32 %v8162, 2147483648
      %v8728 = vor.u32 1.1754944e-38, %v8727
      %v8729 = vsel %vm8726, %v8728, %v8724
      %v8730 = vmul.f32 1.0, %v8729
      %v8731 = vrcp.pop %v8163
      %v8732 = vmul.f32 %v8163, %v8731
      %v8733 = vsub.f32 1.0, %v8732
      %v8734 = vmul.f32 %v8731, %v8733
      %v8735 = vadd.f32 %v8731, %v8734
      %vm8736 = vweird.f32 %v8163
      %vm8737 = vweird.f32 %v8731
      %vm8738 = vmor %vm8736, %vm8737
      %v8739 = vsel %vm8738, %v8731, %v8735
      %v8740 = vand.u32 2147483647, %v8163
      %vm8741 = vcmp.eq.f32.partialorder %v8740, 8.507059e+37
      %v8742 = vand.u32 %v8163, 2147483648
      %v8743 = vor.u32 1.1754944e-38, %v8742
      %v8744 = vsel %vm8741, %v8743, %v8739
      %v8745 = vmul.f32 1.0, %v8744
      %v8746 = vrcp.pop %v8164
      %v8747 = vmul.f32 %v8164, %v8746
      %v8748 = vsub.f32 1.0, %v8747
      %v8749 = vmul.f32 %v8746, %v8748
      %v8750 = vadd.f32 %v8746, %v8749
      %vm8751 = vweird.f32 %v8164
      %vm8752 = vweird.f32 %v8746
      %vm8753 = vmor %vm8751, %vm8752
      %v8754 = vsel %vm8753, %v8746, %v8750
      %v8755 = vand.u32 2147483647, %v8164
      %vm8756 = vcmp.eq.f32.partialorder %v8755, 8.507059e+37
      %v8757 = vand.u32 %v8164, 2147483648
      %v8758 = vor.u32 1.1754944e-38, %v8757
      %v8759 = vsel %vm8756, %v8758, %v8754
      %v8760 = vmul.f32 1.0, %v8759
      %v8761 = vrcp.pop %v8165
      %v8762 = vmul.f32 %v8165, %v8761
      %v8763 = vsub.f32 1.0, %v8762
      %v8764 = vmul.f32 %v8761, %v8763
      %v8765 = vadd.f32 %v8761, %v8764
      %vm8766 = vweird.f32 %v8165
      %vm8767 = vweird.f32 %v8761
      %vm8768 = vmor %vm8766, %vm8767
      %v8769 = vsel %vm8768, %v8761, %v8765
      %v8770 = vand.u32 2147483647, %v8165
      %vm8771 = vcmp.eq.f32.partialorder %v8770, 8.507059e+37
      %v8772 = vand.u32 %v8165, 2147483648
      %v8773 = vor.u32 1.1754944e-38, %v8772
      %v8774 = vsel %vm8771, %v8773, %v8769
      %v8775 = vmul.f32 1.0, %v8774
      %v8776 = vrcp.pop %v8166
      %v8777 = vmul.f32 %v8166, %v8776
      %v8778 = vsub.f32 1.0, %v8777
      %v8779 = vmul.f32 %v8776, %v8778
      %v8780 = vadd.f32 %v8776, %v8779
      %vm8781 = vweird.f32 %v8166
      %vm8782 = vweird.f32 %v8776
      %vm8783 = vmor %vm8781, %vm8782
      %v8784 = vsel %vm8783, %v8776, %v8780
      %v8785 = vand.u32 2147483647, %v8166
      %vm8786 = vcmp.eq.f32.partialorder %v8785, 8.507059e+37
      %v8787 = vand.u32 %v8166, 2147483648
      %v8788 = vor.u32 1.1754944e-38, %v8787
      %v8789 = vsel %vm8786, %v8788, %v8784
      %v8790 = vmul.f32 1.0, %v8789
      %v8791 = vrcp.pop %v8167
      %v8792 = vmul.f32 %v8167, %v8791
      %v8793 = vsub.f32 1.0, %v8792
      %v8794 = vmul.f32 %v8791, %v8793
      %v8795 = vadd.f32 %v8791, %v8794
      %vm8796 = vweird.f32 %v8167
      %vm8797 = vweird.f32 %v8791
      %vm8798 = vmor %vm8796, %vm8797
      %v8799 = vsel %vm8798, %v8791, %v8795
      %v8800 = vand.u32 2147483647, %v8167
      %vm8801 = vcmp.eq.f32.partialorder %v8800, 8.507059e+37
      %v8802 = vand.u32 %v8167, 2147483648
      %v8803 = vor.u32 1.1754944e-38, %v8802
      %v8804 = vsel %vm8801, %v8803, %v8799
      %v8805 = vmul.f32 1.0, %v8804
      %v8806 = vrcp.pop %v8168
      %v8807 = vmul.f32 %v8168, %v8806
      %v8808 = vsub.f32 1.0, %v8807
      %v8809 = vmul.f32 %v8806, %v8808
      %v8810 = vadd.f32 %v8806, %v8809
      %vm8811 = vweird.f32 %v8168
      %vm8812 = vweird.f32 %v8806
      %vm8813 = vmor %vm8811, %vm8812
      %v8814 = vsel %vm8813, %v8806, %v8810
      %v8815 = vand.u32 2147483647, %v8168
      %vm8816 = vcmp.eq.f32.partialorder %v8815, 8.507059e+37
      %v8817 = vand.u32 %v8168, 2147483648
      %v8818 = vor.u32 1.1754944e-38, %v8817
      %v8819 = vsel %vm8816, %v8818, %v8814
      %v8820 = vmul.f32 1.0, %v8819
      %v8821 = vrcp.pop %v8169
      %v8822 = vmul.f32 %v8169, %v8821
      %v8823 = vsub.f32 1.0, %v8822
      %v8824 = vmul.f32 %v8821, %v8823
      %v8825 = vadd.f32 %v8821, %v8824
      %vm8826 = vweird.f32 %v8169
      %vm8827 = vweird.f32 %v8821
      %vm8828 = vmor %vm8826, %vm8827
      %v8829 = vsel %vm8828, %v8821, %v8825
      %v8830 = vand.u32 2147483647, %v8169
      %vm8831 = vcmp.eq.f32.partialorder %v8830, 8.507059e+37
      %v8832 = vand.u32 %v8169, 2147483648
      %v8833 = vor.u32 1.1754944e-38, %v8832
      %v8834 = vsel %vm8831, %v8833, %v8829
      %v8835 = vmul.f32 1.0, %v8834
      %v8836 = vrcp.pop %v8170
      %v8837 = vmul.f32 %v8170, %v8836
      %v8838 = vsub.f32 1.0, %v8837
      %v8839 = vmul.f32 %v8836, %v8838
      %v8840 = vadd.f32 %v8836, %v8839
      %vm8841 = vweird.f32 %v8170
      %vm8842 = vweird.f32 %v8836
      %vm8843 = vmor %vm8841, %vm8842
      %v8844 = vsel %vm8843, %v8836, %v8840
      %v8845 = vand.u32 2147483647, %v8170
      %vm8846 = vcmp.eq.f32.partialorder %v8845, 8.507059e+37
      %v8847 = vand.u32 %v8170, 2147483648
      %v8848 = vor.u32 1.1754944e-38, %v8847
      %v8849 = vsel %vm8846, %v8848, %v8844
      %v8850 = vmul.f32 1.0, %v8849
      %v8851 = vrcp.pop %v8171
      %v8852 = vmul.f32 %v8171, %v8851
      %v8853 = vsub.f32 1.0, %v8852
      %v8854 = vmul.f32 %v8851, %v8853
      %v8855 = vadd.f32 %v8851, %v8854
      %vm8856 = vweird.f32 %v8171
      %vm8857 = vweird.f32 %v8851
      %vm8858 = vmor %vm8856, %vm8857
      %v8859 = vsel %vm8858, %v8851, %v8855
      %v8860 = vand.u32 2147483647, %v8171
      %vm8861 = vcmp.eq.f32.partialorder %v8860, 8.507059e+37
      %v8862 = vand.u32 %v8171, 2147483648
      %v8863 = vor.u32 1.1754944e-38, %v8862
      %v8864 = vsel %vm8861, %v8863, %v8859
      %v8865 = vmul.f32 1.0, %v8864
      %v8866 = vrcp.pop %v8172
      %v8867 = vmul.f32 %v8172, %v8866
      %v8868 = vsub.f32 1.0, %v8867
      %v8869 = vmul.f32 %v8866, %v8868
      %v8870 = vadd.f32 %v8866, %v8869
      %vm8871 = vweird.f32 %v8172
      %vm8872 = vweird.f32 %v8866
      %vm8873 = vmor %vm8871, %vm8872
      %v8874 = vsel %vm8873, %v8866, %v8870
      %v8875 = vand.u32 2147483647, %v8172
      %vm8876 = vcmp.eq.f32.partialorder %v8875, 8.507059e+37
      %v8877 = vand.u32 %v8172, 2147483648
      %v8878 = vor.u32 1.1754944e-38, %v8877
      %v8879 = vsel %vm8876, %v8878, %v8874
      %v8880 = vmul.f32 1.0, %v8879
      %v8881 = vrcp.pop %v8173
      %v8882 = vmul.f32 %v8173, %v8881
      %v8883 = vsub.f32 1.0, %v8882
      %v8884 = vmul.f32 %v8881, %v8883
      %v8885 = vadd.f32 %v8881, %v8884
      %vm8886 = vweird.f32 %v8173
      %vm8887 = vweird.f32 %v8881
      %vm8888 = vmor %vm8886, %vm8887
      %v8889 = vsel %vm8888, %v8881, %v8885
      %v8890 = vand.u32 2147483647, %v8173
      %vm8891 = vcmp.eq.f32.partialorder %v8890, 8.507059e+37
      %v8892 = vand.u32 %v8173, 2147483648
      %v8893 = vor.u32 1.1754944e-38, %v8892
      %v8894 = vsel %vm8891, %v8893, %v8889
      %v8895 = vmul.f32 1.0, %v8894
      %v8896 = vrcp.pop %v8174
      %v8897 = vmul.f32 %v8174, %v8896
      %v8898 = vsub.f32 1.0, %v8897
      %v8899 = vmul.f32 %v8896, %v8898
      %v8900 = vadd.f32 %v8896, %v8899
      %vm8901 = vweird.f32 %v8174
      %vm8902 = vweird.f32 %v8896
      %vm8903 = vmor %vm8901, %vm8902
      %v8904 = vsel %vm8903, %v8896, %v8900
      %v8905 = vand.u32 2147483647, %v8174
      %vm8906 = vcmp.eq.f32.partialorder %v8905, 8.507059e+37
      %v8907 = vand.u32 %v8174, 2147483648
      %v8908 = vor.u32 1.1754944e-38, %v8907
      %v8909 = vsel %vm8906, %v8908, %v8904
      %v8910 = vmul.f32 1.0, %v8909
      %v8911 = vrcp.pop %v8175
      %v8912 = vmul.f32 %v8175, %v8911
      %v8913 = vsub.f32 1.0, %v8912
      %v8914 = vmul.f32 %v8911, %v8913
      %v8915 = vadd.f32 %v8911, %v8914
      %vm8916 = vweird.f32 %v8175
      %vm8917 = vweird.f32 %v8911
      %vm8918 = vmor %vm8916, %vm8917
      %v8919 = vsel %vm8918, %v8911, %v8915
      %v8920 = vand.u32 2147483647, %v8175
      %vm8921 = vcmp.eq.f32.partialorder %v8920, 8.507059e+37
      %v8922 = vand.u32 %v8175, 2147483648
      %v8923 = vor.u32 1.1754944e-38, %v8922
      %v8924 = vsel %vm8921, %v8923, %v8919
      %v8925 = vmul.f32 1.0, %v8924
      %v8926 = vrcp.pop %v8176
      %v8927 = vmul.f32 %v8176, %v8926
      %v8928 = vsub.f32 1.0, %v8927
      %v8929 = vmul.f32 %v8926, %v8928
      %v8930 = vadd.f32 %v8926, %v8929
      %vm8931 = vweird.f32 %v8176
      %vm8932 = vweird.f32 %v8926
      %vm8933 = vmor %vm8931, %vm8932
      %v8934 = vsel %vm8933, %v8926, %v8930
      %v8935 = vand.u32 2147483647, %v8176
      %vm8936 = vcmp.eq.f32.partialorder %v8935, 8.507059e+37
      %v8937 = vand.u32 %v8176, 2147483648
      %v8938 = vor.u32 1.1754944e-38, %v8937
      %v8939 = vsel %vm8936, %v8938, %v8934
      %v8940 = vmul.f32 1.0, %v8939
      %v8941 = vrcp.pop %v8177
      %v8942 = vmul.f32 %v8177, %v8941
      %v8943 = vsub.f32 1.0, %v8942
      %v8944 = vmul.f32 %v8941, %v8943
      %v8945 = vadd.f32 %v8941, %v8944
      %vm8946 = vweird.f32 %v8177
      %vm8947 = vweird.f32 %v8941
      %vm8948 = vmor %vm8946, %vm8947
      %v8949 = vsel %vm8948, %v8941, %v8945
      %v8950 = vand.u32 2147483647, %v8177
      %vm8951 = vcmp.eq.f32.partialorder %v8950, 8.507059e+37
      %v8952 = vand.u32 %v8177, 2147483648
      %v8953 = vor.u32 1.1754944e-38, %v8952
      %v8954 = vsel %vm8951, %v8953, %v8949
      %v8955 = vmul.f32 1.0, %v8954
      %v8956 = vrcp.pop %v8178
      %v8957 = vmul.f32 %v8178, %v8956
      %v8958 = vsub.f32 1.0, %v8957
      %v8959 = vmul.f32 %v8956, %v8958
      %v8960 = vadd.f32 %v8956, %v8959
      %vm8961 = vweird.f32 %v8178
      %vm8962 = vweird.f32 %v8956
      %vm8963 = vmor %vm8961, %vm8962
      %v8964 = vsel %vm8963, %v8956, %v8960
      %v8965 = vand.u32 2147483647, %v8178
      %vm8966 = vcmp.eq.f32.partialorder %v8965, 8.507059e+37
      %v8967 = vand.u32 %v8178, 2147483648
      %v8968 = vor.u32 1.1754944e-38, %v8967
      %v8969 = vsel %vm8966, %v8968, %v8964
      %v8970 = vmul.f32 1.0, %v8969
      %v8971 = vrcp.pop %v8179
      %v8972 = vmul.f32 %v8179, %v8971
      %v8973 = vsub.f32 1.0, %v8972
      %v8974 = vmul.f32 %v8971, %v8973
      %v8975 = vadd.f32 %v8971, %v8974
      %vm8976 = vweird.f32 %v8179
      %vm8977 = vweird.f32 %v8971
      %vm8978 = vmor %vm8976, %vm8977
      %v8979 = vsel %vm8978, %v8971, %v8975
      %v8980 = vand.u32 2147483647, %v8179
      %vm8981 = vcmp.eq.f32.partialorder %v8980, 8.507059e+37
      %v8982 = vand.u32 %v8179, 2147483648
      %v8983 = vor.u32 1.1754944e-38, %v8982
      %v8984 = vsel %vm8981, %v8983, %v8979
      %v8985 = vmul.f32 1.0, %v8984
      %v8986 = vrcp.pop %v8180
      %v8987 = vmul.f32 %v8180, %v8986
      %v8988 = vsub.f32 1.0, %v8987
      %v8989 = vmul.f32 %v8986, %v8988
      %v8990 = vadd.f32 %v8986, %v8989
      %vm8991 = vweird.f32 %v8180
      %vm8992 = vweird.f32 %v8986
      %vm8993 = vmor %vm8991, %vm8992
      %v8994 = vsel %vm8993, %v8986, %v8990
      %v8995 = vand.u32 2147483647, %v8180
      %vm8996 = vcmp.eq.f32.partialorder %v8995, 8.507059e+37
      %v8997 = vand.u32 %v8180, 2147483648
      %v8998 = vor.u32 1.1754944e-38, %v8997
      %v8999 = vsel %vm8996, %v8998, %v8994
      %v9000 = vmul.f32 1.0, %v8999
      %v9001 = vrcp.pop %v8181
      %v9002 = vmul.f32 %v8181, %v9001
      %v9003 = vsub.f32 1.0, %v9002
      %v9004 = vmul.f32 %v9001, %v9003
      %v9005 = vadd.f32 %v9001, %v9004
      %vm9006 = vweird.f32 %v8181
      %vm9007 = vweird.f32 %v9001
      %vm9008 = vmor %vm9006, %vm9007
      %v9009 = vsel %vm9008, %v9001, %v9005
      %v9010 = vand.u32 2147483647, %v8181
      %vm9011 = vcmp.eq.f32.partialorder %v9010, 8.507059e+37
      %v9012 = vand.u32 %v8181, 2147483648
      %v9013 = vor.u32 1.1754944e-38, %v9012
      %v9014 = vsel %vm9011, %v9013, %v9009
      %v9015 = vmul.f32 1.0, %v9014
      %v9016 = vrcp.pop %v8182
      %v9017 = vmul.f32 %v8182, %v9016
      %v9018 = vsub.f32 1.0, %v9017
      %v9019 = vmul.f32 %v9016, %v9018
      %v9020 = vadd.f32 %v9016, %v9019
      %vm9021 = vweird.f32 %v8182
      %vm9022 = vweird.f32 %v9016
      %vm9023 = vmor %vm9021, %vm9022
      %v9024 = vsel %vm9023, %v9016, %v9020
      %v9025 = vand.u32 2147483647, %v8182
      %vm9026 = vcmp.eq.f32.partialorder %v9025, 8.507059e+37
      %v9027 = vand.u32 %v8182, 2147483648
      %v9028 = vor.u32 1.1754944e-38, %v9027
      %v9029 = vsel %vm9026, %v9028, %v9024
      %v9030 = vmul.f32 1.0, %v9029
      %v9031 = vrcp.pop %v8183
      %v9032 = vmul.f32 %v8183, %v9031
      %v9033 = vsub.f32 1.0, %v9032
      %v9034 = vmul.f32 %v9031, %v9033
      %v9035 = vadd.f32 %v9031, %v9034
      %vm9036 = vweird.f32 %v8183
      %vm9037 = vweird.f32 %v9031
      %vm9038 = vmor %vm9036, %vm9037
      %v9039 = vsel %vm9038, %v9031, %v9035
      %v9040 = vand.u32 2147483647, %v8183
      %vm9041 = vcmp.eq.f32.partialorder %v9040, 8.507059e+37
      %v9042 = vand.u32 %v8183, 2147483648
      %v9043 = vor.u32 1.1754944e-38, %v9042
      %v9044 = vsel %vm9041, %v9043, %v9039
      %v9045 = vmul.f32 1.0, %v9044
      %v9046 = vrcp.pop %v8184
      %v9047 = vmul.f32 %v8184, %v9046
      %v9048 = vsub.f32 1.0, %v9047
      %v9049 = vmul.f32 %v9046, %v9048
      %v9050 = vadd.f32 %v9046, %v9049
      %vm9051 = vweird.f32 %v8184
      %vm9052 = vweird.f32 %v9046
      %vm9053 = vmor %vm9051, %vm9052
      %v9054 = vsel %vm9053, %v9046, %v9050
      %v9055 = vand.u32 2147483647, %v8184
      %vm9056 = vcmp.eq.f32.partialorder %v9055, 8.507059e+37
      %v9057 = vand.u32 %v8184, 2147483648
      %v9058 = vor.u32 1.1754944e-38, %v9057
      %v9059 = vsel %vm9056, %v9058, %v9054
      %v9060 = vmul.f32 1.0, %v9059
      %v9061 = vrcp.pop %v8185
      %v9062 = vmul.f32 %v8185, %v9061
      %v9063 = vsub.f32 1.0, %v9062
      %v9064 = vmul.f32 %v9061, %v9063
      %v9065 = vadd.f32 %v9061, %v9064
      %vm9066 = vweird.f32 %v8185
      %vm9067 = vweird.f32 %v9061
      %vm9068 = vmor %vm9066, %vm9067
      %v9069 = vsel %vm9068, %v9061, %v9065
      %v9070 = vand.u32 2147483647, %v8185
      %vm9071 = vcmp.eq.f32.partialorder %v9070, 8.507059e+37
      %v9072 = vand.u32 %v8185, 2147483648
      %v9073 = vor.u32 1.1754944e-38, %v9072
      %v9074 = vsel %vm9071, %v9073, %v9069
      %v9075 = vmul.f32 1.0, %v9074
      %v9076 = vrcp.pop %v8186
      %v9077 = vmul.f32 %v8186, %v9076
      %v9078 = vsub.f32 1.0, %v9077
      %v9079 = vmul.f32 %v9076, %v9078
      %v9080 = vadd.f32 %v9076, %v9079
      %vm9081 = vweird.f32 %v8186
      %vm9082 = vweird.f32 %v9076
      %vm9083 = vmor %vm9081, %vm9082
      %v9084 = vsel %vm9083, %v9076, %v9080
      %v9085 = vand.u32 2147483647, %v8186
      %vm9086 = vcmp.eq.f32.partialorder %v9085, 8.507059e+37
      %v9087 = vand.u32 %v8186, 2147483648
      %v9088 = vor.u32 1.1754944e-38, %v9087
      %v9089 = vsel %vm9086, %v9088, %v9084
      %v9090 = vmul.f32 1.0, %v9089
      %v9091 = vrcp.pop %v8187
      %v9092 = vmul.f32 %v8187, %v9091
      %v9093 = vsub.f32 1.0, %v9092
      %v9094 = vmul.f32 %v9091, %v9093
      %v9095 = vadd.f32 %v9091, %v9094
      %vm9096 = vweird.f32 %v8187
      %vm9097 = vweird.f32 %v9091
      %vm9098 = vmor %vm9096, %vm9097
      %v9099 = vsel %vm9098, %v9091, %v9095
      %v9100 = vand.u32 2147483647, %v8187
      %vm9101 = vcmp.eq.f32.partialorder %v9100, 8.507059e+37
      %v9102 = vand.u32 %v8187, 2147483648
      %v9103 = vor.u32 1.1754944e-38, %v9102
      %v9104 = vsel %vm9101, %v9103, %v9099
      %v9105 = vmul.f32 1.0, %v9104
      %v9106 = vrcp.pop %v8188
      %v9107 = vmul.f32 %v8188, %v9106
      %v9108 = vsub.f32 1.0, %v9107
      %v9109 = vmul.f32 %v9106, %v9108
      %v9110 = vadd.f32 %v9106, %v9109
      %vm9111 = vweird.f32 %v8188
      %vm9112 = vweird.f32 %v9106
      %vm9113 = vmor %vm9111, %vm9112
      %v9114 = vsel %vm9113, %v9106, %v9110
      %v9115 = vand.u32 2147483647, %v8188
      %vm9116 = vcmp.eq.f32.partialorder %v9115, 8.507059e+37
      %v9117 = vand.u32 %v8188, 2147483648
      %v9118 = vor.u32 1.1754944e-38, %v9117
      %v9119 = vsel %vm9116, %v9118, %v9114
      %v9120 = vmul.f32 1.0, %v9119
      %v9121 = vrcp.pop %v8189
      %v9122 = vmul.f32 %v8189, %v9121
      %v9123 = vsub.f32 1.0, %v9122
      %v9124 = vmul.f32 %v9121, %v9123
      %v9125 = vadd.f32 %v9121, %v9124
      %vm9126 = vweird.f32 %v8189
      %vm9127 = vweird.f32 %v9121
      %vm9128 = vmor %vm9126, %vm9127
      %v9129 = vsel %vm9128, %v9121, %v9125
      %v9130 = vand.u32 2147483647, %v8189
      %vm9131 = vcmp.eq.f32.partialorder %v9130, 8.507059e+37
      %v9132 = vand.u32 %v8189, 2147483648
      %v9133 = vor.u32 1.1754944e-38, %v9132
      %v9134 = vsel %vm9131, %v9133, %v9129
      %v9135 = vmul.f32 1.0, %v9134
      %v9136 = vrcp.pop %v8190
      %v9137 = vmul.f32 %v8190, %v9136
      %v9138 = vsub.f32 1.0, %v9137
      %v9139 = vmul.f32 %v9136, %v9138
      %v9140 = vadd.f32 %v9136, %v9139
      %vm9141 = vweird.f32 %v8190
      %vm9142 = vweird.f32 %v9136
      %vm9143 = vmor %vm9141, %vm9142
      %v9144 = vsel %vm9143, %v9136, %v9140
      %v9145 = vand.u32 2147483647, %v8190
      %vm9146 = vcmp.eq.f32.partialorder %v9145, 8.507059e+37
      %v9147 = vand.u32 %v8190, 2147483648
      %v9148 = vor.u32 1.1754944e-38, %v9147
      %v9149 = vsel %vm9146, %v9148, %v9144
      %v9150 = vmul.f32 1.0, %v9149
      %9151 = vst [vmem:[%s359] sm:$0xff] %v8205
      %9152 = vst [vmem:[%s359 + $0x8] sm:$0xff] %v8220
      %9153 = vst [vmem:[%s359 + $0x10] sm:$0xff] %v8235
      %9154 = vst [vmem:[%s359 + $0x18] sm:$0xff] %v8250
      %9155 = vst [vmem:[%s359 + $0x20] sm:$0xff] %v8265
      %9156 = vst [vmem:[%s359 + $0x28] sm:$0xff] %v8280
      %9157 = vst [vmem:[%s359 + $0x30] sm:$0xff] %v8295
      %9158 = vst [vmem:[%s359 + $0x38] sm:$0xff] %v8310
      %9159 = vst [vmem:[%s359 + $0x40] sm:$0xff] %v8325
      %9160 = vst [vmem:[%s359 + $0x48] sm:$0xff] %v8340
      %9161 = vst [vmem:[%s359 + $0x50] sm:$0xff] %v8355
      %9162 = vst [vmem:[%s359 + $0x58] sm:$0xff] %v8370
      %9163 = vst [vmem:[%s359 + $0x60] sm:$0xff] %v8385
      %9164 = vst [vmem:[%s359 + $0x68] sm:$0xff] %v8400
      %9165 = vst [vmem:[%s359 + $0x70] sm:$0xff] %v8415
      %9166 = vst [vmem:[%s359 + $0x78] sm:$0xff] %v8430
      %9167 = vst [vmem:[%s359 + $0x80] sm:$0xff] %v8445
      %9168 = vst [vmem:[%s359 + $0x88] sm:$0xff] %v8460
      %9169 = vst [vmem:[%s359 + $0x90] sm:$0xff] %v8475
      %9170 = vst [vmem:[%s359 + $0x98] sm:$0xff] %v8490
      %9171 = vst [vmem:[%s359 + $0xa0] sm:$0xff] %v8505
      %9172 = vst [vmem:[%s359 + $0xa8] sm:$0xff] %v8520
      %9173 = vst [vmem:[%s359 + $0xb0] sm:$0xff] %v8535
      %9174 = vst [vmem:[%s359 + $0xb8] sm:$0xff] %v8550
      %9175 = vst [vmem:[%s359 + $0xc0] sm:$0xff] %v8565
      %9176 = vst [vmem:[%s359 + $0xc8] sm:$0xff] %v8580
      %9177 = vst [vmem:[%s359 + $0xd0] sm:$0xff] %v8595
      %9178 = vst [vmem:[%s359 + $0xd8] sm:$0xff] %v8610
      %9179 = vst [vmem:[%s359 + $0xe0] sm:$0xff] %v8625
      %9180 = vst [vmem:[%s359 + $0xe8] sm:$0xff] %v8640
      %9181 = vst [vmem:[%s359 + $0xf0] sm:$0xff] %v8655
      %9182 = vst [vmem:[%s359 + $0xf8] sm:$0xff] %v8670
      %9183 = vst [vmem:[%s359 + $0x100] sm:$0xff] %v8685
      %9184 = vst [vmem:[%s359 + $0x108] sm:$0xff] %v8700
      %9185 = vst [vmem:[%s359 + $0x110] sm:$0xff] %v8715
      %9186 = vst [vmem:[%s359 + $0x118] sm:$0xff] %v8730
      %9187 = vst [vmem:[%s359 + $0x120] sm:$0xff] %v8745
      %9188 = vst [vmem:[%s359 + $0x128] sm:$0xff] %v8760
      %9189 = vst [vmem:[%s359 + $0x130] sm:$0xff] %v8775
      %9190 = vst [vmem:[%s359 + $0x138] sm:$0xff] %v8790
      %9191 = vst [vmem:[%s359 + $0x140] sm:$0xff] %v8805
      %9192 = vst [vmem:[%s359 + $0x148] sm:$0xff] %v8820
      %9193 = vst [vmem:[%s359 + $0x150] sm:$0xff] %v8835
      %9194 = vst [vmem:[%s359 + $0x158] sm:$0xff] %v8850
      %9195 = vst [vmem:[%s359 + $0x160] sm:$0xff] %v8865
      %9196 = vst [vmem:[%s359 + $0x168] sm:$0xff] %v8880
      %9197 = vst [vmem:[%s359 + $0x170] sm:$0xff] %v8895
      %9198 = vst [vmem:[%s359 + $0x178] sm:$0xff] %v8910
      %9199 = vst [vmem:[%s359 + $0x180] sm:$0xff] %v8925
      %9200 = vst [vmem:[%s359 + $0x188] sm:$0xff] %v8940
      %9201 = vst [vmem:[%s359 + $0x190] sm:$0xff] %v8955
      %9202 = vst [vmem:[%s359 + $0x198] sm:$0xff] %v8970
      %9203 = vst [vmem:[%s359 + $0x1a0] sm:$0xff] %v8985
      %9204 = vst [vmem:[%s359 + $0x1a8] sm:$0xff] %v9000
      %9205 = vst [vmem:[%s359 + $0x1b0] sm:$0xff] %v9015
      %9206 = vst [vmem:[%s359 + $0x1b8] sm:$0xff] %v9030
      %9207 = vst [vmem:[%s359 + $0x1c0] sm:$0xff] %v9045
      %9208 = vst [vmem:[%s359 + $0x1c8] sm:$0xff] %v9060
      %9209 = vst [vmem:[%s359 + $0x1d0] sm:$0xff] %v9075
      %9210 = vst [vmem:[%s359 + $0x1d8] sm:$0xff] %v9090
      %9211 = vst [vmem:[%s359 + $0x1e0] sm:$0xff] %v9105
      %9212 = vst [vmem:[%s359 + $0x1e8] sm:$0xff] %v9120
      %9213 = vst [vmem:[%s359 + $0x1f0] sm:$0xff] %v9135
      %9214 = vst [vmem:[%s359 + $0x1f8] sm:$0xff] %v9150
      %p9215 = scmp.lt.s32.totalorder %s21, 1
      %s9216 = scalar_select %p9215, %s21, 1
      %s9217 = smul.addr %s9216, 64
      %s9218 = smul.addr %s9217, 8
      %s9219 = scalar_lea.vmem %s10, %s9218
      // Predicated region
      $region61: #{ds_out_forward.1} parent=59 // pred_check
        %p9220 = pneg %p254
      $region62: #{ds_out_forward.1} parent=59 // pred_check_branch
        %9222 = sbr.rel (%p9220) target = $region64
      $region63: #{ds_out_forward.1} parent=59 // pred_region
        _
      $region64: #{ds_out_forward.1} parent=59 // pred_fallthru
        _
    $region60: #{ds_out_forward.1} parent=5 // pred_fallthru
      _
    %p9223 = scmp.le.s32.totalorder 2, %s16
    // Predicated region
    $region65: #{ds_out_forward.1} parent=5 // pred_check
      %p9224 = pneg %p9223
    $region66: #{ds_out_forward.1} parent=5 // pred_check_branch
      %9226 = sbr.rel (%p9224) target = $region68
    $region67: #{ds_out_forward.1} parent=5 // pred_region
      %s9227 = ssub.s32 %s16, 2
      // Predicated region
      $region69: #{ds_out_forward.1} parent=67 // pred_check
        %p9228 = pneg %p260
      $region70: #{ds_out_forward.1} parent=67 // pred_check_branch
        %9230 = sbr.rel (%p9228) target = $region72
      $region71: #{ds_out_forward.1} parent=67 // pred_region
        %p9231 = scmp.lt.s32.totalorder %s22, 1
        %s9232 = scalar_select %p9231, %s22, 1
        %s9233 = smul.addr %s9232, 64
        %s9234 = smul.addr %s9233, 8
        %s9235 = scalar_lea.vmem %s10, %s9234
      $region72: #{ds_out_forward.1} parent=67 // pred_fallthru
        _
    $region68: #{ds_out_forward.1} parent=5 // pred_fallthru
      _
  $region6: #{ds_out_forward.1} parent=0 // loop_footer
    %s20 = sadd.s32 1, %s16
  $region7: #{ds_out_forward.1} parent=0 // loop_footer_branch
    %15 = sbr.rel target = $region3
  $region8: #{ds_out_forward.1} parent=0 // loop_exit
    _

</llo_original>
